<compile_context>
chip_gen: v7x
topology: tpu7x:2x2x1
jax: 0.10.0
libtpu: 0.0.40
codegen_flags: <defaults>
</compile_context>

<pallas_src>
import math

import jax
import jax.numpy as jnp
from jax.experimental import pallas as pl
from jax.experimental.pallas import tpu as pltpu


# ---- static geometry (MNIST: 28 -> 24 -> 20 -> pool 10 -> 6 -> pool 3) ----
KH = KW = 5
H0 = W0 = 28
C1 = 32                      # conv1 / conv2 output channels
C3 = 64                      # conv3 output channels
W1F = 28                     # flat row width after conv1 (valid width 24)
L1 = 24 * W1F                # 672  conv1 flat output length
L2 = 20 * W1F                # 560  conv2 flat output length (valid cols < 20)
WP1 = 10                     # flat row width after pool1 (all valid)
L3 = 10 * WP1                # 100  pool1 flat output length
L4 = 6 * WP1                 # 60   conv3 flat output length (valid cols < 6)
L5 = 3 * 3                   # 9    pool2 flat output length
LXP = H0 * W0 + (KW - 1)     # 788  zero-padded flat input length


# --------------------- fused conv stack (conv1..pool2) kernel ---------------------
def _make_conv_stack_kernel(bblk):
    def kernel(x_ref, w1_ref, b1_ref, w2_ref, b2_ref, w3_ref, b3_ref,
               s1_ref, s2_ref, o_ref,
               x1_ref, a1_ref, x2_ref, a2_ref, x3_ref):
        # x_ref : (bblk, 1, 788)  flat, tail-zero-padded images
        # w1/w2/w3 : (32,25) (32,800) (64,800)   im2col-reshaped conv weights
        # s1/s2 : (4, 560, 100) (4, 60, 9)       one-hot 2x2-pool selection matmuls
        # o_ref : (bblk, 64, 9)                  pooled features, torch (C,H,W) order
        w1 = w1_ref[...]; b1 = b1_ref[...]
        w2 = w2_ref[...]; b2 = b2_ref[...]
        w3 = w3_ref[...]; b3 = b3_ref[...]

        for bi in range(bblk):
            # ---- conv1 (1->32, 5x5): im2col (25, 672) + single MXU matmul ----
            for k in range(KH * KW):
                dy, dx = divmod(k, KW)
                x1_ref[k:k + 1, :] = x_ref[bi, :, pl.ds(dy * W0 + dx, L1)]
            y1 = jnp.dot(w1, x1_ref[...], preferred_element_type=jnp.float32) + b1
            a1_ref[:, :L1] = jnp.maximum(y1, 0.0)                     # relu(conv1)
            a1_ref[:, L1:] = jnp.zeros((C1, KW - 1), jnp.float32)     # shift padding

            # ---- conv2 (32->32, 5x5): im2col (800, 560), one K=800 matmul ----
            for k in range(KH * KW):
                dy, dx = divmod(k, KW)
                x2_ref[k * C1:(k + 1) * C1, :] = a1_ref[:, pl.ds(dy * W1F + dx, L2)]
            y2 = jnp.dot(w2, x2_ref[...], preferred_element_type=jnp.float32) + b2
            y2 = jnp.maximum(y2, 0.0)        # relu commutes with max-pool (monotone)

            # ---- pool1 (2x2) via 4 one-hot selection matmuls on the flat axis ----
            # (junk columns of the flat layout are never selected -> stays compact)
            p1 = jnp.dot(y2, s1_ref[0], preferred_element_type=jnp.float32)
            for a in range(1, 4):
                p1 = jnp.maximum(
                    p1, jnp.dot(y2, s1_ref[a], preferred_element_type=jnp.float32))
            a2_ref[:, :L3] = p1                                       # (32, 100)
            a2_ref[:, L3:] = jnp.zeros((C1, KW - 1), jnp.float32)

            # ---- conv3 (32->64, 5x5): im2col (800, 60), one K=800 matmul ----
            for k in range(KH * KW):
                dy, dx = divmod(k, KW)
                x3_ref[k * C1:(k + 1) * C1, :] = a2_ref[:, pl.ds(dy * WP1 + dx, L4)]
            y3 = jnp.dot(w3, x3_ref[...], preferred_element_type=jnp.float32) + b3
            y3 = jnp.maximum(y3, 0.0)

            # ---- pool2 (2x2) -> (64, 9), already in torch .view (C,H,W) order ----
            p2 = jnp.dot(y3, s2_ref[0], preferred_element_type=jnp.float32)
            for a in range(1, 4):
                p2 = jnp.maximum(
                    p2, jnp.dot(y3, s2_ref[a], preferred_element_type=jnp.float32))
            o_ref[bi] = p2.astype(o_ref.dtype)

    return kernel


def _pool_select(h_valid, w_flat, h_out, w_out):
    """One-hot matrices (4, h_valid*w_flat, h_out*w_out):
    out column (r, c) selects flat input index w_flat*(2r+a) + (2c+b)."""
    lin = h_valid * w_flat
    lout = h_out * w_out
    i = jnp.arange(lin)[:, None]
    j = jnp.arange(lout)[None, :]
    r, c = j // w_out, j % w_out
    mats = [(i == (w_flat * (2 * r + a) + (2 * c + b))).astype(jnp.float32)
            for a in range(2) for b in range(2)]
    return jnp.stack(mats, axis=0)


def conv_stack(x, p, block_b=1):
    """Fused conv1->relu->conv2->relu->pool->conv3->relu->pool. Returns (B, 576)."""
    B = x.shape[0]
    assert x.shape[1:] == (1, H0, W0), "MNIST geometry required by the FC dims"
    assert B % block_b == 0

    # one tiny pad of the INPUT so every shifted 5x5 tap slice stays in bounds
    xf = jnp.pad(x.reshape(B, 1, H0 * W0), ((0, 0), (0, 0), (0, KW - 1)))  # (B,1,788)

    # im2col-reshaped weights: K order = (dy, dx, cin)
    w1k = jnp.transpose(p["w1"], (0, 2, 3, 1)).reshape(C1, KH * KW)            # (32, 25)
    w2k = jnp.transpose(p["w2"], (0, 2, 3, 1)).reshape(C1, KH * KW * C1)       # (32, 800)
    w3k = jnp.transpose(p["w3"], (0, 2, 3, 1)).reshape(C3, KH * KW * C1)       # (64, 800)
    b1k = p["b1"].reshape(C1, 1)
    b2k = p["b2"].reshape(C1, 1)
    b3k = p["b3"].reshape(C3, 1)
    s1 = _pool_select(20, W1F, 10, 10)                                         # (4, 560, 100)
    s2 = _pool_select(6, WP1, 3, 3)                                            # (4, 60, 9)

    out = pl.pallas_call(
        _make_conv_stack_kernel(block_b),
        out_shape=jax.ShapeDtypeStruct((B, C3, L5), jnp.float32),
        grid=(B // block_b,),
        in_specs=[
            pl.BlockSpec((block_b, 1, LXP), lambda i: (i, 0, 0)),
            pl.BlockSpec((C1, KH * KW), lambda i: (0, 0)),
            pl.BlockSpec((C1, 1), lambda i: (0, 0)),
            pl.BlockSpec((C1, KH * KW * C1), lambda i: (0, 0)),
            pl.BlockSpec((C1, 1), lambda i: (0, 0)),
            pl.BlockSpec((C3, KH * KW * C1), lambda i: (0, 0)),
            pl.BlockSpec((C3, 1), lambda i: (0, 0)),
            pl.BlockSpec((4, L2, L3), lambda i: (0, 0, 0)),
            pl.BlockSpec((4, L4, L5), lambda i: (0, 0, 0)),
        ],
        out_specs=pl.BlockSpec((block_b, C3, L5), lambda i: (i, 0, 0)),
        scratch_shapes=[
            pltpu.VMEM((KH * KW, L1), jnp.float32),        # X1 im2col  (25, 672)
            pltpu.VMEM((C1, L1 + KW - 1), jnp.float32),    # conv1 act  (32, 676)
            pltpu.VMEM((KH * KW * C1, L2), jnp.float32),   # X2 im2col  (800, 560)
            pltpu.VMEM((C1, L3 + KW - 1), jnp.float32),    # pool1 act  (32, 104)
            pltpu.VMEM((KH * KW * C1, L4), jnp.float32),   # X3 im2col  (800, 60)
        ],
        compiler_params=pltpu.CompilerParams(dimension_semantics=("parallel",)),
    )(xf, w1k, b1k, w2k, b2k, w3k, b3k, s1, s2)
    # (B, 64, 9) -> (B, 576): contiguous flatten, identical order to torch .view on NCHW
    return out.reshape(B, C3 * L5)


# -------------------------- FC head: fc1+ReLU, fc2, log_softmax --------------------------
def _mlp_kernel(x_ref, w1_ref, b1_ref, w2_ref, b2_ref, o_ref):
    x = x_ref[...]                                                               # (bm, 576)
    h = jnp.dot(x, w1_ref[...], preferred_element_type=jnp.float32) + b1_ref[...]
    h = jnp.maximum(h, 0.0)
    # TODO(synk): F.dropout(p=0.5) is identity at inference; training mode would need pltpu.prng_random_bits.
    logits = jnp.dot(h, w2_ref[...], preferred_element_type=jnp.float32) + b2_ref[...]
    m = jnp.max(logits, axis=-1, keepdims=True)
    s = logits - m
    lse = jnp.log(jnp.sum(jnp.exp(s), axis=-1, keepdims=True))
    o_ref[...] = (s - lse).astype(o_ref.dtype)


def mlp_log_softmax(x, w1, b1, w2, b2, block_m=256):
    B, D = x.shape
    Dh, Do = w1.shape[1], w2.shape[1]
    bm = min(block_m, B)
    return pl.pallas_call(
        _mlp_kernel,
        out_shape=jax.ShapeDtypeStruct((B, Do), jnp.float32),
        grid=(pl.cdiv(B, bm),),
        in_specs=[
            pl.BlockSpec((bm, D), lambda i: (i, 0)),
            pl.BlockSpec((D, Dh), lambda i: (0, 0)),
            pl.BlockSpec((1, Dh), lambda i: (0, 0)),
            pl.BlockSpec((Dh, Do), lambda i: (0, 0)),
            pl.BlockSpec((1, Do), lambda i: (0, 0)),
        ],
        out_specs=pl.BlockSpec((bm, Do), lambda i: (i, 0)),
        compiler_params=pltpu.CompilerParams(dimension_semantics=("parallel",)),
    )(x, w1, b1, w2, b2)


# ------------------------------------ full model ------------------------------------
def mnist_cnn_forward(x, p, block_b=1):
    feat = conv_stack(x, p, block_b=block_b)                          # (B, 576)
    return mlp_log_softmax(feat, p["fw1"], p["fb1"], p["fw2"], p["fb2"])  # (B, 10) log-probs


def init_params(key):
    def u(k, shape, fan_in):
        b = 1.0 / math.sqrt(fan_in)
        return jax.random.uniform(k, shape, jnp.float32, -b, b)

    ks = jax.random.split(key, 10)
    p = {}
    p["w1"], p["b1"] = u(ks[0], (32, 1, 5, 5), 25), u(ks[1], (32,), 25)
    p["w2"], p["b2"] = u(ks[2], (32, 32, 5, 5), 32 * 25), u(ks[3], (32,), 32 * 25)
    p["w3"], p["b3"] = u(ks[4], (64, 32, 5, 5), 32 * 25), u(ks[5], (64,), 32 * 25)
    p["fw1"], p["fb1"] = u(ks[6], (576, 256), 576), u(ks[7], (1, 256), 576)
    p["fw2"], p["fb2"] = u(ks[8], (256, 10), 256), u(ks[9], (1, 10), 256)
    return p


# ------------------------------- pure-JAX reference -------------------------------
def reference_forward(x, p):
    prec = jax.lax.Precision.HIGHEST

    def conv(z, w, b):
        y = jax.lax.conv_general_dilated(
            z, w, (1, 1), "VALID",
            dimension_numbers=("NCHW", "OIHW", "NCHW"), precision=prec)
        return y + b[None, :, None, None]

    def pool(z):
        B, C, H, W = z.shape
        return z.reshape(B, C, H // 2, 2, W // 2, 2).max(axis=(3, 5))

    y = jax.nn.relu(conv(x, p["w1"], p["b1"]))
    y = jax.nn.relu(pool(conv(y, p["w2"], p["b2"])))
    y = jax.nn.relu(pool(conv(y, p["w3"], p["b3"])))
    y = y.reshape(y.shape[0], -1)
    y = jax.nn.relu(jnp.dot(y, p["fw1"], precision=prec) + p["fb1"])
    y = jnp.dot(y, p["fw2"], precision=prec) + p["fb2"]
    return jax.nn.log_softmax(y, axis=1)


if __name__ == "__main__":
    key = jax.random.PRNGKey(0)
    kx, kp = jax.random.split(key)
    # MNIST geometry is required by the FC dims (28 -> 24 -> 20 -> 10 -> 6 -> 3)
    x = jax.random.normal(kx, (2, 1, 28, 28), jnp.float32)
    params = init_params(kp)

    out = jax.jit(mnist_cnn_forward)(x, params)
    out = jax.block_until_ready(out)

    ref = reference_forward(x, params)
    assert out.shape == (2, 10)
    assert bool(jnp.all(jnp.isfinite(out)))
    assert bool(jnp.allclose(out, ref, atol=2e-3, rtol=2e-3)), "Pallas output mismatches JAX reference"
    print("KERNEL_OK")
</pallas_src>

<mosaic_0001>
module attributes {stable_mosaic.version = 11 : i64} {
  func.func @kernel(%arg0: i32, %arg1: memref<1x1x788xf32, #tpu.memory_space<vmem>>, %arg2: memref<32x25xf32, #tpu.memory_space<vmem>>, %arg3: memref<32x1xf32, #tpu.memory_space<vmem>>, %arg4: memref<32x800xf32, #tpu.memory_space<vmem>>, %arg5: memref<32x1xf32, #tpu.memory_space<vmem>>, %arg6: memref<64x800xf32, #tpu.memory_space<vmem>>, %arg7: memref<64x1xf32, #tpu.memory_space<vmem>>, %arg8: memref<4x560x100xf32, #tpu.memory_space<vmem>>, %arg9: memref<4x60x9xf32, #tpu.memory_space<vmem>>, %arg10: memref<1x64x9xf32, #tpu.memory_space<vmem>>, %arg11: memref<25x672xf32, #tpu.memory_space<vmem>>, %arg12: memref<32x676xf32, #tpu.memory_space<vmem>>, %arg13: memref<800x560xf32, #tpu.memory_space<vmem>>, %arg14: memref<32x104xf32, #tpu.memory_space<vmem>>, %arg15: memref<800x60xf32, #tpu.memory_space<vmem>>) attributes {dimension_semantics = [#tpu.dimension_semantics<parallel>], iteration_bounds = array<i64: 2>, scalar_prefetch = 0 : i64, scratch_operands = 5 : i64, tpu.core_type = #tpu.core_type<tc>, window_params = [{transform_indices = @transform_0, window_bounds = array<i64: 1, 1, 788>}, {pipeline_mode = #tpu.pipeline_mode<synchronous>, transform_indices = @transform_1, window_bounds = array<i64: 32, 25>}, {pipeline_mode = #tpu.pipeline_mode<synchronous>, transform_indices = @transform_2, window_bounds = array<i64: 32, 1>}, {pipeline_mode = #tpu.pipeline_mode<synchronous>, transform_indices = @transform_3, window_bounds = array<i64: 32, 800>}, {pipeline_mode = #tpu.pipeline_mode<synchronous>, transform_indices = @transform_4, window_bounds = array<i64: 32, 1>}, {pipeline_mode = #tpu.pipeline_mode<synchronous>, transform_indices = @transform_5, window_bounds = array<i64: 64, 800>}, {pipeline_mode = #tpu.pipeline_mode<synchronous>, transform_indices = @transform_6, window_bounds = array<i64: 64, 1>}, {pipeline_mode = #tpu.pipeline_mode<synchronous>, transform_indices = @transform_7, window_bounds = array<i64: 4, 560, 100>}, {pipeline_mode = #tpu.pipeline_mode<synchronous>, transform_indices = @transform_8, window_bounds = array<i64: 4, 60, 9>}, {transform_indices = @transform_9, window_bounds = array<i64: 1, 64, 9>}]} {
    %c0 = arith.constant 0 : index
    %c0_0 = arith.constant 0 : index
    %0 = vector.load %arg2[%c0, %c0_0] : memref<32x25xf32, #tpu.memory_space<vmem>>, vector<32x25xf32>
    %c0_1 = arith.constant 0 : index
    %c0_2 = arith.constant 0 : index
    %1 = vector.load %arg3[%c0_1, %c0_2] : memref<32x1xf32, #tpu.memory_space<vmem>>, vector<32x1xf32>
    %c0_3 = arith.constant 0 : index
    %c0_4 = arith.constant 0 : index
    %2 = vector.load %arg4[%c0_3, %c0_4] : memref<32x800xf32, #tpu.memory_space<vmem>>, vector<32x800xf32>
    %c0_5 = arith.constant 0 : index
    %c0_6 = arith.constant 0 : index
    %3 = vector.load %arg5[%c0_5, %c0_6] : memref<32x1xf32, #tpu.memory_space<vmem>>, vector<32x1xf32>
    %c0_7 = arith.constant 0 : index
    %c0_8 = arith.constant 0 : index
    %4 = vector.load %arg6[%c0_7, %c0_8] : memref<64x800xf32, #tpu.memory_space<vmem>>, vector<64x800xf32>
    %c0_9 = arith.constant 0 : index
    %c0_10 = arith.constant 0 : index
    %5 = vector.load %arg7[%c0_9, %c0_10] : memref<64x1xf32, #tpu.memory_space<vmem>>, vector<64x1xf32>
    %c0_11 = arith.constant 0 : index
    %c0_12 = arith.constant 0 : index
    %c0_13 = arith.constant 0 : index
    %6 = vector.load %arg1[%c0_11, %c0_12, %c0_13] : memref<1x1x788xf32, #tpu.memory_space<vmem>>, vector<1x1x672xf32>
    %7 = vector.shape_cast %6 : vector<1x1x672xf32> to vector<1x672xf32>
    %c0_14 = arith.constant 0 : index
    %c0_15 = arith.constant 0 : index
    %8 = vector.load %arg11[%c0_14, %c0_15] : memref<25x672xf32, #tpu.memory_space<vmem>>, vector<1x672xf32>
    tpu.vector_store %arg11[%c0_14, %c0_15], %7 {strides = array<i32>} : memref<25x672xf32, #tpu.memory_space<vmem>>, vector<1x672xf32>,
    %c0_16 = arith.constant 0 : index
    %c0_17 = arith.constant 0 : index
    %c1 = arith.constant 1 : index
    %9 = vector.load %arg1[%c0_16, %c0_17, %c1] : memref<1x1x788xf32, #tpu.memory_space<vmem>>, vector<1x1x672xf32>
    %10 = vector.shape_cast %9 : vector<1x1x672xf32> to vector<1x672xf32>
    %c1_18 = arith.constant 1 : index
    %c0_19 = arith.constant 0 : index
    %11 = vector.load %arg11[%c1_18, %c0_19] : memref<25x672xf32, #tpu.memory_space<vmem>>, vector<1x672xf32>
    tpu.vector_store %arg11[%c1_18, %c0_19], %10 {strides = array<i32>} : memref<25x672xf32, #tpu.memory_space<vmem>>, vector<1x672xf32>,
    %c0_20 = arith.constant 0 : index
    %c0_21 = arith.constant 0 : index
    %c2 = arith.constant 2 : index
    %12 = vector.load %arg1[%c0_20, %c0_21, %c2] : memref<1x1x788xf32, #tpu.memory_space<vmem>>, vector<1x1x672xf32>
    %13 = vector.shape_cast %12 : vector<1x1x672xf32> to vector<1x672xf32>
    %c2_22 = arith.constant 2 : index
    %c0_23 = arith.constant 0 : index
    %14 = vector.load %arg11[%c2_22, %c0_23] : memref<25x672xf32, #tpu.memory_space<vmem>>, vector<1x672xf32>
    tpu.vector_store %arg11[%c2_22, %c0_23], %13 {strides = array<i32>} : memref<25x672xf32, #tpu.memory_space<vmem>>, vector<1x672xf32>,
    %c0_24 = arith.constant 0 : index
    %c0_25 = arith.constant 0 : index
    %c3 = arith.constant 3 : index
    %15 = vector.load %arg1[%c0_24, %c0_25, %c3] : memref<1x1x788xf32, #tpu.memory_space<vmem>>, vector<1x1x672xf32>
    %16 = vector.shape_cast %15 : vector<1x1x672xf32> to vector<1x672xf32>
    %c3_26 = arith.constant 3 : index
    %c0_27 = arith.constant 0 : index
    %17 = vector.load %arg11[%c3_26, %c0_27] : memref<25x672xf32, #tpu.memory_space<vmem>>, vector<1x672xf32>
    tpu.vector_store %arg11[%c3_26, %c0_27], %16 {strides = array<i32>} : memref<25x672xf32, #tpu.memory_space<vmem>>, vector<1x672xf32>,
    %c0_28 = arith.constant 0 : index
    %c0_29 = arith.constant 0 : index
    %c4 = arith.constant 4 : index
    %18 = vector.load %arg1[%c0_28, %c0_29, %c4] : memref<1x1x788xf32, #tpu.memory_space<vmem>>, vector<1x1x672xf32>
    %19 = vector.shape_cast %18 : vector<1x1x672xf32> to vector<1x672xf32>
    %c4_30 = arith.constant 4 : index
    %c0_31 = arith.constant 0 : index
    %20 = vector.load %arg11[%c4_30, %c0_31] : memref<25x672xf32, #tpu.memory_space<vmem>>, vector<1x672xf32>
    tpu.vector_store %arg11[%c4_30, %c0_31], %19 {strides = array<i32>} : memref<25x672xf32, #tpu.memory_space<vmem>>, vector<1x672xf32>,
    %c0_32 = arith.constant 0 : index
    %c0_33 = arith.constant 0 : index
    %c28 = arith.constant 28 : index
    %21 = vector.load %arg1[%c0_32, %c0_33, %c28] : memref<1x1x788xf32, #tpu.memory_space<vmem>>, vector<1x1x672xf32>
    %22 = vector.shape_cast %21 : vector<1x1x672xf32> to vector<1x672xf32>
    %c5 = arith.constant 5 : index
    %c0_34 = arith.constant 0 : index
    %23 = vector.load %arg11[%c5, %c0_34] : memref<25x672xf32, #tpu.memory_space<vmem>>, vector<1x672xf32>
    tpu.vector_store %arg11[%c5, %c0_34], %22 {strides = array<i32>} : memref<25x672xf32, #tpu.memory_space<vmem>>, vector<1x672xf32>,
    %c0_35 = arith.constant 0 : index
    %c0_36 = arith.constant 0 : index
    %c29 = arith.constant 29 : index
    %24 = vector.load %arg1[%c0_35, %c0_36, %c29] : memref<1x1x788xf32, #tpu.memory_space<vmem>>, vector<1x1x672xf32>
    %25 = vector.shape_cast %24 : vector<1x1x672xf32> to vector<1x672xf32>
    %c6 = arith.constant 6 : index
    %c0_37 = arith.constant 0 : index
    %26 = vector.load %arg11[%c6, %c0_37] : memref<25x672xf32, #tpu.memory_space<vmem>>, vector<1x672xf32>
    tpu.vector_store %arg11[%c6, %c0_37], %25 {strides = array<i32>} : memref<25x672xf32, #tpu.memory_space<vmem>>, vector<1x672xf32>,
    %c0_38 = arith.constant 0 : index
    %c0_39 = arith.constant 0 : index
    %c30 = arith.constant 30 : index
    %27 = vector.load %arg1[%c0_38, %c0_39, %c30] : memref<1x1x788xf32, #tpu.memory_space<vmem>>, vector<1x1x672xf32>
    %28 = vector.shape_cast %27 : vector<1x1x672xf32> to vector<1x672xf32>
    %c7 = arith.constant 7 : index
    %c0_40 = arith.constant 0 : index
    %29 = vector.load %arg11[%c7, %c0_40] : memref<25x672xf32, #tpu.memory_space<vmem>>, vector<1x672xf32>
    tpu.vector_store %arg11[%c7, %c0_40], %28 {strides = array<i32>} : memref<25x672xf32, #tpu.memory_space<vmem>>, vector<1x672xf32>,
    %c0_41 = arith.constant 0 : index
    %c0_42 = arith.constant 0 : index
    %c31 = arith.constant 31 : index
    %30 = vector.load %arg1[%c0_41, %c0_42, %c31] : memref<1x1x788xf32, #tpu.memory_space<vmem>>, vector<1x1x672xf32>
    %31 = vector.shape_cast %30 : vector<1x1x672xf32> to vector<1x672xf32>
    %c8 = arith.constant 8 : index
    %c0_43 = arith.constant 0 : index
    %32 = vector.load %arg11[%c8, %c0_43] : memref<25x672xf32, #tpu.memory_space<vmem>>, vector<1x672xf32>
    tpu.vector_store %arg11[%c8, %c0_43], %31 {strides = array<i32>} : memref<25x672xf32, #tpu.memory_space<vmem>>, vector<1x672xf32>,
    %c0_44 = arith.constant 0 : index
    %c0_45 = arith.constant 0 : index
    %c32 = arith.constant 32 : index
    %33 = vector.load %arg1[%c0_44, %c0_45, %c32] : memref<1x1x788xf32, #tpu.memory_space<vmem>>, vector<1x1x672xf32>
    %34 = vector.shape_cast %33 : vector<1x1x672xf32> to vector<1x672xf32>
    %c9 = arith.constant 9 : index
    %c0_46 = arith.constant 0 : index
    %35 = vector.load %arg11[%c9, %c0_46] : memref<25x672xf32, #tpu.memory_space<vmem>>, vector<1x672xf32>
    tpu.vector_store %arg11[%c9, %c0_46], %34 {strides = array<i32>} : memref<25x672xf32, #tpu.memory_space<vmem>>, vector<1x672xf32>,
    %c0_47 = arith.constant 0 : index
    %c0_48 = arith.constant 0 : index
    %c56 = arith.constant 56 : index
    %36 = vector.load %arg1[%c0_47, %c0_48, %c56] : memref<1x1x788xf32, #tpu.memory_space<vmem>>, vector<1x1x672xf32>
    %37 = vector.shape_cast %36 : vector<1x1x672xf32> to vector<1x672xf32>
    %c10 = arith.constant 10 : index
    %c0_49 = arith.constant 0 : index
    %38 = vector.load %arg11[%c10, %c0_49] : memref<25x672xf32, #tpu.memory_space<vmem>>, vector<1x672xf32>
    tpu.vector_store %arg11[%c10, %c0_49], %37 {strides = array<i32>} : memref<25x672xf32, #tpu.memory_space<vmem>>, vector<1x672xf32>,
    %c0_50 = arith.constant 0 : index
    %c0_51 = arith.constant 0 : index
    %c57 = arith.constant 57 : index
    %39 = vector.load %arg1[%c0_50, %c0_51, %c57] : memref<1x1x788xf32, #tpu.memory_space<vmem>>, vector<1x1x672xf32>
    %40 = vector.shape_cast %39 : vector<1x1x672xf32> to vector<1x672xf32>
    %c11 = arith.constant 11 : index
    %c0_52 = arith.constant 0 : index
    %41 = vector.load %arg11[%c11, %c0_52] : memref<25x672xf32, #tpu.memory_space<vmem>>, vector<1x672xf32>
    tpu.vector_store %arg11[%c11, %c0_52], %40 {strides = array<i32>} : memref<25x672xf32, #tpu.memory_space<vmem>>, vector<1x672xf32>,
    %c0_53 = arith.constant 0 : index
    %c0_54 = arith.constant 0 : index
    %c58 = arith.constant 58 : index
    %42 = vector.load %arg1[%c0_53, %c0_54, %c58] : memref<1x1x788xf32, #tpu.memory_space<vmem>>, vector<1x1x672xf32>
    %43 = vector.shape_cast %42 : vector<1x1x672xf32> to vector<1x672xf32>
    %c12 = arith.constant 12 : index
    %c0_55 = arith.constant 0 : index
    %44 = vector.load %arg11[%c12, %c0_55] : memref<25x672xf32, #tpu.memory_space<vmem>>, vector<1x672xf32>
    tpu.vector_store %arg11[%c12, %c0_55], %43 {strides = array<i32>} : memref<25x672xf32, #tpu.memory_space<vmem>>, vector<1x672xf32>,
    %c0_56 = arith.constant 0 : index
    %c0_57 = arith.constant 0 : index
    %c59 = arith.constant 59 : index
    %45 = vector.load %arg1[%c0_56, %c0_57, %c59] : memref<1x1x788xf32, #tpu.memory_space<vmem>>, vector<1x1x672xf32>
    %46 = vector.shape_cast %45 : vector<1x1x672xf32> to vector<1x672xf32>
    %c13 = arith.constant 13 : index
    %c0_58 = arith.constant 0 : index
    %47 = vector.load %arg11[%c13, %c0_58] : memref<25x672xf32, #tpu.memory_space<vmem>>, vector<1x672xf32>
    tpu.vector_store %arg11[%c13, %c0_58], %46 {strides = array<i32>} : memref<25x672xf32, #tpu.memory_space<vmem>>, vector<1x672xf32>,
    %c0_59 = arith.constant 0 : index
    %c0_60 = arith.constant 0 : index
    %c60 = arith.constant 60 : index
    %48 = vector.load %arg1[%c0_59, %c0_60, %c60] : memref<1x1x788xf32, #tpu.memory_space<vmem>>, vector<1x1x672xf32>
    %49 = vector.shape_cast %48 : vector<1x1x672xf32> to vector<1x672xf32>
    %c14 = arith.constant 14 : index
    %c0_61 = arith.constant 0 : index
    %50 = vector.load %arg11[%c14, %c0_61] : memref<25x672xf32, #tpu.memory_space<vmem>>, vector<1x672xf32>
    tpu.vector_store %arg11[%c14, %c0_61], %49 {strides = array<i32>} : memref<25x672xf32, #tpu.memory_space<vmem>>, vector<1x672xf32>,
    %c0_62 = arith.constant 0 : index
    %c0_63 = arith.constant 0 : index
    %c84 = arith.constant 84 : index
    %51 = vector.load %arg1[%c0_62, %c0_63, %c84] : memref<1x1x788xf32, #tpu.memory_space<vmem>>, vector<1x1x672xf32>
    %52 = vector.shape_cast %51 : vector<1x1x672xf32> to vector<1x672xf32>
    %c15 = arith.constant 15 : index
    %c0_64 = arith.constant 0 : index
    %53 = vector.load %arg11[%c15, %c0_64] : memref<25x672xf32, #tpu.memory_space<vmem>>, vector<1x672xf32>
    tpu.vector_store %arg11[%c15, %c0_64], %52 {strides = array<i32>} : memref<25x672xf32, #tpu.memory_space<vmem>>, vector<1x672xf32>,
    %c0_65 = arith.constant 0 : index
    %c0_66 = arith.constant 0 : index
    %c85 = arith.constant 85 : index
    %54 = vector.load %arg1[%c0_65, %c0_66, %c85] : memref<1x1x788xf32, #tpu.memory_space<vmem>>, vector<1x1x672xf32>
    %55 = vector.shape_cast %54 : vector<1x1x672xf32> to vector<1x672xf32>
    %c16 = arith.constant 16 : index
    %c0_67 = arith.constant 0 : index
    %56 = vector.load %arg11[%c16, %c0_67] : memref<25x672xf32, #tpu.memory_space<vmem>>, vector<1x672xf32>
    tpu.vector_store %arg11[%c16, %c0_67], %55 {strides = array<i32>} : memref<25x672xf32, #tpu.memory_space<vmem>>, vector<1x672xf32>,
    %c0_68 = arith.constant 0 : index
    %c0_69 = arith.constant 0 : index
    %c86 = arith.constant 86 : index
    %57 = vector.load %arg1[%c0_68, %c0_69, %c86] : memref<1x1x788xf32, #tpu.memory_space<vmem>>, vector<1x1x672xf32>
    %58 = vector.shape_cast %57 : vector<1x1x672xf32> to vector<1x672xf32>
    %c17 = arith.constant 17 : index
    %c0_70 = arith.constant 0 : index
    %59 = vector.load %arg11[%c17, %c0_70] : memref<25x672xf32, #tpu.memory_space<vmem>>, vector<1x672xf32>
    tpu.vector_store %arg11[%c17, %c0_70], %58 {strides = array<i32>} : memref<25x672xf32, #tpu.memory_space<vmem>>, vector<1x672xf32>,
    %c0_71 = arith.constant 0 : index
    %c0_72 = arith.constant 0 : index
    %c87 = arith.constant 87 : index
    %60 = vector.load %arg1[%c0_71, %c0_72, %c87] : memref<1x1x788xf32, #tpu.memory_space<vmem>>, vector<1x1x672xf32>
    %61 = vector.shape_cast %60 : vector<1x1x672xf32> to vector<1x672xf32>
    %c18 = arith.constant 18 : index
    %c0_73 = arith.constant 0 : index
    %62 = vector.load %arg11[%c18, %c0_73] : memref<25x672xf32, #tpu.memory_space<vmem>>, vector<1x672xf32>
    tpu.vector_store %arg11[%c18, %c0_73], %61 {strides = array<i32>} : memref<25x672xf32, #tpu.memory_space<vmem>>, vector<1x672xf32>,
    %c0_74 = arith.constant 0 : index
    %c0_75 = arith.constant 0 : index
    %c88 = arith.constant 88 : index
    %63 = vector.load %arg1[%c0_74, %c0_75, %c88] : memref<1x1x788xf32, #tpu.memory_space<vmem>>, vector<1x1x672xf32>
    %64 = vector.shape_cast %63 : vector<1x1x672xf32> to vector<1x672xf32>
    %c19 = arith.constant 19 : index
    %c0_76 = arith.constant 0 : index
    %65 = vector.load %arg11[%c19, %c0_76] : memref<25x672xf32, #tpu.memory_space<vmem>>, vector<1x672xf32>
    tpu.vector_store %arg11[%c19, %c0_76], %64 {strides = array<i32>} : memref<25x672xf32, #tpu.memory_space<vmem>>, vector<1x672xf32>,
    %c0_77 = arith.constant 0 : index
    %c0_78 = arith.constant 0 : index
    %c112 = arith.constant 112 : index
    %66 = vector.load %arg1[%c0_77, %c0_78, %c112] : memref<1x1x788xf32, #tpu.memory_space<vmem>>, vector<1x1x672xf32>
    %67 = vector.shape_cast %66 : vector<1x1x672xf32> to vector<1x672xf32>
    %c20 = arith.constant 20 : index
    %c0_79 = arith.constant 0 : index
    %68 = vector.load %arg11[%c20, %c0_79] : memref<25x672xf32, #tpu.memory_space<vmem>>, vector<1x672xf32>
    tpu.vector_store %arg11[%c20, %c0_79], %67 {strides = array<i32>} : memref<25x672xf32, #tpu.memory_space<vmem>>, vector<1x672xf32>,
    %c0_80 = arith.constant 0 : index
    %c0_81 = arith.constant 0 : index
    %c113 = arith.constant 113 : index
    %69 = vector.load %arg1[%c0_80, %c0_81, %c113] : memref<1x1x788xf32, #tpu.memory_space<vmem>>, vector<1x1x672xf32>
    %70 = vector.shape_cast %69 : vector<1x1x672xf32> to vector<1x672xf32>
    %c21 = arith.constant 21 : index
    %c0_82 = arith.constant 0 : index
    %71 = vector.load %arg11[%c21, %c0_82] : memref<25x672xf32, #tpu.memory_space<vmem>>, vector<1x672xf32>
    tpu.vector_store %arg11[%c21, %c0_82], %70 {strides = array<i32>} : memref<25x672xf32, #tpu.memory_space<vmem>>, vector<1x672xf32>,
    %c0_83 = arith.constant 0 : index
    %c0_84 = arith.constant 0 : index
    %c114 = arith.constant 114 : index
    %72 = vector.load %arg1[%c0_83, %c0_84, %c114] : memref<1x1x788xf32, #tpu.memory_space<vmem>>, vector<1x1x672xf32>
    %73 = vector.shape_cast %72 : vector<1x1x672xf32> to vector<1x672xf32>
    %c22 = arith.constant 22 : index
    %c0_85 = arith.constant 0 : index
    %74 = vector.load %arg11[%c22, %c0_85] : memref<25x672xf32, #tpu.memory_space<vmem>>, vector<1x672xf32>
    tpu.vector_store %arg11[%c22, %c0_85], %73 {strides = array<i32>} : memref<25x672xf32, #tpu.memory_space<vmem>>, vector<1x672xf32>,
    %c0_86 = arith.constant 0 : index
    %c0_87 = arith.constant 0 : index
    %c115 = arith.constant 115 : index
    %75 = vector.load %arg1[%c0_86, %c0_87, %c115] : memref<1x1x788xf32, #tpu.memory_space<vmem>>, vector<1x1x672xf32>
    %76 = vector.shape_cast %75 : vector<1x1x672xf32> to vector<1x672xf32>
    %c23 = arith.constant 23 : index
    %c0_88 = arith.constant 0 : index
    %77 = vector.load %arg11[%c23, %c0_88] : memref<25x672xf32, #tpu.memory_space<vmem>>, vector<1x672xf32>
    tpu.vector_store %arg11[%c23, %c0_88], %76 {strides = array<i32>} : memref<25x672xf32, #tpu.memory_space<vmem>>, vector<1x672xf32>,
    %c0_89 = arith.constant 0 : index
    %c0_90 = arith.constant 0 : index
    %c116 = arith.constant 116 : index
    %78 = vector.load %arg1[%c0_89, %c0_90, %c116] : memref<1x1x788xf32, #tpu.memory_space<vmem>>, vector<1x1x672xf32>
    %79 = vector.shape_cast %78 : vector<1x1x672xf32> to vector<1x672xf32>
    %c24 = arith.constant 24 : index
    %c0_91 = arith.constant 0 : index
    %80 = vector.load %arg11[%c24, %c0_91] : memref<25x672xf32, #tpu.memory_space<vmem>>, vector<1x672xf32>
    tpu.vector_store %arg11[%c24, %c0_91], %79 {strides = array<i32>} : memref<25x672xf32, #tpu.memory_space<vmem>>, vector<1x672xf32>,
    %c0_92 = arith.constant 0 : index
    %c0_93 = arith.constant 0 : index
    %81 = vector.load %arg11[%c0_92, %c0_93] : memref<25x672xf32, #tpu.memory_space<vmem>>, vector<25x672xf32>
    %cst = arith.constant dense<0.000000e+00> : vector<32x672xf32>
    %82 = tpu.matmul %0, %81, %cst {dimension_numbers = #tpu.dot_dimension_numbers<[1], [0], [0], [1], [0, 0, 1, 1], [], []>} : vector<32x25xf32>, vector<25x672xf32>, vector<32x672xf32> -> vector<32x672xf32>
    %83 = vector.broadcast %1 : vector<32x1xf32> to vector<32x672xf32>
    %84 = arith.addf %82, %83 : vector<32x672xf32>
    %cst_94 = arith.constant 0.000000e+00 : f32
    %85 = vector.broadcast %cst_94 : f32 to vector<32x672xf32>
    %86 = arith.maximumf %84, %85 : vector<32x672xf32>
    %c0_95 = arith.constant 0 : index
    %c0_96 = arith.constant 0 : index
    %87 = vector.load %arg12[%c0_95, %c0_96] : memref<32x676xf32, #tpu.memory_space<vmem>>, vector<32x672xf32>
    tpu.vector_store %arg12[%c0_95, %c0_96], %86 {strides = array<i32>} : memref<32x676xf32, #tpu.memory_space<vmem>>, vector<32x672xf32>,
    %cst_97 = arith.constant 0.000000e+00 : f32
    %88 = vector.broadcast %cst_97 : f32 to vector<32x4xf32>
    %c0_98 = arith.constant 0 : index
    %c672 = arith.constant 672 : index
    %89 = vector.load %arg12[%c0_98, %c672] : memref<32x676xf32, #tpu.memory_space<vmem>>, vector<32x4xf32>
    tpu.vector_store %arg12[%c0_98, %c672], %88 {strides = array<i32>} : memref<32x676xf32, #tpu.memory_space<vmem>>, vector<32x4xf32>,
    %c0_99 = arith.constant 0 : index
    %c0_100 = arith.constant 0 : index
    %90 = vector.load %arg12[%c0_99, %c0_100] : memref<32x676xf32, #tpu.memory_space<vmem>>, vector<32x560xf32>
    %c0_101 = arith.constant 0 : index
    %c0_102 = arith.constant 0 : index
    %91 = vector.load %arg13[%c0_101, %c0_102] : memref<800x560xf32, #tpu.memory_space<vmem>>, vector<32x560xf32>
    tpu.vector_store %arg13[%c0_101, %c0_102], %90 {strides = array<i32>} : memref<800x560xf32, #tpu.memory_space<vmem>>, vector<32x560xf32>,
    %c0_103 = arith.constant 0 : index
    %c1_104 = arith.constant 1 : index
    %92 = vector.load %arg12[%c0_103, %c1_104] : memref<32x676xf32, #tpu.memory_space<vmem>>, vector<32x560xf32>
    %c32_105 = arith.constant 32 : index
    %c0_106 = arith.constant 0 : index
    %93 = vector.load %arg13[%c32_105, %c0_106] : memref<800x560xf32, #tpu.memory_space<vmem>>, vector<32x560xf32>
    tpu.vector_store %arg13[%c32_105, %c0_106], %92 {strides = array<i32>} : memref<800x560xf32, #tpu.memory_space<vmem>>, vector<32x560xf32>,
    %c0_107 = arith.constant 0 : index
    %c2_108 = arith.constant 2 : index
    %94 = vector.load %arg12[%c0_107, %c2_108] : memref<32x676xf32, #tpu.memory_space<vmem>>, vector<32x560xf32>
    %c64 = arith.constant 64 : index
    %c0_109 = arith.constant 0 : index
    %95 = vector.load %arg13[%c64, %c0_109] : memref<800x560xf32, #tpu.memory_space<vmem>>, vector<32x560xf32>
    tpu.vector_store %arg13[%c64, %c0_109], %94 {strides = array<i32>} : memref<800x560xf32, #tpu.memory_space<vmem>>, vector<32x560xf32>,
    %c0_110 = arith.constant 0 : index
    %c3_111 = arith.constant 3 : index
    %96 = vector.load %arg12[%c0_110, %c3_111] : memref<32x676xf32, #tpu.memory_space<vmem>>, vector<32x560xf32>
    %c96 = arith.constant 96 : index
    %c0_112 = arith.constant 0 : index
    %97 = vector.load %arg13[%c96, %c0_112] : memref<800x560xf32, #tpu.memory_space<vmem>>, vector<32x560xf32>
    tpu.vector_store %arg13[%c96, %c0_112], %96 {strides = array<i32>} : memref<800x560xf32, #tpu.memory_space<vmem>>, vector<32x560xf32>,
    %c0_113 = arith.constant 0 : index
    %c4_114 = arith.constant 4 : index
    %98 = vector.load %arg12[%c0_113, %c4_114] : memref<32x676xf32, #tpu.memory_space<vmem>>, vector<32x560xf32>
    %c128 = arith.constant 128 : index
    %c0_115 = arith.constant 0 : index
    %99 = vector.load %arg13[%c128, %c0_115] : memref<800x560xf32, #tpu.memory_space<vmem>>, vector<32x560xf32>
    tpu.vector_store %arg13[%c128, %c0_115], %98 {strides = array<i32>} : memref<800x560xf32, #tpu.memory_space<vmem>>, vector<32x560xf32>,
    %c0_116 = arith.constant 0 : index
    %c28_117 = arith.constant 28 : index
    %100 = vector.load %arg12[%c0_116, %c28_117] : memref<32x676xf32, #tpu.memory_space<vmem>>, vector<32x560xf32>
    %c160 = arith.constant 160 : index
    %c0_118 = arith.constant 0 : index
    %101 = vector.load %arg13[%c160, %c0_118] : memref<800x560xf32, #tpu.memory_space<vmem>>, vector<32x560xf32>
    tpu.vector_store %arg13[%c160, %c0_118], %100 {strides = array<i32>} : memref<800x560xf32, #tpu.memory_space<vmem>>, vector<32x560xf32>,
    %c0_119 = arith.constant 0 : index
    %c29_120 = arith.constant 29 : index
    %102 = vector.load %arg12[%c0_119, %c29_120] : memref<32x676xf32, #tpu.memory_space<vmem>>, vector<32x560xf32>
    %c192 = arith.constant 192 : index
    %c0_121 = arith.constant 0 : index
    %103 = vector.load %arg13[%c192, %c0_121] : memref<800x560xf32, #tpu.memory_space<vmem>>, vector<32x560xf32>
    tpu.vector_store %arg13[%c192, %c0_121], %102 {strides = array<i32>} : memref<800x560xf32, #tpu.memory_space<vmem>>, vector<32x560xf32>,
    %c0_122 = arith.constant 0 : index
    %c30_123 = arith.constant 30 : index
    %104 = vector.load %arg12[%c0_122, %c30_123] : memref<32x676xf32, #tpu.memory_space<vmem>>, vector<32x560xf32>
    %c224 = arith.constant 224 : index
    %c0_124 = arith.constant 0 : index
    %105 = vector.load %arg13[%c224, %c0_124] : memref<800x560xf32, #tpu.memory_space<vmem>>, vector<32x560xf32>
    tpu.vector_store %arg13[%c224, %c0_124], %104 {strides = array<i32>} : memref<800x560xf32, #tpu.memory_space<vmem>>, vector<32x560xf32>,
    %c0_125 = arith.constant 0 : index
    %c31_126 = arith.constant 31 : index
    %106 = vector.load %arg12[%c0_125, %c31_126] : memref<32x676xf32, #tpu.memory_space<vmem>>, vector<32x560xf32>
    %c256 = arith.constant 256 : index
    %c0_127 = arith.constant 0 : index
    %107 = vector.load %arg13[%c256, %c0_127] : memref<800x560xf32, #tpu.memory_space<vmem>>, vector<32x560xf32>
    tpu.vector_store %arg13[%c256, %c0_127], %106 {strides = array<i32>} : memref<800x560xf32, #tpu.memory_space<vmem>>, vector<32x560xf32>,
    %c0_128 = arith.constant 0 : index
    %c32_129 = arith.constant 32 : index
    %108 = vector.load %arg12[%c0_128, %c32_129] : memref<32x676xf32, #tpu.memory_space<vmem>>, vector<32x560xf32>
    %c288 = arith.constant 288 : index
    %c0_130 = arith.constant 0 : index
    %109 = vector.load %arg13[%c288, %c0_130] : memref<800x560xf32, #tpu.memory_space<vmem>>, vector<32x560xf32>
    tpu.vector_store %arg13[%c288, %c0_130], %108 {strides = array<i32>} : memref<800x560xf32, #tpu.memory_space<vmem>>, vector<32x560xf32>,
    %c0_131 = arith.constant 0 : index
    %c56_132 = arith.constant 56 : index
    %110 = vector.load %arg12[%c0_131, %c56_132] : memref<32x676xf32, #tpu.memory_space<vmem>>, vector<32x560xf32>
    %c320 = arith.constant 320 : index
    %c0_133 = arith.constant 0 : index
    %111 = vector.load %arg13[%c320, %c0_133] : memref<800x560xf32, #tpu.memory_space<vmem>>, vector<32x560xf32>
    tpu.vector_store %arg13[%c320, %c0_133], %110 {strides = array<i32>} : memref<800x560xf32, #tpu.memory_space<vmem>>, vector<32x560xf32>,
    %c0_134 = arith.constant 0 : index
    %c57_135 = arith.constant 57 : index
    %112 = vector.load %arg12[%c0_134, %c57_135] : memref<32x676xf32, #tpu.memory_space<vmem>>, vector<32x560xf32>
    %c352 = arith.constant 352 : index
    %c0_136 = arith.constant 0 : index
    %113 = vector.load %arg13[%c352, %c0_136] : memref<800x560xf32, #tpu.memory_space<vmem>>, vector<32x560xf32>
    tpu.vector_store %arg13[%c352, %c0_136], %112 {strides = array<i32>} : memref<800x560xf32, #tpu.memory_space<vmem>>, vector<32x560xf32>,
    %c0_137 = arith.constant 0 : index
    %c58_138 = arith.constant 58 : index
    %114 = vector.load %arg12[%c0_137, %c58_138] : memref<32x676xf32, #tpu.memory_space<vmem>>, vector<32x560xf32>
    %c384 = arith.constant 384 : index
    %c0_139 = arith.constant 0 : index
    %115 = vector.load %arg13[%c384, %c0_139] : memref<800x560xf32, #tpu.memory_space<vmem>>, vector<32x560xf32>
    tpu.vector_store %arg13[%c384, %c0_139], %114 {strides = array<i32>} : memref<800x560xf32, #tpu.memory_space<vmem>>, vector<32x560xf32>,
    %c0_140 = arith.constant 0 : index
    %c59_141 = arith.constant 59 : index
    %116 = vector.load %arg12[%c0_140, %c59_141] : memref<32x676xf32, #tpu.memory_space<vmem>>, vector<32x560xf32>
    %c416 = arith.constant 416 : index
    %c0_142 = arith.constant 0 : index
    %117 = vector.load %arg13[%c416, %c0_142] : memref<800x560xf32, #tpu.memory_space<vmem>>, vector<32x560xf32>
    tpu.vector_store %arg13[%c416, %c0_142], %116 {strides = array<i32>} : memref<800x560xf32, #tpu.memory_space<vmem>>, vector<32x560xf32>,
    %c0_143 = arith.constant 0 : index
    %c60_144 = arith.constant 60 : index
    %118 = vector.load %arg12[%c0_143, %c60_144] : memref<32x676xf32, #tpu.memory_space<vmem>>, vector<32x560xf32>
    %c448 = arith.constant 448 : index
    %c0_145 = arith.constant 0 : index
    %119 = vector.load %arg13[%c448, %c0_145] : memref<800x560xf32, #tpu.memory_space<vmem>>, vector<32x560xf32>
    tpu.vector_store %arg13[%c448, %c0_145], %118 {strides = array<i32>} : memref<800x560xf32, #tpu.memory_space<vmem>>, vector<32x560xf32>,
    %c0_146 = arith.constant 0 : index
    %c84_147 = arith.constant 84 : index
    %120 = vector.load %arg12[%c0_146, %c84_147] : memref<32x676xf32, #tpu.memory_space<vmem>>, vector<32x560xf32>
    %c480 = arith.constant 480 : index
    %c0_148 = arith.constant 0 : index
    %121 = vector.load %arg13[%c480, %c0_148] : memref<800x560xf32, #tpu.memory_space<vmem>>, vector<32x560xf32>
    tpu.vector_store %arg13[%c480, %c0_148], %120 {strides = array<i32>} : memref<800x560xf32, #tpu.memory_space<vmem>>, vector<32x560xf32>,
    %c0_149 = arith.constant 0 : index
    %c85_150 = arith.constant 85 : index
    %122 = vector.load %arg12[%c0_149, %c85_150] : memref<32x676xf32, #tpu.memory_space<vmem>>, vector<32x560xf32>
    %c512 = arith.constant 512 : index
    %c0_151 = arith.constant 0 : index
    %123 = vector.load %arg13[%c512, %c0_151] : memref<800x560xf32, #tpu.memory_space<vmem>>, vector<32x560xf32>
    tpu.vector_store %arg13[%c512, %c0_151], %122 {strides = array<i32>} : memref<800x560xf32, #tpu.memory_space<vmem>>, vector<32x560xf32>,
    %c0_152 = arith.constant 0 : index
    %c86_153 = arith.constant 86 : index
    %124 = vector.load %arg12[%c0_152, %c86_153] : memref<32x676xf32, #tpu.memory_space<vmem>>, vector<32x560xf32>
    %c544 = arith.constant 544 : index
    %c0_154 = arith.constant 0 : index
    %125 = vector.load %arg13[%c544, %c0_154] : memref<800x560xf32, #tpu.memory_space<vmem>>, vector<32x560xf32>
    tpu.vector_store %arg13[%c544, %c0_154], %124 {strides = array<i32>} : memref<800x560xf32, #tpu.memory_space<vmem>>, vector<32x560xf32>,
    %c0_155 = arith.constant 0 : index
    %c87_156 = arith.constant 87 : index
    %126 = vector.load %arg12[%c0_155, %c87_156] : memref<32x676xf32, #tpu.memory_space<vmem>>, vector<32x560xf32>
    %c576 = arith.constant 576 : index
    %c0_157 = arith.constant 0 : index
    %127 = vector.load %arg13[%c576, %c0_157] : memref<800x560xf32, #tpu.memory_space<vmem>>, vector<32x560xf32>
    tpu.vector_store %arg13[%c576, %c0_157], %126 {strides = array<i32>} : memref<800x560xf32, #tpu.memory_space<vmem>>, vector<32x560xf32>,
    %c0_158 = arith.constant 0 : index
    %c88_159 = arith.constant 88 : index
    %128 = vector.load %arg12[%c0_158, %c88_159] : memref<32x676xf32, #tpu.memory_space<vmem>>, vector<32x560xf32>
    %c608 = arith.constant 608 : index
    %c0_160 = arith.constant 0 : index
    %129 = vector.load %arg13[%c608, %c0_160] : memref<800x560xf32, #tpu.memory_space<vmem>>, vector<32x560xf32>
    tpu.vector_store %arg13[%c608, %c0_160], %128 {strides = array<i32>} : memref<800x560xf32, #tpu.memory_space<vmem>>, vector<32x560xf32>,
    %c0_161 = arith.constant 0 : index
    %c112_162 = arith.constant 112 : index
    %130 = vector.load %arg12[%c0_161, %c112_162] : memref<32x676xf32, #tpu.memory_space<vmem>>, vector<32x560xf32>
    %c640 = arith.constant 640 : index
    %c0_163 = arith.constant 0 : index
    %131 = vector.load %arg13[%c640, %c0_163] : memref<800x560xf32, #tpu.memory_space<vmem>>, vector<32x560xf32>
    tpu.vector_store %arg13[%c640, %c0_163], %130 {strides = array<i32>} : memref<800x560xf32, #tpu.memory_space<vmem>>, vector<32x560xf32>,
    %c0_164 = arith.constant 0 : index
    %c113_165 = arith.constant 113 : index
    %132 = vector.load %arg12[%c0_164, %c113_165] : memref<32x676xf32, #tpu.memory_space<vmem>>, vector<32x560xf32>
    %c672_166 = arith.constant 672 : index
    %c0_167 = arith.constant 0 : index
    %133 = vector.load %arg13[%c672_166, %c0_167] : memref<800x560xf32, #tpu.memory_space<vmem>>, vector<32x560xf32>
    tpu.vector_store %arg13[%c672_166, %c0_167], %132 {strides = array<i32>} : memref<800x560xf32, #tpu.memory_space<vmem>>, vector<32x560xf32>,
    %c0_168 = arith.constant 0 : index
    %c114_169 = arith.constant 114 : index
    %134 = vector.load %arg12[%c0_168, %c114_169] : memref<32x676xf32, #tpu.memory_space<vmem>>, vector<32x560xf32>
    %c704 = arith.constant 704 : index
    %c0_170 = arith.constant 0 : index
    %135 = vector.load %arg13[%c704, %c0_170] : memref<800x560xf32, #tpu.memory_space<vmem>>, vector<32x560xf32>
    tpu.vector_store %arg13[%c704, %c0_170], %134 {strides = array<i32>} : memref<800x560xf32, #tpu.memory_space<vmem>>, vector<32x560xf32>,
    %c0_171 = arith.constant 0 : index
    %c115_172 = arith.constant 115 : index
    %136 = vector.load %arg12[%c0_171, %c115_172] : memref<32x676xf32, #tpu.memory_space<vmem>>, vector<32x560xf32>
    %c736 = arith.constant 736 : index
    %c0_173 = arith.constant 0 : index
    %137 = vector.load %arg13[%c736, %c0_173] : memref<800x560xf32, #tpu.memory_space<vmem>>, vector<32x560xf32>
    tpu.vector_store %arg13[%c736, %c0_173], %136 {strides = array<i32>} : memref<800x560xf32, #tpu.memory_space<vmem>>, vector<32x560xf32>,
    %c0_174 = arith.constant 0 : index
    %c116_175 = arith.constant 116 : index
    %138 = vector.load %arg12[%c0_174, %c116_175] : memref<32x676xf32, #tpu.memory_space<vmem>>, vector<32x560xf32>
    %c768 = arith.constant 768 : index
    %c0_176 = arith.constant 0 : index
    %139 = vector.load %arg13[%c768, %c0_176] : memref<800x560xf32, #tpu.memory_space<vmem>>, vector<32x560xf32>
    tpu.vector_store %arg13[%c768, %c0_176], %138 {strides = array<i32>} : memref<800x560xf32, #tpu.memory_space<vmem>>, vector<32x560xf32>,
    %c0_177 = arith.constant 0 : index
    %c0_178 = arith.constant 0 : index
    %140 = vector.load %arg13[%c0_177, %c0_178] : memref<800x560xf32, #tpu.memory_space<vmem>>, vector<800x560xf32>
    %cst_179 = arith.constant dense<0.000000e+00> : vector<32x560xf32>
    %141 = tpu.matmul %2, %140, %cst_179 {dimension_numbers = #tpu.dot_dimension_numbers<[1], [0], [0], [1], [0, 0, 1, 1], [], []>} : vector<32x800xf32>, vector<800x560xf32>, vector<32x560xf32> -> vector<32x560xf32>
    %142 = vector.broadcast %3 : vector<32x1xf32> to vector<32x560xf32>
    %143 = arith.addf %141, %142 : vector<32x560xf32>
    %cst_180 = arith.constant 0.000000e+00 : f32
    %144 = vector.broadcast %cst_180 : f32 to vector<32x560xf32>
    %145 = arith.maximumf %143, %144 : vector<32x560xf32>
    %c0_181 = arith.constant 0 : index
    %c0_182 = arith.constant 0 : index
    %c0_183 = arith.constant 0 : index
    %146 = vector.load %arg8[%c0_181, %c0_182, %c0_183] : memref<4x560x100xf32, #tpu.memory_space<vmem>>, vector<1x560x100xf32>
    %147 = vector.shape_cast %146 : vector<1x560x100xf32> to vector<560x100xf32>
    %cst_184 = arith.constant dense<0.000000e+00> : vector<32x100xf32>
    %148 = tpu.matmul %145, %147, %cst_184 {dimension_numbers = #tpu.dot_dimension_numbers<[1], [0], [0], [1], [0, 0, 1, 1], [], []>} : vector<32x560xf32>, vector<560x100xf32>, vector<32x100xf32> -> vector<32x100xf32>
    %c1_185 = arith.constant 1 : index
    %c0_186 = arith.constant 0 : index
    %c0_187 = arith.constant 0 : index
    %149 = vector.load %arg8[%c1_185, %c0_186, %c0_187] : memref<4x560x100xf32, #tpu.memory_space<vmem>>, vector<1x560x100xf32>
    %150 = vector.shape_cast %149 : vector<1x560x100xf32> to vector<560x100xf32>
    %cst_188 = arith.constant dense<0.000000e+00> : vector<32x100xf32>
    %151 = tpu.matmul %145, %150, %cst_188 {dimension_numbers = #tpu.dot_dimension_numbers<[1], [0], [0], [1], [0, 0, 1, 1], [], []>} : vector<32x560xf32>, vector<560x100xf32>, vector<32x100xf32> -> vector<32x100xf32>
    %152 = arith.maximumf %148, %151 : vector<32x100xf32>
    %c2_189 = arith.constant 2 : index
    %c0_190 = arith.constant 0 : index
    %c0_191 = arith.constant 0 : index
    %153 = vector.load %arg8[%c2_189, %c0_190, %c0_191] : memref<4x560x100xf32, #tpu.memory_space<vmem>>, vector<1x560x100xf32>
    %154 = vector.shape_cast %153 : vector<1x560x100xf32> to vector<560x100xf32>
    %cst_192 = arith.constant dense<0.000000e+00> : vector<32x100xf32>
    %155 = tpu.matmul %145, %154, %cst_192 {dimension_numbers = #tpu.dot_dimension_numbers<[1], [0], [0], [1], [0, 0, 1, 1], [], []>} : vector<32x560xf32>, vector<560x100xf32>, vector<32x100xf32> -> vector<32x100xf32>
    %156 = arith.maximumf %152, %155 : vector<32x100xf32>
    %c3_193 = arith.constant 3 : index
    %c0_194 = arith.constant 0 : index
    %c0_195 = arith.constant 0 : index
    %157 = vector.load %arg8[%c3_193, %c0_194, %c0_195] : memref<4x560x100xf32, #tpu.memory_space<vmem>>, vector<1x560x100xf32>
    %158 = vector.shape_cast %157 : vector<1x560x100xf32> to vector<560x100xf32>
    %cst_196 = arith.constant dense<0.000000e+00> : vector<32x100xf32>
    %159 = tpu.matmul %145, %158, %cst_196 {dimension_numbers = #tpu.dot_dimension_numbers<[1], [0], [0], [1], [0, 0, 1, 1], [], []>} : vector<32x560xf32>, vector<560x100xf32>, vector<32x100xf32> -> vector<32x100xf32>
    %160 = arith.maximumf %156, %159 : vector<32x100xf32>
    %c0_197 = arith.constant 0 : index
    %c0_198 = arith.constant 0 : index
    %161 = vector.load %arg14[%c0_197, %c0_198] : memref<32x104xf32, #tpu.memory_space<vmem>>, vector<32x100xf32>
    tpu.vector_store %arg14[%c0_197, %c0_198], %160 {strides = array<i32>} : memref<32x104xf32, #tpu.memory_space<vmem>>, vector<32x100xf32>,
    %cst_199 = arith.constant 0.000000e+00 : f32
    %162 = vector.broadcast %cst_199 : f32 to vector<32x4xf32>
    %c0_200 = arith.constant 0 : index
    %c100 = arith.constant 100 : index
    %163 = vector.load %arg14[%c0_200, %c100] : memref<32x104xf32, #tpu.memory_space<vmem>>, vector<32x4xf32>
    tpu.vector_store %arg14[%c0_200, %c100], %162 {strides = array<i32>} : memref<32x104xf32, #tpu.memory_space<vmem>>, vector<32x4xf32>,
    %c0_201 = arith.constant 0 : index
    %c0_202 = arith.constant 0 : index
    %164 = vector.load %arg14[%c0_201, %c0_202] : memref<32x104xf32, #tpu.memory_space<vmem>>, vector<32x60xf32>
    %c0_203 = arith.constant 0 : index
    %c0_204 = arith.constant 0 : index
    %165 = vector.load %arg15[%c0_203, %c0_204] : memref<800x60xf32, #tpu.memory_space<vmem>>, vector<32x60xf32>
    tpu.vector_store %arg15[%c0_203, %c0_204], %164 {strides = array<i32>} : memref<800x60xf32, #tpu.memory_space<vmem>>, vector<32x60xf32>,
    %c0_205 = arith.constant 0 : index
    %c1_206 = arith.constant 1 : index
    %166 = vector.load %arg14[%c0_205, %c1_206] : memref<32x104xf32, #tpu.memory_space<vmem>>, vector<32x60xf32>
    %c32_207 = arith.constant 32 : index
    %c0_208 = arith.constant 0 : index
    %167 = vector.load %arg15[%c32_207, %c0_208] : memref<800x60xf32, #tpu.memory_space<vmem>>, vector<32x60xf32>
    tpu.vector_store %arg15[%c32_207, %c0_208], %166 {strides = array<i32>} : memref<800x60xf32, #tpu.memory_space<vmem>>, vector<32x60xf32>,
    %c0_209 = arith.constant 0 : index
    %c2_210 = arith.constant 2 : index
    %168 = vector.load %arg14[%c0_209, %c2_210] : memref<32x104xf32, #tpu.memory_space<vmem>>, vector<32x60xf32>
    %c64_211 = arith.constant 64 : index
    %c0_212 = arith.constant 0 : index
    %169 = vector.load %arg15[%c64_211, %c0_212] : memref<800x60xf32, #tpu.memory_space<vmem>>, vector<32x60xf32>
    tpu.vector_store %arg15[%c64_211, %c0_212], %168 {strides = array<i32>} : memref<800x60xf32, #tpu.memory_space<vmem>>, vector<32x60xf32>,
    %c0_213 = arith.constant 0 : index
    %c3_214 = arith.constant 3 : index
    %170 = vector.load %arg14[%c0_213, %c3_214] : memref<32x104xf32, #tpu.memory_space<vmem>>, vector<32x60xf32>
    %c96_215 = arith.constant 96 : index
    %c0_216 = arith.constant 0 : index
    %171 = vector.load %arg15[%c96_215, %c0_216] : memref<800x60xf32, #tpu.memory_space<vmem>>, vector<32x60xf32>
    tpu.vector_store %arg15[%c96_215, %c0_216], %170 {strides = array<i32>} : memref<800x60xf32, #tpu.memory_space<vmem>>, vector<32x60xf32>,
    %c0_217 = arith.constant 0 : index
    %c4_218 = arith.constant 4 : index
    %172 = vector.load %arg14[%c0_217, %c4_218] : memref<32x104xf32, #tpu.memory_space<vmem>>, vector<32x60xf32>
    %c128_219 = arith.constant 128 : index
    %c0_220 = arith.constant 0 : index
    %173 = vector.load %arg15[%c128_219, %c0_220] : memref<800x60xf32, #tpu.memory_space<vmem>>, vector<32x60xf32>
    tpu.vector_store %arg15[%c128_219, %c0_220], %172 {strides = array<i32>} : memref<800x60xf32, #tpu.memory_space<vmem>>, vector<32x60xf32>,
    %c0_221 = arith.constant 0 : index
    %c10_222 = arith.constant 10 : index
    %174 = vector.load %arg14[%c0_221, %c10_222] : memref<32x104xf32, #tpu.memory_space<vmem>>, vector<32x60xf32>
    %c160_223 = arith.constant 160 : index
    %c0_224 = arith.constant 0 : index
    %175 = vector.load %arg15[%c160_223, %c0_224] : memref<800x60xf32, #tpu.memory_space<vmem>>, vector<32x60xf32>
    tpu.vector_store %arg15[%c160_223, %c0_224], %174 {strides = array<i32>} : memref<800x60xf32, #tpu.memory_space<vmem>>, vector<32x60xf32>,
    %c0_225 = arith.constant 0 : index
    %c11_226 = arith.constant 11 : index
    %176 = vector.load %arg14[%c0_225, %c11_226] : memref<32x104xf32, #tpu.memory_space<vmem>>, vector<32x60xf32>
    %c192_227 = arith.constant 192 : index
    %c0_228 = arith.constant 0 : index
    %177 = vector.load %arg15[%c192_227, %c0_228] : memref<800x60xf32, #tpu.memory_space<vmem>>, vector<32x60xf32>
    tpu.vector_store %arg15[%c192_227, %c0_228], %176 {strides = array<i32>} : memref<800x60xf32, #tpu.memory_space<vmem>>, vector<32x60xf32>,
    %c0_229 = arith.constant 0 : index
    %c12_230 = arith.constant 12 : index
    %178 = vector.load %arg14[%c0_229, %c12_230] : memref<32x104xf32, #tpu.memory_space<vmem>>, vector<32x60xf32>
    %c224_231 = arith.constant 224 : index
    %c0_232 = arith.constant 0 : index
    %179 = vector.load %arg15[%c224_231, %c0_232] : memref<800x60xf32, #tpu.memory_space<vmem>>, vector<32x60xf32>
    tpu.vector_store %arg15[%c224_231, %c0_232], %178 {strides = array<i32>} : memref<800x60xf32, #tpu.memory_space<vmem>>, vector<32x60xf32>,
    %c0_233 = arith.constant 0 : index
    %c13_234 = arith.constant 13 : index
    %180 = vector.load %arg14[%c0_233, %c13_234] : memref<32x104xf32, #tpu.memory_space<vmem>>, vector<32x60xf32>
    %c256_235 = arith.constant 256 : index
    %c0_236 = arith.constant 0 : index
    %181 = vector.load %arg15[%c256_235, %c0_236] : memref<800x60xf32, #tpu.memory_space<vmem>>, vector<32x60xf32>
    tpu.vector_store %arg15[%c256_235, %c0_236], %180 {strides = array<i32>} : memref<800x60xf32, #tpu.memory_space<vmem>>, vector<32x60xf32>,
    %c0_237 = arith.constant 0 : index
    %c14_238 = arith.constant 14 : index
    %182 = vector.load %arg14[%c0_237, %c14_238] : memref<32x104xf32, #tpu.memory_space<vmem>>, vector<32x60xf32>
    %c288_239 = arith.constant 288 : index
    %c0_240 = arith.constant 0 : index
    %183 = vector.load %arg15[%c288_239, %c0_240] : memref<800x60xf32, #tpu.memory_space<vmem>>, vector<32x60xf32>
    tpu.vector_store %arg15[%c288_239, %c0_240], %182 {strides = array<i32>} : memref<800x60xf32, #tpu.memory_space<vmem>>, vector<32x60xf32>,
    %c0_241 = arith.constant 0 : index
    %c20_242 = arith.constant 20 : index
    %184 = vector.load %arg14[%c0_241, %c20_242] : memref<32x104xf32, #tpu.memory_space<vmem>>, vector<32x60xf32>
    %c320_243 = arith.constant 320 : index
    %c0_244 = arith.constant 0 : index
    %185 = vector.load %arg15[%c320_243, %c0_244] : memref<800x60xf32, #tpu.memory_space<vmem>>, vector<32x60xf32>
    tpu.vector_store %arg15[%c320_243, %c0_244], %184 {strides = array<i32>} : memref<800x60xf32, #tpu.memory_space<vmem>>, vector<32x60xf32>,
    %c0_245 = arith.constant 0 : index
    %c21_246 = arith.constant 21 : index
    %186 = vector.load %arg14[%c0_245, %c21_246] : memref<32x104xf32, #tpu.memory_space<vmem>>, vector<32x60xf32>
    %c352_247 = arith.constant 352 : index
    %c0_248 = arith.constant 0 : index
    %187 = vector.load %arg15[%c352_247, %c0_248] : memref<800x60xf32, #tpu.memory_space<vmem>>, vector<32x60xf32>
    tpu.vector_store %arg15[%c352_247, %c0_248], %186 {strides = array<i32>} : memref<800x60xf32, #tpu.memory_space<vmem>>, vector<32x60xf32>,
    %c0_249 = arith.constant 0 : index
    %c22_250 = arith.constant 22 : index
    %188 = vector.load %arg14[%c0_249, %c22_250] : memref<32x104xf32, #tpu.memory_space<vmem>>, vector<32x60xf32>
    %c384_251 = arith.constant 384 : index
    %c0_252 = arith.constant 0 : index
    %189 = vector.load %arg15[%c384_251, %c0_252] : memref<800x60xf32, #tpu.memory_space<vmem>>, vector<32x60xf32>
    tpu.vector_store %arg15[%c384_251, %c0_252], %188 {strides = array<i32>} : memref<800x60xf32, #tpu.memory_space<vmem>>, vector<32x60xf32>,
    %c0_253 = arith.constant 0 : index
    %c23_254 = arith.constant 23 : index
    %190 = vector.load %arg14[%c0_253, %c23_254] : memref<32x104xf32, #tpu.memory_space<vmem>>, vector<32x60xf32>
    %c416_255 = arith.constant 416 : index
    %c0_256 = arith.constant 0 : index
    %191 = vector.load %arg15[%c416_255, %c0_256] : memref<800x60xf32, #tpu.memory_space<vmem>>, vector<32x60xf32>
    tpu.vector_store %arg15[%c416_255, %c0_256], %190 {strides = array<i32>} : memref<800x60xf32, #tpu.memory_space<vmem>>, vector<32x60xf32>,
    %c0_257 = arith.constant 0 : index
    %c24_258 = arith.constant 24 : index
    %192 = vector.load %arg14[%c0_257, %c24_258] : memref<32x104xf32, #tpu.memory_space<vmem>>, vector<32x60xf32>
    %c448_259 = arith.constant 448 : index
    %c0_260 = arith.constant 0 : index
    %193 = vector.load %arg15[%c448_259, %c0_260] : memref<800x60xf32, #tpu.memory_space<vmem>>, vector<32x60xf32>
    tpu.vector_store %arg15[%c448_259, %c0_260], %192 {strides = array<i32>} : memref<800x60xf32, #tpu.memory_space<vmem>>, vector<32x60xf32>,
    %c0_261 = arith.constant 0 : index
    %c30_262 = arith.constant 30 : index
    %194 = vector.load %arg14[%c0_261, %c30_262] : memref<32x104xf32, #tpu.memory_space<vmem>>, vector<32x60xf32>
    %c480_263 = arith.constant 480 : index
    %c0_264 = arith.constant 0 : index
    %195 = vector.load %arg15[%c480_263, %c0_264] : memref<800x60xf32, #tpu.memory_space<vmem>>, vector<32x60xf32>
    tpu.vector_store %arg15[%c480_263, %c0_264], %194 {strides = array<i32>} : memref<800x60xf32, #tpu.memory_space<vmem>>, vector<32x60xf32>,
    %c0_265 = arith.constant 0 : index
    %c31_266 = arith.constant 31 : index
    %196 = vector.load %arg14[%c0_265, %c31_266] : memref<32x104xf32, #tpu.memory_space<vmem>>, vector<32x60xf32>
    %c512_267 = arith.constant 512 : index
    %c0_268 = arith.constant 0 : index
    %197 = vector.load %arg15[%c512_267, %c0_268] : memref<800x60xf32, #tpu.memory_space<vmem>>, vector<32x60xf32>
    tpu.vector_store %arg15[%c512_267, %c0_268], %196 {strides = array<i32>} : memref<800x60xf32, #tpu.memory_space<vmem>>, vector<32x60xf32>,
    %c0_269 = arith.constant 0 : index
    %c32_270 = arith.constant 32 : index
    %198 = vector.load %arg14[%c0_269, %c32_270] : memref<32x104xf32, #tpu.memory_space<vmem>>, vector<32x60xf32>
    %c544_271 = arith.constant 544 : index
    %c0_272 = arith.constant 0 : index
    %199 = vector.load %arg15[%c544_271, %c0_272] : memref<800x60xf32, #tpu.memory_space<vmem>>, vector<32x60xf32>
    tpu.vector_store %arg15[%c544_271, %c0_272], %198 {strides = array<i32>} : memref<800x60xf32, #tpu.memory_space<vmem>>, vector<32x60xf32>,
    %c0_273 = arith.constant 0 : index
    %c33 = arith.constant 33 : index
    %200 = vector.load %arg14[%c0_273, %c33] : memref<32x104xf32, #tpu.memory_space<vmem>>, vector<32x60xf32>
    %c576_274 = arith.constant 576 : index
    %c0_275 = arith.constant 0 : index
    %201 = vector.load %arg15[%c576_274, %c0_275] : memref<800x60xf32, #tpu.memory_space<vmem>>, vector<32x60xf32>
    tpu.vector_store %arg15[%c576_274, %c0_275], %200 {strides = array<i32>} : memref<800x60xf32, #tpu.memory_space<vmem>>, vector<32x60xf32>,
    %c0_276 = arith.constant 0 : index
    %c34 = arith.constant 34 : index
    %202 = vector.load %arg14[%c0_276, %c34] : memref<32x104xf32, #tpu.memory_space<vmem>>, vector<32x60xf32>
    %c608_277 = arith.constant 608 : index
    %c0_278 = arith.constant 0 : index
    %203 = vector.load %arg15[%c608_277, %c0_278] : memref<800x60xf32, #tpu.memory_space<vmem>>, vector<32x60xf32>
    tpu.vector_store %arg15[%c608_277, %c0_278], %202 {strides = array<i32>} : memref<800x60xf32, #tpu.memory_space<vmem>>, vector<32x60xf32>,
    %c0_279 = arith.constant 0 : index
    %c40 = arith.constant 40 : index
    %204 = vector.load %arg14[%c0_279, %c40] : memref<32x104xf32, #tpu.memory_space<vmem>>, vector<32x60xf32>
    %c640_280 = arith.constant 640 : index
    %c0_281 = arith.constant 0 : index
    %205 = vector.load %arg15[%c640_280, %c0_281] : memref<800x60xf32, #tpu.memory_space<vmem>>, vector<32x60xf32>
    tpu.vector_store %arg15[%c640_280, %c0_281], %204 {strides = array<i32>} : memref<800x60xf32, #tpu.memory_space<vmem>>, vector<32x60xf32>,
    %c0_282 = arith.constant 0 : index
    %c41 = arith.constant 41 : index
    %206 = vector.load %arg14[%c0_282, %c41] : memref<32x104xf32, #tpu.memory_space<vmem>>, vector<32x60xf32>
    %c672_283 = arith.constant 672 : index
    %c0_284 = arith.constant 0 : index
    %207 = vector.load %arg15[%c672_283, %c0_284] : memref<800x60xf32, #tpu.memory_space<vmem>>, vector<32x60xf32>
    tpu.vector_store %arg15[%c672_283, %c0_284], %206 {strides = array<i32>} : memref<800x60xf32, #tpu.memory_space<vmem>>, vector<32x60xf32>,
    %c0_285 = arith.constant 0 : index
    %c42 = arith.constant 42 : index
    %208 = vector.load %arg14[%c0_285, %c42] : memref<32x104xf32, #tpu.memory_space<vmem>>, vector<32x60xf32>
    %c704_286 = arith.constant 704 : index
    %c0_287 = arith.constant 0 : index
    %209 = vector.load %arg15[%c704_286, %c0_287] : memref<800x60xf32, #tpu.memory_space<vmem>>, vector<32x60xf32>
    tpu.vector_store %arg15[%c704_286, %c0_287], %208 {strides = array<i32>} : memref<800x60xf32, #tpu.memory_space<vmem>>, vector<32x60xf32>,
    %c0_288 = arith.constant 0 : index
    %c43 = arith.constant 43 : index
    %210 = vector.load %arg14[%c0_288, %c43] : memref<32x104xf32, #tpu.memory_space<vmem>>, vector<32x60xf32>
    %c736_289 = arith.constant 736 : index
    %c0_290 = arith.constant 0 : index
    %211 = vector.load %arg15[%c736_289, %c0_290] : memref<800x60xf32, #tpu.memory_space<vmem>>, vector<32x60xf32>
    tpu.vector_store %arg15[%c736_289, %c0_290], %210 {strides = array<i32>} : memref<800x60xf32, #tpu.memory_space<vmem>>, vector<32x60xf32>,
    %c0_291 = arith.constant 0 : index
    %c44 = arith.constant 44 : index
    %212 = vector.load %arg14[%c0_291, %c44] : memref<32x104xf32, #tpu.memory_space<vmem>>, vector<32x60xf32>
    %c768_292 = arith.constant 768 : index
    %c0_293 = arith.constant 0 : index
    %213 = vector.load %arg15[%c768_292, %c0_293] : memref<800x60xf32, #tpu.memory_space<vmem>>, vector<32x60xf32>
    tpu.vector_store %arg15[%c768_292, %c0_293], %212 {strides = array<i32>} : memref<800x60xf32, #tpu.memory_space<vmem>>, vector<32x60xf32>,
    %c0_294 = arith.constant 0 : index
    %c0_295 = arith.constant 0 : index
    %214 = vector.load %arg15[%c0_294, %c0_295] : memref<800x60xf32, #tpu.memory_space<vmem>>, vector<800x60xf32>
    %cst_296 = arith.constant dense<0.000000e+00> : vector<64x60xf32>
    %215 = tpu.matmul %4, %214, %cst_296 {dimension_numbers = #tpu.dot_dimension_numbers<[1], [0], [0], [1], [0, 0, 1, 1], [], []>} : vector<64x800xf32>, vector<800x60xf32>, vector<64x60xf32> -> vector<64x60xf32>
    %216 = vector.broadcast %5 : vector<64x1xf32> to vector<64x60xf32>
    %217 = arith.addf %215, %216 : vector<64x60xf32>
    %cst_297 = arith.constant 0.000000e+00 : f32
    %218 = vector.broadcast %cst_297 : f32 to vector<64x60xf32>
    %219 = arith.maximumf %217, %218 : vector<64x60xf32>
    %c0_298 = arith.constant 0 : index
    %c0_299 = arith.constant 0 : index
    %c0_300 = arith.constant 0 : index
    %220 = vector.load %arg9[%c0_298, %c0_299, %c0_300] : memref<4x60x9xf32, #tpu.memory_space<vmem>>, vector<1x60x9xf32>
    %221 = vector.shape_cast %220 : vector<1x60x9xf32> to vector<60x9xf32>
    %cst_301 = arith.constant dense<0.000000e+00> : vector<64x9xf32>
    %222 = tpu.matmul %219, %221, %cst_301 {dimension_numbers = #tpu.dot_dimension_numbers<[1], [0], [0], [1], [0, 0, 1, 1], [], []>} : vector<64x60xf32>, vector<60x9xf32>, vector<64x9xf32> -> vector<64x9xf32>
    %c1_302 = arith.constant 1 : index
    %c0_303 = arith.constant 0 : index
    %c0_304 = arith.constant 0 : index
    %223 = vector.load %arg9[%c1_302, %c0_303, %c0_304] : memref<4x60x9xf32, #tpu.memory_space<vmem>>, vector<1x60x9xf32>
    %224 = vector.shape_cast %223 : vector<1x60x9xf32> to vector<60x9xf32>
    %cst_305 = arith.constant dense<0.000000e+00> : vector<64x9xf32>
    %225 = tpu.matmul %219, %224, %cst_305 {dimension_numbers = #tpu.dot_dimension_numbers<[1], [0], [0], [1], [0, 0, 1, 1], [], []>} : vector<64x60xf32>, vector<60x9xf32>, vector<64x9xf32> -> vector<64x9xf32>
    %226 = arith.maximumf %222, %225 : vector<64x9xf32>
    %c2_306 = arith.constant 2 : index
    %c0_307 = arith.constant 0 : index
    %c0_308 = arith.constant 0 : index
    %227 = vector.load %arg9[%c2_306, %c0_307, %c0_308] : memref<4x60x9xf32, #tpu.memory_space<vmem>>, vector<1x60x9xf32>
    %228 = vector.shape_cast %227 : vector<1x60x9xf32> to vector<60x9xf32>
    %cst_309 = arith.constant dense<0.000000e+00> : vector<64x9xf32>
    %229 = tpu.matmul %219, %228, %cst_309 {dimension_numbers = #tpu.dot_dimension_numbers<[1], [0], [0], [1], [0, 0, 1, 1], [], []>} : vector<64x60xf32>, vector<60x9xf32>, vector<64x9xf32> -> vector<64x9xf32>
    %230 = arith.maximumf %226, %229 : vector<64x9xf32>
    %c3_310 = arith.constant 3 : index
    %c0_311 = arith.constant 0 : index
    %c0_312 = arith.constant 0 : index
    %231 = vector.load %arg9[%c3_310, %c0_311, %c0_312] : memref<4x60x9xf32, #tpu.memory_space<vmem>>, vector<1x60x9xf32>
    %232 = vector.shape_cast %231 : vector<1x60x9xf32> to vector<60x9xf32>
    %cst_313 = arith.constant dense<0.000000e+00> : vector<64x9xf32>
    %233 = tpu.matmul %219, %232, %cst_313 {dimension_numbers = #tpu.dot_dimension_numbers<[1], [0], [0], [1], [0, 0, 1, 1], [], []>} : vector<64x60xf32>, vector<60x9xf32>, vector<64x9xf32> -> vector<64x9xf32>
    %234 = arith.maximumf %230, %233 : vector<64x9xf32>
    %c0_314 = arith.constant 0 : index
    %c0_315 = arith.constant 0 : index
    %c0_316 = arith.constant 0 : index
    %235 = vector.load %arg10[%c0_314, %c0_315, %c0_316] : memref<1x64x9xf32, #tpu.memory_space<vmem>>, vector<1x64x9xf32>
    %236 = vector.shape_cast %235 : vector<1x64x9xf32> to vector<64x9xf32>
    %237 = vector.shape_cast %234 : vector<64x9xf32> to vector<1x64x9xf32>
    tpu.vector_store %arg10[%c0_314, %c0_315, %c0_316], %237 {strides = array<i32>} : memref<1x64x9xf32, #tpu.memory_space<vmem>>, vector<1x64x9xf32>,
    return
  }
  func.func @transform_0(%arg0: i32) -> (i32, i32, i32) {
    %c0_i32 = arith.constant 0 : i32
    %c0_i32_0 = arith.constant 0 : i32
    %c0_i32_1 = arith.constant 0 : i32
    return %arg0, %c0_i32, %c0_i32_0 : i32, i32, i32
  }
  func.func @transform_1(%arg0: i32) -> (i32, i32) {
    %c0_i32 = arith.constant 0 : i32
    %c0_i32_0 = arith.constant 0 : i32
    %c0_i32_1 = arith.constant 0 : i32
    return %c0_i32, %c0_i32_0 : i32, i32
  }
  func.func @transform_2(%arg0: i32) -> (i32, i32) {
    %c0_i32 = arith.constant 0 : i32
    %c0_i32_0 = arith.constant 0 : i32
    %c0_i32_1 = arith.constant 0 : i32
    return %c0_i32, %c0_i32_0 : i32, i32
  }
  func.func @transform_3(%arg0: i32) -> (i32, i32) {
    %c0_i32 = arith.constant 0 : i32
    %c0_i32_0 = arith.constant 0 : i32
    %c0_i32_1 = arith.constant 0 : i32
    return %c0_i32, %c0_i32_0 : i32, i32
  }
  func.func @transform_4(%arg0: i32) -> (i32, i32) {
    %c0_i32 = arith.constant 0 : i32
    %c0_i32_0 = arith.constant 0 : i32
    %c0_i32_1 = arith.constant 0 : i32
    return %c0_i32, %c0_i32_0 : i32, i32
  }
  func.func @transform_5(%arg0: i32) -> (i32, i32) {
    %c0_i32 = arith.constant 0 : i32
    %c0_i32_0 = arith.constant 0 : i32
    %c0_i32_1 = arith.constant 0 : i32
    return %c0_i32, %c0_i32_0 : i32, i32
  }
  func.func @transform_6(%arg0: i32) -> (i32, i32) {
    %c0_i32 = arith.constant 0 : i32
    %c0_i32_0 = arith.constant 0 : i32
    %c0_i32_1 = arith.constant 0 : i32
    return %c0_i32, %c0_i32_0 : i32, i32
  }
  func.func @transform_7(%arg0: i32) -> (i32, i32, i32) {
    %c0_i32 = arith.constant 0 : i32
    %c0_i32_0 = arith.constant 0 : i32
    %c0_i32_1 = arith.constant 0 : i32
    %c0_i32_2 = arith.constant 0 : i32
    return %c0_i32, %c0_i32_0, %c0_i32_1 : i32, i32, i32
  }
  func.func @transform_8(%arg0: i32) -> (i32, i32, i32) {
    %c0_i32 = arith.constant 0 : i32
    %c0_i32_0 = arith.constant 0 : i32
    %c0_i32_1 = arith.constant 0 : i32
    %c0_i32_2 = arith.constant 0 : i32
    return %c0_i32, %c0_i32_0, %c0_i32_1 : i32, i32, i32
  }
  func.func @transform_9(%arg0: i32) -> (i32, i32, i32) {
    %c0_i32 = arith.constant 0 : i32
    %c0_i32_0 = arith.constant 0 : i32
    %c0_i32_1 = arith.constant 0 : i32
    return %arg0, %c0_i32, %c0_i32_0 : i32, i32, i32
  }
}

module attributes {stable_mosaic.version = 11 : i64} {
  func.func @_mlp_kernel(%arg0: i32, %arg1: memref<2x576xf32, #tpu.memory_space<vmem>>, %arg2: memref<576x256xf32, #tpu.memory_space<vmem>>, %arg3: memref<1x256xf32, #tpu.memory_space<vmem>>, %arg4: memref<256x10xf32, #tpu.memory_space<vmem>>, %arg5: memref<1x10xf32, #tpu.memory_space<vmem>>, %arg6: memref<2x10xf32, #tpu.memory_space<vmem>>) attributes {dimension_semantics = [#tpu.dimension_semantics<parallel>], iteration_bounds = array<i64: 1>, scalar_prefetch = 0 : i64, scratch_operands = 0 : i64, tpu.core_type = #tpu.core_type<tc>, window_params = [{transform_indices = @transform_0, window_bounds = array<i64: 2, 576>}, {pipeline_mode = #tpu.pipeline_mode<synchronous>, transform_indices = @transform_1, window_bounds = array<i64: 576, 256>}, {pipeline_mode = #tpu.pipeline_mode<synchronous>, transform_indices = @transform_2, window_bounds = array<i64: 1, 256>}, {pipeline_mode = #tpu.pipeline_mode<synchronous>, transform_indices = @transform_3, window_bounds = array<i64: 256, 10>}, {pipeline_mode = #tpu.pipeline_mode<synchronous>, transform_indices = @transform_4, window_bounds = array<i64: 1, 10>}, {transform_indices = @transform_5, window_bounds = array<i64: 2, 10>}]} {
    %c0 = arith.constant 0 : index
    %c0_0 = arith.constant 0 : index
    %0 = vector.load %arg1[%c0, %c0_0] : memref<2x576xf32, #tpu.memory_space<vmem>>, vector<2x576xf32>
    %c0_1 = arith.constant 0 : index
    %c0_2 = arith.constant 0 : index
    %1 = vector.load %arg2[%c0_1, %c0_2] : memref<576x256xf32, #tpu.memory_space<vmem>>, vector<576x256xf32>
    %cst = arith.constant dense<0.000000e+00> : vector<2x256xf32>
    %2 = tpu.matmul %0, %1, %cst {dimension_numbers = #tpu.dot_dimension_numbers<[1], [0], [0], [1], [0, 0, 1, 1], [], []>} : vector<2x576xf32>, vector<576x256xf32>, vector<2x256xf32> -> vector<2x256xf32>
    %c0_3 = arith.constant 0 : index
    %c0_4 = arith.constant 0 : index
    %3 = vector.load %arg3[%c0_3, %c0_4] : memref<1x256xf32, #tpu.memory_space<vmem>>, vector<1x256xf32>
    %4 = vector.broadcast %3 : vector<1x256xf32> to vector<2x256xf32>
    %5 = arith.addf %2, %4 : vector<2x256xf32>
    %cst_5 = arith.constant 0.000000e+00 : f32
    %6 = vector.broadcast %cst_5 : f32 to vector<2x256xf32>
    %7 = arith.maximumf %5, %6 : vector<2x256xf32>
    %c0_6 = arith.constant 0 : index
    %c0_7 = arith.constant 0 : index
    %8 = vector.load %arg4[%c0_6, %c0_7] : memref<256x10xf32, #tpu.memory_space<vmem>>, vector<256x10xf32>
    %cst_8 = arith.constant dense<0.000000e+00> : vector<2x10xf32>
    %9 = tpu.matmul %7, %8, %cst_8 {dimension_numbers = #tpu.dot_dimension_numbers<[1], [0], [0], [1], [0, 0, 1, 1], [], []>} : vector<2x256xf32>, vector<256x10xf32>, vector<2x10xf32> -> vector<2x10xf32>
    %c0_9 = arith.constant 0 : index
    %c0_10 = arith.constant 0 : index
    %10 = vector.load %arg5[%c0_9, %c0_10] : memref<1x10xf32, #tpu.memory_space<vmem>>, vector<1x10xf32>
    %11 = vector.broadcast %10 : vector<1x10xf32> to vector<2x10xf32>
    %12 = arith.addf %9, %11 : vector<2x10xf32>
    %cst_11 = arith.constant dense<0xFF800000> : vector<2xf32>
    %13 = vector.multi_reduction <maximumf>, %12, %cst_11 [1] : vector<2x10xf32> to vector<2xf32>
    %14 = vector.shape_cast %13 : vector<2xf32> to vector<2x1xf32>
    %15 = vector.broadcast %14 : vector<2x1xf32> to vector<2x10xf32>
    %16 = arith.subf %12, %15 : vector<2x10xf32>
    %17 = math.exp %16 : vector<2x10xf32>
    %cst_12 = arith.constant dense<0.000000e+00> : vector<2xf32>
    %18 = vector.multi_reduction <add>, %17, %cst_12 [1] : vector<2x10xf32> to vector<2xf32>
    %19 = vector.shape_cast %18 : vector<2xf32> to vector<2x1xf32>
    %20 = math.log %19 : vector<2x1xf32>
    %21 = vector.broadcast %20 : vector<2x1xf32> to vector<2x10xf32>
    %22 = arith.subf %16, %21 : vector<2x10xf32>
    %c0_13 = arith.constant 0 : index
    %c0_14 = arith.constant 0 : index
    %23 = vector.load %arg6[%c0_13, %c0_14] : memref<2x10xf32, #tpu.memory_space<vmem>>, vector<2x10xf32>
    tpu.vector_store %arg6[%c0_13, %c0_14], %22 {strides = array<i32>} : memref<2x10xf32, #tpu.memory_space<vmem>>, vector<2x10xf32>,
    return
  }
  func.func @transform_0(%arg0: i32) -> (i32, i32) {
    %c0_i32 = arith.constant 0 : i32
    %c0_i32_0 = arith.constant 0 : i32
    return %arg0, %c0_i32 : i32, i32
  }
  func.func @transform_1(%arg0: i32) -> (i32, i32) {
    %c0_i32 = arith.constant 0 : i32
    %c0_i32_0 = arith.constant 0 : i32
    %c0_i32_1 = arith.constant 0 : i32
    return %c0_i32, %c0_i32_0 : i32, i32
  }
  func.func @transform_2(%arg0: i32) -> (i32, i32) {
    %c0_i32 = arith.constant 0 : i32
    %c0_i32_0 = arith.constant 0 : i32
    %c0_i32_1 = arith.constant 0 : i32
    return %c0_i32, %c0_i32_0 : i32, i32
  }
  func.func @transform_3(%arg0: i32) -> (i32, i32) {
    %c0_i32 = arith.constant 0 : i32
    %c0_i32_0 = arith.constant 0 : i32
    %c0_i32_1 = arith.constant 0 : i32
    return %c0_i32, %c0_i32_0 : i32, i32
  }
  func.func @transform_4(%arg0: i32) -> (i32, i32) {
    %c0_i32 = arith.constant 0 : i32
    %c0_i32_0 = arith.constant 0 : i32
    %c0_i32_1 = arith.constant 0 : i32
    return %c0_i32, %c0_i32_0 : i32, i32
  }
  func.func @transform_5(%arg0: i32) -> (i32, i32) {
    %c0_i32 = arith.constant 0 : i32
    %c0_i32_0 = arith.constant 0 : i32
    return %arg0, %c0_i32 : i32, i32
  }
}

</mosaic_0001>

<llo_original>
// kernel: mnist_cnn_forward.3
$region0: #{mnist_cnn_forward.3}
  #allocation0 [shape = 'u32[]', space=smem, size = 0x4, offset = 0x4, fixed_abs, tag = 'smem constant byte address 0x4 - core index']
  #allocation1 [shape = 'u32[144,128]{1,0:T(1,128)}', space=vmem, size = 0x12000, scoped, tag = 'internal scratch']
  %s0 = inlined_call_operand.vmem [shape: f32[2,576], index: 0, kind: input, shape index: {}]
  %s1 = inlined_call_operand.vmem [shape: f32[576,256], index: 1, kind: input, shape index: {}]
  %s2 = inlined_call_operand.vmem [shape: f32[1,256], index: 2, kind: input, shape index: {}]
  %s3 = inlined_call_operand.vmem [shape: f32[256,10], index: 3, kind: input, shape index: {}]
  %s4 = inlined_call_operand.vmem [shape: f32[1,10], index: 4, kind: input, shape index: {}]
  %s5 = inlined_call_operand.hbm [shape: f32[2,10], index: 5, kind: output, shape index: {}]
  %s6 = sld [smem:[#allocation0]]
  $region30: #{mnist_cnn_forward.3} parent=0
    _
  %s8 = ssub.s32 1, %s6
  %s9 = scalar_select 0, %s8, %s6
  $region1: #{mnist_cnn_forward.3} parent=0
    #allocation2 [shape = 'u8[1024]{0}', space=vmem, size = 0x400, scoped, tag = 'output window, operand 0, single buffered']
    #allocation3 [shape = 's32[1]{0}', space=sflag, size = 0x4, scoped, tag = 'scoped memory for mnist_cnn_forward.3']
    %10 = vsyncpa [#allocation3], 0
    // Predicated region
    $region2: #{mnist_cnn_forward.3} parent=1 // pred_check
      _
    $region3: #{mnist_cnn_forward.3} parent=1 // pred_check_branch
      %12 = sbr.rel (0) target = $region5
    $region4: #{mnist_cnn_forward.3} parent=1 // pred_region
      _
    $region5: #{mnist_cnn_forward.3} parent=1 // pred_fallthru
      _
    // Predicated region
    $region6: #{mnist_cnn_forward.3} parent=1 // pred_check
      _
    $region7: #{mnist_cnn_forward.3} parent=1 // pred_check_branch
      %14 = sbr.rel (0) target = $region9
    $region8: #{mnist_cnn_forward.3} parent=1 // pred_region
      _
    $region9: #{mnist_cnn_forward.3} parent=1 // pred_fallthru
      _
    // Predicated region
    $region10: #{mnist_cnn_forward.3} parent=1 // pred_check
      _
    $region11: #{mnist_cnn_forward.3} parent=1 // pred_check_branch
      %16 = sbr.rel (0) target = $region13
    $region12: #{mnist_cnn_forward.3} parent=1 // pred_region
      _
    $region13: #{mnist_cnn_forward.3} parent=1 // pred_fallthru
      _
    // Predicated region
    $region14: #{mnist_cnn_forward.3} parent=1 // pred_check
      _
    $region15: #{mnist_cnn_forward.3} parent=1 // pred_check_branch
      %18 = sbr.rel (0) target = $region17
    $region16: #{mnist_cnn_forward.3} parent=1 // pred_region
      _
    $region17: #{mnist_cnn_forward.3} parent=1 // pred_fallthru
      _
    // Predicated region
    $region18: #{mnist_cnn_forward.3} parent=1 // pred_check
      _
    $region19: #{mnist_cnn_forward.3} parent=1 // pred_check_branch
      %20 = sbr.rel (0) target = $region21
    $region20: #{mnist_cnn_forward.3} parent=1 // pred_region
      _
    $region21: #{mnist_cnn_forward.3} parent=1 // pred_fallthru
      _
    %v21 = vld [vmem:[%s0] sm:$0xff]
    %v22 = vld [vmem:[%s0 + $0x8] sm:$0x3]
    %v23 = vld [vmem:[%s1] sm:$0xff]
    %v24 = vld [vmem:[%s1 + $0x8] sm:$0xff]
    %v25 = vld [vmem:[%s1 + $0x10] sm:$0xff]
    %v26 = vld [vmem:[%s1 + $0x18] sm:$0xff]
    %v27 = vld [vmem:[%s1 + $0x20] sm:$0xff]
    %v28 = vld [vmem:[%s1 + $0x28] sm:$0xff]
    %v29 = vld [vmem:[%s1 + $0x30] sm:$0xff]
    %v30 = vld [vmem:[%s1 + $0x38] sm:$0xff]
    %v31 = vld [vmem:[%s1 + $0x40] sm:$0xff]
    %v32 = vld [vmem:[%s1 + $0x48] sm:$0xff]
    %v33 = vld [vmem:[%s1 + $0x50] sm:$0xff]
    %v34 = vld [vmem:[%s1 + $0x58] sm:$0xff]
    %v35 = vld [vmem:[%s1 + $0x60] sm:$0xff]
    %v36 = vld [vmem:[%s1 + $0x68] sm:$0xff]
    %v37 = vld [vmem:[%s1 + $0x70] sm:$0xff]
    %v38 = vld [vmem:[%s1 + $0x78] sm:$0xff]
    %v39 = vld [vmem:[%s1 + $0x80] sm:$0xff]
    %v40 = vld [vmem:[%s1 + $0x88] sm:$0xff]
    %v41 = vld [vmem:[%s1 + $0x90] sm:$0xff]
    %v42 = vld [vmem:[%s1 + $0x98] sm:$0xff]
    %v43 = vld [vmem:[%s1 + $0xa0] sm:$0xff]
    %v44 = vld [vmem:[%s1 + $0xa8] sm:$0xff]
    %v45 = vld [vmem:[%s1 + $0xb0] sm:$0xff]
    %v46 = vld [vmem:[%s1 + $0xb8] sm:$0xff]
    %v47 = vld [vmem:[%s1 + $0xc0] sm:$0xff]
    %v48 = vld [vmem:[%s1 + $0xc8] sm:$0xff]
    %v49 = vld [vmem:[%s1 + $0xd0] sm:$0xff]
    %v50 = vld [vmem:[%s1 + $0xd8] sm:$0xff]
    %v51 = vld [vmem:[%s1 + $0xe0] sm:$0xff]
    %v52 = vld [vmem:[%s1 + $0xe8] sm:$0xff]
    %v53 = vld [vmem:[%s1 + $0xf0] sm:$0xff]
    %v54 = vld [vmem:[%s1 + $0xf8] sm:$0xff]
    %v55 = vld [vmem:[%s1 + $0x100] sm:$0xff]
    %v56 = vld [vmem:[%s1 + $0x108] sm:$0xff]
    %v57 = vld [vmem:[%s1 + $0x110] sm:$0xff]
    %v58 = vld [vmem:[%s1 + $0x118] sm:$0xff]
    %v59 = vld [vmem:[%s1 + $0x120] sm:$0xff]
    %v60 = vld [vmem:[%s1 + $0x128] sm:$0xff]
    %v61 = vld [vmem:[%s1 + $0x130] sm:$0xff]
    %v62 = vld [vmem:[%s1 + $0x138] sm:$0xff]
    %v63 = vld [vmem:[%s1 + $0x140] sm:$0xff]
    %v64 = vld [vmem:[%s1 + $0x148] sm:$0xff]
    %v65 = vld [vmem:[%s1 + $0x150] sm:$0xff]
    %v66 = vld [vmem:[%s1 + $0x158] sm:$0xff]
    %v67 = vld [vmem:[%s1 + $0x160] sm:$0xff]
    %v68 = vld [vmem:[%s1 + $0x168] sm:$0xff]
    %v69 = vld [vmem:[%s1 + $0x170] sm:$0xff]
    %v70 = vld [vmem:[%s1 + $0x178] sm:$0xff]
    %v71 = vld [vmem:[%s1 + $0x180] sm:$0xff]
    %v72 = vld [vmem:[%s1 + $0x188] sm:$0xff]
    %v73 = vld [vmem:[%s1 + $0x190] sm:$0xff]
    %v74 = vld [vmem:[%s1 + $0x198] sm:$0xff]
    %v75 = vld [vmem:[%s1 + $0x1a0] sm:$0xff]
    %v76 = vld [vmem:[%s1 + $0x1a8] sm:$0xff]
    %v77 = vld [vmem:[%s1 + $0x1b0] sm:$0xff]
    %v78 = vld [vmem:[%s1 + $0x1b8] sm:$0xff]
    %v79 = vld [vmem:[%s1 + $0x1c0] sm:$0xff]
    %v80 = vld [vmem:[%s1 + $0x1c8] sm:$0xff]
    %v81 = vld [vmem:[%s1 + $0x1d0] sm:$0xff]
    %v82 = vld [vmem:[%s1 + $0x1d8] sm:$0xff]
    %v83 = vld [vmem:[%s1 + $0x1e0] sm:$0xff]
    %v84 = vld [vmem:[%s1 + $0x1e8] sm:$0xff]
    %v85 = vld [vmem:[%s1 + $0x1f0] sm:$0xff]
    %v86 = vld [vmem:[%s1 + $0x1f8] sm:$0xff]
    %v87 = vld [vmem:[%s1 + $0x200] sm:$0xff]
    %v88 = vld [vmem:[%s1 + $0x208] sm:$0xff]
    %v89 = vld [vmem:[%s1 + $0x210] sm:$0xff]
    %v90 = vld [vmem:[%s1 + $0x218] sm:$0xff]
    %v91 = vld [vmem:[%s1 + $0x220] sm:$0xff]
    %v92 = vld [vmem:[%s1 + $0x228] sm:$0xff]
    %v93 = vld [vmem:[%s1 + $0x230] sm:$0xff]
    %v94 = vld [vmem:[%s1 + $0x238] sm:$0xff]
    %v95 = vld [vmem:[%s1 + $0x240] sm:$0xff]
    %v96 = vld [vmem:[%s1 + $0x248] sm:$0xff]
    %v97 = vld [vmem:[%s1 + $0x250] sm:$0xff]
    %v98 = vld [vmem:[%s1 + $0x258] sm:$0xff]
    %v99 = vld [vmem:[%s1 + $0x260] sm:$0xff]
    %v100 = vld [vmem:[%s1 + $0x268] sm:$0xff]
    %v101 = vld [vmem:[%s1 + $0x270] sm:$0xff]
    %v102 = vld [vmem:[%s1 + $0x278] sm:$0xff]
    %v103 = vld [vmem:[%s1 + $0x280] sm:$0xff]
    %v104 = vld [vmem:[%s1 + $0x288] sm:$0xff]
    %v105 = vld [vmem:[%s1 + $0x290] sm:$0xff]
    %v106 = vld [vmem:[%s1 + $0x298] sm:$0xff]
    %v107 = vld [vmem:[%s1 + $0x2a0] sm:$0xff]
    %v108 = vld [vmem:[%s1 + $0x2a8] sm:$0xff]
    %v109 = vld [vmem:[%s1 + $0x2b0] sm:$0xff]
    %v110 = vld [vmem:[%s1 + $0x2b8] sm:$0xff]
    %v111 = vld [vmem:[%s1 + $0x2c0] sm:$0xff]
    %v112 = vld [vmem:[%s1 + $0x2c8] sm:$0xff]
    %v113 = vld [vmem:[%s1 + $0x2d0] sm:$0xff]
    %v114 = vld [vmem:[%s1 + $0x2d8] sm:$0xff]
    %v115 = vld [vmem:[%s1 + $0x2e0] sm:$0xff]
    %v116 = vld [vmem:[%s1 + $0x2e8] sm:$0xff]
    %v117 = vld [vmem:[%s1 + $0x2f0] sm:$0xff]
    %v118 = vld [vmem:[%s1 + $0x2f8] sm:$0xff]
    %v119 = vld [vmem:[%s1 + $0x300] sm:$0xff]
    %v120 = vld [vmem:[%s1 + $0x308] sm:$0xff]
    %v121 = vld [vmem:[%s1 + $0x310] sm:$0xff]
    %v122 = vld [vmem:[%s1 + $0x318] sm:$0xff]
    %v123 = vld [vmem:[%s1 + $0x320] sm:$0xff]
    %v124 = vld [vmem:[%s1 + $0x328] sm:$0xff]
    %v125 = vld [vmem:[%s1 + $0x330] sm:$0xff]
    %v126 = vld [vmem:[%s1 + $0x338] sm:$0xff]
    %v127 = vld [vmem:[%s1 + $0x340] sm:$0xff]
    %v128 = vld [vmem:[%s1 + $0x348] sm:$0xff]
    %v129 = vld [vmem:[%s1 + $0x350] sm:$0xff]
    %v130 = vld [vmem:[%s1 + $0x358] sm:$0xff]
    %v131 = vld [vmem:[%s1 + $0x360] sm:$0xff]
    %v132 = vld [vmem:[%s1 + $0x368] sm:$0xff]
    %v133 = vld [vmem:[%s1 + $0x370] sm:$0xff]
    %v134 = vld [vmem:[%s1 + $0x378] sm:$0xff]
    %v135 = vld [vmem:[%s1 + $0x380] sm:$0xff]
    %v136 = vld [vmem:[%s1 + $0x388] sm:$0xff]
    %v137 = vld [vmem:[%s1 + $0x390] sm:$0xff]
    %v138 = vld [vmem:[%s1 + $0x398] sm:$0xff]
    %v139 = vld [vmem:[%s1 + $0x3a0] sm:$0xff]
    %v140 = vld [vmem:[%s1 + $0x3a8] sm:$0xff]
    %v141 = vld [vmem:[%s1 + $0x3b0] sm:$0xff]
    %v142 = vld [vmem:[%s1 + $0x3b8] sm:$0xff]
    %v143 = vld [vmem:[%s1 + $0x3c0] sm:$0xff]
    %v144 = vld [vmem:[%s1 + $0x3c8] sm:$0xff]
    %v145 = vld [vmem:[%s1 + $0x3d0] sm:$0xff]
    %v146 = vld [vmem:[%s1 + $0x3d8] sm:$0xff]
    %v147 = vld [vmem:[%s1 + $0x3e0] sm:$0xff]
    %v148 = vld [vmem:[%s1 + $0x3e8] sm:$0xff]
    %v149 = vld [vmem:[%s1 + $0x3f0] sm:$0xff]
    %v150 = vld [vmem:[%s1 + $0x3f8] sm:$0xff]
    %v151 = vld [vmem:[%s1 + $0x400] sm:$0xff]
    %v152 = vld [vmem:[%s1 + $0x408] sm:$0xff]
    %v153 = vld [vmem:[%s1 + $0x410] sm:$0xff]
    %v154 = vld [vmem:[%s1 + $0x418] sm:$0xff]
    %v155 = vld [vmem:[%s1 + $0x420] sm:$0xff]
    %v156 = vld [vmem:[%s1 + $0x428] sm:$0xff]
    %v157 = vld [vmem:[%s1 + $0x430] sm:$0xff]
    %v158 = vld [vmem:[%s1 + $0x438] sm:$0xff]
    %v159 = vld [vmem:[%s1 + $0x440] sm:$0xff]
    %v160 = vld [vmem:[%s1 + $0x448] sm:$0xff]
    %v161 = vld [vmem:[%s1 + $0x450] sm:$0xff]
    %v162 = vld [vmem:[%s1 + $0x458] sm:$0xff]
    %v163 = vld [vmem:[%s1 + $0x460] sm:$0xff]
    %v164 = vld [vmem:[%s1 + $0x468] sm:$0xff]
    %v165 = vld [vmem:[%s1 + $0x470] sm:$0xff]
    %v166 = vld [vmem:[%s1 + $0x478] sm:$0xff]
    %v167 = vld [vmem:[%s2] sm:$0x3]
    %v169 = vlaneseq
    %v170 = vshrl.u32 %v169, 7
    %v171 = vsub.s32 0, %v170
    %v172 = vrot.slane %v167, %v171
    %v173 = vlaneseq
    %v174 = vshrl.u32 %v173, 7
    %v175 = vsub.s32 1, %v174
    %v176 = vrot.slane %v167, %v175
    %v181 = vcombine.high %v21, %v21
    %v183 = vunpack.c.l.s4 1983009808
    %v184 = vunpack.c.0.s8 %v183
    %v185 = vlaneseq
    %v186 = vshrl.u32 %v185, 7
    %v187 = vsub.s32 %v184, %v186
    %v188 = vrot.slane %v21, %v187
    %v190 = vunpack.c.l.s4 1983009808
    %v191 = vunpack.c.0.s8 %v190
    %v192 = vlaneseq
    %v193 = vshrl.u32 %v192, 7
    %v194 = vsub.s32 %v191, %v193
    %v195 = vrot.slane %v181, %v194
    %v196 = vcombine.high %v188, %v188
    %v197 = vcombine.high %v195, %v195
    %v199 = vunpack.c.l.s4 1983009808
    %v200 = vunpack.c.0.s8 %v199
    %v201 = vlaneseq
    %v202 = vshrl.u32 %v201, 7
    %v203 = vsub.s32 %v200, %v202
    %v204 = vrot.slane %v22, %v203
    %vm209 = vcmask 523264
    %v210 = vsel %vm209, %v204, 0
    %212 = vmatprep.subr.mxu0 %v24
    %213 = vmatpush1.msra.mxu0 %v23
    %214 = vmatprep.subr.mxu0 %v26
    %215 = vmatpush1.msra.mxu0 %v25
    %216 = vmatprep.subr.mxu0 %v28
    %217 = vmatpush1.msra.mxu0 %v27
    %218 = vmatprep.subr.mxu0 %v30
    %219 = vmatpush1.msra.mxu0 %v29
    %220 = vmatprep.subr.mxu0 %v32
    %221 = vmatpush1.msra.mxu0 %v31
    %222 = vmatprep.subr.mxu0 %v34
    %223 = vmatpush1.msra.mxu0 %v33
    %224 = vmatprep.subr.mxu0 %v36
    %225 = vmatpush1.msra.mxu0 %v35
    %226 = vmatprep.subr.mxu0 %v38
    %227 = vmatpush1.msra.mxu0 %v37
    %228 = vmatprep.subr.mxu0 %v40
    %229 = vmatpush1.msra.mxu0 %v39
    %230 = vmatprep.subr.mxu0 %v42
    %231 = vmatpush1.msra.mxu0 %v41
    %232 = vmatprep.subr.mxu0 %v44
    %233 = vmatpush1.msra.mxu0 %v43
    %234 = vmatprep.subr.mxu0 %v46
    %235 = vmatpush1.msra.mxu0 %v45
    %236 = vmatprep.subr.mxu0 %v48
    %237 = vmatpush1.msra.mxu0 %v47
    %238 = vmatprep.subr.mxu0 %v50
    %239 = vmatpush1.msra.mxu0 %v49
    %240 = vmatprep.subr.mxu0 %v52
    %241 = vmatpush1.msra.mxu0 %v51
    %242 = vmatprep.subr.mxu0 %v54
    %243 = vmatpush1.msra.mxu0 %v53
    %244 = vmatprep.subr.mxu0 %v56
    %245 = vmatpush1.msra.mxu0 %v55
    %246 = vmatprep.subr.mxu0 %v58
    %247 = vmatpush1.msra.mxu0 %v57
    %248 = vmatprep.subr.mxu0 %v60
    %249 = vmatpush1.msra.mxu0 %v59
    %250 = vmatprep.subr.mxu0 %v62
    %251 = vmatpush1.msra.mxu0 %v61
    %252 = vmatprep.subr.mxu0 %v64
    %253 = vmatpush1.msra.mxu0 %v63
    %254 = vmatprep.subr.mxu0 %v66
    %255 = vmatpush1.msra.mxu0 %v65
    %256 = vmatprep.subr.mxu0 %v68
    %257 = vmatpush1.msra.mxu0 %v67
    %258 = vmatprep.subr.mxu0 %v70
    %259 = vmatpush1.msra.mxu0 %v69
    %260 = vmatprep.subr.mxu0 %v72
    %261 = vmatpush1.msra.mxu0 %v71
    %262 = vmatprep.subr.mxu0 %v74
    %263 = vmatpush1.msra.mxu0 %v73
    %264 = vmatprep.subr.mxu0 %v76
    %265 = vmatpush1.msra.mxu0 %v75
    %266 = vmatprep.subr.mxu0 %v78
    %267 = vmatpush1.msra.mxu0 %v77
    %268 = vmatprep.subr.mxu0 %v80
    %269 = vmatpush1.msra.mxu0 %v79
    %270 = vmatprep.subr.mxu0 %v82
    %271 = vmatpush1.msra.mxu0 %v81
    %272 = vmatprep.subr.mxu0 %v84
    %273 = vmatpush1.msra.mxu0 %v83
    %274 = vmatprep.subr.mxu0 %v86
    %275 = vmatpush1.msra.mxu0 %v85
    %276 = vmatprep.mubr.f32.mxu0 %v196
    %277 = vmatmul.mubr.f32.gmra.mrb[0].mxu0 %v188
    %v278 = vpop.f32.mrb[0].mxu0
    %v279 = vadd.f32 %v172, %v278
    %v280 = vpop.f32.mrb[0].mxu0
    %v281 = vadd.f32 %v176, %v280
    %282 = vdwg.mxu0
    %283 = vmatprep.subr.mxu0 %v88
    %284 = vmatpush1.msra.mxu0 %v87
    %285 = vmatprep.subr.mxu0 %v90
    %286 = vmatpush1.msra.mxu0 %v89
    %287 = vmatprep.subr.mxu0 %v92
    %288 = vmatpush1.msra.mxu0 %v91
    %289 = vmatprep.subr.mxu0 %v94
    %290 = vmatpush1.msra.mxu0 %v93
    %291 = vmatprep.subr.mxu0 %v96
    %292 = vmatpush1.msra.mxu0 %v95
    %293 = vmatprep.subr.mxu0 %v98
    %294 = vmatpush1.msra.mxu0 %v97
    %295 = vmatprep.subr.mxu0 %v100
    %296 = vmatpush1.msra.mxu0 %v99
    %297 = vmatprep.subr.mxu0 %v102
    %298 = vmatpush1.msra.mxu0 %v101
    %299 = vmatprep.subr.mxu0 %v104
    %300 = vmatpush1.msra.mxu0 %v103
    %301 = vmatprep.subr.mxu0 %v106
    %302 = vmatpush1.msra.mxu0 %v105
    %303 = vmatprep.subr.mxu0 %v108
    %304 = vmatpush1.msra.mxu0 %v107
    %305 = vmatprep.subr.mxu0 %v110
    %306 = vmatpush1.msra.mxu0 %v109
    %307 = vmatprep.subr.mxu0 %v112
    %308 = vmatpush1.msra.mxu0 %v111
    %309 = vmatprep.subr.mxu0 %v114
    %310 = vmatpush1.msra.mxu0 %v113
    %311 = vmatprep.subr.mxu0 %v116
    %312 = vmatpush1.msra.mxu0 %v115
    %313 = vmatprep.subr.mxu0 %v118
    %314 = vmatpush1.msra.mxu0 %v117
    %315 = vmatprep.subr.mxu0 %v120
    %316 = vmatpush1.msra.mxu0 %v119
    %317 = vmatprep.subr.mxu0 %v122
    %318 = vmatpush1.msra.mxu0 %v121
    %319 = vmatprep.subr.mxu0 %v124
    %320 = vmatpush1.msra.mxu0 %v123
    %321 = vmatprep.subr.mxu0 %v126
    %322 = vmatpush1.msra.mxu0 %v125
    %323 = vmatprep.subr.mxu0 %v128
    %324 = vmatpush1.msra.mxu0 %v127
    %325 = vmatprep.subr.mxu0 %v130
    %326 = vmatpush1.msra.mxu0 %v129
    %327 = vmatprep.subr.mxu0 %v132
    %328 = vmatpush1.msra.mxu0 %v131
    %329 = vmatprep.subr.mxu0 %v134
    %330 = vmatpush1.msra.mxu0 %v133
    %331 = vmatprep.subr.mxu0 %v136
    %332 = vmatpush1.msra.mxu0 %v135
    %333 = vmatprep.subr.mxu0 %v138
    %334 = vmatpush1.msra.mxu0 %v137
    %335 = vmatprep.subr.mxu0 %v140
    %336 = vmatpush1.msra.mxu0 %v139
    %337 = vmatprep.subr.mxu0 %v142
    %338 = vmatpush1.msra.mxu0 %v141
    %339 = vmatprep.subr.mxu0 %v144
    %340 = vmatpush1.msra.mxu0 %v143
    %341 = vmatprep.subr.mxu0 %v146
    %342 = vmatpush1.msra.mxu0 %v145
    %343 = vmatprep.subr.mxu0 %v148
    %344 = vmatpush1.msra.mxu0 %v147
    %345 = vmatprep.subr.mxu0 %v150
    %346 = vmatpush1.msra.mxu0 %v149
    %347 = vmatprep.mubr.f32.mxu0 %v197
    %348 = vmatmul.mubr.f32.gmra.mrb[0].mxu0 %v195
    %v349 = vpop.f32.mrb[0].mxu0
    %v350 = vadd.f32 %v279, %v349
    %v351 = vpop.f32.mrb[0].mxu0
    %v352 = vadd.f32 %v281, %v351
    %353 = vdwg.mxu0
    %354 = vmatprep.subr.mxu0 %v152
    %355 = vmatpush1.msra.mxu0 %v151
    %356 = vmatprep.subr.mxu0 %v154
    %357 = vmatpush1.msra.mxu0 %v153
    %358 = vmatprep.subr.mxu0 %v156
    %359 = vmatpush1.msra.mxu0 %v155
    %360 = vmatprep.subr.mxu0 %v158
    %361 = vmatpush1.msra.mxu0 %v157
    %362 = vmatprep.subr.mxu0 %v160
    %363 = vmatpush1.msra.mxu0 %v159
    %364 = vmatprep.subr.mxu0 %v162
    %365 = vmatpush1.msra.mxu0 %v161
    %366 = vmatprep.subr.mxu0 %v164
    %367 = vmatpush1.msra.mxu0 %v163
    %368 = vmatprep.subr.mxu0 %v166
    %369 = vmatpush1.msra.mxu0 %v165
    %370 = vmatprep.subr.mxu0 0.0
    %371 = vmatpush1.msra.mxu0 0.0
    %372 = vmatprep.subr.mxu0 0.0
    %373 = vmatpush1.msra.mxu0 0.0
    %374 = vmatprep.subr.mxu0 0.0
    %375 = vmatpush1.msra.mxu0 0.0
    %376 = vmatprep.subr.mxu0 0.0
    %377 = vmatpush1.msra.mxu0 0.0
    %378 = vmatprep.subr.mxu0 0.0
    %379 = vmatpush1.msra.mxu0 0.0
    %380 = vmatprep.subr.mxu0 0.0
    %381 = vmatpush1.msra.mxu0 0.0
    %382 = vmatprep.subr.mxu0 0.0
    %383 = vmatpush1.msra.mxu0 0.0
    %384 = vmatprep.subr.mxu0 0.0
    %385 = vmatpush1.msra.mxu0 0.0
    %386 = vmatprep.subr.mxu0 0.0
    %387 = vmatpush1.msra.mxu0 0.0
    %388 = vmatprep.subr.mxu0 0.0
    %389 = vmatpush1.msra.mxu0 0.0
    %390 = vmatprep.subr.mxu0 0.0
    %391 = vmatpush1.msra.mxu0 0.0
    %392 = vmatprep.subr.mxu0 0.0
    %393 = vmatpush1.msra.mxu0 0.0
    %394 = vmatprep.subr.mxu0 0.0
    %395 = vmatpush1.msra.mxu0 0.0
    %396 = vmatprep.subr.mxu0 0.0
    %397 = vmatpush1.msra.mxu0 0.0
    %398 = vmatprep.subr.mxu0 0.0
    %399 = vmatpush1.msra.mxu0 0.0
    %400 = vmatprep.subr.mxu0 0.0
    %401 = vmatpush1.msra.mxu0 0.0
    %402 = vmatprep.subr.mxu0 0.0
    %403 = vmatpush1.msra.mxu0 0.0
    %404 = vmatprep.subr.mxu0 0.0
    %405 = vmatpush1.msra.mxu0 0.0
    %406 = vmatprep.subr.mxu0 0.0
    %407 = vmatpush1.msra.mxu0 0.0
    %408 = vmatprep.subr.mxu0 0.0
    %409 = vmatpush1.msra.mxu0 0.0
    %410 = vmatprep.subr.mxu0 0.0
    %411 = vmatpush1.msra.mxu0 0.0
    %412 = vmatprep.subr.mxu0 0.0
    %413 = vmatpush1.msra.mxu0 0.0
    %414 = vmatprep.subr.mxu0 0.0
    %415 = vmatpush1.msra.mxu0 0.0
    %416 = vmatprep.subr.mxu0 0.0
    %417 = vmatpush1.msra.mxu0 0.0
    %418 = vmatprep.mubr.f32.mxu0 0.0
    %419 = vmatmul.mubr.f32.gmra.mrb[0].mxu0 %v210
    %v420 = vpop.f32.mrb[0].mxu0
    %v421 = vadd.f32 %v350, %v420
    %v422 = vpop.f32.mrb[0].mxu0
    %v423 = vadd.f32 %v352, %v422
    %424 = vdwg.mxu0
    %v425 = vmax.f32 %v421, 0.0
    %v426 = vmax.f32 %v423, 0.0
    %v427 = vld [vmem:[%s3] sm:$0xff]
    %v428 = vld [vmem:[%s3 + $0x8] sm:$0xff]
    %v429 = vld [vmem:[%s3 + $0x10] sm:$0xff]
    %v430 = vld [vmem:[%s3 + $0x18] sm:$0xff]
    %v431 = vld [vmem:[%s3 + $0x20] sm:$0xff]
    %v432 = vld [vmem:[%s3 + $0x28] sm:$0xff]
    %v433 = vld [vmem:[%s3 + $0x30] sm:$0xff]
    %v434 = vld [vmem:[%s3 + $0x38] sm:$0xff]
    %v435 = vld [vmem:[%s3 + $0x40] sm:$0xff]
    %v436 = vld [vmem:[%s3 + $0x48] sm:$0xff]
    %v437 = vld [vmem:[%s3 + $0x50] sm:$0xff]
    %v438 = vld [vmem:[%s3 + $0x58] sm:$0xff]
    %v439 = vld [vmem:[%s3 + $0x60] sm:$0xff]
    %v440 = vld [vmem:[%s3 + $0x68] sm:$0xff]
    %v441 = vld [vmem:[%s3 + $0x70] sm:$0xff]
    %v442 = vld [vmem:[%s3 + $0x78] sm:$0xff]
    %v443 = vld [vmem:[%s3 + $0x80] sm:$0xff]
    %v444 = vld [vmem:[%s3 + $0x88] sm:$0xff]
    %v445 = vld [vmem:[%s3 + $0x90] sm:$0xff]
    %v446 = vld [vmem:[%s3 + $0x98] sm:$0xff]
    %v447 = vld [vmem:[%s3 + $0xa0] sm:$0xff]
    %v448 = vld [vmem:[%s3 + $0xa8] sm:$0xff]
    %v449 = vld [vmem:[%s3 + $0xb0] sm:$0xff]
    %v450 = vld [vmem:[%s3 + $0xb8] sm:$0xff]
    %v451 = vld [vmem:[%s3 + $0xc0] sm:$0xff]
    %v452 = vld [vmem:[%s3 + $0xc8] sm:$0xff]
    %v453 = vld [vmem:[%s3 + $0xd0] sm:$0xff]
    %v454 = vld [vmem:[%s3 + $0xd8] sm:$0xff]
    %v455 = vld [vmem:[%s3 + $0xe0] sm:$0xff]
    %v456 = vld [vmem:[%s3 + $0xe8] sm:$0xff]
    %v457 = vld [vmem:[%s3 + $0xf0] sm:$0xff]
    %v458 = vld [vmem:[%s3 + $0xf8] sm:$0xff]
    %v459 = vld [vmem:[%s4] sm:$0x1]
    %v461 = vlaneseq
    %v462 = vshrl.u32 %v461, 7
    %v463 = vsub.s32 0, %v462
    %v464 = vrot.slane %v459, %v463
    %466 = vmatprep.subr.mxu0 0.0
    %467 = vmatpush1.msra.mxu0 %v427
    %468 = vmatprep.subr.mxu0 0.0
    %469 = vmatpush1.msra.mxu0 %v428
    %470 = vmatprep.subr.mxu0 0.0
    %471 = vmatpush1.msra.mxu0 %v429
    %472 = vmatprep.subr.mxu0 0.0
    %473 = vmatpush1.msra.mxu0 %v430
    %474 = vmatprep.subr.mxu0 0.0
    %475 = vmatpush1.msra.mxu0 %v431
    %476 = vmatprep.subr.mxu0 0.0
    %477 = vmatpush1.msra.mxu0 %v432
    %478 = vmatprep.subr.mxu0 0.0
    %479 = vmatpush1.msra.mxu0 %v433
    %480 = vmatprep.subr.mxu0 0.0
    %481 = vmatpush1.msra.mxu0 %v434
    %482 = vmatprep.subr.mxu0 0.0
    %483 = vmatpush1.msra.mxu0 %v435
    %484 = vmatprep.subr.mxu0 0.0
    %485 = vmatpush1.msra.mxu0 %v436
    %486 = vmatprep.subr.mxu0 0.0
    %487 = vmatpush1.msra.mxu0 %v437
    %488 = vmatprep.subr.mxu0 0.0
    %489 = vmatpush1.msra.mxu0 %v438
    %490 = vmatprep.subr.mxu0 0.0
    %491 = vmatpush1.msra.mxu0 %v439
    %492 = vmatprep.subr.mxu0 0.0
    %493 = vmatpush1.msra.mxu0 %v440
    %494 = vmatprep.subr.mxu0 0.0
    %495 = vmatpush1.msra.mxu0 %v441
    %496 = vmatprep.subr.mxu0 0.0
    %497 = vmatpush1.msra.mxu0 %v442
    %498 = vmatprep.subr.mxu0 0.0
    %499 = vmatpush1.msra.mxu0 %v443
    %500 = vmatprep.subr.mxu0 0.0
    %501 = vmatpush1.msra.mxu0 %v444
    %502 = vmatprep.subr.mxu0 0.0
    %503 = vmatpush1.msra.mxu0 %v445
    %504 = vmatprep.subr.mxu0 0.0
    %505 = vmatpush1.msra.mxu0 %v446
    %506 = vmatprep.subr.mxu0 0.0
    %507 = vmatpush1.msra.mxu0 %v447
    %508 = vmatprep.subr.mxu0 0.0
    %509 = vmatpush1.msra.mxu0 %v448
    %510 = vmatprep.subr.mxu0 0.0
    %511 = vmatpush1.msra.mxu0 %v449
    %512 = vmatprep.subr.mxu0 0.0
    %513 = vmatpush1.msra.mxu0 %v450
    %514 = vmatprep.subr.mxu0 0.0
    %515 = vmatpush1.msra.mxu0 %v451
    %516 = vmatprep.subr.mxu0 0.0
    %517 = vmatpush1.msra.mxu0 %v452
    %518 = vmatprep.subr.mxu0 0.0
    %519 = vmatpush1.msra.mxu0 %v453
    %520 = vmatprep.subr.mxu0 0.0
    %521 = vmatpush1.msra.mxu0 %v454
    %522 = vmatprep.subr.mxu0 0.0
    %523 = vmatpush1.msra.mxu0 %v455
    %524 = vmatprep.subr.mxu0 0.0
    %525 = vmatpush1.msra.mxu0 %v456
    %526 = vmatprep.subr.mxu0 0.0
    %527 = vmatpush1.msra.mxu0 %v457
    %528 = vmatprep.subr.mxu0 0.0
    %529 = vmatpush1.msra.mxu0 %v458
    %530 = vmatprep.mubr.f32.mxu0 %v426
    %531 = vmatmul.mubr.f32.gmra.mrb[0].mxu0 %v425
    %v532 = vpop.f32.mrb[0].mxu0
    %v533 = vadd.f32 %v464, %v532
    %v534 = vpop.f32.mrb[0].mxu0
    %535 = vdwg.mxu0
    %vm536 = vcmask 74752
    %v537 = vsel %vm536, %v533, -inf
    %538 = vmax.xlane.f32.xlu0 %v537
    %v539 = vpop.xlane.xlu0 %538
    %v540 = vsub.f32 %v533, %v539
    %v541 = vmul.f32 %v540, 1.442695
    %v542 = vpow.pop %v541
    %v543 = vsel %vm536, %v542, 0.0
    %544 = vadd.xlane.f32.xlu0 %v543
    %v545 = vpop.xlane.xlu0 %544
    %v546 = vlog2.pop %v545
    %v547 = vmul.f32 %v546, 0.6931472
    %v548 = vsub.f32 %v540, %v547
    %549 = vst.msk [vmem:[#allocation2] sm:$0x3] %vm536, %v548
    // Predicated region
    $region22: #{mnist_cnn_forward.3} parent=1 // pred_check
      _
    $region23: #{mnist_cnn_forward.3} parent=1 // pred_check_branch
      %551 = sbr.rel (0) target = $region25
    $region24: #{mnist_cnn_forward.3} parent=1 // pred_region
      %s553 = ssub.s32 32, 32
      %554 = vsyncadd [#allocation3], %s553
      %s556 = sshll.u32 [#allocation2], 4
      %s557 = int_to_ptr.vmem [resolvable:$true] %s556
      %559 = dma.vmem_to_hbm [thread:$0]  %s557, 32, %s5, [#allocation3]
    $region25: #{mnist_cnn_forward.3} parent=1 // pred_fallthru
      _
    // Predicated region
    $region26: #{mnist_cnn_forward.3} parent=1 // pred_check
      _
    $region27: #{mnist_cnn_forward.3} parent=1 // pred_check_branch
      %561 = sbr.rel (0) target = $region29
    $region28: #{mnist_cnn_forward.3} parent=1 // pred_region
      %562 = dma.done [#allocation3], 32
    $region29: #{mnist_cnn_forward.3} parent=1 // pred_fallthru
      _
    %563 = vsyncpa [#allocation3], 1

// kernel: mnist_cnn_forward.2
$region0: #{mnist_cnn_forward.2}
  #allocation0 [shape = 'u32[]', space=smem, size = 0x4, offset = 0x4, fixed_abs, tag = 'smem constant byte address 0x4 - core index']
  #allocation1 [shape = 'u32[144,128]{1,0:T(1,128)}', space=vmem, size = 0x12000, scoped, tag = 'internal scratch']
  #allocation2 [shape = 'f32[25,672]{1,0:T(8,128)}', space=vmem, size = 0x18000, scoped, tag = 'scratch operand']
  #allocation3 [shape = 'f32[32,676]{1,0:T(8,128)}', space=vmem, size = 0x18000, scoped, tag = 'scratch operand']
  #allocation4 [shape = 'f32[800,560]{1,0:T(8,128)}', space=vmem, size = 0x1f4000, scoped, tag = 'scratch operand']
  #allocation5 [shape = 'f32[32,104]{1,0:T(8,128)}', space=vmem, size = 0x4000, scoped, tag = 'scratch operand']
  #allocation6 [shape = 'f32[800,60]{1,0:T(8,128)}', space=vmem, size = 0x64000, scoped, tag = 'scratch operand']
  %s0 = inlined_call_operand.vmem [shape: f32[2,1,788], index: 0, kind: input, shape index: {}]
  %s1 = inlined_call_operand.vmem [shape: f32[32,25], index: 1, kind: input, shape index: {}]
  %s2 = inlined_call_operand.vmem [shape: f32[32,1], index: 2, kind: input, shape index: {}]
  %s3 = inlined_call_operand.vmem [shape: f32[32,800], index: 3, kind: input, shape index: {}]
  %s4 = inlined_call_operand.vmem [shape: f32[32,1], index: 4, kind: input, shape index: {}]
  %s5 = inlined_call_operand.vmem [shape: f32[64,800], index: 5, kind: input, shape index: {}]
  %s6 = inlined_call_operand.vmem [shape: f32[64,1], index: 6, kind: input, shape index: {}]
  %s7 = inlined_call_operand.vmem [shape: f32[4,560,100], index: 7, kind: input, shape index: {}]
  %s8 = inlined_call_operand.vmem [shape: f32[4,60,9], index: 8, kind: input, shape index: {}]
  %s9 = inlined_call_operand.vmem [shape: f32[2,64,9], index: 9, kind: output, shape index: {}]
  %s10 = sld [smem:[#allocation0]]
  $region69: #{mnist_cnn_forward.2} parent=0
    _
  %s12 = ssub.s32 1, %s10
  %s13 = scalar_select 0, %s12, %s10
  loop: start=0, step=1, limit=4
  $region2: #{mnist_cnn_forward.2} parent=0 // loop_pre_header
    _
  $region3: #{mnist_cnn_forward.2} parent=0 // loop_header
    %s15 = sphi 0, %s19
    %p16 = scmp.ge.s32.totalorder %s15, 4
    %s25 = sphi 0, %s27
    %s28 = sphi 0, %s25
    %s29 = sphi 0, %s28
    %s45 = sphi 0, %s29
    %s49 = sphi 0, %s49
    %s51 = sphi 0, %s49
    %s52 = sphi 0, %s51
    %s66 = sphi 0, %s52
    %s70 = sphi 0, %s70
    %s72 = sphi 0, %s70
    %s73 = sphi 0, %s72
    %s87 = sphi 0, %s73
    %s91 = sphi 0, %s91
    %s93 = sphi 0, %s91
    %s94 = sphi 0, %s93
    %s108 = sphi 0, %s94
    %s112 = sphi 0, %s112
    %s114 = sphi 0, %s112
    %s115 = sphi 0, %s114
    %s129 = sphi 0, %s115
    %s133 = sphi 0, %s133
    %s135 = sphi 0, %s133
    %s136 = sphi 0, %s135
    %s150 = sphi 0, %s136
    %s154 = sphi 0, %s154
    %s156 = sphi 0, %s154
    %s157 = sphi 0, %s156
    %s171 = sphi 0, %s157
    %s175 = sphi 0, %s175
    %s177 = sphi 0, %s175
    %s178 = sphi 0, %s177
    %s192 = sphi 0, %s178
    %s196 = sphi 0, %s196
    %s198 = sphi 0, %s196
    %s199 = sphi 0, %s198
    %s213 = sphi 0, %s199
    %s219 = sphi 0, %s221
    %s222 = sphi 0, %s219
    %s223 = sphi 0, %s222
    %s239 = sphi 0, %s223
  $region4: #{mnist_cnn_forward.2} parent=0 // loop_header_branch
    %18 = sbr.rel (%p16) target = $region8
  $region5: #{mnist_cnn_forward.2} parent=0 // loop_body
    %s20 = ssub.s32 %s15, 1
    %s21 = ssub.s32 %s15, 2
    %s22 = sadd.s32 %s15, 1
    %s23 = ssub.s32 %s15, %s22
    %p24 = scmp.eq.s32.totalorder %s23, 0
    %s26 = sadd.s32 %s25, 1
    %s27 = scalar_select %p24, %s25, %s26
    %p30 = pneg %p24
    %p31 = scmp.eq.s32.totalorder %s15, 1
    %p32 = por %p30, %p31
    %p33 = scmp.ne.s32.totalorder %s25, %s28
    %p34 = scmp.eq.s32.totalorder %s15, 0
    %p35 = por %p33, %p34
    %p36 = scmp.ne.s32.totalorder %s25, %s28
    %p37 = scmp.eq.s32.totalorder %s20, 1
    %p38 = por %p36, %p37
    %p39 = scmp.ne.s32.totalorder %s28, %s29
    %p40 = scmp.eq.s32.totalorder %s20, 0
    %p41 = por %p39, %p40
    %p42 = scmp.ne.s32.totalorder %s28, %s29
    %p43 = scmp.eq.s32.totalorder %s21, 1
    %p44 = por %p42, %p43
    %p46 = scmp.ne.s32.totalorder %s29, %s45
    %p47 = scmp.eq.s32.totalorder %s21, 0
    %p48 = por %p46, %p47
    %s50 = sadd.s32 %s49, 1
    %p53 = scmp.eq.s32.totalorder %s15, 1
    %p54 = scmp.ne.s32.totalorder %s49, %s51
    %p55 = scmp.eq.s32.totalorder %s15, 0
    %p56 = por %p54, %p55
    %p57 = scmp.ne.s32.totalorder %s49, %s51
    %p58 = scmp.eq.s32.totalorder %s20, 1
    %p59 = por %p57, %p58
    %p60 = scmp.ne.s32.totalorder %s51, %s52
    %p61 = scmp.eq.s32.totalorder %s20, 0
    %p62 = por %p60, %p61
    %p63 = scmp.ne.s32.totalorder %s51, %s52
    %p64 = scmp.eq.s32.totalorder %s21, 1
    %p65 = por %p63, %p64
    %p67 = scmp.ne.s32.totalorder %s52, %s66
    %p68 = scmp.eq.s32.totalorder %s21, 0
    %p69 = por %p67, %p68
    %s71 = sadd.s32 %s70, 1
    %p74 = scmp.eq.s32.totalorder %s15, 1
    %p75 = scmp.ne.s32.totalorder %s70, %s72
    %p76 = scmp.eq.s32.totalorder %s15, 0
    %p77 = por %p75, %p76
    %p78 = scmp.ne.s32.totalorder %s70, %s72
    %p79 = scmp.eq.s32.totalorder %s20, 1
    %p80 = por %p78, %p79
    %p81 = scmp.ne.s32.totalorder %s72, %s73
    %p82 = scmp.eq.s32.totalorder %s20, 0
    %p83 = por %p81, %p82
    %p84 = scmp.ne.s32.totalorder %s72, %s73
    %p85 = scmp.eq.s32.totalorder %s21, 1
    %p86 = por %p84, %p85
    %p88 = scmp.ne.s32.totalorder %s73, %s87
    %p89 = scmp.eq.s32.totalorder %s21, 0
    %p90 = por %p88, %p89
    %s92 = sadd.s32 %s91, 1
    %p95 = scmp.eq.s32.totalorder %s15, 1
    %p96 = scmp.ne.s32.totalorder %s91, %s93
    %p97 = scmp.eq.s32.totalorder %s15, 0
    %p98 = por %p96, %p97
    %p99 = scmp.ne.s32.totalorder %s91, %s93
    %p100 = scmp.eq.s32.totalorder %s20, 1
    %p101 = por %p99, %p100
    %p102 = scmp.ne.s32.totalorder %s93, %s94
    %p103 = scmp.eq.s32.totalorder %s20, 0
    %p104 = por %p102, %p103
    %p105 = scmp.ne.s32.totalorder %s93, %s94
    %p106 = scmp.eq.s32.totalorder %s21, 1
    %p107 = por %p105, %p106
    %p109 = scmp.ne.s32.totalorder %s94, %s108
    %p110 = scmp.eq.s32.totalorder %s21, 0
    %p111 = por %p109, %p110
    %s113 = sadd.s32 %s112, 1
    %p116 = scmp.eq.s32.totalorder %s15, 1
    %p117 = scmp.ne.s32.totalorder %s112, %s114
    %p118 = scmp.eq.s32.totalorder %s15, 0
    %p119 = por %p117, %p118
    %p120 = scmp.ne.s32.totalorder %s112, %s114
    %p121 = scmp.eq.s32.totalorder %s20, 1
    %p122 = por %p120, %p121
    %p123 = scmp.ne.s32.totalorder %s114, %s115
    %p124 = scmp.eq.s32.totalorder %s20, 0
    %p125 = por %p123, %p124
    %p126 = scmp.ne.s32.totalorder %s114, %s115
    %p127 = scmp.eq.s32.totalorder %s21, 1
    %p128 = por %p126, %p127
    %p130 = scmp.ne.s32.totalorder %s115, %s129
    %p131 = scmp.eq.s32.totalorder %s21, 0
    %p132 = por %p130, %p131
    %s134 = sadd.s32 %s133, 1
    %p137 = scmp.eq.s32.totalorder %s15, 1
    %p138 = scmp.ne.s32.totalorder %s133, %s135
    %p139 = scmp.eq.s32.totalorder %s15, 0
    %p140 = por %p138, %p139
    %p141 = scmp.ne.s32.totalorder %s133, %s135
    %p142 = scmp.eq.s32.totalorder %s20, 1
    %p143 = por %p141, %p142
    %p144 = scmp.ne.s32.totalorder %s135, %s136
    %p145 = scmp.eq.s32.totalorder %s20, 0
    %p146 = por %p144, %p145
    %p147 = scmp.ne.s32.totalorder %s135, %s136
    %p148 = scmp.eq.s32.totalorder %s21, 1
    %p149 = por %p147, %p148
    %p151 = scmp.ne.s32.totalorder %s136, %s150
    %p152 = scmp.eq.s32.totalorder %s21, 0
    %p153 = por %p151, %p152
    %s155 = sadd.s32 %s154, 1
    %p158 = scmp.eq.s32.totalorder %s15, 1
    %p159 = scmp.ne.s32.totalorder %s154, %s156
    %p160 = scmp.eq.s32.totalorder %s15, 0
    %p161 = por %p159, %p160
    %p162 = scmp.ne.s32.totalorder %s154, %s156
    %p163 = scmp.eq.s32.totalorder %s20, 1
    %p164 = por %p162, %p163
    %p165 = scmp.ne.s32.totalorder %s156, %s157
    %p166 = scmp.eq.s32.totalorder %s20, 0
    %p167 = por %p165, %p166
    %p168 = scmp.ne.s32.totalorder %s156, %s157
    %p169 = scmp.eq.s32.totalorder %s21, 1
    %p170 = por %p168, %p169
    %p172 = scmp.ne.s32.totalorder %s157, %s171
    %p173 = scmp.eq.s32.totalorder %s21, 0
    %p174 = por %p172, %p173
    %s176 = sadd.s32 %s175, 1
    %p179 = scmp.eq.s32.totalorder %s15, 1
    %p180 = scmp.ne.s32.totalorder %s175, %s177
    %p181 = scmp.eq.s32.totalorder %s15, 0
    %p182 = por %p180, %p181
    %p183 = scmp.ne.s32.totalorder %s175, %s177
    %p184 = scmp.eq.s32.totalorder %s20, 1
    %p185 = por %p183, %p184
    %p186 = scmp.ne.s32.totalorder %s177, %s178
    %p187 = scmp.eq.s32.totalorder %s20, 0
    %p188 = por %p186, %p187
    %p189 = scmp.ne.s32.totalorder %s177, %s178
    %p190 = scmp.eq.s32.totalorder %s21, 1
    %p191 = por %p189, %p190
    %p193 = scmp.ne.s32.totalorder %s178, %s192
    %p194 = scmp.eq.s32.totalorder %s21, 0
    %p195 = por %p193, %p194
    %s197 = sadd.s32 %s196, 1
    %p200 = scmp.eq.s32.totalorder %s15, 1
    %p201 = scmp.ne.s32.totalorder %s196, %s198
    %p202 = scmp.eq.s32.totalorder %s15, 0
    %p203 = por %p201, %p202
    %p204 = scmp.ne.s32.totalorder %s196, %s198
    %p205 = scmp.eq.s32.totalorder %s20, 1
    %p206 = por %p204, %p205
    %p207 = scmp.ne.s32.totalorder %s198, %s199
    %p208 = scmp.eq.s32.totalorder %s20, 0
    %p209 = por %p207, %p208
    %p210 = scmp.ne.s32.totalorder %s198, %s199
    %p211 = scmp.eq.s32.totalorder %s21, 1
    %p212 = por %p210, %p211
    %p214 = scmp.ne.s32.totalorder %s199, %s213
    %p215 = scmp.eq.s32.totalorder %s21, 0
    %p216 = por %p214, %p215
    %s217 = ssub.s32 %s15, %s22
    %p218 = scmp.eq.s32.totalorder %s217, 0
    %s220 = sadd.s32 %s219, 1
    %s221 = scalar_select %p218, %s219, %s220
    %p224 = pneg %p218
    %p225 = scmp.eq.s32.totalorder %s15, 1
    %p226 = por %p224, %p225
    %p227 = scmp.ne.s32.totalorder %s219, %s222
    %p228 = scmp.eq.s32.totalorder %s15, 0
    %p229 = por %p227, %p228
    %p230 = scmp.ne.s32.totalorder %s219, %s222
    %p231 = scmp.eq.s32.totalorder %s20, 1
    %p232 = por %p230, %p231
    %p233 = scmp.ne.s32.totalorder %s222, %s223
    %p234 = scmp.eq.s32.totalorder %s20, 0
    %p235 = por %p233, %p234
    %p236 = scmp.ne.s32.totalorder %s222, %s223
    %p237 = scmp.eq.s32.totalorder %s21, 1
    %p238 = por %p236, %p237
    %p240 = scmp.ne.s32.totalorder %s223, %s239
    %p241 = scmp.eq.s32.totalorder %s21, 0
    %p242 = por %p240, %p241
    %p243 = scmp.le.s32.totalorder 1, %s15
    %p244 = scmp.lt.s32.totalorder %s15, 3
    %p245 = pnand %p243, %p244
    %p246 = pneg %p245
    // Predicated region
    $region9: #{mnist_cnn_forward.2} parent=5 // pred_check
      _
    $region10: #{mnist_cnn_forward.2} parent=5 // pred_check_branch
      %248 = sbr.rel (%p245) target = $region12
    $region11: #{mnist_cnn_forward.2} parent=5 // pred_region
      %s249 = ssub.s32 %s15, 1
      // Predicated region
      $region13: #{mnist_cnn_forward.2} parent=11 // pred_check
        %p250 = pneg %p62
      $region14: #{mnist_cnn_forward.2} parent=11 // pred_check_branch
        %252 = sbr.rel (%p250) target = $region16
      $region15: #{mnist_cnn_forward.2} parent=11 // pred_region
        _
      $region16: #{mnist_cnn_forward.2} parent=11 // pred_fallthru
        _
      // Predicated region
      $region17: #{mnist_cnn_forward.2} parent=11 // pred_check
        %p253 = pneg %p83
      $region18: #{mnist_cnn_forward.2} parent=11 // pred_check_branch
        %255 = sbr.rel (%p253) target = $region20
      $region19: #{mnist_cnn_forward.2} parent=11 // pred_region
        _
      $region20: #{mnist_cnn_forward.2} parent=11 // pred_fallthru
        _
      // Predicated region
      $region21: #{mnist_cnn_forward.2} parent=11 // pred_check
        %p256 = pneg %p104
      $region22: #{mnist_cnn_forward.2} parent=11 // pred_check_branch
        %258 = sbr.rel (%p256) target = $region24
      $region23: #{mnist_cnn_forward.2} parent=11 // pred_region
        _
      $region24: #{mnist_cnn_forward.2} parent=11 // pred_fallthru
        _
      // Predicated region
      $region25: #{mnist_cnn_forward.2} parent=11 // pred_check
        %p259 = pneg %p125
      $region26: #{mnist_cnn_forward.2} parent=11 // pred_check_branch
        %261 = sbr.rel (%p259) target = $region28
      $region27: #{mnist_cnn_forward.2} parent=11 // pred_region
        _
      $region28: #{mnist_cnn_forward.2} parent=11 // pred_fallthru
        _
      // Predicated region
      $region29: #{mnist_cnn_forward.2} parent=11 // pred_check
        %p262 = pneg %p146
      $region30: #{mnist_cnn_forward.2} parent=11 // pred_check_branch
        %264 = sbr.rel (%p262) target = $region32
      $region31: #{mnist_cnn_forward.2} parent=11 // pred_region
        _
      $region32: #{mnist_cnn_forward.2} parent=11 // pred_fallthru
        _
      // Predicated region
      $region33: #{mnist_cnn_forward.2} parent=11 // pred_check
        %p265 = pneg %p167
      $region34: #{mnist_cnn_forward.2} parent=11 // pred_check_branch
        %267 = sbr.rel (%p265) target = $region36
      $region35: #{mnist_cnn_forward.2} parent=11 // pred_region
        _
      $region36: #{mnist_cnn_forward.2} parent=11 // pred_fallthru
        _
      // Predicated region
      $region37: #{mnist_cnn_forward.2} parent=11 // pred_check
        %p268 = pneg %p188
      $region38: #{mnist_cnn_forward.2} parent=11 // pred_check_branch
        %270 = sbr.rel (%p268) target = $region40
      $region39: #{mnist_cnn_forward.2} parent=11 // pred_region
        _
      $region40: #{mnist_cnn_forward.2} parent=11 // pred_fallthru
        _
      // Predicated region
      $region41: #{mnist_cnn_forward.2} parent=11 // pred_check
        %p271 = pneg %p209
      $region42: #{mnist_cnn_forward.2} parent=11 // pred_check_branch
        %273 = sbr.rel (%p271) target = $region44
      $region43: #{mnist_cnn_forward.2} parent=11 // pred_region
        _
      $region44: #{mnist_cnn_forward.2} parent=11 // pred_fallthru
        _
    $region12: #{mnist_cnn_forward.2} parent=5 // pred_fallthru
      _
    %p274 = scmp.lt.s32.totalorder %s15, 2
    // Predicated region
    $region45: #{mnist_cnn_forward.2} parent=5 // pred_check
      %p275 = pneg %p274
    $region46: #{mnist_cnn_forward.2} parent=5 // pred_check_branch
      %277 = sbr.rel (%p275) target = $region48
    $region47: #{mnist_cnn_forward.2} parent=5 // pred_region
      // Predicated region
      $region49: #{mnist_cnn_forward.2} parent=47 // pred_check
        %p278 = pneg %p35
      $region50: #{mnist_cnn_forward.2} parent=47 // pred_check_branch
        %280 = sbr.rel (%p278) target = $region52
      $region51: #{mnist_cnn_forward.2} parent=47 // pred_region
        %p281 = scmp.lt.s32.totalorder %s15, 1
        %s282 = scalar_select %p281, %s15, 1
        %s283 = smul.addr %s282, 7
        %s284 = scalar_lea.vmem %s0, %s283
      $region52: #{mnist_cnn_forward.2} parent=47 // pred_fallthru
        _
    $region48: #{mnist_cnn_forward.2} parent=5 // pred_fallthru
      _
    %p285 = scmp.le.s32.totalorder 1, %s15
    %p286 = scmp.lt.s32.totalorder %s15, 3
    %p287 = pnand %p285, %p286
    %p288 = pneg %p287
    // Predicated region
    $region53: #{mnist_cnn_forward.2} parent=5 // pred_check
      _
    $region54: #{mnist_cnn_forward.2} parent=5 // pred_check_branch
      %290 = sbr.rel (%p287) target = $region56
    $region55: #{mnist_cnn_forward.2} parent=5 // pred_region
      %s291 = ssub.s32 %s15, 1
      %p292 = scmp.lt.s32.totalorder %s20, 1
      %s293 = scalar_select %p292, %s20, 1
      %s294 = smul.addr %s293, 7
      %s295 = scalar_lea.vmem %s0, %s294
      %p296 = pneg %p41
      %p297 = pneg %p38
      %p298 = pneg %p62
      %p299 = pneg %p59
      %p300 = pneg %p83
      %p301 = pneg %p80
      %p302 = pneg %p104
      %p303 = pneg %p101
      %p304 = pneg %p125
      %p305 = pneg %p122
      %p306 = pneg %p146
      %p307 = pneg %p143
      %p308 = pneg %p167
      %p309 = pneg %p164
      %p310 = pneg %p188
      %p311 = pneg %p185
      %p312 = pneg %p209
      %p313 = pneg %p206
      %p314 = pneg %p235
      %p315 = pneg %p232
      %p316 = scmp.lt.s32.totalorder %s20, 1
      %s317 = scalar_select %p316, %s20, 1
      %s318 = smul.addr %s317, 8
      %s319 = smul.addr %s318, 8
      %s320 = scalar_lea.vmem %s9, %s319
      %p321 = scmp.lt.s32.totalorder %s20, 1
      %s322 = scalar_select %p321, %s20, 1
      %s323 = smul.addr %s322, 7
      %s324 = scalar_lea.vmem %s0, %s323
      %p325 = scmp.lt.s32.totalorder %s20, 1
      %s326 = scalar_select %p325, %s20, 1
      %s327 = smul.addr %s326, 8
      %s328 = smul.addr %s327, 8
      %s329 = scalar_lea.vmem %s9, %s328
      %v330 = vld [vmem:[%s1] sm:$0xff]
      %v331 = vld [vmem:[%s1 + $0x8] sm:$0xff]
      %v332 = vld [vmem:[%s1 + $0x10] sm:$0xff]
      %v333 = vld [vmem:[%s1 + $0x18] sm:$0xff]
      %v334 = vld [vmem:[%s2] sm:$0xff]
      %v335 = vld [vmem:[%s2 + $0x8] sm:$0xff]
      %v336 = vld [vmem:[%s2 + $0x10] sm:$0xff]
      %v337 = vld [vmem:[%s2 + $0x18] sm:$0xff]
      %v338 = vld [vmem:[%s3] sm:$0xff]
      %v339 = vld [vmem:[%s3 + $0x8] sm:$0xff]
      %v340 = vld [vmem:[%s3 + $0x10] sm:$0xff]
      %v341 = vld [vmem:[%s3 + $0x18] sm:$0xff]
      %v342 = vld [vmem:[%s3 + $0x20] sm:$0xff]
      %v343 = vld [vmem:[%s3 + $0x28] sm:$0xff]
      %v344 = vld [vmem:[%s3 + $0x30] sm:$0xff]
      %v345 = vld [vmem:[%s3 + $0x38] sm:$0xff]
      %v346 = vld [vmem:[%s3 + $0x40] sm:$0xff]
      %v347 = vld [vmem:[%s3 + $0x48] sm:$0xff]
      %v348 = vld [vmem:[%s3 + $0x50] sm:$0xff]
      %v349 = vld [vmem:[%s3 + $0x58] sm:$0xff]
      %v350 = vld [vmem:[%s3 + $0x60] sm:$0xff]
      %v351 = vld [vmem:[%s3 + $0x68] sm:$0xff]
      %v352 = vld [vmem:[%s3 + $0x70] sm:$0xff]
      %v353 = vld [vmem:[%s3 + $0x78] sm:$0xff]
      %v354 = vld [vmem:[%s3 + $0x80] sm:$0xff]
      %v355 = vld [vmem:[%s3 + $0x88] sm:$0xff]
      %v356 = vld [vmem:[%s3 + $0x90] sm:$0xff]
      %v357 = vld [vmem:[%s3 + $0x98] sm:$0xff]
      %v358 = vld [vmem:[%s3 + $0xa0] sm:$0xff]
      %v359 = vld [vmem:[%s3 + $0xa8] sm:$0xff]
      %v360 = vld [vmem:[%s3 + $0xb0] sm:$0xff]
      %v361 = vld [vmem:[%s3 + $0xb8] sm:$0xff]
      %v362 = vld [vmem:[%s3 + $0xc0] sm:$0xff]
      %v363 = vld [vmem:[%s3 + $0xc8] sm:$0xff]
      %v364 = vld [vmem:[%s3 + $0xd0] sm:$0xff]
      %v365 = vld [vmem:[%s3 + $0xd8] sm:$0xff]
      %v366 = vld [vmem:[%s4] sm:$0xff]
      %v367 = vld [vmem:[%s4 + $0x8] sm:$0xff]
      %v368 = vld [vmem:[%s4 + $0x10] sm:$0xff]
      %v369 = vld [vmem:[%s4 + $0x18] sm:$0xff]
      %v370 = vld [vmem:[%s5] sm:$0xff]
      %v371 = vld [vmem:[%s5 + $0x8] sm:$0xff]
      %v372 = vld [vmem:[%s5 + $0x10] sm:$0xff]
      %v373 = vld [vmem:[%s5 + $0x18] sm:$0xff]
      %v374 = vld [vmem:[%s5 + $0x20] sm:$0xff]
      %v375 = vld [vmem:[%s5 + $0x28] sm:$0xff]
      %v376 = vld [vmem:[%s5 + $0x30] sm:$0xff]
      %v377 = vld [vmem:[%s5 + $0x38] sm:$0xff]
      %v378 = vld [vmem:[%s5 + $0x40] sm:$0xff]
      %v379 = vld [vmem:[%s5 + $0x48] sm:$0xff]
      %v380 = vld [vmem:[%s5 + $0x50] sm:$0xff]
      %v381 = vld [vmem:[%s5 + $0x58] sm:$0xff]
      %v382 = vld [vmem:[%s5 + $0x60] sm:$0xff]
      %v383 = vld [vmem:[%s5 + $0x68] sm:$0xff]
      %v384 = vld [vmem:[%s5 + $0x70] sm:$0xff]
      %v385 = vld [vmem:[%s5 + $0x78] sm:$0xff]
      %v386 = vld [vmem:[%s5 + $0x80] sm:$0xff]
      %v387 = vld [vmem:[%s5 + $0x88] sm:$0xff]
      %v388 = vld [vmem:[%s5 + $0x90] sm:$0xff]
      %v389 = vld [vmem:[%s5 + $0x98] sm:$0xff]
      %v390 = vld [vmem:[%s5 + $0xa0] sm:$0xff]
      %v391 = vld [vmem:[%s5 + $0xa8] sm:$0xff]
      %v392 = vld [vmem:[%s5 + $0xb0] sm:$0xff]
      %v393 = vld [vmem:[%s5 + $0xb8] sm:$0xff]
      %v394 = vld [vmem:[%s5 + $0xc0] sm:$0xff]
      %v395 = vld [vmem:[%s5 + $0xc8] sm:$0xff]
      %v396 = vld [vmem:[%s5 + $0xd0] sm:$0xff]
      %v397 = vld [vmem:[%s5 + $0xd8] sm:$0xff]
      %v398 = vld [vmem:[%s5 + $0xe0] sm:$0xff]
      %v399 = vld [vmem:[%s5 + $0xe8] sm:$0xff]
      %v400 = vld [vmem:[%s5 + $0xf0] sm:$0xff]
      %v401 = vld [vmem:[%s5 + $0xf8] sm:$0xff]
      %v402 = vld [vmem:[%s5 + $0x100] sm:$0xff]
      %v403 = vld [vmem:[%s5 + $0x108] sm:$0xff]
      %v404 = vld [vmem:[%s5 + $0x110] sm:$0xff]
      %v405 = vld [vmem:[%s5 + $0x118] sm:$0xff]
      %v406 = vld [vmem:[%s5 + $0x120] sm:$0xff]
      %v407 = vld [vmem:[%s5 + $0x128] sm:$0xff]
      %v408 = vld [vmem:[%s5 + $0x130] sm:$0xff]
      %v409 = vld [vmem:[%s5 + $0x138] sm:$0xff]
      %v410 = vld [vmem:[%s5 + $0x140] sm:$0xff]
      %v411 = vld [vmem:[%s5 + $0x148] sm:$0xff]
      %v412 = vld [vmem:[%s5 + $0x150] sm:$0xff]
      %v413 = vld [vmem:[%s5 + $0x158] sm:$0xff]
      %v414 = vld [vmem:[%s5 + $0x160] sm:$0xff]
      %v415 = vld [vmem:[%s5 + $0x168] sm:$0xff]
      %v416 = vld [vmem:[%s5 + $0x170] sm:$0xff]
      %v417 = vld [vmem:[%s5 + $0x178] sm:$0xff]
      %v418 = vld [vmem:[%s5 + $0x180] sm:$0xff]
      %v419 = vld [vmem:[%s5 + $0x188] sm:$0xff]
      %v420 = vld [vmem:[%s5 + $0x190] sm:$0xff]
      %v421 = vld [vmem:[%s5 + $0x198] sm:$0xff]
      %v422 = vld [vmem:[%s5 + $0x1a0] sm:$0xff]
      %v423 = vld [vmem:[%s5 + $0x1a8] sm:$0xff]
      %v424 = vld [vmem:[%s5 + $0x1b0] sm:$0xff]
      %v425 = vld [vmem:[%s5 + $0x1b8] sm:$0xff]
      %v426 = vld [vmem:[%s6] sm:$0xff]
      %v427 = vld [vmem:[%s6 + $0x8] sm:$0xff]
      %v428 = vld [vmem:[%s6 + $0x10] sm:$0xff]
      %v429 = vld [vmem:[%s6 + $0x18] sm:$0xff]
      %v430 = vld [vmem:[%s6 + $0x20] sm:$0xff]
      %v431 = vld [vmem:[%s6 + $0x28] sm:$0xff]
      %v432 = vld [vmem:[%s6 + $0x30] sm:$0xff]
      %v433 = vld [vmem:[%s6 + $0x38] sm:$0xff]
      %v434 = vld [vmem:[%s324] sm:$0x3f]
      %v435 = vlaneseq
      %vm436 = vcmp.ge.s32.totalorder %v435, 0
      %vm437 = vcmp.lt.s32.totalorder %v435, 672
      %vm438 = vmand %vm436, %vm437
      %439 = vst.msk [vmem:[#allocation2] ss:$8 sm:$0xf] %vm438, %v434
      %440 = vst.msk [vmem:[#allocation2] ss:$8 sm:$0x30] %vm438, %v434
      %v441 = vld [vmem:[%s324] sm:$0x3f]
      %443 = vrot.lane.b32.xlu0 %v441, 127
      %v444 = vpop.permute.xlu0 %443
      %v445 = vrot.slane %v444, 1
      %vm446 = vcmask 1039360
      %v447 = vsel %vm446, %v444, %v445
      %s449 = scalar_lea.vmem [#allocation2], 1
      %450 = vst.msk [vmem:[%s449] ss:$8 sm:$0xf] %vm438, %v447
      %451 = vst.msk [vmem:[%s449] ss:$8 sm:$0x30] %vm438, %v447
      %v452 = vld [vmem:[%s324] sm:$0x3f]
      %454 = vrot.lane.b32.xlu0 %v452, 126
      %v455 = vpop.permute.xlu0 %454
      %v456 = vrot.slane %v455, 1
      %vm457 = vcmask 1031168
      %v458 = vsel %vm457, %v455, %v456
      %s460 = scalar_lea.vmem [#allocation2], 2
      %461 = vst.msk [vmem:[%s460] ss:$8 sm:$0xf] %vm438, %v458
      %462 = vst.msk [vmem:[%s460] ss:$8 sm:$0x30] %vm438, %v458
      %v463 = vld [vmem:[%s324] sm:$0x3f]
      %465 = vrot.lane.b32.xlu0 %v463, 125
      %v466 = vpop.permute.xlu0 %465
      %v467 = vrot.slane %v466, 1
      %vm468 = vcmask 1022976
      %v469 = vsel %vm468, %v466, %v467
      %s471 = scalar_lea.vmem [#allocation2], 3
      %472 = vst.msk [vmem:[%s471] ss:$8 sm:$0xf] %vm438, %v469
      %473 = vst.msk [vmem:[%s471] ss:$8 sm:$0x30] %vm438, %v469
      %v474 = vld [vmem:[%s324] sm:$0x3f]
      %476 = vrot.lane.b32.xlu0 %v474, 124
      %v477 = vpop.permute.xlu0 %476
      %v478 = vrot.slane %v477, 1
      %vm479 = vcmask 1014784
      %v480 = vsel %vm479, %v477, %v478
      %s482 = scalar_lea.vmem [#allocation2], 4
      %483 = vst.msk [vmem:[%s482] ss:$8 sm:$0xf] %vm438, %v480
      %484 = vst.msk [vmem:[%s482] ss:$8 sm:$0x30] %vm438, %v480
      %v485 = vld [vmem:[%s324] sm:$0x3f]
      %487 = vrot.lane.b32.xlu0 %v485, 100
      %v488 = vpop.permute.xlu0 %487
      %v489 = vrot.slane %v488, 1
      %vm490 = vcmask 818176
      %v491 = vsel %vm490, %v488, %v489
      %s493 = scalar_lea.vmem [#allocation2], 5
      %494 = vst.msk [vmem:[%s493] ss:$8 sm:$0xf] %vm438, %v491
      %495 = vst.msk [vmem:[%s493] ss:$8 sm:$0x30] %vm438, %v491
      %v496 = vld [vmem:[%s324] sm:$0x3f]
      %498 = vrot.lane.b32.xlu0 %v496, 99
      %v499 = vpop.permute.xlu0 %498
      %v500 = vrot.slane %v499, 1
      %vm501 = vcmask 809984
      %v502 = vsel %vm501, %v499, %v500
      %s504 = scalar_lea.vmem [#allocation2], 6
      %505 = vst.msk [vmem:[%s504] ss:$8 sm:$0xf] %vm438, %v502
      %506 = vst.msk [vmem:[%s504] ss:$8 sm:$0x30] %vm438, %v502
      %v507 = vld [vmem:[%s324] sm:$0x3f]
      %509 = vrot.lane.b32.xlu0 %v507, 98
      %v510 = vpop.permute.xlu0 %509
      %v511 = vrot.slane %v510, 1
      %vm512 = vcmask 801792
      %v513 = vsel %vm512, %v510, %v511
      %s515 = scalar_lea.vmem [#allocation2], 7
      %516 = vst.msk [vmem:[%s515] ss:$8 sm:$0xf] %vm438, %v513
      %517 = vst.msk [vmem:[%s515] ss:$8 sm:$0x30] %vm438, %v513
      %v518 = vld [vmem:[%s324] sm:$0x3f]
      %520 = vrot.lane.b32.xlu0 %v518, 97
      %v521 = vpop.permute.xlu0 %520
      %v522 = vrot.slane %v521, 1
      %vm523 = vcmask 793600
      %v524 = vsel %vm523, %v521, %v522
      %s526 = scalar_lea.vmem [#allocation2], 48
      %527 = vst.msk [vmem:[%s526] ss:$8 sm:$0xf] %vm438, %v524
      %528 = vst.msk [vmem:[%s526] ss:$8 sm:$0x30] %vm438, %v524
      %v529 = vld [vmem:[%s324] sm:$0x3f]
      %531 = vrot.lane.b32.xlu0 %v529, 96
      %v532 = vpop.permute.xlu0 %531
      %v533 = vrot.slane %v532, 1
      %vm534 = vcmask 785408
      %v535 = vsel %vm534, %v532, %v533
      %s537 = scalar_lea.vmem [#allocation2], 49
      %538 = vst.msk [vmem:[%s537] ss:$8 sm:$0xf] %vm438, %v535
      %539 = vst.msk [vmem:[%s537] ss:$8 sm:$0x30] %vm438, %v535
      %v540 = vld [vmem:[%s324] sm:$0x3f]
      %542 = vrot.lane.b32.xlu0 %v540, 72
      %v543 = vpop.permute.xlu0 %542
      %v544 = vrot.slane %v543, 1
      %vm545 = vcmask 588800
      %v546 = vsel %vm545, %v543, %v544
      %s548 = scalar_lea.vmem [#allocation2], 50
      %549 = vst.msk [vmem:[%s548] ss:$8 sm:$0xf] %vm438, %v546
      %550 = vst.msk [vmem:[%s548] ss:$8 sm:$0x30] %vm438, %v546
      %v551 = vld [vmem:[%s324] sm:$0x3f]
      %553 = vrot.lane.b32.xlu0 %v551, 71
      %v554 = vpop.permute.xlu0 %553
      %v555 = vrot.slane %v554, 1
      %vm556 = vcmask 580608
      %v557 = vsel %vm556, %v554, %v555
      %s559 = scalar_lea.vmem [#allocation2], 51
      %560 = vst.msk [vmem:[%s559] ss:$8 sm:$0xf] %vm438, %v557
      %561 = vst.msk [vmem:[%s559] ss:$8 sm:$0x30] %vm438, %v557
      %v562 = vld [vmem:[%s324] sm:$0x3f]
      %564 = vrot.lane.b32.xlu0 %v562, 70
      %v565 = vpop.permute.xlu0 %564
      %v566 = vrot.slane %v565, 1
      %vm567 = vcmask 572416
      %v568 = vsel %vm567, %v565, %v566
      %s570 = scalar_lea.vmem [#allocation2], 52
      %571 = vst.msk [vmem:[%s570] ss:$8 sm:$0xf] %vm438, %v568
      %572 = vst.msk [vmem:[%s570] ss:$8 sm:$0x30] %vm438, %v568
      %v573 = vld [vmem:[%s324] sm:$0x3f]
      %575 = vrot.lane.b32.xlu0 %v573, 69
      %v576 = vpop.permute.xlu0 %575
      %v577 = vrot.slane %v576, 1
      %vm578 = vcmask 564224
      %v579 = vsel %vm578, %v576, %v577
      %s581 = scalar_lea.vmem [#allocation2], 53
      %582 = vst.msk [vmem:[%s581] ss:$8 sm:$0xf] %vm438, %v579
      %583 = vst.msk [vmem:[%s581] ss:$8 sm:$0x30] %vm438, %v579
      %v584 = vld [vmem:[%s324] sm:$0x3f]
      %586 = vrot.lane.b32.xlu0 %v584, 68
      %v587 = vpop.permute.xlu0 %586
      %v588 = vrot.slane %v587, 1
      %vm589 = vcmask 556032
      %v590 = vsel %vm589, %v587, %v588
      %s592 = scalar_lea.vmem [#allocation2], 54
      %593 = vst.msk [vmem:[%s592] ss:$8 sm:$0xf] %vm438, %v590
      %594 = vst.msk [vmem:[%s592] ss:$8 sm:$0x30] %vm438, %v590
      %v595 = vld [vmem:[%s324] sm:$0x3f]
      %597 = vrot.lane.b32.xlu0 %v595, 44
      %v598 = vpop.permute.xlu0 %597
      %v599 = vrot.slane %v598, 1
      %vm600 = vcmask 359424
      %v601 = vsel %vm600, %v598, %v599
      %s603 = scalar_lea.vmem [#allocation2], 55
      %604 = vst.msk [vmem:[%s603] ss:$8 sm:$0xf] %vm438, %v601
      %605 = vst.msk [vmem:[%s603] ss:$8 sm:$0x30] %vm438, %v601
      %v606 = vld [vmem:[%s324] sm:$0x3f]
      %608 = vrot.lane.b32.xlu0 %v606, 43
      %v609 = vpop.permute.xlu0 %608
      %v610 = vrot.slane %v609, 1
      %vm611 = vcmask 351232
      %v612 = vsel %vm611, %v609, %v610
      %s614 = scalar_lea.vmem [#allocation2], 96
      %615 = vst.msk [vmem:[%s614] ss:$8 sm:$0xf] %vm438, %v612
      %616 = vst.msk [vmem:[%s614] ss:$8 sm:$0x30] %vm438, %v612
      %v617 = vld [vmem:[%s324] sm:$0x3f]
      %619 = vrot.lane.b32.xlu0 %v617, 42
      %v620 = vpop.permute.xlu0 %619
      %v621 = vrot.slane %v620, 1
      %vm622 = vcmask 343040
      %v623 = vsel %vm622, %v620, %v621
      %s625 = scalar_lea.vmem [#allocation2], 97
      %626 = vst.msk [vmem:[%s625] ss:$8 sm:$0xf] %vm438, %v623
      %627 = vst.msk [vmem:[%s625] ss:$8 sm:$0x30] %vm438, %v623
      %v628 = vld [vmem:[%s324] sm:$0x3f]
      %630 = vrot.lane.b32.xlu0 %v628, 41
      %v631 = vpop.permute.xlu0 %630
      %v632 = vrot.slane %v631, 1
      %vm633 = vcmask 334848
      %v634 = vsel %vm633, %v631, %v632
      %s636 = scalar_lea.vmem [#allocation2], 98
      %637 = vst.msk [vmem:[%s636] ss:$8 sm:$0xf] %vm438, %v634
      %638 = vst.msk [vmem:[%s636] ss:$8 sm:$0x30] %vm438, %v634
      %v639 = vld [vmem:[%s324] sm:$0x3f]
      %641 = vrot.lane.b32.xlu0 %v639, 40
      %v642 = vpop.permute.xlu0 %641
      %v643 = vrot.slane %v642, 1
      %vm644 = vcmask 326656
      %v645 = vsel %vm644, %v642, %v643
      %s647 = scalar_lea.vmem [#allocation2], 99
      %648 = vst.msk [vmem:[%s647] ss:$8 sm:$0xf] %vm438, %v645
      %649 = vst.msk [vmem:[%s647] ss:$8 sm:$0x30] %vm438, %v645
      %v650 = vld [vmem:[%s324] sm:$0x7f]
      %652 = vrot.lane.b32.xlu0 %v650, 16
      %v653 = vpop.permute.xlu0 %652
      %v654 = vrot.slane %v653, 1
      %vm655 = vcmask 130048
      %v656 = vsel %vm655, %v653, %v654
      %s658 = scalar_lea.vmem [#allocation2], 100
      %659 = vst.msk [vmem:[%s658] ss:$8 sm:$0xf] %vm438, %v656
      %660 = vst.msk [vmem:[%s658] ss:$8 sm:$0x30] %vm438, %v656
      %v661 = vld [vmem:[%s324] sm:$0x7f]
      %663 = vrot.lane.b32.xlu0 %v661, 15
      %v664 = vpop.permute.xlu0 %663
      %v665 = vrot.slane %v664, 1
      %vm666 = vcmask 121856
      %v667 = vsel %vm666, %v664, %v665
      %s669 = scalar_lea.vmem [#allocation2], 101
      %670 = vst.msk [vmem:[%s669] ss:$8 sm:$0xf] %vm438, %v667
      %671 = vst.msk [vmem:[%s669] ss:$8 sm:$0x30] %vm438, %v667
      %v672 = vld [vmem:[%s324] sm:$0x7f]
      %674 = vrot.lane.b32.xlu0 %v672, 14
      %v675 = vpop.permute.xlu0 %674
      %v676 = vrot.slane %v675, 1
      %vm677 = vcmask 113664
      %v678 = vsel %vm677, %v675, %v676
      %s680 = scalar_lea.vmem [#allocation2], 102
      %681 = vst.msk [vmem:[%s680] ss:$8 sm:$0xf] %vm438, %v678
      %682 = vst.msk [vmem:[%s680] ss:$8 sm:$0x30] %vm438, %v678
      %v683 = vld [vmem:[%s324] sm:$0x7f]
      %685 = vrot.lane.b32.xlu0 %v683, 13
      %v686 = vpop.permute.xlu0 %685
      %v687 = vrot.slane %v686, 1
      %vm688 = vcmask 105472
      %v689 = vsel %vm688, %v686, %v687
      %s691 = scalar_lea.vmem [#allocation2], 103
      %692 = vst.msk [vmem:[%s691] ss:$8 sm:$0xf] %vm438, %v689
      %693 = vst.msk [vmem:[%s691] ss:$8 sm:$0x30] %vm438, %v689
      %v694 = vld [vmem:[%s324] sm:$0x7f]
      %696 = vrot.lane.b32.xlu0 %v694, 12
      %v697 = vpop.permute.xlu0 %696
      %v698 = vrot.slane %v697, 1
      %vm699 = vcmask 97280
      %v700 = vsel %vm699, %v697, %v698
      %s702 = scalar_lea.vmem [#allocation2], 144
      %703 = vst.msk [vmem:[%s702] ss:$8 sm:$0xf] %vm438, %v700
      %704 = vst.msk [vmem:[%s702] ss:$8 sm:$0x30] %vm438, %v700
      %v705 = vld [vmem:[#allocation2] sm:$0xff]
      %v706 = vld [vmem:[#allocation2 + $0x8] sm:$0xff]
      %v707 = vld [vmem:[#allocation2 + $0x10] sm:$0xff]
      %v708 = vld [vmem:[#allocation2 + $0x18] sm:$0xff]
      %v709 = vld [vmem:[#allocation2 + $0x20] sm:$0xff]
      %v710 = vld [vmem:[#allocation2 + $0x28] sm:$0xff]
      %v711 = vld [vmem:[#allocation2 + $0x30] sm:$0xff]
      %v712 = vld [vmem:[#allocation2 + $0x38] sm:$0xff]
      %v713 = vld [vmem:[#allocation2 + $0x40] sm:$0xff]
      %v714 = vld [vmem:[#allocation2 + $0x48] sm:$0xff]
      %v715 = vld [vmem:[#allocation2 + $0x50] sm:$0xff]
      %v716 = vld [vmem:[#allocation2 + $0x58] sm:$0xff]
      %v717 = vld [vmem:[#allocation2 + $0x60] sm:$0xff]
      %v718 = vld [vmem:[#allocation2 + $0x68] sm:$0xff]
      %v719 = vld [vmem:[#allocation2 + $0x70] sm:$0xff]
      %v720 = vld [vmem:[#allocation2 + $0x78] sm:$0xff]
      %v721 = vld [vmem:[#allocation2 + $0x80] sm:$0xff]
      %v722 = vld [vmem:[#allocation2 + $0x88] sm:$0xff]
      %v723 = vld [vmem:[#allocation2 + $0x90] sm:$0x1]
      %v724 = vld [vmem:[#allocation2 + $0x98] sm:$0x1]
      %v725 = vld [vmem:[#allocation2 + $0xa0] sm:$0x1]
      %v726 = vld [vmem:[#allocation2 + $0xa8] sm:$0x1]
      %v727 = vld [vmem:[#allocation2 + $0xb0] sm:$0x1]
      %v728 = vld [vmem:[#allocation2 + $0xb8] sm:$0x1]
      %730 = vset.pattern.permute.xlu0 0
      %731 = vperm.xlu0 %730, %v334
      %v732 = vpop.permute.xlu0 %731
      %735 = vset.pattern.permute.xlu0 0
      %736 = vperm.xlu0 %735, %v335
      %v737 = vpop.permute.xlu0 %736
      %740 = vset.pattern.permute.xlu0 0
      %741 = vperm.xlu0 %740, %v336
      %v742 = vpop.permute.xlu0 %741
      %745 = vset.pattern.permute.xlu0 0
      %746 = vperm.xlu0 %745, %v337
      %v747 = vpop.permute.xlu0 %746
      %vm749 = vcmask 203776
      %v751 = vsel %vm749, %v330, 0
      %v754 = vsel %vm749, %v331, 0
      %v757 = vsel %vm749, %v332, 0
      %v760 = vsel %vm749, %v333, 0
      %vm762 = vcmask 1040384
      %v764 = vsel %vm762, %v723, 0
      %v767 = vsel %vm762, %v724, 0
      %v770 = vsel %vm762, %v725, 0
      %v773 = vsel %vm762, %v726, 0
      %v776 = vsel %vm762, %v727, 0
      %v779 = vsel %vm762, %v728, 0
      %781 = vmatprep.subr.mxu0 %v706
      %782 = vmatpush1.msra.mxu0 %v705
      %783 = vmatprep.subr.mxu0 %v712
      %784 = vmatpush1.msra.mxu0 %v711
      %785 = vmatprep.subr.mxu0 %v718
      %786 = vmatpush1.msra.mxu0 %v717
      %787 = vmatprep.subr.mxu0 %v767
      %788 = vmatpush1.msra.mxu0 %v764
      %789 = vmatprep.subr.mxu0 0.0
      %790 = vmatpush1.msra.mxu0 0.0
      %791 = vmatprep.subr.mxu0 0.0
      %792 = vmatpush1.msra.mxu0 0.0
      %793 = vmatprep.subr.mxu0 0.0
      %794 = vmatpush1.msra.mxu0 0.0
      %795 = vmatprep.subr.mxu0 0.0
      %796 = vmatpush1.msra.mxu0 0.0
      %797 = vmatprep.subr.mxu0 0.0
      %798 = vmatpush1.msra.mxu0 0.0
      %799 = vmatprep.subr.mxu0 0.0
      %800 = vmatpush1.msra.mxu0 0.0
      %801 = vmatprep.subr.mxu0 0.0
      %802 = vmatpush1.msra.mxu0 0.0
      %803 = vmatprep.subr.mxu0 0.0
      %804 = vmatpush1.msra.mxu0 0.0
      %805 = vmatprep.subr.mxu0 0.0
      %806 = vmatpush1.msra.mxu0 0.0
      %807 = vmatprep.subr.mxu0 0.0
      %808 = vmatpush1.msra.mxu0 0.0
      %809 = vmatprep.subr.mxu0 0.0
      %810 = vmatpush1.msra.mxu0 0.0
      %811 = vmatprep.subr.mxu0 0.0
      %812 = vmatpush1.msra.mxu0 0.0
      %813 = vmatprep.subr.mxu0 0.0
      %814 = vmatpush1.msra.mxu0 0.0
      %815 = vmatprep.subr.mxu0 0.0
      %816 = vmatpush1.msra.mxu0 0.0
      %817 = vmatprep.subr.mxu0 0.0
      %818 = vmatpush1.msra.mxu0 0.0
      %819 = vmatprep.subr.mxu0 0.0
      %820 = vmatpush1.msra.mxu0 0.0
      %821 = vmatprep.subr.mxu0 0.0
      %822 = vmatpush1.msra.mxu0 0.0
      %823 = vmatprep.subr.mxu0 0.0
      %824 = vmatpush1.msra.mxu0 0.0
      %825 = vmatprep.subr.mxu0 0.0
      %826 = vmatpush1.msra.mxu0 0.0
      %827 = vmatprep.subr.mxu0 0.0
      %828 = vmatpush1.msra.mxu0 0.0
      %829 = vmatprep.subr.mxu0 0.0
      %830 = vmatpush1.msra.mxu0 0.0
      %831 = vmatprep.subr.mxu0 0.0
      %832 = vmatpush1.msra.mxu0 0.0
      %833 = vmatprep.subr.mxu0 0.0
      %834 = vmatpush1.msra.mxu0 0.0
      %835 = vmatprep.subr.mxu0 0.0
      %836 = vmatpush1.msra.mxu0 0.0
      %837 = vmatprep.subr.mxu0 0.0
      %838 = vmatpush1.msra.mxu0 0.0
      %839 = vmatprep.subr.mxu0 0.0
      %840 = vmatpush1.msra.mxu0 0.0
      %841 = vmatprep.subr.mxu0 0.0
      %842 = vmatpush1.msra.mxu0 0.0
      %843 = vmatprep.subr.mxu0 0.0
      %844 = vmatpush1.msra.mxu0 0.0
      %845 = vmatprep.mubr.f32.mxu0 0.0
      %846 = vmatmul.mubr.f32.gmra.mrb[0].mxu0 %v751
      %v847 = vpop.f32.mrb[0].mxu0
      %v848 = vadd.f32 %v732, %v847
      %v849 = vpop.f32.mrb[0].mxu0
      %v850 = vadd.f32 %v732, %v849
      %851 = vmatprep.mubr.f32.mxu0 0.0
      %852 = vmatmul.mubr.f32.gmra.mrb[0].mxu0 %v754
      %v853 = vpop.f32.mrb[0].mxu0
      %v854 = vadd.f32 %v737, %v853
      %v855 = vpop.f32.mrb[0].mxu0
      %v856 = vadd.f32 %v737, %v855
      %857 = vmatprep.mubr.f32.mxu0 0.0
      %858 = vmatmul.mubr.f32.gmra.mrb[0].mxu0 %v757
      %v859 = vpop.f32.mrb[0].mxu0
      %v860 = vadd.f32 %v742, %v859
      %v861 = vpop.f32.mrb[0].mxu0
      %v862 = vadd.f32 %v742, %v861
      %863 = vmatprep.mubr.f32.mxu0 0.0
      %864 = vmatmul.mubr.f32.gmra.mrb[0].mxu0 %v760
      %v865 = vpop.f32.mrb[0].mxu0
      %v866 = vadd.f32 %v747, %v865
      %v867 = vpop.f32.mrb[0].mxu0
      %v868 = vadd.f32 %v747, %v867
      %869 = vdwg.mxu0
      %870 = vmatprep.subr.mxu0 %v708
      %871 = vmatpush1.msra.mxu0 %v707
      %872 = vmatprep.subr.mxu0 %v714
      %873 = vmatpush1.msra.mxu0 %v713
      %874 = vmatprep.subr.mxu0 %v720
      %875 = vmatpush1.msra.mxu0 %v719
      %876 = vmatprep.subr.mxu0 %v773
      %877 = vmatpush1.msra.mxu0 %v770
      %878 = vmatprep.subr.mxu0 0.0
      %879 = vmatpush1.msra.mxu0 0.0
      %880 = vmatprep.subr.mxu0 0.0
      %881 = vmatpush1.msra.mxu0 0.0
      %882 = vmatprep.subr.mxu0 0.0
      %883 = vmatpush1.msra.mxu0 0.0
      %884 = vmatprep.subr.mxu0 0.0
      %885 = vmatpush1.msra.mxu0 0.0
      %886 = vmatprep.subr.mxu0 0.0
      %887 = vmatpush1.msra.mxu0 0.0
      %888 = vmatprep.subr.mxu0 0.0
      %889 = vmatpush1.msra.mxu0 0.0
      %890 = vmatprep.subr.mxu0 0.0
      %891 = vmatpush1.msra.mxu0 0.0
      %892 = vmatprep.subr.mxu0 0.0
      %893 = vmatpush1.msra.mxu0 0.0
      %894 = vmatprep.subr.mxu0 0.0
      %895 = vmatpush1.msra.mxu0 0.0
      %896 = vmatprep.subr.mxu0 0.0
      %897 = vmatpush1.msra.mxu0 0.0
      %898 = vmatprep.subr.mxu0 0.0
      %899 = vmatpush1.msra.mxu0 0.0
      %900 = vmatprep.subr.mxu0 0.0
      %901 = vmatpush1.msra.mxu0 0.0
      %902 = vmatprep.subr.mxu0 0.0
      %903 = vmatpush1.msra.mxu0 0.0
      %904 = vmatprep.subr.mxu0 0.0
      %905 = vmatpush1.msra.mxu0 0.0
      %906 = vmatprep.subr.mxu0 0.0
      %907 = vmatpush1.msra.mxu0 0.0
      %908 = vmatprep.subr.mxu0 0.0
      %909 = vmatpush1.msra.mxu0 0.0
      %910 = vmatprep.subr.mxu0 0.0
      %911 = vmatpush1.msra.mxu0 0.0
      %912 = vmatprep.subr.mxu0 0.0
      %913 = vmatpush1.msra.mxu0 0.0
      %914 = vmatprep.subr.mxu0 0.0
      %915 = vmatpush1.msra.mxu0 0.0
      %916 = vmatprep.subr.mxu0 0.0
      %917 = vmatpush1.msra.mxu0 0.0
      %918 = vmatprep.subr.mxu0 0.0
      %919 = vmatpush1.msra.mxu0 0.0
      %920 = vmatprep.subr.mxu0 0.0
      %921 = vmatpush1.msra.mxu0 0.0
      %922 = vmatprep.subr.mxu0 0.0
      %923 = vmatpush1.msra.mxu0 0.0
      %924 = vmatprep.subr.mxu0 0.0
      %925 = vmatpush1.msra.mxu0 0.0
      %926 = vmatprep.subr.mxu0 0.0
      %927 = vmatpush1.msra.mxu0 0.0
      %928 = vmatprep.subr.mxu0 0.0
      %929 = vmatpush1.msra.mxu0 0.0
      %930 = vmatprep.subr.mxu0 0.0
      %931 = vmatpush1.msra.mxu0 0.0
      %932 = vmatprep.subr.mxu0 0.0
      %933 = vmatpush1.msra.mxu0 0.0
      %934 = vmatprep.mubr.f32.mxu0 0.0
      %935 = vmatmul.mubr.f32.gmra.mrb[0].mxu0 %v751
      %v936 = vpop.f32.mrb[0].mxu0
      %v937 = vadd.f32 %v732, %v936
      %v938 = vpop.f32.mrb[0].mxu0
      %v939 = vadd.f32 %v732, %v938
      %940 = vmatprep.mubr.f32.mxu0 0.0
      %941 = vmatmul.mubr.f32.gmra.mrb[0].mxu0 %v754
      %v942 = vpop.f32.mrb[0].mxu0
      %v943 = vadd.f32 %v737, %v942
      %v944 = vpop.f32.mrb[0].mxu0
      %v945 = vadd.f32 %v737, %v944
      %946 = vmatprep.mubr.f32.mxu0 0.0
      %947 = vmatmul.mubr.f32.gmra.mrb[0].mxu0 %v757
      %v948 = vpop.f32.mrb[0].mxu0
      %v949 = vadd.f32 %v742, %v948
      %v950 = vpop.f32.mrb[0].mxu0
      %v951 = vadd.f32 %v742, %v950
      %952 = vmatprep.mubr.f32.mxu0 0.0
      %953 = vmatmul.mubr.f32.gmra.mrb[0].mxu0 %v760
      %v954 = vpop.f32.mrb[0].mxu0
      %v955 = vadd.f32 %v747, %v954
      %v956 = vpop.f32.mrb[0].mxu0
      %v957 = vadd.f32 %v747, %v956
      %958 = vdwg.mxu0
      %959 = vmatprep.subr.mxu0 %v710
      %960 = vmatpush1.msra.mxu0 %v709
      %961 = vmatprep.subr.mxu0 %v716
      %962 = vmatpush1.msra.mxu0 %v715
      %963 = vmatprep.subr.mxu0 %v722
      %964 = vmatpush1.msra.mxu0 %v721
      %965 = vmatprep.subr.mxu0 %v779
      %966 = vmatpush1.msra.mxu0 %v776
      %967 = vmatprep.subr.mxu0 0.0
      %968 = vmatpush1.msra.mxu0 0.0
      %969 = vmatprep.subr.mxu0 0.0
      %970 = vmatpush1.msra.mxu0 0.0
      %971 = vmatprep.subr.mxu0 0.0
      %972 = vmatpush1.msra.mxu0 0.0
      %973 = vmatprep.subr.mxu0 0.0
      %974 = vmatpush1.msra.mxu0 0.0
      %975 = vmatprep.subr.mxu0 0.0
      %976 = vmatpush1.msra.mxu0 0.0
      %977 = vmatprep.subr.mxu0 0.0
      %978 = vmatpush1.msra.mxu0 0.0
      %979 = vmatprep.subr.mxu0 0.0
      %980 = vmatpush1.msra.mxu0 0.0
      %981 = vmatprep.subr.mxu0 0.0
      %982 = vmatpush1.msra.mxu0 0.0
      %983 = vmatprep.subr.mxu0 0.0
      %984 = vmatpush1.msra.mxu0 0.0
      %985 = vmatprep.subr.mxu0 0.0
      %986 = vmatpush1.msra.mxu0 0.0
      %987 = vmatprep.subr.mxu0 0.0
      %988 = vmatpush1.msra.mxu0 0.0
      %989 = vmatprep.subr.mxu0 0.0
      %990 = vmatpush1.msra.mxu0 0.0
      %991 = vmatprep.subr.mxu0 0.0
      %992 = vmatpush1.msra.mxu0 0.0
      %993 = vmatprep.subr.mxu0 0.0
      %994 = vmatpush1.msra.mxu0 0.0
      %995 = vmatprep.subr.mxu0 0.0
      %996 = vmatpush1.msra.mxu0 0.0
      %997 = vmatprep.subr.mxu0 0.0
      %998 = vmatpush1.msra.mxu0 0.0
      %999 = vmatprep.subr.mxu0 0.0
      %1000 = vmatpush1.msra.mxu0 0.0
      %1001 = vmatprep.subr.mxu0 0.0
      %1002 = vmatpush1.msra.mxu0 0.0
      %1003 = vmatprep.subr.mxu0 0.0
      %1004 = vmatpush1.msra.mxu0 0.0
      %1005 = vmatprep.subr.mxu0 0.0
      %1006 = vmatpush1.msra.mxu0 0.0
      %1007 = vmatprep.subr.mxu0 0.0
      %1008 = vmatpush1.msra.mxu0 0.0
      %1009 = vmatprep.subr.mxu0 0.0
      %1010 = vmatpush1.msra.mxu0 0.0
      %1011 = vmatprep.subr.mxu0 0.0
      %1012 = vmatpush1.msra.mxu0 0.0
      %1013 = vmatprep.subr.mxu0 0.0
      %1014 = vmatpush1.msra.mxu0 0.0
      %1015 = vmatprep.subr.mxu0 0.0
      %1016 = vmatpush1.msra.mxu0 0.0
      %1017 = vmatprep.subr.mxu0 0.0
      %1018 = vmatpush1.msra.mxu0 0.0
      %1019 = vmatprep.subr.mxu0 0.0
      %1020 = vmatpush1.msra.mxu0 0.0
      %1021 = vmatprep.subr.mxu0 0.0
      %1022 = vmatpush1.msra.mxu0 0.0
      %1023 = vmatprep.mubr.f32.mxu0 0.0
      %1024 = vmatmul.mubr.f32.gmra.mrb[0].mxu0 %v751
      %v1025 = vpop.f32.mrb[0].mxu0
      %v1026 = vadd.f32 %v732, %v1025
      %v1027 = vpop.f32.mrb[0].mxu0
      %v1028 = vadd.f32 %v732, %v1027
      %1029 = vmatprep.mubr.f32.mxu0 0.0
      %1030 = vmatmul.mubr.f32.gmra.mrb[0].mxu0 %v754
      %v1031 = vpop.f32.mrb[0].mxu0
      %v1032 = vadd.f32 %v737, %v1031
      %v1033 = vpop.f32.mrb[0].mxu0
      %v1034 = vadd.f32 %v737, %v1033
      %1035 = vmatprep.mubr.f32.mxu0 0.0
      %1036 = vmatmul.mubr.f32.gmra.mrb[0].mxu0 %v757
      %v1037 = vpop.f32.mrb[0].mxu0
      %v1038 = vadd.f32 %v742, %v1037
      %v1039 = vpop.f32.mrb[0].mxu0
      %v1040 = vadd.f32 %v742, %v1039
      %1041 = vmatprep.mubr.f32.mxu0 0.0
      %1042 = vmatmul.mubr.f32.gmra.mrb[0].mxu0 %v760
      %v1043 = vpop.f32.mrb[0].mxu0
      %v1044 = vadd.f32 %v747, %v1043
      %v1045 = vpop.f32.mrb[0].mxu0
      %v1046 = vadd.f32 %v747, %v1045
      %1047 = vdwg.mxu0
      %v1048 = vmax.f32 %v848, 0.0
      %v1049 = vmax.f32 %v850, 0.0
      %v1050 = vmax.f32 %v937, 0.0
      %v1051 = vmax.f32 %v939, 0.0
      %v1052 = vmax.f32 %v1026, 0.0
      %v1053 = vmax.f32 %v1028, 0.0
      %v1054 = vmax.f32 %v854, 0.0
      %v1055 = vmax.f32 %v856, 0.0
      %v1056 = vmax.f32 %v943, 0.0
      %v1057 = vmax.f32 %v945, 0.0
      %v1058 = vmax.f32 %v1032, 0.0
      %v1059 = vmax.f32 %v1034, 0.0
      %v1060 = vmax.f32 %v860, 0.0
      %v1061 = vmax.f32 %v862, 0.0
      %v1062 = vmax.f32 %v949, 0.0
      %v1063 = vmax.f32 %v951, 0.0
      %v1064 = vmax.f32 %v1038, 0.0
      %v1065 = vmax.f32 %v1040, 0.0
      %v1066 = vmax.f32 %v866, 0.0
      %v1067 = vmax.f32 %v868, 0.0
      %v1068 = vmax.f32 %v955, 0.0
      %v1069 = vmax.f32 %v957, 0.0
      %v1070 = vmax.f32 %v1044, 0.0
      %v1071 = vmax.f32 %v1046, 0.0
      %1072 = vst [vmem:[#allocation3] sm:$0xff] %v1048
      %1073 = vst [vmem:[#allocation3 + $0x8] sm:$0xff] %v1049
      %1074 = vst [vmem:[#allocation3 + $0x10] sm:$0xff] %v1050
      %1075 = vst [vmem:[#allocation3 + $0x18] sm:$0xff] %v1051
      %1076 = vst [vmem:[#allocation3 + $0x20] sm:$0xff] %v1052
      %vm1077 = vcmask 261120
      %1078 = vst.msk [vmem:[#allocation3 + $0x28] sm:$0xff] %vm1077, %v1053
      %1079 = vst [vmem:[#allocation3 + $0x30] sm:$0xff] %v1054
      %1080 = vst [vmem:[#allocation3 + $0x38] sm:$0xff] %v1055
      %1081 = vst [vmem:[#allocation3 + $0x40] sm:$0xff] %v1056
      %1082 = vst [vmem:[#allocation3 + $0x48] sm:$0xff] %v1057
      %1083 = vst [vmem:[#allocation3 + $0x50] sm:$0xff] %v1058
      %1084 = vst.msk [vmem:[#allocation3 + $0x58] sm:$0xff] %vm1077, %v1059
      %1085 = vst [vmem:[#allocation3 + $0x60] sm:$0xff] %v1060
      %1086 = vst [vmem:[#allocation3 + $0x68] sm:$0xff] %v1061
      %1087 = vst [vmem:[#allocation3 + $0x70] sm:$0xff] %v1062
      %1088 = vst [vmem:[#allocation3 + $0x78] sm:$0xff] %v1063
      %1089 = vst [vmem:[#allocation3 + $0x80] sm:$0xff] %v1064
      %1090 = vst.msk [vmem:[#allocation3 + $0x88] sm:$0xff] %vm1077, %v1065
      %1091 = vst [vmem:[#allocation3 + $0x90] sm:$0xff] %v1066
      %1092 = vst [vmem:[#allocation3 + $0x98] sm:$0xff] %v1067
      %1093 = vst [vmem:[#allocation3 + $0xa0] sm:$0xff] %v1068
      %1094 = vst [vmem:[#allocation3 + $0xa8] sm:$0xff] %v1069
      %1095 = vst [vmem:[#allocation3 + $0xb0] sm:$0xff] %v1070
      %1096 = vst.msk [vmem:[#allocation3 + $0xb8] sm:$0xff] %vm1077, %v1071
      %vm1097 = vcmask 294144
      %1098 = vst.msk [vmem:[#allocation3 + $0x28] sm:$0xff] %vm1097, 0.0
      %1099 = vst.msk [vmem:[#allocation3 + $0x58] sm:$0xff] %vm1097, 0.0
      %1100 = vst.msk [vmem:[#allocation3 + $0x88] sm:$0xff] %vm1097, 0.0
      %1101 = vst.msk [vmem:[#allocation3 + $0xb8] sm:$0xff] %vm1097, 0.0
      %v1102 = vld [vmem:[#allocation3] sm:$0xff]
      %v1103 = vld [vmem:[#allocation3 + $0x8] sm:$0xff]
      %v1104 = vld [vmem:[#allocation3 + $0x10] sm:$0xff]
      %v1105 = vld [vmem:[#allocation3 + $0x18] sm:$0xff]
      %v1106 = vld [vmem:[#allocation3 + $0x20] sm:$0xff]
      %v1107 = vld [vmem:[#allocation3 + $0x30] sm:$0xff]
      %v1108 = vld [vmem:[#allocation3 + $0x38] sm:$0xff]
      %v1109 = vld [vmem:[#allocation3 + $0x40] sm:$0xff]
      %v1110 = vld [vmem:[#allocation3 + $0x48] sm:$0xff]
      %v1111 = vld [vmem:[#allocation3 + $0x50] sm:$0xff]
      %v1112 = vld [vmem:[#allocation3 + $0x60] sm:$0xff]
      %v1113 = vld [vmem:[#allocation3 + $0x68] sm:$0xff]
      %v1114 = vld [vmem:[#allocation3 + $0x70] sm:$0xff]
      %v1115 = vld [vmem:[#allocation3 + $0x78] sm:$0xff]
      %v1116 = vld [vmem:[#allocation3 + $0x80] sm:$0xff]
      %v1117 = vld [vmem:[#allocation3 + $0x90] sm:$0xff]
      %v1118 = vld [vmem:[#allocation3 + $0x98] sm:$0xff]
      %v1119 = vld [vmem:[#allocation3 + $0xa0] sm:$0xff]
      %v1120 = vld [vmem:[#allocation3 + $0xa8] sm:$0xff]
      %v1121 = vld [vmem:[#allocation3 + $0xb0] sm:$0xff]
      %1122 = vst [vmem:[#allocation4] sm:$0xff] %v1102
      %1123 = vst [vmem:[#allocation4 + $0x8] sm:$0xff] %v1103
      %1124 = vst [vmem:[#allocation4 + $0x10] sm:$0xff] %v1104
      %1125 = vst [vmem:[#allocation4 + $0x18] sm:$0xff] %v1105
      %vm1126 = vcmask 392192
      %1127 = vst.msk [vmem:[#allocation4 + $0x20] sm:$0xff] %vm1126, %v1106
      %1128 = vst [vmem:[#allocation4 + $0x28] sm:$0xff] %v1107
      %1129 = vst [vmem:[#allocation4 + $0x30] sm:$0xff] %v1108
      %1130 = vst [vmem:[#allocation4 + $0x38] sm:$0xff] %v1109
      %1131 = vst [vmem:[#allocation4 + $0x40] sm:$0xff] %v1110
      %1132 = vst.msk [vmem:[#allocation4 + $0x48] sm:$0xff] %vm1126, %v1111
      %1133 = vst [vmem:[#allocation4 + $0x50] sm:$0xff] %v1112
      %1134 = vst [vmem:[#allocation4 + $0x58] sm:$0xff] %v1113
      %1135 = vst [vmem:[#allocation4 + $0x60] sm:$0xff] %v1114
      %1136 = vst [vmem:[#allocation4 + $0x68] sm:$0xff] %v1115
      %1137 = vst.msk [vmem:[#allocation4 + $0x70] sm:$0xff] %vm1126, %v1116
      %1138 = vst [vmem:[#allocation4 + $0x78] sm:$0xff] %v1117
      %1139 = vst [vmem:[#allocation4 + $0x80] sm:$0xff] %v1118
      %1140 = vst [vmem:[#allocation4 + $0x88] sm:$0xff] %v1119
      %1141 = vst [vmem:[#allocation4 + $0x90] sm:$0xff] %v1120
      %1142 = vst.msk [vmem:[#allocation4 + $0x98] sm:$0xff] %vm1126, %v1121
      %v1143 = vld [vmem:[#allocation3] sm:$0xff]
      %v1144 = vld [vmem:[#allocation3 + $0x8] sm:$0xff]
      %v1145 = vld [vmem:[#allocation3 + $0x10] sm:$0xff]
      %v1146 = vld [vmem:[#allocation3 + $0x18] sm:$0xff]
      %v1147 = vld [vmem:[#allocation3 + $0x20] sm:$0xff]
      %v1148 = vld [vmem:[#allocation3 + $0x30] sm:$0xff]
      %v1149 = vld [vmem:[#allocation3 + $0x38] sm:$0xff]
      %v1150 = vld [vmem:[#allocation3 + $0x40] sm:$0xff]
      %v1151 = vld [vmem:[#allocation3 + $0x48] sm:$0xff]
      %v1152 = vld [vmem:[#allocation3 + $0x50] sm:$0xff]
      %v1153 = vld [vmem:[#allocation3 + $0x60] sm:$0xff]
      %v1154 = vld [vmem:[#allocation3 + $0x68] sm:$0xff]
      %v1155 = vld [vmem:[#allocation3 + $0x70] sm:$0xff]
      %v1156 = vld [vmem:[#allocation3 + $0x78] sm:$0xff]
      %v1157 = vld [vmem:[#allocation3 + $0x80] sm:$0xff]
      %v1158 = vld [vmem:[#allocation3 + $0x90] sm:$0xff]
      %v1159 = vld [vmem:[#allocation3 + $0x98] sm:$0xff]
      %v1160 = vld [vmem:[#allocation3 + $0xa0] sm:$0xff]
      %v1161 = vld [vmem:[#allocation3 + $0xa8] sm:$0xff]
      %v1162 = vld [vmem:[#allocation3 + $0xb0] sm:$0xff]
      %1183 = vrot.lane.b32.xlu0 %v1143, 127
      %v1184 = vpop.permute.xlu0 %1183
      %1185 = vrot.lane.b32.xlu0 %v1144, 127
      %v1186 = vpop.permute.xlu0 %1185
      %1187 = vrot.lane.b32.xlu0 %v1145, 127
      %v1188 = vpop.permute.xlu0 %1187
      %1189 = vrot.lane.b32.xlu0 %v1146, 127
      %v1190 = vpop.permute.xlu0 %1189
      %1191 = vrot.lane.b32.xlu0 %v1147, 127
      %v1192 = vpop.permute.xlu0 %1191
      %1193 = vrot.lane.b32.xlu0 %v1148, 127
      %v1194 = vpop.permute.xlu0 %1193
      %1195 = vrot.lane.b32.xlu0 %v1149, 127
      %v1196 = vpop.permute.xlu0 %1195
      %1197 = vrot.lane.b32.xlu0 %v1150, 127
      %v1198 = vpop.permute.xlu0 %1197
      %1199 = vrot.lane.b32.xlu0 %v1151, 127
      %v1200 = vpop.permute.xlu0 %1199
      %1201 = vrot.lane.b32.xlu0 %v1152, 127
      %v1202 = vpop.permute.xlu0 %1201
      %1203 = vrot.lane.b32.xlu0 %v1153, 127
      %v1204 = vpop.permute.xlu0 %1203
      %1205 = vrot.lane.b32.xlu0 %v1154, 127
      %v1206 = vpop.permute.xlu0 %1205
      %1207 = vrot.lane.b32.xlu0 %v1155, 127
      %v1208 = vpop.permute.xlu0 %1207
      %1209 = vrot.lane.b32.xlu0 %v1156, 127
      %v1210 = vpop.permute.xlu0 %1209
      %1211 = vrot.lane.b32.xlu0 %v1157, 127
      %v1212 = vpop.permute.xlu0 %1211
      %1213 = vrot.lane.b32.xlu0 %v1158, 127
      %v1214 = vpop.permute.xlu0 %1213
      %1215 = vrot.lane.b32.xlu0 %v1159, 127
      %v1216 = vpop.permute.xlu0 %1215
      %1217 = vrot.lane.b32.xlu0 %v1160, 127
      %v1218 = vpop.permute.xlu0 %1217
      %1219 = vrot.lane.b32.xlu0 %v1161, 127
      %v1220 = vpop.permute.xlu0 %1219
      %1221 = vrot.lane.b32.xlu0 %v1162, 127
      %v1222 = vpop.permute.xlu0 %1221
      %v1223 = vsel %vm446, %v1184, %v1186
      %v1224 = vsel %vm446, %v1186, %v1188
      %v1225 = vsel %vm446, %v1188, %v1190
      %v1226 = vsel %vm446, %v1190, %v1192
      %v1227 = vsel %vm446, %v1194, %v1196
      %v1228 = vsel %vm446, %v1196, %v1198
      %v1229 = vsel %vm446, %v1198, %v1200
      %v1230 = vsel %vm446, %v1200, %v1202
      %v1231 = vsel %vm446, %v1204, %v1206
      %v1232 = vsel %vm446, %v1206, %v1208
      %v1233 = vsel %vm446, %v1208, %v1210
      %v1234 = vsel %vm446, %v1210, %v1212
      %v1235 = vsel %vm446, %v1214, %v1216
      %v1236 = vsel %vm446, %v1216, %v1218
      %v1237 = vsel %vm446, %v1218, %v1220
      %v1238 = vsel %vm446, %v1220, %v1222
      %1259 = vst [vmem:[#allocation4 + $0xa0] sm:$0xff] %v1223
      %1260 = vst [vmem:[#allocation4 + $0xa8] sm:$0xff] %v1224
      %1261 = vst [vmem:[#allocation4 + $0xb0] sm:$0xff] %v1225
      %1262 = vst [vmem:[#allocation4 + $0xb8] sm:$0xff] %v1226
      %1263 = vst.msk [vmem:[#allocation4 + $0xc0] sm:$0xff] %vm1126, %v1192
      %1264 = vst [vmem:[#allocation4 + $0xc8] sm:$0xff] %v1227
      %1265 = vst [vmem:[#allocation4 + $0xd0] sm:$0xff] %v1228
      %1266 = vst [vmem:[#allocation4 + $0xd8] sm:$0xff] %v1229
      %1267 = vst [vmem:[#allocation4 + $0xe0] sm:$0xff] %v1230
      %1268 = vst.msk [vmem:[#allocation4 + $0xe8] sm:$0xff] %vm1126, %v1202
      %1269 = vst [vmem:[#allocation4 + $0xf0] sm:$0xff] %v1231
      %1270 = vst [vmem:[#allocation4 + $0xf8] sm:$0xff] %v1232
      %1271 = vst [vmem:[#allocation4 + $0x100] sm:$0xff] %v1233
      %1272 = vst [vmem:[#allocation4 + $0x108] sm:$0xff] %v1234
      %1273 = vst.msk [vmem:[#allocation4 + $0x110] sm:$0xff] %vm1126, %v1212
      %1274 = vst [vmem:[#allocation4 + $0x118] sm:$0xff] %v1235
      %1275 = vst [vmem:[#allocation4 + $0x120] sm:$0xff] %v1236
      %1276 = vst [vmem:[#allocation4 + $0x128] sm:$0xff] %v1237
      %1277 = vst [vmem:[#allocation4 + $0x130] sm:$0xff] %v1238
      %1278 = vst.msk [vmem:[#allocation4 + $0x138] sm:$0xff] %vm1126, %v1222
      %v1279 = vld [vmem:[#allocation3] sm:$0xff]
      %v1280 = vld [vmem:[#allocation3 + $0x8] sm:$0xff]
      %v1281 = vld [vmem:[#allocation3 + $0x10] sm:$0xff]
      %v1282 = vld [vmem:[#allocation3 + $0x18] sm:$0xff]
      %v1283 = vld [vmem:[#allocation3 + $0x20] sm:$0xff]
      %v1284 = vld [vmem:[#allocation3 + $0x30] sm:$0xff]
      %v1285 = vld [vmem:[#allocation3 + $0x38] sm:$0xff]
      %v1286 = vld [vmem:[#allocation3 + $0x40] sm:$0xff]
      %v1287 = vld [vmem:[#allocation3 + $0x48] sm:$0xff]
      %v1288 = vld [vmem:[#allocation3 + $0x50] sm:$0xff]
      %v1289 = vld [vmem:[#allocation3 + $0x60] sm:$0xff]
      %v1290 = vld [vmem:[#allocation3 + $0x68] sm:$0xff]
      %v1291 = vld [vmem:[#allocation3 + $0x70] sm:$0xff]
      %v1292 = vld [vmem:[#allocation3 + $0x78] sm:$0xff]
      %v1293 = vld [vmem:[#allocation3 + $0x80] sm:$0xff]
      %v1294 = vld [vmem:[#allocation3 + $0x90] sm:$0xff]
      %v1295 = vld [vmem:[#allocation3 + $0x98] sm:$0xff]
      %v1296 = vld [vmem:[#allocation3 + $0xa0] sm:$0xff]
      %v1297 = vld [vmem:[#allocation3 + $0xa8] sm:$0xff]
      %v1298 = vld [vmem:[#allocation3 + $0xb0] sm:$0xff]
      %1319 = vrot.lane.b32.xlu0 %v1279, 126
      %v1320 = vpop.permute.xlu0 %1319
      %1321 = vrot.lane.b32.xlu0 %v1280, 126
      %v1322 = vpop.permute.xlu0 %1321
      %1323 = vrot.lane.b32.xlu0 %v1281, 126
      %v1324 = vpop.permute.xlu0 %1323
      %1325 = vrot.lane.b32.xlu0 %v1282, 126
      %v1326 = vpop.permute.xlu0 %1325
      %1327 = vrot.lane.b32.xlu0 %v1283, 126
      %v1328 = vpop.permute.xlu0 %1327
      %1329 = vrot.lane.b32.xlu0 %v1284, 126
      %v1330 = vpop.permute.xlu0 %1329
      %1331 = vrot.lane.b32.xlu0 %v1285, 126
      %v1332 = vpop.permute.xlu0 %1331
      %1333 = vrot.lane.b32.xlu0 %v1286, 126
      %v1334 = vpop.permute.xlu0 %1333
      %1335 = vrot.lane.b32.xlu0 %v1287, 126
      %v1336 = vpop.permute.xlu0 %1335
      %1337 = vrot.lane.b32.xlu0 %v1288, 126
      %v1338 = vpop.permute.xlu0 %1337
      %1339 = vrot.lane.b32.xlu0 %v1289, 126
      %v1340 = vpop.permute.xlu0 %1339
      %1341 = vrot.lane.b32.xlu0 %v1290, 126
      %v1342 = vpop.permute.xlu0 %1341
      %1343 = vrot.lane.b32.xlu0 %v1291, 126
      %v1344 = vpop.permute.xlu0 %1343
      %1345 = vrot.lane.b32.xlu0 %v1292, 126
      %v1346 = vpop.permute.xlu0 %1345
      %1347 = vrot.lane.b32.xlu0 %v1293, 126
      %v1348 = vpop.permute.xlu0 %1347
      %1349 = vrot.lane.b32.xlu0 %v1294, 126
      %v1350 = vpop.permute.xlu0 %1349
      %1351 = vrot.lane.b32.xlu0 %v1295, 126
      %v1352 = vpop.permute.xlu0 %1351
      %1353 = vrot.lane.b32.xlu0 %v1296, 126
      %v1354 = vpop.permute.xlu0 %1353
      %1355 = vrot.lane.b32.xlu0 %v1297, 126
      %v1356 = vpop.permute.xlu0 %1355
      %1357 = vrot.lane.b32.xlu0 %v1298, 126
      %v1358 = vpop.permute.xlu0 %1357
      %v1359 = vsel %vm457, %v1320, %v1322
      %v1360 = vsel %vm457, %v1322, %v1324
      %v1361 = vsel %vm457, %v1324, %v1326
      %v1362 = vsel %vm457, %v1326, %v1328
      %v1363 = vsel %vm457, %v1330, %v1332
      %v1364 = vsel %vm457, %v1332, %v1334
      %v1365 = vsel %vm457, %v1334, %v1336
      %v1366 = vsel %vm457, %v1336, %v1338
      %v1367 = vsel %vm457, %v1340, %v1342
      %v1368 = vsel %vm457, %v1342, %v1344
      %v1369 = vsel %vm457, %v1344, %v1346
      %v1370 = vsel %vm457, %v1346, %v1348
      %v1371 = vsel %vm457, %v1350, %v1352
      %v1372 = vsel %vm457, %v1352, %v1354
      %v1373 = vsel %vm457, %v1354, %v1356
      %v1374 = vsel %vm457, %v1356, %v1358
      %1395 = vst [vmem:[#allocation4 + $0x140] sm:$0xff] %v1359
      %1396 = vst [vmem:[#allocation4 + $0x148] sm:$0xff] %v1360
      %1397 = vst [vmem:[#allocation4 + $0x150] sm:$0xff] %v1361
      %1398 = vst [vmem:[#allocation4 + $0x158] sm:$0xff] %v1362
      %1399 = vst.msk [vmem:[#allocation4 + $0x160] sm:$0xff] %vm1126, %v1328
      %1400 = vst [vmem:[#allocation4 + $0x168] sm:$0xff] %v1363
      %1401 = vst [vmem:[#allocation4 + $0x170] sm:$0xff] %v1364
      %1402 = vst [vmem:[#allocation4 + $0x178] sm:$0xff] %v1365
      %1403 = vst [vmem:[#allocation4 + $0x180] sm:$0xff] %v1366
      %1404 = vst.msk [vmem:[#allocation4 + $0x188] sm:$0xff] %vm1126, %v1338
      %1405 = vst [vmem:[#allocation4 + $0x190] sm:$0xff] %v1367
      %1406 = vst [vmem:[#allocation4 + $0x198] sm:$0xff] %v1368
      %1407 = vst [vmem:[#allocation4 + $0x1a0] sm:$0xff] %v1369
      %1408 = vst [vmem:[#allocation4 + $0x1a8] sm:$0xff] %v1370
      %1409 = vst.msk [vmem:[#allocation4 + $0x1b0] sm:$0xff] %vm1126, %v1348
      %1410 = vst [vmem:[#allocation4 + $0x1b8] sm:$0xff] %v1371
      %1411 = vst [vmem:[#allocation4 + $0x1c0] sm:$0xff] %v1372
      %1412 = vst [vmem:[#allocation4 + $0x1c8] sm:$0xff] %v1373
      %1413 = vst [vmem:[#allocation4 + $0x1d0] sm:$0xff] %v1374
      %1414 = vst.msk [vmem:[#allocation4 + $0x1d8] sm:$0xff] %vm1126, %v1358
      %v1415 = vld [vmem:[#allocation3] sm:$0xff]
      %v1416 = vld [vmem:[#allocation3 + $0x8] sm:$0xff]
      %v1417 = vld [vmem:[#allocation3 + $0x10] sm:$0xff]
      %v1418 = vld [vmem:[#allocation3 + $0x18] sm:$0xff]
      %v1419 = vld [vmem:[#allocation3 + $0x20] sm:$0xff]
      %v1420 = vld [vmem:[#allocation3 + $0x30] sm:$0xff]
      %v1421 = vld [vmem:[#allocation3 + $0x38] sm:$0xff]
      %v1422 = vld [vmem:[#allocation3 + $0x40] sm:$0xff]
      %v1423 = vld [vmem:[#allocation3 + $0x48] sm:$0xff]
      %v1424 = vld [vmem:[#allocation3 + $0x50] sm:$0xff]
      %v1425 = vld [vmem:[#allocation3 + $0x60] sm:$0xff]
      %v1426 = vld [vmem:[#allocation3 + $0x68] sm:$0xff]
      %v1427 = vld [vmem:[#allocation3 + $0x70] sm:$0xff]
      %v1428 = vld [vmem:[#allocation3 + $0x78] sm:$0xff]
      %v1429 = vld [vmem:[#allocation3 + $0x80] sm:$0xff]
      %v1430 = vld [vmem:[#allocation3 + $0x90] sm:$0xff]
      %v1431 = vld [vmem:[#allocation3 + $0x98] sm:$0xff]
      %v1432 = vld [vmem:[#allocation3 + $0xa0] sm:$0xff]
      %v1433 = vld [vmem:[#allocation3 + $0xa8] sm:$0xff]
      %v1434 = vld [vmem:[#allocation3 + $0xb0] sm:$0xff]
      %1455 = vrot.lane.b32.xlu0 %v1415, 125
      %v1456 = vpop.permute.xlu0 %1455
      %1457 = vrot.lane.b32.xlu0 %v1416, 125
      %v1458 = vpop.permute.xlu0 %1457
      %1459 = vrot.lane.b32.xlu0 %v1417, 125
      %v1460 = vpop.permute.xlu0 %1459
      %1461 = vrot.lane.b32.xlu0 %v1418, 125
      %v1462 = vpop.permute.xlu0 %1461
      %1463 = vrot.lane.b32.xlu0 %v1419, 125
      %v1464 = vpop.permute.xlu0 %1463
      %1465 = vrot.lane.b32.xlu0 %v1420, 125
      %v1466 = vpop.permute.xlu0 %1465
      %1467 = vrot.lane.b32.xlu0 %v1421, 125
      %v1468 = vpop.permute.xlu0 %1467
      %1469 = vrot.lane.b32.xlu0 %v1422, 125
      %v1470 = vpop.permute.xlu0 %1469
      %1471 = vrot.lane.b32.xlu0 %v1423, 125
      %v1472 = vpop.permute.xlu0 %1471
      %1473 = vrot.lane.b32.xlu0 %v1424, 125
      %v1474 = vpop.permute.xlu0 %1473
      %1475 = vrot.lane.b32.xlu0 %v1425, 125
      %v1476 = vpop.permute.xlu0 %1475
      %1477 = vrot.lane.b32.xlu0 %v1426, 125
      %v1478 = vpop.permute.xlu0 %1477
      %1479 = vrot.lane.b32.xlu0 %v1427, 125
      %v1480 = vpop.permute.xlu0 %1479
      %1481 = vrot.lane.b32.xlu0 %v1428, 125
      %v1482 = vpop.permute.xlu0 %1481
      %1483 = vrot.lane.b32.xlu0 %v1429, 125
      %v1484 = vpop.permute.xlu0 %1483
      %1485 = vrot.lane.b32.xlu0 %v1430, 125
      %v1486 = vpop.permute.xlu0 %1485
      %1487 = vrot.lane.b32.xlu0 %v1431, 125
      %v1488 = vpop.permute.xlu0 %1487
      %1489 = vrot.lane.b32.xlu0 %v1432, 125
      %v1490 = vpop.permute.xlu0 %1489
      %1491 = vrot.lane.b32.xlu0 %v1433, 125
      %v1492 = vpop.permute.xlu0 %1491
      %1493 = vrot.lane.b32.xlu0 %v1434, 125
      %v1494 = vpop.permute.xlu0 %1493
      %v1495 = vsel %vm468, %v1456, %v1458
      %v1496 = vsel %vm468, %v1458, %v1460
      %v1497 = vsel %vm468, %v1460, %v1462
      %v1498 = vsel %vm468, %v1462, %v1464
      %v1499 = vsel %vm468, %v1466, %v1468
      %v1500 = vsel %vm468, %v1468, %v1470
      %v1501 = vsel %vm468, %v1470, %v1472
      %v1502 = vsel %vm468, %v1472, %v1474
      %v1503 = vsel %vm468, %v1476, %v1478
      %v1504 = vsel %vm468, %v1478, %v1480
      %v1505 = vsel %vm468, %v1480, %v1482
      %v1506 = vsel %vm468, %v1482, %v1484
      %v1507 = vsel %vm468, %v1486, %v1488
      %v1508 = vsel %vm468, %v1488, %v1490
      %v1509 = vsel %vm468, %v1490, %v1492
      %v1510 = vsel %vm468, %v1492, %v1494
      %1531 = vst [vmem:[#allocation4 + $0x1e0] sm:$0xff] %v1495
      %1532 = vst [vmem:[#allocation4 + $0x1e8] sm:$0xff] %v1496
      %1533 = vst [vmem:[#allocation4 + $0x1f0] sm:$0xff] %v1497
      %1534 = vst [vmem:[#allocation4 + $0x1f8] sm:$0xff] %v1498
      %1535 = vst.msk [vmem:[#allocation4 + $0x200] sm:$0xff] %vm1126, %v1464
      %1536 = vst [vmem:[#allocation4 + $0x208] sm:$0xff] %v1499
      %1537 = vst [vmem:[#allocation4 + $0x210] sm:$0xff] %v1500
      %1538 = vst [vmem:[#allocation4 + $0x218] sm:$0xff] %v1501
      %1539 = vst [vmem:[#allocation4 + $0x220] sm:$0xff] %v1502
      %1540 = vst.msk [vmem:[#allocation4 + $0x228] sm:$0xff] %vm1126, %v1474
      %1541 = vst [vmem:[#allocation4 + $0x230] sm:$0xff] %v1503
      %1542 = vst [vmem:[#allocation4 + $0x238] sm:$0xff] %v1504
      %1543 = vst [vmem:[#allocation4 + $0x240] sm:$0xff] %v1505
      %1544 = vst [vmem:[#allocation4 + $0x248] sm:$0xff] %v1506
      %1545 = vst.msk [vmem:[#allocation4 + $0x250] sm:$0xff] %vm1126, %v1484
      %1546 = vst [vmem:[#allocation4 + $0x258] sm:$0xff] %v1507
      %1547 = vst [vmem:[#allocation4 + $0x260] sm:$0xff] %v1508
      %1548 = vst [vmem:[#allocation4 + $0x268] sm:$0xff] %v1509
      %1549 = vst [vmem:[#allocation4 + $0x270] sm:$0xff] %v1510
      %1550 = vst.msk [vmem:[#allocation4 + $0x278] sm:$0xff] %vm1126, %v1494
      %v1551 = vld [vmem:[#allocation3] sm:$0xff]
      %v1552 = vld [vmem:[#allocation3 + $0x8] sm:$0xff]
      %v1553 = vld [vmem:[#allocation3 + $0x10] sm:$0xff]
      %v1554 = vld [vmem:[#allocation3 + $0x18] sm:$0xff]
      %v1555 = vld [vmem:[#allocation3 + $0x20] sm:$0xff]
      %v1556 = vld [vmem:[#allocation3 + $0x30] sm:$0xff]
      %v1557 = vld [vmem:[#allocation3 + $0x38] sm:$0xff]
      %v1558 = vld [vmem:[#allocation3 + $0x40] sm:$0xff]
      %v1559 = vld [vmem:[#allocation3 + $0x48] sm:$0xff]
      %v1560 = vld [vmem:[#allocation3 + $0x50] sm:$0xff]
      %v1561 = vld [vmem:[#allocation3 + $0x60] sm:$0xff]
      %v1562 = vld [vmem:[#allocation3 + $0x68] sm:$0xff]
      %v1563 = vld [vmem:[#allocation3 + $0x70] sm:$0xff]
      %v1564 = vld [vmem:[#allocation3 + $0x78] sm:$0xff]
      %v1565 = vld [vmem:[#allocation3 + $0x80] sm:$0xff]
      %v1566 = vld [vmem:[#allocation3 + $0x90] sm:$0xff]
      %v1567 = vld [vmem:[#allocation3 + $0x98] sm:$0xff]
      %v1568 = vld [vmem:[#allocation3 + $0xa0] sm:$0xff]
      %v1569 = vld [vmem:[#allocation3 + $0xa8] sm:$0xff]
      %v1570 = vld [vmem:[#allocation3 + $0xb0] sm:$0xff]
      %1591 = vrot.lane.b32.xlu0 %v1551, 124
      %v1592 = vpop.permute.xlu0 %1591
      %1593 = vrot.lane.b32.xlu0 %v1552, 124
      %v1594 = vpop.permute.xlu0 %1593
      %1595 = vrot.lane.b32.xlu0 %v1553, 124
      %v1596 = vpop.permute.xlu0 %1595
      %1597 = vrot.lane.b32.xlu0 %v1554, 124
      %v1598 = vpop.permute.xlu0 %1597
      %1599 = vrot.lane.b32.xlu0 %v1555, 124
      %v1600 = vpop.permute.xlu0 %1599
      %1601 = vrot.lane.b32.xlu0 %v1556, 124
      %v1602 = vpop.permute.xlu0 %1601
      %1603 = vrot.lane.b32.xlu0 %v1557, 124
      %v1604 = vpop.permute.xlu0 %1603
      %1605 = vrot.lane.b32.xlu0 %v1558, 124
      %v1606 = vpop.permute.xlu0 %1605
      %1607 = vrot.lane.b32.xlu0 %v1559, 124
      %v1608 = vpop.permute.xlu0 %1607
      %1609 = vrot.lane.b32.xlu0 %v1560, 124
      %v1610 = vpop.permute.xlu0 %1609
      %1611 = vrot.lane.b32.xlu0 %v1561, 124
      %v1612 = vpop.permute.xlu0 %1611
      %1613 = vrot.lane.b32.xlu0 %v1562, 124
      %v1614 = vpop.permute.xlu0 %1613
      %1615 = vrot.lane.b32.xlu0 %v1563, 124
      %v1616 = vpop.permute.xlu0 %1615
      %1617 = vrot.lane.b32.xlu0 %v1564, 124
      %v1618 = vpop.permute.xlu0 %1617
      %1619 = vrot.lane.b32.xlu0 %v1565, 124
      %v1620 = vpop.permute.xlu0 %1619
      %1621 = vrot.lane.b32.xlu0 %v1566, 124
      %v1622 = vpop.permute.xlu0 %1621
      %1623 = vrot.lane.b32.xlu0 %v1567, 124
      %v1624 = vpop.permute.xlu0 %1623
      %1625 = vrot.lane.b32.xlu0 %v1568, 124
      %v1626 = vpop.permute.xlu0 %1625
      %1627 = vrot.lane.b32.xlu0 %v1569, 124
      %v1628 = vpop.permute.xlu0 %1627
      %1629 = vrot.lane.b32.xlu0 %v1570, 124
      %v1630 = vpop.permute.xlu0 %1629
      %v1631 = vsel %vm479, %v1592, %v1594
      %v1632 = vsel %vm479, %v1594, %v1596
      %v1633 = vsel %vm479, %v1596, %v1598
      %v1634 = vsel %vm479, %v1598, %v1600
      %v1635 = vsel %vm479, %v1602, %v1604
      %v1636 = vsel %vm479, %v1604, %v1606
      %v1637 = vsel %vm479, %v1606, %v1608
      %v1638 = vsel %vm479, %v1608, %v1610
      %v1639 = vsel %vm479, %v1612, %v1614
      %v1640 = vsel %vm479, %v1614, %v1616
      %v1641 = vsel %vm479, %v1616, %v1618
      %v1642 = vsel %vm479, %v1618, %v1620
      %v1643 = vsel %vm479, %v1622, %v1624
      %v1644 = vsel %vm479, %v1624, %v1626
      %v1645 = vsel %vm479, %v1626, %v1628
      %v1646 = vsel %vm479, %v1628, %v1630
      %1667 = vst [vmem:[#allocation4 + $0x280] sm:$0xff] %v1631
      %1668 = vst [vmem:[#allocation4 + $0x288] sm:$0xff] %v1632
      %1669 = vst [vmem:[#allocation4 + $0x290] sm:$0xff] %v1633
      %1670 = vst [vmem:[#allocation4 + $0x298] sm:$0xff] %v1634
      %1671 = vst.msk [vmem:[#allocation4 + $0x2a0] sm:$0xff] %vm1126, %v1600
      %1672 = vst [vmem:[#allocation4 + $0x2a8] sm:$0xff] %v1635
      %1673 = vst [vmem:[#allocation4 + $0x2b0] sm:$0xff] %v1636
      %1674 = vst [vmem:[#allocation4 + $0x2b8] sm:$0xff] %v1637
      %1675 = vst [vmem:[#allocation4 + $0x2c0] sm:$0xff] %v1638
      %1676 = vst.msk [vmem:[#allocation4 + $0x2c8] sm:$0xff] %vm1126, %v1610
      %1677 = vst [vmem:[#allocation4 + $0x2d0] sm:$0xff] %v1639
      %1678 = vst [vmem:[#allocation4 + $0x2d8] sm:$0xff] %v1640
      %1679 = vst [vmem:[#allocation4 + $0x2e0] sm:$0xff] %v1641
      %1680 = vst [vmem:[#allocation4 + $0x2e8] sm:$0xff] %v1642
      %1681 = vst.msk [vmem:[#allocation4 + $0x2f0] sm:$0xff] %vm1126, %v1620
      %1682 = vst [vmem:[#allocation4 + $0x2f8] sm:$0xff] %v1643
      %1683 = vst [vmem:[#allocation4 + $0x300] sm:$0xff] %v1644
      %1684 = vst [vmem:[#allocation4 + $0x308] sm:$0xff] %v1645
      %1685 = vst [vmem:[#allocation4 + $0x310] sm:$0xff] %v1646
      %1686 = vst.msk [vmem:[#allocation4 + $0x318] sm:$0xff] %vm1126, %v1630
      %v1687 = vld [vmem:[#allocation3] sm:$0xff]
      %v1688 = vld [vmem:[#allocation3 + $0x8] sm:$0xff]
      %v1689 = vld [vmem:[#allocation3 + $0x10] sm:$0xff]
      %v1690 = vld [vmem:[#allocation3 + $0x18] sm:$0xff]
      %v1691 = vld [vmem:[#allocation3 + $0x20] sm:$0xff]
      %v1692 = vld [vmem:[#allocation3 + $0x30] sm:$0xff]
      %v1693 = vld [vmem:[#allocation3 + $0x38] sm:$0xff]
      %v1694 = vld [vmem:[#allocation3 + $0x40] sm:$0xff]
      %v1695 = vld [vmem:[#allocation3 + $0x48] sm:$0xff]
      %v1696 = vld [vmem:[#allocation3 + $0x50] sm:$0xff]
      %v1697 = vld [vmem:[#allocation3 + $0x60] sm:$0xff]
      %v1698 = vld [vmem:[#allocation3 + $0x68] sm:$0xff]
      %v1699 = vld [vmem:[#allocation3 + $0x70] sm:$0xff]
      %v1700 = vld [vmem:[#allocation3 + $0x78] sm:$0xff]
      %v1701 = vld [vmem:[#allocation3 + $0x80] sm:$0xff]
      %v1702 = vld [vmem:[#allocation3 + $0x90] sm:$0xff]
      %v1703 = vld [vmem:[#allocation3 + $0x98] sm:$0xff]
      %v1704 = vld [vmem:[#allocation3 + $0xa0] sm:$0xff]
      %v1705 = vld [vmem:[#allocation3 + $0xa8] sm:$0xff]
      %v1706 = vld [vmem:[#allocation3 + $0xb0] sm:$0xff]
      %1727 = vrot.lane.b32.xlu0 %v1687, 100
      %v1728 = vpop.permute.xlu0 %1727
      %1729 = vrot.lane.b32.xlu0 %v1688, 100
      %v1730 = vpop.permute.xlu0 %1729
      %1731 = vrot.lane.b32.xlu0 %v1689, 100
      %v1732 = vpop.permute.xlu0 %1731
      %1733 = vrot.lane.b32.xlu0 %v1690, 100
      %v1734 = vpop.permute.xlu0 %1733
      %1735 = vrot.lane.b32.xlu0 %v1691, 100
      %v1736 = vpop.permute.xlu0 %1735
      %1737 = vrot.lane.b32.xlu0 %v1692, 100
      %v1738 = vpop.permute.xlu0 %1737
      %1739 = vrot.lane.b32.xlu0 %v1693, 100
      %v1740 = vpop.permute.xlu0 %1739
      %1741 = vrot.lane.b32.xlu0 %v1694, 100
      %v1742 = vpop.permute.xlu0 %1741
      %1743 = vrot.lane.b32.xlu0 %v1695, 100
      %v1744 = vpop.permute.xlu0 %1743
      %1745 = vrot.lane.b32.xlu0 %v1696, 100
      %v1746 = vpop.permute.xlu0 %1745
      %1747 = vrot.lane.b32.xlu0 %v1697, 100
      %v1748 = vpop.permute.xlu0 %1747
      %1749 = vrot.lane.b32.xlu0 %v1698, 100
      %v1750 = vpop.permute.xlu0 %1749
      %1751 = vrot.lane.b32.xlu0 %v1699, 100
      %v1752 = vpop.permute.xlu0 %1751
      %1753 = vrot.lane.b32.xlu0 %v1700, 100
      %v1754 = vpop.permute.xlu0 %1753
      %1755 = vrot.lane.b32.xlu0 %v1701, 100
      %v1756 = vpop.permute.xlu0 %1755
      %1757 = vrot.lane.b32.xlu0 %v1702, 100
      %v1758 = vpop.permute.xlu0 %1757
      %1759 = vrot.lane.b32.xlu0 %v1703, 100
      %v1760 = vpop.permute.xlu0 %1759
      %1761 = vrot.lane.b32.xlu0 %v1704, 100
      %v1762 = vpop.permute.xlu0 %1761
      %1763 = vrot.lane.b32.xlu0 %v1705, 100
      %v1764 = vpop.permute.xlu0 %1763
      %1765 = vrot.lane.b32.xlu0 %v1706, 100
      %v1766 = vpop.permute.xlu0 %1765
      %v1767 = vsel %vm490, %v1728, %v1730
      %v1768 = vsel %vm490, %v1730, %v1732
      %v1769 = vsel %vm490, %v1732, %v1734
      %v1770 = vsel %vm490, %v1734, %v1736
      %v1771 = vsel %vm490, %v1738, %v1740
      %v1772 = vsel %vm490, %v1740, %v1742
      %v1773 = vsel %vm490, %v1742, %v1744
      %v1774 = vsel %vm490, %v1744, %v1746
      %v1775 = vsel %vm490, %v1748, %v1750
      %v1776 = vsel %vm490, %v1750, %v1752
      %v1777 = vsel %vm490, %v1752, %v1754
      %v1778 = vsel %vm490, %v1754, %v1756
      %v1779 = vsel %vm490, %v1758, %v1760
      %v1780 = vsel %vm490, %v1760, %v1762
      %v1781 = vsel %vm490, %v1762, %v1764
      %v1782 = vsel %vm490, %v1764, %v1766
      %1803 = vst [vmem:[#allocation4 + $0x320] sm:$0xff] %v1767
      %1804 = vst [vmem:[#allocation4 + $0x328] sm:$0xff] %v1768
      %1805 = vst [vmem:[#allocation4 + $0x330] sm:$0xff] %v1769
      %1806 = vst [vmem:[#allocation4 + $0x338] sm:$0xff] %v1770
      %1807 = vst.msk [vmem:[#allocation4 + $0x340] sm:$0xff] %vm1126, %v1736
      %1808 = vst [vmem:[#allocation4 + $0x348] sm:$0xff] %v1771
      %1809 = vst [vmem:[#allocation4 + $0x350] sm:$0xff] %v1772
      %1810 = vst [vmem:[#allocation4 + $0x358] sm:$0xff] %v1773
      %1811 = vst [vmem:[#allocation4 + $0x360] sm:$0xff] %v1774
      %1812 = vst.msk [vmem:[#allocation4 + $0x368] sm:$0xff] %vm1126, %v1746
      %1813 = vst [vmem:[#allocation4 + $0x370] sm:$0xff] %v1775
      %1814 = vst [vmem:[#allocation4 + $0x378] sm:$0xff] %v1776
      %1815 = vst [vmem:[#allocation4 + $0x380] sm:$0xff] %v1777
      %1816 = vst [vmem:[#allocation4 + $0x388] sm:$0xff] %v1778
      %1817 = vst.msk [vmem:[#allocation4 + $0x390] sm:$0xff] %vm1126, %v1756
      %1818 = vst [vmem:[#allocation4 + $0x398] sm:$0xff] %v1779
      %1819 = vst [vmem:[#allocation4 + $0x3a0] sm:$0xff] %v1780
      %1820 = vst [vmem:[#allocation4 + $0x3a8] sm:$0xff] %v1781
      %1821 = vst [vmem:[#allocation4 + $0x3b0] sm:$0xff] %v1782
      %1822 = vst.msk [vmem:[#allocation4 + $0x3b8] sm:$0xff] %vm1126, %v1766
      %v1823 = vld [vmem:[#allocation3] sm:$0xff]
      %v1824 = vld [vmem:[#allocation3 + $0x8] sm:$0xff]
      %v1825 = vld [vmem:[#allocation3 + $0x10] sm:$0xff]
      %v1826 = vld [vmem:[#allocation3 + $0x18] sm:$0xff]
      %v1827 = vld [vmem:[#allocation3 + $0x20] sm:$0xff]
      %v1828 = vld [vmem:[#allocation3 + $0x30] sm:$0xff]
      %v1829 = vld [vmem:[#allocation3 + $0x38] sm:$0xff]
      %v1830 = vld [vmem:[#allocation3 + $0x40] sm:$0xff]
      %v1831 = vld [vmem:[#allocation3 + $0x48] sm:$0xff]
      %v1832 = vld [vmem:[#allocation3 + $0x50] sm:$0xff]
      %v1833 = vld [vmem:[#allocation3 + $0x60] sm:$0xff]
      %v1834 = vld [vmem:[#allocation3 + $0x68] sm:$0xff]
      %v1835 = vld [vmem:[#allocation3 + $0x70] sm:$0xff]
      %v1836 = vld [vmem:[#allocation3 + $0x78] sm:$0xff]
      %v1837 = vld [vmem:[#allocation3 + $0x80] sm:$0xff]
      %v1838 = vld [vmem:[#allocation3 + $0x90] sm:$0xff]
      %v1839 = vld [vmem:[#allocation3 + $0x98] sm:$0xff]
      %v1840 = vld [vmem:[#allocation3 + $0xa0] sm:$0xff]
      %v1841 = vld [vmem:[#allocation3 + $0xa8] sm:$0xff]
      %v1842 = vld [vmem:[#allocation3 + $0xb0] sm:$0xff]
      %1863 = vrot.lane.b32.xlu0 %v1823, 99
      %v1864 = vpop.permute.xlu0 %1863
      %1865 = vrot.lane.b32.xlu0 %v1824, 99
      %v1866 = vpop.permute.xlu0 %1865
      %1867 = vrot.lane.b32.xlu0 %v1825, 99
      %v1868 = vpop.permute.xlu0 %1867
      %1869 = vrot.lane.b32.xlu0 %v1826, 99
      %v1870 = vpop.permute.xlu0 %1869
      %1871 = vrot.lane.b32.xlu0 %v1827, 99
      %v1872 = vpop.permute.xlu0 %1871
      %1873 = vrot.lane.b32.xlu0 %v1828, 99
      %v1874 = vpop.permute.xlu0 %1873
      %1875 = vrot.lane.b32.xlu0 %v1829, 99
      %v1876 = vpop.permute.xlu0 %1875
      %1877 = vrot.lane.b32.xlu0 %v1830, 99
      %v1878 = vpop.permute.xlu0 %1877
      %1879 = vrot.lane.b32.xlu0 %v1831, 99
      %v1880 = vpop.permute.xlu0 %1879
      %1881 = vrot.lane.b32.xlu0 %v1832, 99
      %v1882 = vpop.permute.xlu0 %1881
      %1883 = vrot.lane.b32.xlu0 %v1833, 99
      %v1884 = vpop.permute.xlu0 %1883
      %1885 = vrot.lane.b32.xlu0 %v1834, 99
      %v1886 = vpop.permute.xlu0 %1885
      %1887 = vrot.lane.b32.xlu0 %v1835, 99
      %v1888 = vpop.permute.xlu0 %1887
      %1889 = vrot.lane.b32.xlu0 %v1836, 99
      %v1890 = vpop.permute.xlu0 %1889
      %1891 = vrot.lane.b32.xlu0 %v1837, 99
      %v1892 = vpop.permute.xlu0 %1891
      %1893 = vrot.lane.b32.xlu0 %v1838, 99
      %v1894 = vpop.permute.xlu0 %1893
      %1895 = vrot.lane.b32.xlu0 %v1839, 99
      %v1896 = vpop.permute.xlu0 %1895
      %1897 = vrot.lane.b32.xlu0 %v1840, 99
      %v1898 = vpop.permute.xlu0 %1897
      %1899 = vrot.lane.b32.xlu0 %v1841, 99
      %v1900 = vpop.permute.xlu0 %1899
      %1901 = vrot.lane.b32.xlu0 %v1842, 99
      %v1902 = vpop.permute.xlu0 %1901
      %v1903 = vsel %vm501, %v1864, %v1866
      %v1904 = vsel %vm501, %v1866, %v1868
      %v1905 = vsel %vm501, %v1868, %v1870
      %v1906 = vsel %vm501, %v1870, %v1872
      %v1907 = vsel %vm501, %v1874, %v1876
      %v1908 = vsel %vm501, %v1876, %v1878
      %v1909 = vsel %vm501, %v1878, %v1880
      %v1910 = vsel %vm501, %v1880, %v1882
      %v1911 = vsel %vm501, %v1884, %v1886
      %v1912 = vsel %vm501, %v1886, %v1888
      %v1913 = vsel %vm501, %v1888, %v1890
      %v1914 = vsel %vm501, %v1890, %v1892
      %v1915 = vsel %vm501, %v1894, %v1896
      %v1916 = vsel %vm501, %v1896, %v1898
      %v1917 = vsel %vm501, %v1898, %v1900
      %v1918 = vsel %vm501, %v1900, %v1902
      %1939 = vst [vmem:[#allocation4 + $0x3c0] sm:$0xff] %v1903
      %1940 = vst [vmem:[#allocation4 + $0x3c8] sm:$0xff] %v1904
      %1941 = vst [vmem:[#allocation4 + $0x3d0] sm:$0xff] %v1905
      %1942 = vst [vmem:[#allocation4 + $0x3d8] sm:$0xff] %v1906
      %1943 = vst.msk [vmem:[#allocation4 + $0x3e0] sm:$0xff] %vm1126, %v1872
      %1944 = vst [vmem:[#allocation4 + $0x3e8] sm:$0xff] %v1907
      %1945 = vst [vmem:[#allocation4 + $0x3f0] sm:$0xff] %v1908
      %1946 = vst [vmem:[#allocation4 + $0x3f8] sm:$0xff] %v1909
      %1947 = vst [vmem:[#allocation4 + $0x400] sm:$0xff] %v1910
      %1948 = vst.msk [vmem:[#allocation4 + $0x408] sm:$0xff] %vm1126, %v1882
      %1949 = vst [vmem:[#allocation4 + $0x410] sm:$0xff] %v1911
      %1950 = vst [vmem:[#allocation4 + $0x418] sm:$0xff] %v1912
      %1951 = vst [vmem:[#allocation4 + $0x420] sm:$0xff] %v1913
      %1952 = vst [vmem:[#allocation4 + $0x428] sm:$0xff] %v1914
      %1953 = vst.msk [vmem:[#allocation4 + $0x430] sm:$0xff] %vm1126, %v1892
      %1954 = vst [vmem:[#allocation4 + $0x438] sm:$0xff] %v1915
      %1955 = vst [vmem:[#allocation4 + $0x440] sm:$0xff] %v1916
      %1956 = vst [vmem:[#allocation4 + $0x448] sm:$0xff] %v1917
      %1957 = vst [vmem:[#allocation4 + $0x450] sm:$0xff] %v1918
      %1958 = vst.msk [vmem:[#allocation4 + $0x458] sm:$0xff] %vm1126, %v1902
      %v1959 = vld [vmem:[#allocation3] sm:$0xff]
      %v1960 = vld [vmem:[#allocation3 + $0x8] sm:$0xff]
      %v1961 = vld [vmem:[#allocation3 + $0x10] sm:$0xff]
      %v1962 = vld [vmem:[#allocation3 + $0x18] sm:$0xff]
      %v1963 = vld [vmem:[#allocation3 + $0x20] sm:$0xff]
      %v1964 = vld [vmem:[#allocation3 + $0x30] sm:$0xff]
      %v1965 = vld [vmem:[#allocation3 + $0x38] sm:$0xff]
      %v1966 = vld [vmem:[#allocation3 + $0x40] sm:$0xff]
      %v1967 = vld [vmem:[#allocation3 + $0x48] sm:$0xff]
      %v1968 = vld [vmem:[#allocation3 + $0x50] sm:$0xff]
      %v1969 = vld [vmem:[#allocation3 + $0x60] sm:$0xff]
      %v1970 = vld [vmem:[#allocation3 + $0x68] sm:$0xff]
      %v1971 = vld [vmem:[#allocation3 + $0x70] sm:$0xff]
      %v1972 = vld [vmem:[#allocation3 + $0x78] sm:$0xff]
      %v1973 = vld [vmem:[#allocation3 + $0x80] sm:$0xff]
      %v1974 = vld [vmem:[#allocation3 + $0x90] sm:$0xff]
      %v1975 = vld [vmem:[#allocation3 + $0x98] sm:$0xff]
      %v1976 = vld [vmem:[#allocation3 + $0xa0] sm:$0xff]
      %v1977 = vld [vmem:[#allocation3 + $0xa8] sm:$0xff]
      %v1978 = vld [vmem:[#allocation3 + $0xb0] sm:$0xff]
      %1999 = vrot.lane.b32.xlu0 %v1959, 98
      %v2000 = vpop.permute.xlu0 %1999
      %2001 = vrot.lane.b32.xlu0 %v1960, 98
      %v2002 = vpop.permute.xlu0 %2001
      %2003 = vrot.lane.b32.xlu0 %v1961, 98
      %v2004 = vpop.permute.xlu0 %2003
      %2005 = vrot.lane.b32.xlu0 %v1962, 98
      %v2006 = vpop.permute.xlu0 %2005
      %2007 = vrot.lane.b32.xlu0 %v1963, 98
      %v2008 = vpop.permute.xlu0 %2007
      %2009 = vrot.lane.b32.xlu0 %v1964, 98
      %v2010 = vpop.permute.xlu0 %2009
      %2011 = vrot.lane.b32.xlu0 %v1965, 98
      %v2012 = vpop.permute.xlu0 %2011
      %2013 = vrot.lane.b32.xlu0 %v1966, 98
      %v2014 = vpop.permute.xlu0 %2013
      %2015 = vrot.lane.b32.xlu0 %v1967, 98
      %v2016 = vpop.permute.xlu0 %2015
      %2017 = vrot.lane.b32.xlu0 %v1968, 98
      %v2018 = vpop.permute.xlu0 %2017
      %2019 = vrot.lane.b32.xlu0 %v1969, 98
      %v2020 = vpop.permute.xlu0 %2019
      %2021 = vrot.lane.b32.xlu0 %v1970, 98
      %v2022 = vpop.permute.xlu0 %2021
      %2023 = vrot.lane.b32.xlu0 %v1971, 98
      %v2024 = vpop.permute.xlu0 %2023
      %2025 = vrot.lane.b32.xlu0 %v1972, 98
      %v2026 = vpop.permute.xlu0 %2025
      %2027 = vrot.lane.b32.xlu0 %v1973, 98
      %v2028 = vpop.permute.xlu0 %2027
      %2029 = vrot.lane.b32.xlu0 %v1974, 98
      %v2030 = vpop.permute.xlu0 %2029
      %2031 = vrot.lane.b32.xlu0 %v1975, 98
      %v2032 = vpop.permute.xlu0 %2031
      %2033 = vrot.lane.b32.xlu0 %v1976, 98
      %v2034 = vpop.permute.xlu0 %2033
      %2035 = vrot.lane.b32.xlu0 %v1977, 98
      %v2036 = vpop.permute.xlu0 %2035
      %2037 = vrot.lane.b32.xlu0 %v1978, 98
      %v2038 = vpop.permute.xlu0 %2037
      %v2039 = vsel %vm512, %v2000, %v2002
      %v2040 = vsel %vm512, %v2002, %v2004
      %v2041 = vsel %vm512, %v2004, %v2006
      %v2042 = vsel %vm512, %v2006, %v2008
      %v2043 = vsel %vm512, %v2010, %v2012
      %v2044 = vsel %vm512, %v2012, %v2014
      %v2045 = vsel %vm512, %v2014, %v2016
      %v2046 = vsel %vm512, %v2016, %v2018
      %v2047 = vsel %vm512, %v2020, %v2022
      %v2048 = vsel %vm512, %v2022, %v2024
      %v2049 = vsel %vm512, %v2024, %v2026
      %v2050 = vsel %vm512, %v2026, %v2028
      %v2051 = vsel %vm512, %v2030, %v2032
      %v2052 = vsel %vm512, %v2032, %v2034
      %v2053 = vsel %vm512, %v2034, %v2036
      %v2054 = vsel %vm512, %v2036, %v2038
      %2075 = vst [vmem:[#allocation4 + $0x460] sm:$0xff] %v2039
      %2076 = vst [vmem:[#allocation4 + $0x468] sm:$0xff] %v2040
      %2077 = vst [vmem:[#allocation4 + $0x470] sm:$0xff] %v2041
      %2078 = vst [vmem:[#allocation4 + $0x478] sm:$0xff] %v2042
      %2079 = vst.msk [vmem:[#allocation4 + $0x480] sm:$0xff] %vm1126, %v2008
      %2080 = vst [vmem:[#allocation4 + $0x488] sm:$0xff] %v2043
      %2081 = vst [vmem:[#allocation4 + $0x490] sm:$0xff] %v2044
      %2082 = vst [vmem:[#allocation4 + $0x498] sm:$0xff] %v2045
      %2083 = vst [vmem:[#allocation4 + $0x4a0] sm:$0xff] %v2046
      %2084 = vst.msk [vmem:[#allocation4 + $0x4a8] sm:$0xff] %vm1126, %v2018
      %2085 = vst [vmem:[#allocation4 + $0x4b0] sm:$0xff] %v2047
      %2086 = vst [vmem:[#allocation4 + $0x4b8] sm:$0xff] %v2048
      %2087 = vst [vmem:[#allocation4 + $0x4c0] sm:$0xff] %v2049
      %2088 = vst [vmem:[#allocation4 + $0x4c8] sm:$0xff] %v2050
      %2089 = vst.msk [vmem:[#allocation4 + $0x4d0] sm:$0xff] %vm1126, %v2028
      %2090 = vst [vmem:[#allocation4 + $0x4d8] sm:$0xff] %v2051
      %2091 = vst [vmem:[#allocation4 + $0x4e0] sm:$0xff] %v2052
      %2092 = vst [vmem:[#allocation4 + $0x4e8] sm:$0xff] %v2053
      %2093 = vst [vmem:[#allocation4 + $0x4f0] sm:$0xff] %v2054
      %2094 = vst.msk [vmem:[#allocation4 + $0x4f8] sm:$0xff] %vm1126, %v2038
      %v2095 = vld [vmem:[#allocation3] sm:$0xff]
      %v2096 = vld [vmem:[#allocation3 + $0x8] sm:$0xff]
      %v2097 = vld [vmem:[#allocation3 + $0x10] sm:$0xff]
      %v2098 = vld [vmem:[#allocation3 + $0x18] sm:$0xff]
      %v2099 = vld [vmem:[#allocation3 + $0x20] sm:$0xff]
      %v2100 = vld [vmem:[#allocation3 + $0x30] sm:$0xff]
      %v2101 = vld [vmem:[#allocation3 + $0x38] sm:$0xff]
      %v2102 = vld [vmem:[#allocation3 + $0x40] sm:$0xff]
      %v2103 = vld [vmem:[#allocation3 + $0x48] sm:$0xff]
      %v2104 = vld [vmem:[#allocation3 + $0x50] sm:$0xff]
      %v2105 = vld [vmem:[#allocation3 + $0x60] sm:$0xff]
      %v2106 = vld [vmem:[#allocation3 + $0x68] sm:$0xff]
      %v2107 = vld [vmem:[#allocation3 + $0x70] sm:$0xff]
      %v2108 = vld [vmem:[#allocation3 + $0x78] sm:$0xff]
      %v2109 = vld [vmem:[#allocation3 + $0x80] sm:$0xff]
      %v2110 = vld [vmem:[#allocation3 + $0x90] sm:$0xff]
      %v2111 = vld [vmem:[#allocation3 + $0x98] sm:$0xff]
      %v2112 = vld [vmem:[#allocation3 + $0xa0] sm:$0xff]
      %v2113 = vld [vmem:[#allocation3 + $0xa8] sm:$0xff]
      %v2114 = vld [vmem:[#allocation3 + $0xb0] sm:$0xff]
      %2135 = vrot.lane.b32.xlu0 %v2095, 97
      %v2136 = vpop.permute.xlu0 %2135
      %2137 = vrot.lane.b32.xlu0 %v2096, 97
      %v2138 = vpop.permute.xlu0 %2137
      %2139 = vrot.lane.b32.xlu0 %v2097, 97
      %v2140 = vpop.permute.xlu0 %2139
      %2141 = vrot.lane.b32.xlu0 %v2098, 97
      %v2142 = vpop.permute.xlu0 %2141
      %2143 = vrot.lane.b32.xlu0 %v2099, 97
      %v2144 = vpop.permute.xlu0 %2143
      %2145 = vrot.lane.b32.xlu0 %v2100, 97
      %v2146 = vpop.permute.xlu0 %2145
      %2147 = vrot.lane.b32.xlu0 %v2101, 97
      %v2148 = vpop.permute.xlu0 %2147
      %2149 = vrot.lane.b32.xlu0 %v2102, 97
      %v2150 = vpop.permute.xlu0 %2149
      %2151 = vrot.lane.b32.xlu0 %v2103, 97
      %v2152 = vpop.permute.xlu0 %2151
      %2153 = vrot.lane.b32.xlu0 %v2104, 97
      %v2154 = vpop.permute.xlu0 %2153
      %2155 = vrot.lane.b32.xlu0 %v2105, 97
      %v2156 = vpop.permute.xlu0 %2155
      %2157 = vrot.lane.b32.xlu0 %v2106, 97
      %v2158 = vpop.permute.xlu0 %2157
      %2159 = vrot.lane.b32.xlu0 %v2107, 97
      %v2160 = vpop.permute.xlu0 %2159
      %2161 = vrot.lane.b32.xlu0 %v2108, 97
      %v2162 = vpop.permute.xlu0 %2161
      %2163 = vrot.lane.b32.xlu0 %v2109, 97
      %v2164 = vpop.permute.xlu0 %2163
      %2165 = vrot.lane.b32.xlu0 %v2110, 97
      %v2166 = vpop.permute.xlu0 %2165
      %2167 = vrot.lane.b32.xlu0 %v2111, 97
      %v2168 = vpop.permute.xlu0 %2167
      %2169 = vrot.lane.b32.xlu0 %v2112, 97
      %v2170 = vpop.permute.xlu0 %2169
      %2171 = vrot.lane.b32.xlu0 %v2113, 97
      %v2172 = vpop.permute.xlu0 %2171
      %2173 = vrot.lane.b32.xlu0 %v2114, 97
      %v2174 = vpop.permute.xlu0 %2173
      %v2175 = vsel %vm523, %v2136, %v2138
      %v2176 = vsel %vm523, %v2138, %v2140
      %v2177 = vsel %vm523, %v2140, %v2142
      %v2178 = vsel %vm523, %v2142, %v2144
      %v2179 = vsel %vm523, %v2146, %v2148
      %v2180 = vsel %vm523, %v2148, %v2150
      %v2181 = vsel %vm523, %v2150, %v2152
      %v2182 = vsel %vm523, %v2152, %v2154
      %v2183 = vsel %vm523, %v2156, %v2158
      %v2184 = vsel %vm523, %v2158, %v2160
      %v2185 = vsel %vm523, %v2160, %v2162
      %v2186 = vsel %vm523, %v2162, %v2164
      %v2187 = vsel %vm523, %v2166, %v2168
      %v2188 = vsel %vm523, %v2168, %v2170
      %v2189 = vsel %vm523, %v2170, %v2172
      %v2190 = vsel %vm523, %v2172, %v2174
      %2211 = vst [vmem:[#allocation4 + $0x500] sm:$0xff] %v2175
      %2212 = vst [vmem:[#allocation4 + $0x508] sm:$0xff] %v2176
      %2213 = vst [vmem:[#allocation4 + $0x510] sm:$0xff] %v2177
      %2214 = vst [vmem:[#allocation4 + $0x518] sm:$0xff] %v2178
      %2215 = vst.msk [vmem:[#allocation4 + $0x520] sm:$0xff] %vm1126, %v2144
      %2216 = vst [vmem:[#allocation4 + $0x528] sm:$0xff] %v2179
      %2217 = vst [vmem:[#allocation4 + $0x530] sm:$0xff] %v2180
      %2218 = vst [vmem:[#allocation4 + $0x538] sm:$0xff] %v2181
      %2219 = vst [vmem:[#allocation4 + $0x540] sm:$0xff] %v2182
      %2220 = vst.msk [vmem:[#allocation4 + $0x548] sm:$0xff] %vm1126, %v2154
      %2221 = vst [vmem:[#allocation4 + $0x550] sm:$0xff] %v2183
      %2222 = vst [vmem:[#allocation4 + $0x558] sm:$0xff] %v2184
      %2223 = vst [vmem:[#allocation4 + $0x560] sm:$0xff] %v2185
      %2224 = vst [vmem:[#allocation4 + $0x568] sm:$0xff] %v2186
      %2225 = vst.msk [vmem:[#allocation4 + $0x570] sm:$0xff] %vm1126, %v2164
      %2226 = vst [vmem:[#allocation4 + $0x578] sm:$0xff] %v2187
      %2227 = vst [vmem:[#allocation4 + $0x580] sm:$0xff] %v2188
      %2228 = vst [vmem:[#allocation4 + $0x588] sm:$0xff] %v2189
      %2229 = vst [vmem:[#allocation4 + $0x590] sm:$0xff] %v2190
      %2230 = vst.msk [vmem:[#allocation4 + $0x598] sm:$0xff] %vm1126, %v2174
      %v2231 = vld [vmem:[#allocation3] sm:$0xff]
      %v2232 = vld [vmem:[#allocation3 + $0x8] sm:$0xff]
      %v2233 = vld [vmem:[#allocation3 + $0x10] sm:$0xff]
      %v2234 = vld [vmem:[#allocation3 + $0x18] sm:$0xff]
      %v2235 = vld [vmem:[#allocation3 + $0x20] sm:$0xff]
      %v2236 = vld [vmem:[#allocation3 + $0x30] sm:$0xff]
      %v2237 = vld [vmem:[#allocation3 + $0x38] sm:$0xff]
      %v2238 = vld [vmem:[#allocation3 + $0x40] sm:$0xff]
      %v2239 = vld [vmem:[#allocation3 + $0x48] sm:$0xff]
      %v2240 = vld [vmem:[#allocation3 + $0x50] sm:$0xff]
      %v2241 = vld [vmem:[#allocation3 + $0x60] sm:$0xff]
      %v2242 = vld [vmem:[#allocation3 + $0x68] sm:$0xff]
      %v2243 = vld [vmem:[#allocation3 + $0x70] sm:$0xff]
      %v2244 = vld [vmem:[#allocation3 + $0x78] sm:$0xff]
      %v2245 = vld [vmem:[#allocation3 + $0x80] sm:$0xff]
      %v2246 = vld [vmem:[#allocation3 + $0x90] sm:$0xff]
      %v2247 = vld [vmem:[#allocation3 + $0x98] sm:$0xff]
      %v2248 = vld [vmem:[#allocation3 + $0xa0] sm:$0xff]
      %v2249 = vld [vmem:[#allocation3 + $0xa8] sm:$0xff]
      %v2250 = vld [vmem:[#allocation3 + $0xb0] sm:$0xff]
      %2271 = vrot.lane.b32.xlu0 %v2231, 96
      %v2272 = vpop.permute.xlu0 %2271
      %2273 = vrot.lane.b32.xlu0 %v2232, 96
      %v2274 = vpop.permute.xlu0 %2273
      %2275 = vrot.lane.b32.xlu0 %v2233, 96
      %v2276 = vpop.permute.xlu0 %2275
      %2277 = vrot.lane.b32.xlu0 %v2234, 96
      %v2278 = vpop.permute.xlu0 %2277
      %2279 = vrot.lane.b32.xlu0 %v2235, 96
      %v2280 = vpop.permute.xlu0 %2279
      %2281 = vrot.lane.b32.xlu0 %v2236, 96
      %v2282 = vpop.permute.xlu0 %2281
      %2283 = vrot.lane.b32.xlu0 %v2237, 96
      %v2284 = vpop.permute.xlu0 %2283
      %2285 = vrot.lane.b32.xlu0 %v2238, 96
      %v2286 = vpop.permute.xlu0 %2285
      %2287 = vrot.lane.b32.xlu0 %v2239, 96
      %v2288 = vpop.permute.xlu0 %2287
      %2289 = vrot.lane.b32.xlu0 %v2240, 96
      %v2290 = vpop.permute.xlu0 %2289
      %2291 = vrot.lane.b32.xlu0 %v2241, 96
      %v2292 = vpop.permute.xlu0 %2291
      %2293 = vrot.lane.b32.xlu0 %v2242, 96
      %v2294 = vpop.permute.xlu0 %2293
      %2295 = vrot.lane.b32.xlu0 %v2243, 96
      %v2296 = vpop.permute.xlu0 %2295
      %2297 = vrot.lane.b32.xlu0 %v2244, 96
      %v2298 = vpop.permute.xlu0 %2297
      %2299 = vrot.lane.b32.xlu0 %v2245, 96
      %v2300 = vpop.permute.xlu0 %2299
      %2301 = vrot.lane.b32.xlu0 %v2246, 96
      %v2302 = vpop.permute.xlu0 %2301
      %2303 = vrot.lane.b32.xlu0 %v2247, 96
      %v2304 = vpop.permute.xlu0 %2303
      %2305 = vrot.lane.b32.xlu0 %v2248, 96
      %v2306 = vpop.permute.xlu0 %2305
      %2307 = vrot.lane.b32.xlu0 %v2249, 96
      %v2308 = vpop.permute.xlu0 %2307
      %2309 = vrot.lane.b32.xlu0 %v2250, 96
      %v2310 = vpop.permute.xlu0 %2309
      %v2311 = vsel %vm534, %v2272, %v2274
      %v2312 = vsel %vm534, %v2274, %v2276
      %v2313 = vsel %vm534, %v2276, %v2278
      %v2314 = vsel %vm534, %v2278, %v2280
      %v2315 = vsel %vm534, %v2282, %v2284
      %v2316 = vsel %vm534, %v2284, %v2286
      %v2317 = vsel %vm534, %v2286, %v2288
      %v2318 = vsel %vm534, %v2288, %v2290
      %v2319 = vsel %vm534, %v2292, %v2294
      %v2320 = vsel %vm534, %v2294, %v2296
      %v2321 = vsel %vm534, %v2296, %v2298
      %v2322 = vsel %vm534, %v2298, %v2300
      %v2323 = vsel %vm534, %v2302, %v2304
      %v2324 = vsel %vm534, %v2304, %v2306
      %v2325 = vsel %vm534, %v2306, %v2308
      %v2326 = vsel %vm534, %v2308, %v2310
      %2347 = vst [vmem:[#allocation4 + $0x5a0] sm:$0xff] %v2311
      %2348 = vst [vmem:[#allocation4 + $0x5a8] sm:$0xff] %v2312
      %2349 = vst [vmem:[#allocation4 + $0x5b0] sm:$0xff] %v2313
      %2350 = vst [vmem:[#allocation4 + $0x5b8] sm:$0xff] %v2314
      %2351 = vst.msk [vmem:[#allocation4 + $0x5c0] sm:$0xff] %vm1126, %v2280
      %2352 = vst [vmem:[#allocation4 + $0x5c8] sm:$0xff] %v2315
      %2353 = vst [vmem:[#allocation4 + $0x5d0] sm:$0xff] %v2316
      %2354 = vst [vmem:[#allocation4 + $0x5d8] sm:$0xff] %v2317
      %2355 = vst [vmem:[#allocation4 + $0x5e0] sm:$0xff] %v2318
      %2356 = vst.msk [vmem:[#allocation4 + $0x5e8] sm:$0xff] %vm1126, %v2290
      %2357 = vst [vmem:[#allocation4 + $0x5f0] sm:$0xff] %v2319
      %2358 = vst [vmem:[#allocation4 + $0x5f8] sm:$0xff] %v2320
      %2359 = vst [vmem:[#allocation4 + $0x600] sm:$0xff] %v2321
      %2360 = vst [vmem:[#allocation4 + $0x608] sm:$0xff] %v2322
      %2361 = vst.msk [vmem:[#allocation4 + $0x610] sm:$0xff] %vm1126, %v2300
      %2362 = vst [vmem:[#allocation4 + $0x618] sm:$0xff] %v2323
      %2363 = vst [vmem:[#allocation4 + $0x620] sm:$0xff] %v2324
      %2364 = vst [vmem:[#allocation4 + $0x628] sm:$0xff] %v2325
      %2365 = vst [vmem:[#allocation4 + $0x630] sm:$0xff] %v2326
      %2366 = vst.msk [vmem:[#allocation4 + $0x638] sm:$0xff] %vm1126, %v2310
      %v2367 = vld [vmem:[#allocation3] sm:$0xff]
      %v2368 = vld [vmem:[#allocation3 + $0x8] sm:$0xff]
      %v2369 = vld [vmem:[#allocation3 + $0x10] sm:$0xff]
      %v2370 = vld [vmem:[#allocation3 + $0x18] sm:$0xff]
      %v2371 = vld [vmem:[#allocation3 + $0x20] sm:$0xff]
      %v2372 = vld [vmem:[#allocation3 + $0x30] sm:$0xff]
      %v2373 = vld [vmem:[#allocation3 + $0x38] sm:$0xff]
      %v2374 = vld [vmem:[#allocation3 + $0x40] sm:$0xff]
      %v2375 = vld [vmem:[#allocation3 + $0x48] sm:$0xff]
      %v2376 = vld [vmem:[#allocation3 + $0x50] sm:$0xff]
      %v2377 = vld [vmem:[#allocation3 + $0x60] sm:$0xff]
      %v2378 = vld [vmem:[#allocation3 + $0x68] sm:$0xff]
      %v2379 = vld [vmem:[#allocation3 + $0x70] sm:$0xff]
      %v2380 = vld [vmem:[#allocation3 + $0x78] sm:$0xff]
      %v2381 = vld [vmem:[#allocation3 + $0x80] sm:$0xff]
      %v2382 = vld [vmem:[#allocation3 + $0x90] sm:$0xff]
      %v2383 = vld [vmem:[#allocation3 + $0x98] sm:$0xff]
      %v2384 = vld [vmem:[#allocation3 + $0xa0] sm:$0xff]
      %v2385 = vld [vmem:[#allocation3 + $0xa8] sm:$0xff]
      %v2386 = vld [vmem:[#allocation3 + $0xb0] sm:$0xff]
      %2407 = vrot.lane.b32.xlu0 %v2367, 72
      %v2408 = vpop.permute.xlu0 %2407
      %2409 = vrot.lane.b32.xlu0 %v2368, 72
      %v2410 = vpop.permute.xlu0 %2409
      %2411 = vrot.lane.b32.xlu0 %v2369, 72
      %v2412 = vpop.permute.xlu0 %2411
      %2413 = vrot.lane.b32.xlu0 %v2370, 72
      %v2414 = vpop.permute.xlu0 %2413
      %2415 = vrot.lane.b32.xlu0 %v2371, 72
      %v2416 = vpop.permute.xlu0 %2415
      %2417 = vrot.lane.b32.xlu0 %v2372, 72
      %v2418 = vpop.permute.xlu0 %2417
      %2419 = vrot.lane.b32.xlu0 %v2373, 72
      %v2420 = vpop.permute.xlu0 %2419
      %2421 = vrot.lane.b32.xlu0 %v2374, 72
      %v2422 = vpop.permute.xlu0 %2421
      %2423 = vrot.lane.b32.xlu0 %v2375, 72
      %v2424 = vpop.permute.xlu0 %2423
      %2425 = vrot.lane.b32.xlu0 %v2376, 72
      %v2426 = vpop.permute.xlu0 %2425
      %2427 = vrot.lane.b32.xlu0 %v2377, 72
      %v2428 = vpop.permute.xlu0 %2427
      %2429 = vrot.lane.b32.xlu0 %v2378, 72
      %v2430 = vpop.permute.xlu0 %2429
      %2431 = vrot.lane.b32.xlu0 %v2379, 72
      %v2432 = vpop.permute.xlu0 %2431
      %2433 = vrot.lane.b32.xlu0 %v2380, 72
      %v2434 = vpop.permute.xlu0 %2433
      %2435 = vrot.lane.b32.xlu0 %v2381, 72
      %v2436 = vpop.permute.xlu0 %2435
      %2437 = vrot.lane.b32.xlu0 %v2382, 72
      %v2438 = vpop.permute.xlu0 %2437
      %2439 = vrot.lane.b32.xlu0 %v2383, 72
      %v2440 = vpop.permute.xlu0 %2439
      %2441 = vrot.lane.b32.xlu0 %v2384, 72
      %v2442 = vpop.permute.xlu0 %2441
      %2443 = vrot.lane.b32.xlu0 %v2385, 72
      %v2444 = vpop.permute.xlu0 %2443
      %2445 = vrot.lane.b32.xlu0 %v2386, 72
      %v2446 = vpop.permute.xlu0 %2445
      %v2447 = vsel %vm545, %v2408, %v2410
      %v2448 = vsel %vm545, %v2410, %v2412
      %v2449 = vsel %vm545, %v2412, %v2414
      %v2450 = vsel %vm545, %v2414, %v2416
      %v2451 = vsel %vm545, %v2418, %v2420
      %v2452 = vsel %vm545, %v2420, %v2422
      %v2453 = vsel %vm545, %v2422, %v2424
      %v2454 = vsel %vm545, %v2424, %v2426
      %v2455 = vsel %vm545, %v2428, %v2430
      %v2456 = vsel %vm545, %v2430, %v2432
      %v2457 = vsel %vm545, %v2432, %v2434
      %v2458 = vsel %vm545, %v2434, %v2436
      %v2459 = vsel %vm545, %v2438, %v2440
      %v2460 = vsel %vm545, %v2440, %v2442
      %v2461 = vsel %vm545, %v2442, %v2444
      %v2462 = vsel %vm545, %v2444, %v2446
      %2483 = vst [vmem:[#allocation4 + $0x640] sm:$0xff] %v2447
      %2484 = vst [vmem:[#allocation4 + $0x648] sm:$0xff] %v2448
      %2485 = vst [vmem:[#allocation4 + $0x650] sm:$0xff] %v2449
      %2486 = vst [vmem:[#allocation4 + $0x658] sm:$0xff] %v2450
      %2487 = vst.msk [vmem:[#allocation4 + $0x660] sm:$0xff] %vm1126, %v2416
      %2488 = vst [vmem:[#allocation4 + $0x668] sm:$0xff] %v2451
      %2489 = vst [vmem:[#allocation4 + $0x670] sm:$0xff] %v2452
      %2490 = vst [vmem:[#allocation4 + $0x678] sm:$0xff] %v2453
      %2491 = vst [vmem:[#allocation4 + $0x680] sm:$0xff] %v2454
      %2492 = vst.msk [vmem:[#allocation4 + $0x688] sm:$0xff] %vm1126, %v2426
      %2493 = vst [vmem:[#allocation4 + $0x690] sm:$0xff] %v2455
      %2494 = vst [vmem:[#allocation4 + $0x698] sm:$0xff] %v2456
      %2495 = vst [vmem:[#allocation4 + $0x6a0] sm:$0xff] %v2457
      %2496 = vst [vmem:[#allocation4 + $0x6a8] sm:$0xff] %v2458
      %2497 = vst.msk [vmem:[#allocation4 + $0x6b0] sm:$0xff] %vm1126, %v2436
      %2498 = vst [vmem:[#allocation4 + $0x6b8] sm:$0xff] %v2459
      %2499 = vst [vmem:[#allocation4 + $0x6c0] sm:$0xff] %v2460
      %2500 = vst [vmem:[#allocation4 + $0x6c8] sm:$0xff] %v2461
      %2501 = vst [vmem:[#allocation4 + $0x6d0] sm:$0xff] %v2462
      %2502 = vst.msk [vmem:[#allocation4 + $0x6d8] sm:$0xff] %vm1126, %v2446
      %v2503 = vld [vmem:[#allocation3] sm:$0xff]
      %v2504 = vld [vmem:[#allocation3 + $0x8] sm:$0xff]
      %v2505 = vld [vmem:[#allocation3 + $0x10] sm:$0xff]
      %v2506 = vld [vmem:[#allocation3 + $0x18] sm:$0xff]
      %v2507 = vld [vmem:[#allocation3 + $0x20] sm:$0xff]
      %v2508 = vld [vmem:[#allocation3 + $0x30] sm:$0xff]
      %v2509 = vld [vmem:[#allocation3 + $0x38] sm:$0xff]
      %v2510 = vld [vmem:[#allocation3 + $0x40] sm:$0xff]
      %v2511 = vld [vmem:[#allocation3 + $0x48] sm:$0xff]
      %v2512 = vld [vmem:[#allocation3 + $0x50] sm:$0xff]
      %v2513 = vld [vmem:[#allocation3 + $0x60] sm:$0xff]
      %v2514 = vld [vmem:[#allocation3 + $0x68] sm:$0xff]
      %v2515 = vld [vmem:[#allocation3 + $0x70] sm:$0xff]
      %v2516 = vld [vmem:[#allocation3 + $0x78] sm:$0xff]
      %v2517 = vld [vmem:[#allocation3 + $0x80] sm:$0xff]
      %v2518 = vld [vmem:[#allocation3 + $0x90] sm:$0xff]
      %v2519 = vld [vmem:[#allocation3 + $0x98] sm:$0xff]
      %v2520 = vld [vmem:[#allocation3 + $0xa0] sm:$0xff]
      %v2521 = vld [vmem:[#allocation3 + $0xa8] sm:$0xff]
      %v2522 = vld [vmem:[#allocation3 + $0xb0] sm:$0xff]
      %2543 = vrot.lane.b32.xlu0 %v2503, 71
      %v2544 = vpop.permute.xlu0 %2543
      %2545 = vrot.lane.b32.xlu0 %v2504, 71
      %v2546 = vpop.permute.xlu0 %2545
      %2547 = vrot.lane.b32.xlu0 %v2505, 71
      %v2548 = vpop.permute.xlu0 %2547
      %2549 = vrot.lane.b32.xlu0 %v2506, 71
      %v2550 = vpop.permute.xlu0 %2549
      %2551 = vrot.lane.b32.xlu0 %v2507, 71
      %v2552 = vpop.permute.xlu0 %2551
      %2553 = vrot.lane.b32.xlu0 %v2508, 71
      %v2554 = vpop.permute.xlu0 %2553
      %2555 = vrot.lane.b32.xlu0 %v2509, 71
      %v2556 = vpop.permute.xlu0 %2555
      %2557 = vrot.lane.b32.xlu0 %v2510, 71
      %v2558 = vpop.permute.xlu0 %2557
      %2559 = vrot.lane.b32.xlu0 %v2511, 71
      %v2560 = vpop.permute.xlu0 %2559
      %2561 = vrot.lane.b32.xlu0 %v2512, 71
      %v2562 = vpop.permute.xlu0 %2561
      %2563 = vrot.lane.b32.xlu0 %v2513, 71
      %v2564 = vpop.permute.xlu0 %2563
      %2565 = vrot.lane.b32.xlu0 %v2514, 71
      %v2566 = vpop.permute.xlu0 %2565
      %2567 = vrot.lane.b32.xlu0 %v2515, 71
      %v2568 = vpop.permute.xlu0 %2567
      %2569 = vrot.lane.b32.xlu0 %v2516, 71
      %v2570 = vpop.permute.xlu0 %2569
      %2571 = vrot.lane.b32.xlu0 %v2517, 71
      %v2572 = vpop.permute.xlu0 %2571
      %2573 = vrot.lane.b32.xlu0 %v2518, 71
      %v2574 = vpop.permute.xlu0 %2573
      %2575 = vrot.lane.b32.xlu0 %v2519, 71
      %v2576 = vpop.permute.xlu0 %2575
      %2577 = vrot.lane.b32.xlu0 %v2520, 71
      %v2578 = vpop.permute.xlu0 %2577
      %2579 = vrot.lane.b32.xlu0 %v2521, 71
      %v2580 = vpop.permute.xlu0 %2579
      %2581 = vrot.lane.b32.xlu0 %v2522, 71
      %v2582 = vpop.permute.xlu0 %2581
      %v2583 = vsel %vm556, %v2544, %v2546
      %v2584 = vsel %vm556, %v2546, %v2548
      %v2585 = vsel %vm556, %v2548, %v2550
      %v2586 = vsel %vm556, %v2550, %v2552
      %v2587 = vsel %vm556, %v2554, %v2556
      %v2588 = vsel %vm556, %v2556, %v2558
      %v2589 = vsel %vm556, %v2558, %v2560
      %v2590 = vsel %vm556, %v2560, %v2562
      %v2591 = vsel %vm556, %v2564, %v2566
      %v2592 = vsel %vm556, %v2566, %v2568
      %v2593 = vsel %vm556, %v2568, %v2570
      %v2594 = vsel %vm556, %v2570, %v2572
      %v2595 = vsel %vm556, %v2574, %v2576
      %v2596 = vsel %vm556, %v2576, %v2578
      %v2597 = vsel %vm556, %v2578, %v2580
      %v2598 = vsel %vm556, %v2580, %v2582
      %2619 = vst [vmem:[#allocation4 + $0x6e0] sm:$0xff] %v2583
      %2620 = vst [vmem:[#allocation4 + $0x6e8] sm:$0xff] %v2584
      %2621 = vst [vmem:[#allocation4 + $0x6f0] sm:$0xff] %v2585
      %2622 = vst [vmem:[#allocation4 + $0x6f8] sm:$0xff] %v2586
      %2623 = vst.msk [vmem:[#allocation4 + $0x700] sm:$0xff] %vm1126, %v2552
      %2624 = vst [vmem:[#allocation4 + $0x708] sm:$0xff] %v2587
      %2625 = vst [vmem:[#allocation4 + $0x710] sm:$0xff] %v2588
      %2626 = vst [vmem:[#allocation4 + $0x718] sm:$0xff] %v2589
      %2627 = vst [vmem:[#allocation4 + $0x720] sm:$0xff] %v2590
      %2628 = vst.msk [vmem:[#allocation4 + $0x728] sm:$0xff] %vm1126, %v2562
      %2629 = vst [vmem:[#allocation4 + $0x730] sm:$0xff] %v2591
      %2630 = vst [vmem:[#allocation4 + $0x738] sm:$0xff] %v2592
      %2631 = vst [vmem:[#allocation4 + $0x740] sm:$0xff] %v2593
      %2632 = vst [vmem:[#allocation4 + $0x748] sm:$0xff] %v2594
      %2633 = vst.msk [vmem:[#allocation4 + $0x750] sm:$0xff] %vm1126, %v2572
      %2634 = vst [vmem:[#allocation4 + $0x758] sm:$0xff] %v2595
      %2635 = vst [vmem:[#allocation4 + $0x760] sm:$0xff] %v2596
      %2636 = vst [vmem:[#allocation4 + $0x768] sm:$0xff] %v2597
      %2637 = vst [vmem:[#allocation4 + $0x770] sm:$0xff] %v2598
      %2638 = vst.msk [vmem:[#allocation4 + $0x778] sm:$0xff] %vm1126, %v2582
      %v2639 = vld [vmem:[#allocation3] sm:$0xff]
      %v2640 = vld [vmem:[#allocation3 + $0x8] sm:$0xff]
      %v2641 = vld [vmem:[#allocation3 + $0x10] sm:$0xff]
      %v2642 = vld [vmem:[#allocation3 + $0x18] sm:$0xff]
      %v2643 = vld [vmem:[#allocation3 + $0x20] sm:$0xff]
      %v2644 = vld [vmem:[#allocation3 + $0x30] sm:$0xff]
      %v2645 = vld [vmem:[#allocation3 + $0x38] sm:$0xff]
      %v2646 = vld [vmem:[#allocation3 + $0x40] sm:$0xff]
      %v2647 = vld [vmem:[#allocation3 + $0x48] sm:$0xff]
      %v2648 = vld [vmem:[#allocation3 + $0x50] sm:$0xff]
      %v2649 = vld [vmem:[#allocation3 + $0x60] sm:$0xff]
      %v2650 = vld [vmem:[#allocation3 + $0x68] sm:$0xff]
      %v2651 = vld [vmem:[#allocation3 + $0x70] sm:$0xff]
      %v2652 = vld [vmem:[#allocation3 + $0x78] sm:$0xff]
      %v2653 = vld [vmem:[#allocation3 + $0x80] sm:$0xff]
      %v2654 = vld [vmem:[#allocation3 + $0x90] sm:$0xff]
      %v2655 = vld [vmem:[#allocation3 + $0x98] sm:$0xff]
      %v2656 = vld [vmem:[#allocation3 + $0xa0] sm:$0xff]
      %v2657 = vld [vmem:[#allocation3 + $0xa8] sm:$0xff]
      %v2658 = vld [vmem:[#allocation3 + $0xb0] sm:$0xff]
      %2679 = vrot.lane.b32.xlu0 %v2639, 70
      %v2680 = vpop.permute.xlu0 %2679
      %2681 = vrot.lane.b32.xlu0 %v2640, 70
      %v2682 = vpop.permute.xlu0 %2681
      %2683 = vrot.lane.b32.xlu0 %v2641, 70
      %v2684 = vpop.permute.xlu0 %2683
      %2685 = vrot.lane.b32.xlu0 %v2642, 70
      %v2686 = vpop.permute.xlu0 %2685
      %2687 = vrot.lane.b32.xlu0 %v2643, 70
      %v2688 = vpop.permute.xlu0 %2687
      %2689 = vrot.lane.b32.xlu0 %v2644, 70
      %v2690 = vpop.permute.xlu0 %2689
      %2691 = vrot.lane.b32.xlu0 %v2645, 70
      %v2692 = vpop.permute.xlu0 %2691
      %2693 = vrot.lane.b32.xlu0 %v2646, 70
      %v2694 = vpop.permute.xlu0 %2693
      %2695 = vrot.lane.b32.xlu0 %v2647, 70
      %v2696 = vpop.permute.xlu0 %2695
      %2697 = vrot.lane.b32.xlu0 %v2648, 70
      %v2698 = vpop.permute.xlu0 %2697
      %2699 = vrot.lane.b32.xlu0 %v2649, 70
      %v2700 = vpop.permute.xlu0 %2699
      %2701 = vrot.lane.b32.xlu0 %v2650, 70
      %v2702 = vpop.permute.xlu0 %2701
      %2703 = vrot.lane.b32.xlu0 %v2651, 70
      %v2704 = vpop.permute.xlu0 %2703
      %2705 = vrot.lane.b32.xlu0 %v2652, 70
      %v2706 = vpop.permute.xlu0 %2705
      %2707 = vrot.lane.b32.xlu0 %v2653, 70
      %v2708 = vpop.permute.xlu0 %2707
      %2709 = vrot.lane.b32.xlu0 %v2654, 70
      %v2710 = vpop.permute.xlu0 %2709
      %2711 = vrot.lane.b32.xlu0 %v2655, 70
      %v2712 = vpop.permute.xlu0 %2711
      %2713 = vrot.lane.b32.xlu0 %v2656, 70
      %v2714 = vpop.permute.xlu0 %2713
      %2715 = vrot.lane.b32.xlu0 %v2657, 70
      %v2716 = vpop.permute.xlu0 %2715
      %2717 = vrot.lane.b32.xlu0 %v2658, 70
      %v2718 = vpop.permute.xlu0 %2717
      %v2719 = vsel %vm567, %v2680, %v2682
      %v2720 = vsel %vm567, %v2682, %v2684
      %v2721 = vsel %vm567, %v2684, %v2686
      %v2722 = vsel %vm567, %v2686, %v2688
      %v2723 = vsel %vm567, %v2690, %v2692
      %v2724 = vsel %vm567, %v2692, %v2694
      %v2725 = vsel %vm567, %v2694, %v2696
      %v2726 = vsel %vm567, %v2696, %v2698
      %v2727 = vsel %vm567, %v2700, %v2702
      %v2728 = vsel %vm567, %v2702, %v2704
      %v2729 = vsel %vm567, %v2704, %v2706
      %v2730 = vsel %vm567, %v2706, %v2708
      %v2731 = vsel %vm567, %v2710, %v2712
      %v2732 = vsel %vm567, %v2712, %v2714
      %v2733 = vsel %vm567, %v2714, %v2716
      %v2734 = vsel %vm567, %v2716, %v2718
      %2755 = vst [vmem:[#allocation4 + $0x780] sm:$0xff] %v2719
      %2756 = vst [vmem:[#allocation4 + $0x788] sm:$0xff] %v2720
      %2757 = vst [vmem:[#allocation4 + $0x790] sm:$0xff] %v2721
      %2758 = vst [vmem:[#allocation4 + $0x798] sm:$0xff] %v2722
      %2759 = vst.msk [vmem:[#allocation4 + $0x7a0] sm:$0xff] %vm1126, %v2688
      %2760 = vst [vmem:[#allocation4 + $0x7a8] sm:$0xff] %v2723
      %2761 = vst [vmem:[#allocation4 + $0x7b0] sm:$0xff] %v2724
      %2762 = vst [vmem:[#allocation4 + $0x7b8] sm:$0xff] %v2725
      %2763 = vst [vmem:[#allocation4 + $0x7c0] sm:$0xff] %v2726
      %2764 = vst.msk [vmem:[#allocation4 + $0x7c8] sm:$0xff] %vm1126, %v2698
      %2765 = vst [vmem:[#allocation4 + $0x7d0] sm:$0xff] %v2727
      %2766 = vst [vmem:[#allocation4 + $0x7d8] sm:$0xff] %v2728
      %2767 = vst [vmem:[#allocation4 + $0x7e0] sm:$0xff] %v2729
      %2768 = vst [vmem:[#allocation4 + $0x7e8] sm:$0xff] %v2730
      %2769 = vst.msk [vmem:[#allocation4 + $0x7f0] sm:$0xff] %vm1126, %v2708
      %2770 = vst [vmem:[#allocation4 + $0x7f8] sm:$0xff] %v2731
      %2771 = vst [vmem:[#allocation4 + $0x800] sm:$0xff] %v2732
      %2772 = vst [vmem:[#allocation4 + $0x808] sm:$0xff] %v2733
      %2773 = vst [vmem:[#allocation4 + $0x810] sm:$0xff] %v2734
      %2774 = vst.msk [vmem:[#allocation4 + $0x818] sm:$0xff] %vm1126, %v2718
      %v2775 = vld [vmem:[#allocation3] sm:$0xff]
      %v2776 = vld [vmem:[#allocation3 + $0x8] sm:$0xff]
      %v2777 = vld [vmem:[#allocation3 + $0x10] sm:$0xff]
      %v2778 = vld [vmem:[#allocation3 + $0x18] sm:$0xff]
      %v2779 = vld [vmem:[#allocation3 + $0x20] sm:$0xff]
      %v2780 = vld [vmem:[#allocation3 + $0x30] sm:$0xff]
      %v2781 = vld [vmem:[#allocation3 + $0x38] sm:$0xff]
      %v2782 = vld [vmem:[#allocation3 + $0x40] sm:$0xff]
      %v2783 = vld [vmem:[#allocation3 + $0x48] sm:$0xff]
      %v2784 = vld [vmem:[#allocation3 + $0x50] sm:$0xff]
      %v2785 = vld [vmem:[#allocation3 + $0x60] sm:$0xff]
      %v2786 = vld [vmem:[#allocation3 + $0x68] sm:$0xff]
      %v2787 = vld [vmem:[#allocation3 + $0x70] sm:$0xff]
      %v2788 = vld [vmem:[#allocation3 + $0x78] sm:$0xff]
      %v2789 = vld [vmem:[#allocation3 + $0x80] sm:$0xff]
      %v2790 = vld [vmem:[#allocation3 + $0x90] sm:$0xff]
      %v2791 = vld [vmem:[#allocation3 + $0x98] sm:$0xff]
      %v2792 = vld [vmem:[#allocation3 + $0xa0] sm:$0xff]
      %v2793 = vld [vmem:[#allocation3 + $0xa8] sm:$0xff]
      %v2794 = vld [vmem:[#allocation3 + $0xb0] sm:$0xff]
      %2815 = vrot.lane.b32.xlu0 %v2775, 69
      %v2816 = vpop.permute.xlu0 %2815
      %2817 = vrot.lane.b32.xlu0 %v2776, 69
      %v2818 = vpop.permute.xlu0 %2817
      %2819 = vrot.lane.b32.xlu0 %v2777, 69
      %v2820 = vpop.permute.xlu0 %2819
      %2821 = vrot.lane.b32.xlu0 %v2778, 69
      %v2822 = vpop.permute.xlu0 %2821
      %2823 = vrot.lane.b32.xlu0 %v2779, 69
      %v2824 = vpop.permute.xlu0 %2823
      %2825 = vrot.lane.b32.xlu0 %v2780, 69
      %v2826 = vpop.permute.xlu0 %2825
      %2827 = vrot.lane.b32.xlu0 %v2781, 69
      %v2828 = vpop.permute.xlu0 %2827
      %2829 = vrot.lane.b32.xlu0 %v2782, 69
      %v2830 = vpop.permute.xlu0 %2829
      %2831 = vrot.lane.b32.xlu0 %v2783, 69
      %v2832 = vpop.permute.xlu0 %2831
      %2833 = vrot.lane.b32.xlu0 %v2784, 69
      %v2834 = vpop.permute.xlu0 %2833
      %2835 = vrot.lane.b32.xlu0 %v2785, 69
      %v2836 = vpop.permute.xlu0 %2835
      %2837 = vrot.lane.b32.xlu0 %v2786, 69
      %v2838 = vpop.permute.xlu0 %2837
      %2839 = vrot.lane.b32.xlu0 %v2787, 69
      %v2840 = vpop.permute.xlu0 %2839
      %2841 = vrot.lane.b32.xlu0 %v2788, 69
      %v2842 = vpop.permute.xlu0 %2841
      %2843 = vrot.lane.b32.xlu0 %v2789, 69
      %v2844 = vpop.permute.xlu0 %2843
      %2845 = vrot.lane.b32.xlu0 %v2790, 69
      %v2846 = vpop.permute.xlu0 %2845
      %2847 = vrot.lane.b32.xlu0 %v2791, 69
      %v2848 = vpop.permute.xlu0 %2847
      %2849 = vrot.lane.b32.xlu0 %v2792, 69
      %v2850 = vpop.permute.xlu0 %2849
      %2851 = vrot.lane.b32.xlu0 %v2793, 69
      %v2852 = vpop.permute.xlu0 %2851
      %2853 = vrot.lane.b32.xlu0 %v2794, 69
      %v2854 = vpop.permute.xlu0 %2853
      %v2855 = vsel %vm578, %v2816, %v2818
      %v2856 = vsel %vm578, %v2818, %v2820
      %v2857 = vsel %vm578, %v2820, %v2822
      %v2858 = vsel %vm578, %v2822, %v2824
      %v2859 = vsel %vm578, %v2826, %v2828
      %v2860 = vsel %vm578, %v2828, %v2830
      %v2861 = vsel %vm578, %v2830, %v2832
      %v2862 = vsel %vm578, %v2832, %v2834
      %v2863 = vsel %vm578, %v2836, %v2838
      %v2864 = vsel %vm578, %v2838, %v2840
      %v2865 = vsel %vm578, %v2840, %v2842
      %v2866 = vsel %vm578, %v2842, %v2844
      %v2867 = vsel %vm578, %v2846, %v2848
      %v2868 = vsel %vm578, %v2848, %v2850
      %v2869 = vsel %vm578, %v2850, %v2852
      %v2870 = vsel %vm578, %v2852, %v2854
      %2891 = vst [vmem:[#allocation4 + $0x820] sm:$0xff] %v2855
      %2892 = vst [vmem:[#allocation4 + $0x828] sm:$0xff] %v2856
      %2893 = vst [vmem:[#allocation4 + $0x830] sm:$0xff] %v2857
      %2894 = vst [vmem:[#allocation4 + $0x838] sm:$0xff] %v2858
      %2895 = vst.msk [vmem:[#allocation4 + $0x840] sm:$0xff] %vm1126, %v2824
      %2896 = vst [vmem:[#allocation4 + $0x848] sm:$0xff] %v2859
      %2897 = vst [vmem:[#allocation4 + $0x850] sm:$0xff] %v2860
      %2898 = vst [vmem:[#allocation4 + $0x858] sm:$0xff] %v2861
      %2899 = vst [vmem:[#allocation4 + $0x860] sm:$0xff] %v2862
      %2900 = vst.msk [vmem:[#allocation4 + $0x868] sm:$0xff] %vm1126, %v2834
      %2901 = vst [vmem:[#allocation4 + $0x870] sm:$0xff] %v2863
      %2902 = vst [vmem:[#allocation4 + $0x878] sm:$0xff] %v2864
      %2903 = vst [vmem:[#allocation4 + $0x880] sm:$0xff] %v2865
      %2904 = vst [vmem:[#allocation4 + $0x888] sm:$0xff] %v2866
      %2905 = vst.msk [vmem:[#allocation4 + $0x890] sm:$0xff] %vm1126, %v2844
      %2906 = vst [vmem:[#allocation4 + $0x898] sm:$0xff] %v2867
      %2907 = vst [vmem:[#allocation4 + $0x8a0] sm:$0xff] %v2868
      %2908 = vst [vmem:[#allocation4 + $0x8a8] sm:$0xff] %v2869
      %2909 = vst [vmem:[#allocation4 + $0x8b0] sm:$0xff] %v2870
      %2910 = vst.msk [vmem:[#allocation4 + $0x8b8] sm:$0xff] %vm1126, %v2854
      %v2911 = vld [vmem:[#allocation3] sm:$0xff]
      %v2912 = vld [vmem:[#allocation3 + $0x8] sm:$0xff]
      %v2913 = vld [vmem:[#allocation3 + $0x10] sm:$0xff]
      %v2914 = vld [vmem:[#allocation3 + $0x18] sm:$0xff]
      %v2915 = vld [vmem:[#allocation3 + $0x20] sm:$0xff]
      %v2916 = vld [vmem:[#allocation3 + $0x30] sm:$0xff]
      %v2917 = vld [vmem:[#allocation3 + $0x38] sm:$0xff]
      %v2918 = vld [vmem:[#allocation3 + $0x40] sm:$0xff]
      %v2919 = vld [vmem:[#allocation3 + $0x48] sm:$0xff]
      %v2920 = vld [vmem:[#allocation3 + $0x50] sm:$0xff]
      %v2921 = vld [vmem:[#allocation3 + $0x60] sm:$0xff]
      %v2922 = vld [vmem:[#allocation3 + $0x68] sm:$0xff]
      %v2923 = vld [vmem:[#allocation3 + $0x70] sm:$0xff]
      %v2924 = vld [vmem:[#allocation3 + $0x78] sm:$0xff]
      %v2925 = vld [vmem:[#allocation3 + $0x80] sm:$0xff]
      %v2926 = vld [vmem:[#allocation3 + $0x90] sm:$0xff]
      %v2927 = vld [vmem:[#allocation3 + $0x98] sm:$0xff]
      %v2928 = vld [vmem:[#allocation3 + $0xa0] sm:$0xff]
      %v2929 = vld [vmem:[#allocation3 + $0xa8] sm:$0xff]
      %v2930 = vld [vmem:[#allocation3 + $0xb0] sm:$0xff]
      %2951 = vrot.lane.b32.xlu0 %v2911, 68
      %v2952 = vpop.permute.xlu0 %2951
      %2953 = vrot.lane.b32.xlu0 %v2912, 68
      %v2954 = vpop.permute.xlu0 %2953
      %2955 = vrot.lane.b32.xlu0 %v2913, 68
      %v2956 = vpop.permute.xlu0 %2955
      %2957 = vrot.lane.b32.xlu0 %v2914, 68
      %v2958 = vpop.permute.xlu0 %2957
      %2959 = vrot.lane.b32.xlu0 %v2915, 68
      %v2960 = vpop.permute.xlu0 %2959
      %2961 = vrot.lane.b32.xlu0 %v2916, 68
      %v2962 = vpop.permute.xlu0 %2961
      %2963 = vrot.lane.b32.xlu0 %v2917, 68
      %v2964 = vpop.permute.xlu0 %2963
      %2965 = vrot.lane.b32.xlu0 %v2918, 68
      %v2966 = vpop.permute.xlu0 %2965
      %2967 = vrot.lane.b32.xlu0 %v2919, 68
      %v2968 = vpop.permute.xlu0 %2967
      %2969 = vrot.lane.b32.xlu0 %v2920, 68
      %v2970 = vpop.permute.xlu0 %2969
      %2971 = vrot.lane.b32.xlu0 %v2921, 68
      %v2972 = vpop.permute.xlu0 %2971
      %2973 = vrot.lane.b32.xlu0 %v2922, 68
      %v2974 = vpop.permute.xlu0 %2973
      %2975 = vrot.lane.b32.xlu0 %v2923, 68
      %v2976 = vpop.permute.xlu0 %2975
      %2977 = vrot.lane.b32.xlu0 %v2924, 68
      %v2978 = vpop.permute.xlu0 %2977
      %2979 = vrot.lane.b32.xlu0 %v2925, 68
      %v2980 = vpop.permute.xlu0 %2979
      %2981 = vrot.lane.b32.xlu0 %v2926, 68
      %v2982 = vpop.permute.xlu0 %2981
      %2983 = vrot.lane.b32.xlu0 %v2927, 68
      %v2984 = vpop.permute.xlu0 %2983
      %2985 = vrot.lane.b32.xlu0 %v2928, 68
      %v2986 = vpop.permute.xlu0 %2985
      %2987 = vrot.lane.b32.xlu0 %v2929, 68
      %v2988 = vpop.permute.xlu0 %2987
      %2989 = vrot.lane.b32.xlu0 %v2930, 68
      %v2990 = vpop.permute.xlu0 %2989
      %v2991 = vsel %vm589, %v2952, %v2954
      %v2992 = vsel %vm589, %v2954, %v2956
      %v2993 = vsel %vm589, %v2956, %v2958
      %v2994 = vsel %vm589, %v2958, %v2960
      %v2995 = vsel %vm589, %v2962, %v2964
      %v2996 = vsel %vm589, %v2964, %v2966
      %v2997 = vsel %vm589, %v2966, %v2968
      %v2998 = vsel %vm589, %v2968, %v2970
      %v2999 = vsel %vm589, %v2972, %v2974
      %v3000 = vsel %vm589, %v2974, %v2976
      %v3001 = vsel %vm589, %v2976, %v2978
      %v3002 = vsel %vm589, %v2978, %v2980
      %v3003 = vsel %vm589, %v2982, %v2984
      %v3004 = vsel %vm589, %v2984, %v2986
      %v3005 = vsel %vm589, %v2986, %v2988
      %v3006 = vsel %vm589, %v2988, %v2990
      %3027 = vst [vmem:[#allocation4 + $0x8c0] sm:$0xff] %v2991
      %3028 = vst [vmem:[#allocation4 + $0x8c8] sm:$0xff] %v2992
      %3029 = vst [vmem:[#allocation4 + $0x8d0] sm:$0xff] %v2993
      %3030 = vst [vmem:[#allocation4 + $0x8d8] sm:$0xff] %v2994
      %3031 = vst.msk [vmem:[#allocation4 + $0x8e0] sm:$0xff] %vm1126, %v2960
      %3032 = vst [vmem:[#allocation4 + $0x8e8] sm:$0xff] %v2995
      %3033 = vst [vmem:[#allocation4 + $0x8f0] sm:$0xff] %v2996
      %3034 = vst [vmem:[#allocation4 + $0x8f8] sm:$0xff] %v2997
      %3035 = vst [vmem:[#allocation4 + $0x900] sm:$0xff] %v2998
      %3036 = vst.msk [vmem:[#allocation4 + $0x908] sm:$0xff] %vm1126, %v2970
      %3037 = vst [vmem:[#allocation4 + $0x910] sm:$0xff] %v2999
      %3038 = vst [vmem:[#allocation4 + $0x918] sm:$0xff] %v3000
      %3039 = vst [vmem:[#allocation4 + $0x920] sm:$0xff] %v3001
      %3040 = vst [vmem:[#allocation4 + $0x928] sm:$0xff] %v3002
      %3041 = vst.msk [vmem:[#allocation4 + $0x930] sm:$0xff] %vm1126, %v2980
      %3042 = vst [vmem:[#allocation4 + $0x938] sm:$0xff] %v3003
      %3043 = vst [vmem:[#allocation4 + $0x940] sm:$0xff] %v3004
      %3044 = vst [vmem:[#allocation4 + $0x948] sm:$0xff] %v3005
      %3045 = vst [vmem:[#allocation4 + $0x950] sm:$0xff] %v3006
      %3046 = vst.msk [vmem:[#allocation4 + $0x958] sm:$0xff] %vm1126, %v2990
      %v3047 = vld [vmem:[#allocation3] sm:$0xff]
      %v3048 = vld [vmem:[#allocation3 + $0x8] sm:$0xff]
      %v3049 = vld [vmem:[#allocation3 + $0x10] sm:$0xff]
      %v3050 = vld [vmem:[#allocation3 + $0x18] sm:$0xff]
      %v3051 = vld [vmem:[#allocation3 + $0x20] sm:$0xff]
      %v3052 = vld [vmem:[#allocation3 + $0x28] sm:$0xff]
      %v3053 = vld [vmem:[#allocation3 + $0x30] sm:$0xff]
      %v3054 = vld [vmem:[#allocation3 + $0x38] sm:$0xff]
      %v3055 = vld [vmem:[#allocation3 + $0x40] sm:$0xff]
      %v3056 = vld [vmem:[#allocation3 + $0x48] sm:$0xff]
      %v3057 = vld [vmem:[#allocation3 + $0x50] sm:$0xff]
      %v3058 = vld [vmem:[#allocation3 + $0x58] sm:$0xff]
      %v3059 = vld [vmem:[#allocation3 + $0x60] sm:$0xff]
      %v3060 = vld [vmem:[#allocation3 + $0x68] sm:$0xff]
      %v3061 = vld [vmem:[#allocation3 + $0x70] sm:$0xff]
      %v3062 = vld [vmem:[#allocation3 + $0x78] sm:$0xff]
      %v3063 = vld [vmem:[#allocation3 + $0x80] sm:$0xff]
      %v3064 = vld [vmem:[#allocation3 + $0x88] sm:$0xff]
      %v3065 = vld [vmem:[#allocation3 + $0x90] sm:$0xff]
      %v3066 = vld [vmem:[#allocation3 + $0x98] sm:$0xff]
      %v3067 = vld [vmem:[#allocation3 + $0xa0] sm:$0xff]
      %v3068 = vld [vmem:[#allocation3 + $0xa8] sm:$0xff]
      %v3069 = vld [vmem:[#allocation3 + $0xb0] sm:$0xff]
      %v3070 = vld [vmem:[#allocation3 + $0xb8] sm:$0xff]
      %3095 = vrot.lane.b32.xlu0 %v3047, 44
      %v3096 = vpop.permute.xlu0 %3095
      %3097 = vrot.lane.b32.xlu0 %v3048, 44
      %v3098 = vpop.permute.xlu0 %3097
      %3099 = vrot.lane.b32.xlu0 %v3049, 44
      %v3100 = vpop.permute.xlu0 %3099
      %3101 = vrot.lane.b32.xlu0 %v3050, 44
      %v3102 = vpop.permute.xlu0 %3101
      %3103 = vrot.lane.b32.xlu0 %v3051, 44
      %v3104 = vpop.permute.xlu0 %3103
      %3105 = vrot.lane.b32.xlu0 %v3052, 44
      %v3106 = vpop.permute.xlu0 %3105
      %3107 = vrot.lane.b32.xlu0 %v3053, 44
      %v3108 = vpop.permute.xlu0 %3107
      %3109 = vrot.lane.b32.xlu0 %v3054, 44
      %v3110 = vpop.permute.xlu0 %3109
      %3111 = vrot.lane.b32.xlu0 %v3055, 44
      %v3112 = vpop.permute.xlu0 %3111
      %3113 = vrot.lane.b32.xlu0 %v3056, 44
      %v3114 = vpop.permute.xlu0 %3113
      %3115 = vrot.lane.b32.xlu0 %v3057, 44
      %v3116 = vpop.permute.xlu0 %3115
      %3117 = vrot.lane.b32.xlu0 %v3058, 44
      %v3118 = vpop.permute.xlu0 %3117
      %3119 = vrot.lane.b32.xlu0 %v3059, 44
      %v3120 = vpop.permute.xlu0 %3119
      %3121 = vrot.lane.b32.xlu0 %v3060, 44
      %v3122 = vpop.permute.xlu0 %3121
      %3123 = vrot.lane.b32.xlu0 %v3061, 44
      %v3124 = vpop.permute.xlu0 %3123
      %3125 = vrot.lane.b32.xlu0 %v3062, 44
      %v3126 = vpop.permute.xlu0 %3125
      %3127 = vrot.lane.b32.xlu0 %v3063, 44
      %v3128 = vpop.permute.xlu0 %3127
      %3129 = vrot.lane.b32.xlu0 %v3064, 44
      %v3130 = vpop.permute.xlu0 %3129
      %3131 = vrot.lane.b32.xlu0 %v3065, 44
      %v3132 = vpop.permute.xlu0 %3131
      %3133 = vrot.lane.b32.xlu0 %v3066, 44
      %v3134 = vpop.permute.xlu0 %3133
      %3135 = vrot.lane.b32.xlu0 %v3067, 44
      %v3136 = vpop.permute.xlu0 %3135
      %3137 = vrot.lane.b32.xlu0 %v3068, 44
      %v3138 = vpop.permute.xlu0 %3137
      %3139 = vrot.lane.b32.xlu0 %v3069, 44
      %v3140 = vpop.permute.xlu0 %3139
      %3141 = vrot.lane.b32.xlu0 %v3070, 44
      %v3142 = vpop.permute.xlu0 %3141
      %v3143 = vsel %vm600, %v3096, %v3098
      %v3144 = vsel %vm600, %v3098, %v3100
      %v3145 = vsel %vm600, %v3100, %v3102
      %v3146 = vsel %vm600, %v3102, %v3104
      %v3147 = vsel %vm600, %v3104, %v3106
      %v3148 = vsel %vm600, %v3108, %v3110
      %v3149 = vsel %vm600, %v3110, %v3112
      %v3150 = vsel %vm600, %v3112, %v3114
      %v3151 = vsel %vm600, %v3114, %v3116
      %v3152 = vsel %vm600, %v3116, %v3118
      %v3153 = vsel %vm600, %v3120, %v3122
      %v3154 = vsel %vm600, %v3122, %v3124
      %v3155 = vsel %vm600, %v3124, %v3126
      %v3156 = vsel %vm600, %v3126, %v3128
      %v3157 = vsel %vm600, %v3128, %v3130
      %v3158 = vsel %vm600, %v3132, %v3134
      %v3159 = vsel %vm600, %v3134, %v3136
      %v3160 = vsel %vm600, %v3136, %v3138
      %v3161 = vsel %vm600, %v3138, %v3140
      %v3162 = vsel %vm600, %v3140, %v3142
      %3183 = vst [vmem:[#allocation4 + $0x960] sm:$0xff] %v3143
      %3184 = vst [vmem:[#allocation4 + $0x968] sm:$0xff] %v3144
      %3185 = vst [vmem:[#allocation4 + $0x970] sm:$0xff] %v3145
      %3186 = vst [vmem:[#allocation4 + $0x978] sm:$0xff] %v3146
      %3187 = vst.msk [vmem:[#allocation4 + $0x980] sm:$0xff] %vm1126, %v3147
      %3188 = vst [vmem:[#allocation4 + $0x988] sm:$0xff] %v3148
      %3189 = vst [vmem:[#allocation4 + $0x990] sm:$0xff] %v3149
      %3190 = vst [vmem:[#allocation4 + $0x998] sm:$0xff] %v3150
      %3191 = vst [vmem:[#allocation4 + $0x9a0] sm:$0xff] %v3151
      %3192 = vst.msk [vmem:[#allocation4 + $0x9a8] sm:$0xff] %vm1126, %v3152
      %3193 = vst [vmem:[#allocation4 + $0x9b0] sm:$0xff] %v3153
      %3194 = vst [vmem:[#allocation4 + $0x9b8] sm:$0xff] %v3154
      %3195 = vst [vmem:[#allocation4 + $0x9c0] sm:$0xff] %v3155
      %3196 = vst [vmem:[#allocation4 + $0x9c8] sm:$0xff] %v3156
      %3197 = vst.msk [vmem:[#allocation4 + $0x9d0] sm:$0xff] %vm1126, %v3157
      %3198 = vst [vmem:[#allocation4 + $0x9d8] sm:$0xff] %v3158
      %3199 = vst [vmem:[#allocation4 + $0x9e0] sm:$0xff] %v3159
      %3200 = vst [vmem:[#allocation4 + $0x9e8] sm:$0xff] %v3160
      %3201 = vst [vmem:[#allocation4 + $0x9f0] sm:$0xff] %v3161
      %3202 = vst.msk [vmem:[#allocation4 + $0x9f8] sm:$0xff] %vm1126, %v3162
      %v3203 = vld [vmem:[#allocation3] sm:$0xff]
      %v3204 = vld [vmem:[#allocation3 + $0x8] sm:$0xff]
      %v3205 = vld [vmem:[#allocation3 + $0x10] sm:$0xff]
      %v3206 = vld [vmem:[#allocation3 + $0x18] sm:$0xff]
      %v3207 = vld [vmem:[#allocation3 + $0x20] sm:$0xff]
      %v3208 = vld [vmem:[#allocation3 + $0x28] sm:$0xff]
      %v3209 = vld [vmem:[#allocation3 + $0x30] sm:$0xff]
      %v3210 = vld [vmem:[#allocation3 + $0x38] sm:$0xff]
      %v3211 = vld [vmem:[#allocation3 + $0x40] sm:$0xff]
      %v3212 = vld [vmem:[#allocation3 + $0x48] sm:$0xff]
      %v3213 = vld [vmem:[#allocation3 + $0x50] sm:$0xff]
      %v3214 = vld [vmem:[#allocation3 + $0x58] sm:$0xff]
      %v3215 = vld [vmem:[#allocation3 + $0x60] sm:$0xff]
      %v3216 = vld [vmem:[#allocation3 + $0x68] sm:$0xff]
      %v3217 = vld [vmem:[#allocation3 + $0x70] sm:$0xff]
      %v3218 = vld [vmem:[#allocation3 + $0x78] sm:$0xff]
      %v3219 = vld [vmem:[#allocation3 + $0x80] sm:$0xff]
      %v3220 = vld [vmem:[#allocation3 + $0x88] sm:$0xff]
      %v3221 = vld [vmem:[#allocation3 + $0x90] sm:$0xff]
      %v3222 = vld [vmem:[#allocation3 + $0x98] sm:$0xff]
      %v3223 = vld [vmem:[#allocation3 + $0xa0] sm:$0xff]
      %v3224 = vld [vmem:[#allocation3 + $0xa8] sm:$0xff]
      %v3225 = vld [vmem:[#allocation3 + $0xb0] sm:$0xff]
      %v3226 = vld [vmem:[#allocation3 + $0xb8] sm:$0xff]
      %3251 = vrot.lane.b32.xlu0 %v3203, 43
      %v3252 = vpop.permute.xlu0 %3251
      %3253 = vrot.lane.b32.xlu0 %v3204, 43
      %v3254 = vpop.permute.xlu0 %3253
      %3255 = vrot.lane.b32.xlu0 %v3205, 43
      %v3256 = vpop.permute.xlu0 %3255
      %3257 = vrot.lane.b32.xlu0 %v3206, 43
      %v3258 = vpop.permute.xlu0 %3257
      %3259 = vrot.lane.b32.xlu0 %v3207, 43
      %v3260 = vpop.permute.xlu0 %3259
      %3261 = vrot.lane.b32.xlu0 %v3208, 43
      %v3262 = vpop.permute.xlu0 %3261
      %3263 = vrot.lane.b32.xlu0 %v3209, 43
      %v3264 = vpop.permute.xlu0 %3263
      %3265 = vrot.lane.b32.xlu0 %v3210, 43
      %v3266 = vpop.permute.xlu0 %3265
      %3267 = vrot.lane.b32.xlu0 %v3211, 43
      %v3268 = vpop.permute.xlu0 %3267
      %3269 = vrot.lane.b32.xlu0 %v3212, 43
      %v3270 = vpop.permute.xlu0 %3269
      %3271 = vrot.lane.b32.xlu0 %v3213, 43
      %v3272 = vpop.permute.xlu0 %3271
      %3273 = vrot.lane.b32.xlu0 %v3214, 43
      %v3274 = vpop.permute.xlu0 %3273
      %3275 = vrot.lane.b32.xlu0 %v3215, 43
      %v3276 = vpop.permute.xlu0 %3275
      %3277 = vrot.lane.b32.xlu0 %v3216, 43
      %v3278 = vpop.permute.xlu0 %3277
      %3279 = vrot.lane.b32.xlu0 %v3217, 43
      %v3280 = vpop.permute.xlu0 %3279
      %3281 = vrot.lane.b32.xlu0 %v3218, 43
      %v3282 = vpop.permute.xlu0 %3281
      %3283 = vrot.lane.b32.xlu0 %v3219, 43
      %v3284 = vpop.permute.xlu0 %3283
      %3285 = vrot.lane.b32.xlu0 %v3220, 43
      %v3286 = vpop.permute.xlu0 %3285
      %3287 = vrot.lane.b32.xlu0 %v3221, 43
      %v3288 = vpop.permute.xlu0 %3287
      %3289 = vrot.lane.b32.xlu0 %v3222, 43
      %v3290 = vpop.permute.xlu0 %3289
      %3291 = vrot.lane.b32.xlu0 %v3223, 43
      %v3292 = vpop.permute.xlu0 %3291
      %3293 = vrot.lane.b32.xlu0 %v3224, 43
      %v3294 = vpop.permute.xlu0 %3293
      %3295 = vrot.lane.b32.xlu0 %v3225, 43
      %v3296 = vpop.permute.xlu0 %3295
      %3297 = vrot.lane.b32.xlu0 %v3226, 43
      %v3298 = vpop.permute.xlu0 %3297
      %v3299 = vsel %vm611, %v3252, %v3254
      %v3300 = vsel %vm611, %v3254, %v3256
      %v3301 = vsel %vm611, %v3256, %v3258
      %v3302 = vsel %vm611, %v3258, %v3260
      %v3303 = vsel %vm611, %v3260, %v3262
      %v3304 = vsel %vm611, %v3264, %v3266
      %v3305 = vsel %vm611, %v3266, %v3268
      %v3306 = vsel %vm611, %v3268, %v3270
      %v3307 = vsel %vm611, %v3270, %v3272
      %v3308 = vsel %vm611, %v3272, %v3274
      %v3309 = vsel %vm611, %v3276, %v3278
      %v3310 = vsel %vm611, %v3278, %v3280
      %v3311 = vsel %vm611, %v3280, %v3282
      %v3312 = vsel %vm611, %v3282, %v3284
      %v3313 = vsel %vm611, %v3284, %v3286
      %v3314 = vsel %vm611, %v3288, %v3290
      %v3315 = vsel %vm611, %v3290, %v3292
      %v3316 = vsel %vm611, %v3292, %v3294
      %v3317 = vsel %vm611, %v3294, %v3296
      %v3318 = vsel %vm611, %v3296, %v3298
      %3339 = vst [vmem:[#allocation4 + $0xa00] sm:$0xff] %v3299
      %3340 = vst [vmem:[#allocation4 + $0xa08] sm:$0xff] %v3300
      %3341 = vst [vmem:[#allocation4 + $0xa10] sm:$0xff] %v3301
      %3342 = vst [vmem:[#allocation4 + $0xa18] sm:$0xff] %v3302
      %3343 = vst.msk [vmem:[#allocation4 + $0xa20] sm:$0xff] %vm1126, %v3303
      %3344 = vst [vmem:[#allocation4 + $0xa28] sm:$0xff] %v3304
      %3345 = vst [vmem:[#allocation4 + $0xa30] sm:$0xff] %v3305
      %3346 = vst [vmem:[#allocation4 + $0xa38] sm:$0xff] %v3306
      %3347 = vst [vmem:[#allocation4 + $0xa40] sm:$0xff] %v3307
      %3348 = vst.msk [vmem:[#allocation4 + $0xa48] sm:$0xff] %vm1126, %v3308
      %3349 = vst [vmem:[#allocation4 + $0xa50] sm:$0xff] %v3309
      %3350 = vst [vmem:[#allocation4 + $0xa58] sm:$0xff] %v3310
      %3351 = vst [vmem:[#allocation4 + $0xa60] sm:$0xff] %v3311
      %3352 = vst [vmem:[#allocation4 + $0xa68] sm:$0xff] %v3312
      %3353 = vst.msk [vmem:[#allocation4 + $0xa70] sm:$0xff] %vm1126, %v3313
      %3354 = vst [vmem:[#allocation4 + $0xa78] sm:$0xff] %v3314
      %3355 = vst [vmem:[#allocation4 + $0xa80] sm:$0xff] %v3315
      %3356 = vst [vmem:[#allocation4 + $0xa88] sm:$0xff] %v3316
      %3357 = vst [vmem:[#allocation4 + $0xa90] sm:$0xff] %v3317
      %3358 = vst.msk [vmem:[#allocation4 + $0xa98] sm:$0xff] %vm1126, %v3318
      %v3359 = vld [vmem:[#allocation3] sm:$0xff]
      %v3360 = vld [vmem:[#allocation3 + $0x8] sm:$0xff]
      %v3361 = vld [vmem:[#allocation3 + $0x10] sm:$0xff]
      %v3362 = vld [vmem:[#allocation3 + $0x18] sm:$0xff]
      %v3363 = vld [vmem:[#allocation3 + $0x20] sm:$0xff]
      %v3364 = vld [vmem:[#allocation3 + $0x28] sm:$0xff]
      %v3365 = vld [vmem:[#allocation3 + $0x30] sm:$0xff]
      %v3366 = vld [vmem:[#allocation3 + $0x38] sm:$0xff]
      %v3367 = vld [vmem:[#allocation3 + $0x40] sm:$0xff]
      %v3368 = vld [vmem:[#allocation3 + $0x48] sm:$0xff]
      %v3369 = vld [vmem:[#allocation3 + $0x50] sm:$0xff]
      %v3370 = vld [vmem:[#allocation3 + $0x58] sm:$0xff]
      %v3371 = vld [vmem:[#allocation3 + $0x60] sm:$0xff]
      %v3372 = vld [vmem:[#allocation3 + $0x68] sm:$0xff]
      %v3373 = vld [vmem:[#allocation3 + $0x70] sm:$0xff]
      %v3374 = vld [vmem:[#allocation3 + $0x78] sm:$0xff]
      %v3375 = vld [vmem:[#allocation3 + $0x80] sm:$0xff]
      %v3376 = vld [vmem:[#allocation3 + $0x88] sm:$0xff]
      %v3377 = vld [vmem:[#allocation3 + $0x90] sm:$0xff]
      %v3378 = vld [vmem:[#allocation3 + $0x98] sm:$0xff]
      %v3379 = vld [vmem:[#allocation3 + $0xa0] sm:$0xff]
      %v3380 = vld [vmem:[#allocation3 + $0xa8] sm:$0xff]
      %v3381 = vld [vmem:[#allocation3 + $0xb0] sm:$0xff]
      %v3382 = vld [vmem:[#allocation3 + $0xb8] sm:$0xff]
      %3407 = vrot.lane.b32.xlu0 %v3359, 42
      %v3408 = vpop.permute.xlu0 %3407
      %3409 = vrot.lane.b32.xlu0 %v3360, 42
      %v3410 = vpop.permute.xlu0 %3409
      %3411 = vrot.lane.b32.xlu0 %v3361, 42
      %v3412 = vpop.permute.xlu0 %3411
      %3413 = vrot.lane.b32.xlu0 %v3362, 42
      %v3414 = vpop.permute.xlu0 %3413
      %3415 = vrot.lane.b32.xlu0 %v3363, 42
      %v3416 = vpop.permute.xlu0 %3415
      %3417 = vrot.lane.b32.xlu0 %v3364, 42
      %v3418 = vpop.permute.xlu0 %3417
      %3419 = vrot.lane.b32.xlu0 %v3365, 42
      %v3420 = vpop.permute.xlu0 %3419
      %3421 = vrot.lane.b32.xlu0 %v3366, 42
      %v3422 = vpop.permute.xlu0 %3421
      %3423 = vrot.lane.b32.xlu0 %v3367, 42
      %v3424 = vpop.permute.xlu0 %3423
      %3425 = vrot.lane.b32.xlu0 %v3368, 42
      %v3426 = vpop.permute.xlu0 %3425
      %3427 = vrot.lane.b32.xlu0 %v3369, 42
      %v3428 = vpop.permute.xlu0 %3427
      %3429 = vrot.lane.b32.xlu0 %v3370, 42
      %v3430 = vpop.permute.xlu0 %3429
      %3431 = vrot.lane.b32.xlu0 %v3371, 42
      %v3432 = vpop.permute.xlu0 %3431
      %3433 = vrot.lane.b32.xlu0 %v3372, 42
      %v3434 = vpop.permute.xlu0 %3433
      %3435 = vrot.lane.b32.xlu0 %v3373, 42
      %v3436 = vpop.permute.xlu0 %3435
      %3437 = vrot.lane.b32.xlu0 %v3374, 42
      %v3438 = vpop.permute.xlu0 %3437
      %3439 = vrot.lane.b32.xlu0 %v3375, 42
      %v3440 = vpop.permute.xlu0 %3439
      %3441 = vrot.lane.b32.xlu0 %v3376, 42
      %v3442 = vpop.permute.xlu0 %3441
      %3443 = vrot.lane.b32.xlu0 %v3377, 42
      %v3444 = vpop.permute.xlu0 %3443
      %3445 = vrot.lane.b32.xlu0 %v3378, 42
      %v3446 = vpop.permute.xlu0 %3445
      %3447 = vrot.lane.b32.xlu0 %v3379, 42
      %v3448 = vpop.permute.xlu0 %3447
      %3449 = vrot.lane.b32.xlu0 %v3380, 42
      %v3450 = vpop.permute.xlu0 %3449
      %3451 = vrot.lane.b32.xlu0 %v3381, 42
      %v3452 = vpop.permute.xlu0 %3451
      %3453 = vrot.lane.b32.xlu0 %v3382, 42
      %v3454 = vpop.permute.xlu0 %3453
      %v3455 = vsel %vm622, %v3408, %v3410
      %v3456 = vsel %vm622, %v3410, %v3412
      %v3457 = vsel %vm622, %v3412, %v3414
      %v3458 = vsel %vm622, %v3414, %v3416
      %v3459 = vsel %vm622, %v3416, %v3418
      %v3460 = vsel %vm622, %v3420, %v3422
      %v3461 = vsel %vm622, %v3422, %v3424
      %v3462 = vsel %vm622, %v3424, %v3426
      %v3463 = vsel %vm622, %v3426, %v3428
      %v3464 = vsel %vm622, %v3428, %v3430
      %v3465 = vsel %vm622, %v3432, %v3434
      %v3466 = vsel %vm622, %v3434, %v3436
      %v3467 = vsel %vm622, %v3436, %v3438
      %v3468 = vsel %vm622, %v3438, %v3440
      %v3469 = vsel %vm622, %v3440, %v3442
      %v3470 = vsel %vm622, %v3444, %v3446
      %v3471 = vsel %vm622, %v3446, %v3448
      %v3472 = vsel %vm622, %v3448, %v3450
      %v3473 = vsel %vm622, %v3450, %v3452
      %v3474 = vsel %vm622, %v3452, %v3454
      %3495 = vst [vmem:[#allocation4 + $0xaa0] sm:$0xff] %v3455
      %3496 = vst [vmem:[#allocation4 + $0xaa8] sm:$0xff] %v3456
      %3497 = vst [vmem:[#allocation4 + $0xab0] sm:$0xff] %v3457
      %3498 = vst [vmem:[#allocation4 + $0xab8] sm:$0xff] %v3458
      %3499 = vst.msk [vmem:[#allocation4 + $0xac0] sm:$0xff] %vm1126, %v3459
      %3500 = vst [vmem:[#allocation4 + $0xac8] sm:$0xff] %v3460
      %3501 = vst [vmem:[#allocation4 + $0xad0] sm:$0xff] %v3461
      %3502 = vst [vmem:[#allocation4 + $0xad8] sm:$0xff] %v3462
      %3503 = vst [vmem:[#allocation4 + $0xae0] sm:$0xff] %v3463
      %3504 = vst.msk [vmem:[#allocation4 + $0xae8] sm:$0xff] %vm1126, %v3464
      %3505 = vst [vmem:[#allocation4 + $0xaf0] sm:$0xff] %v3465
      %3506 = vst [vmem:[#allocation4 + $0xaf8] sm:$0xff] %v3466
      %3507 = vst [vmem:[#allocation4 + $0xb00] sm:$0xff] %v3467
      %3508 = vst [vmem:[#allocation4 + $0xb08] sm:$0xff] %v3468
      %3509 = vst.msk [vmem:[#allocation4 + $0xb10] sm:$0xff] %vm1126, %v3469
      %3510 = vst [vmem:[#allocation4 + $0xb18] sm:$0xff] %v3470
      %3511 = vst [vmem:[#allocation4 + $0xb20] sm:$0xff] %v3471
      %3512 = vst [vmem:[#allocation4 + $0xb28] sm:$0xff] %v3472
      %3513 = vst [vmem:[#allocation4 + $0xb30] sm:$0xff] %v3473
      %3514 = vst.msk [vmem:[#allocation4 + $0xb38] sm:$0xff] %vm1126, %v3474
      %v3515 = vld [vmem:[#allocation3] sm:$0xff]
      %v3516 = vld [vmem:[#allocation3 + $0x8] sm:$0xff]
      %v3517 = vld [vmem:[#allocation3 + $0x10] sm:$0xff]
      %v3518 = vld [vmem:[#allocation3 + $0x18] sm:$0xff]
      %v3519 = vld [vmem:[#allocation3 + $0x20] sm:$0xff]
      %v3520 = vld [vmem:[#allocation3 + $0x28] sm:$0xff]
      %v3521 = vld [vmem:[#allocation3 + $0x30] sm:$0xff]
      %v3522 = vld [vmem:[#allocation3 + $0x38] sm:$0xff]
      %v3523 = vld [vmem:[#allocation3 + $0x40] sm:$0xff]
      %v3524 = vld [vmem:[#allocation3 + $0x48] sm:$0xff]
      %v3525 = vld [vmem:[#allocation3 + $0x50] sm:$0xff]
      %v3526 = vld [vmem:[#allocation3 + $0x58] sm:$0xff]
      %v3527 = vld [vmem:[#allocation3 + $0x60] sm:$0xff]
      %v3528 = vld [vmem:[#allocation3 + $0x68] sm:$0xff]
      %v3529 = vld [vmem:[#allocation3 + $0x70] sm:$0xff]
      %v3530 = vld [vmem:[#allocation3 + $0x78] sm:$0xff]
      %v3531 = vld [vmem:[#allocation3 + $0x80] sm:$0xff]
      %v3532 = vld [vmem:[#allocation3 + $0x88] sm:$0xff]
      %v3533 = vld [vmem:[#allocation3 + $0x90] sm:$0xff]
      %v3534 = vld [vmem:[#allocation3 + $0x98] sm:$0xff]
      %v3535 = vld [vmem:[#allocation3 + $0xa0] sm:$0xff]
      %v3536 = vld [vmem:[#allocation3 + $0xa8] sm:$0xff]
      %v3537 = vld [vmem:[#allocation3 + $0xb0] sm:$0xff]
      %v3538 = vld [vmem:[#allocation3 + $0xb8] sm:$0xff]
      %3563 = vrot.lane.b32.xlu0 %v3515, 41
      %v3564 = vpop.permute.xlu0 %3563
      %3565 = vrot.lane.b32.xlu0 %v3516, 41
      %v3566 = vpop.permute.xlu0 %3565
      %3567 = vrot.lane.b32.xlu0 %v3517, 41
      %v3568 = vpop.permute.xlu0 %3567
      %3569 = vrot.lane.b32.xlu0 %v3518, 41
      %v3570 = vpop.permute.xlu0 %3569
      %3571 = vrot.lane.b32.xlu0 %v3519, 41
      %v3572 = vpop.permute.xlu0 %3571
      %3573 = vrot.lane.b32.xlu0 %v3520, 41
      %v3574 = vpop.permute.xlu0 %3573
      %3575 = vrot.lane.b32.xlu0 %v3521, 41
      %v3576 = vpop.permute.xlu0 %3575
      %3577 = vrot.lane.b32.xlu0 %v3522, 41
      %v3578 = vpop.permute.xlu0 %3577
      %3579 = vrot.lane.b32.xlu0 %v3523, 41
      %v3580 = vpop.permute.xlu0 %3579
      %3581 = vrot.lane.b32.xlu0 %v3524, 41
      %v3582 = vpop.permute.xlu0 %3581
      %3583 = vrot.lane.b32.xlu0 %v3525, 41
      %v3584 = vpop.permute.xlu0 %3583
      %3585 = vrot.lane.b32.xlu0 %v3526, 41
      %v3586 = vpop.permute.xlu0 %3585
      %3587 = vrot.lane.b32.xlu0 %v3527, 41
      %v3588 = vpop.permute.xlu0 %3587
      %3589 = vrot.lane.b32.xlu0 %v3528, 41
      %v3590 = vpop.permute.xlu0 %3589
      %3591 = vrot.lane.b32.xlu0 %v3529, 41
      %v3592 = vpop.permute.xlu0 %3591
      %3593 = vrot.lane.b32.xlu0 %v3530, 41
      %v3594 = vpop.permute.xlu0 %3593
      %3595 = vrot.lane.b32.xlu0 %v3531, 41
      %v3596 = vpop.permute.xlu0 %3595
      %3597 = vrot.lane.b32.xlu0 %v3532, 41
      %v3598 = vpop.permute.xlu0 %3597
      %3599 = vrot.lane.b32.xlu0 %v3533, 41
      %v3600 = vpop.permute.xlu0 %3599
      %3601 = vrot.lane.b32.xlu0 %v3534, 41
      %v3602 = vpop.permute.xlu0 %3601
      %3603 = vrot.lane.b32.xlu0 %v3535, 41
      %v3604 = vpop.permute.xlu0 %3603
      %3605 = vrot.lane.b32.xlu0 %v3536, 41
      %v3606 = vpop.permute.xlu0 %3605
      %3607 = vrot.lane.b32.xlu0 %v3537, 41
      %v3608 = vpop.permute.xlu0 %3607
      %3609 = vrot.lane.b32.xlu0 %v3538, 41
      %v3610 = vpop.permute.xlu0 %3609
      %v3611 = vsel %vm633, %v3564, %v3566
      %v3612 = vsel %vm633, %v3566, %v3568
      %v3613 = vsel %vm633, %v3568, %v3570
      %v3614 = vsel %vm633, %v3570, %v3572
      %v3615 = vsel %vm633, %v3572, %v3574
      %v3616 = vsel %vm633, %v3576, %v3578
      %v3617 = vsel %vm633, %v3578, %v3580
      %v3618 = vsel %vm633, %v3580, %v3582
      %v3619 = vsel %vm633, %v3582, %v3584
      %v3620 = vsel %vm633, %v3584, %v3586
      %v3621 = vsel %vm633, %v3588, %v3590
      %v3622 = vsel %vm633, %v3590, %v3592
      %v3623 = vsel %vm633, %v3592, %v3594
      %v3624 = vsel %vm633, %v3594, %v3596
      %v3625 = vsel %vm633, %v3596, %v3598
      %v3626 = vsel %vm633, %v3600, %v3602
      %v3627 = vsel %vm633, %v3602, %v3604
      %v3628 = vsel %vm633, %v3604, %v3606
      %v3629 = vsel %vm633, %v3606, %v3608
      %v3630 = vsel %vm633, %v3608, %v3610
      %3651 = vst [vmem:[#allocation4 + $0xb40] sm:$0xff] %v3611
      %3652 = vst [vmem:[#allocation4 + $0xb48] sm:$0xff] %v3612
      %3653 = vst [vmem:[#allocation4 + $0xb50] sm:$0xff] %v3613
      %3654 = vst [vmem:[#allocation4 + $0xb58] sm:$0xff] %v3614
      %3655 = vst.msk [vmem:[#allocation4 + $0xb60] sm:$0xff] %vm1126, %v3615
      %3656 = vst [vmem:[#allocation4 + $0xb68] sm:$0xff] %v3616
      %3657 = vst [vmem:[#allocation4 + $0xb70] sm:$0xff] %v3617
      %3658 = vst [vmem:[#allocation4 + $0xb78] sm:$0xff] %v3618
      %3659 = vst [vmem:[#allocation4 + $0xb80] sm:$0xff] %v3619
      %3660 = vst.msk [vmem:[#allocation4 + $0xb88] sm:$0xff] %vm1126, %v3620
      %3661 = vst [vmem:[#allocation4 + $0xb90] sm:$0xff] %v3621
      %3662 = vst [vmem:[#allocation4 + $0xb98] sm:$0xff] %v3622
      %3663 = vst [vmem:[#allocation4 + $0xba0] sm:$0xff] %v3623
      %3664 = vst [vmem:[#allocation4 + $0xba8] sm:$0xff] %v3624
      %3665 = vst.msk [vmem:[#allocation4 + $0xbb0] sm:$0xff] %vm1126, %v3625
      %3666 = vst [vmem:[#allocation4 + $0xbb8] sm:$0xff] %v3626
      %3667 = vst [vmem:[#allocation4 + $0xbc0] sm:$0xff] %v3627
      %3668 = vst [vmem:[#allocation4 + $0xbc8] sm:$0xff] %v3628
      %3669 = vst [vmem:[#allocation4 + $0xbd0] sm:$0xff] %v3629
      %3670 = vst.msk [vmem:[#allocation4 + $0xbd8] sm:$0xff] %vm1126, %v3630
      %v3671 = vld [vmem:[#allocation3] sm:$0xff]
      %v3672 = vld [vmem:[#allocation3 + $0x8] sm:$0xff]
      %v3673 = vld [vmem:[#allocation3 + $0x10] sm:$0xff]
      %v3674 = vld [vmem:[#allocation3 + $0x18] sm:$0xff]
      %v3675 = vld [vmem:[#allocation3 + $0x20] sm:$0xff]
      %v3676 = vld [vmem:[#allocation3 + $0x28] sm:$0xff]
      %v3677 = vld [vmem:[#allocation3 + $0x30] sm:$0xff]
      %v3678 = vld [vmem:[#allocation3 + $0x38] sm:$0xff]
      %v3679 = vld [vmem:[#allocation3 + $0x40] sm:$0xff]
      %v3680 = vld [vmem:[#allocation3 + $0x48] sm:$0xff]
      %v3681 = vld [vmem:[#allocation3 + $0x50] sm:$0xff]
      %v3682 = vld [vmem:[#allocation3 + $0x58] sm:$0xff]
      %v3683 = vld [vmem:[#allocation3 + $0x60] sm:$0xff]
      %v3684 = vld [vmem:[#allocation3 + $0x68] sm:$0xff]
      %v3685 = vld [vmem:[#allocation3 + $0x70] sm:$0xff]
      %v3686 = vld [vmem:[#allocation3 + $0x78] sm:$0xff]
      %v3687 = vld [vmem:[#allocation3 + $0x80] sm:$0xff]
      %v3688 = vld [vmem:[#allocation3 + $0x88] sm:$0xff]
      %v3689 = vld [vmem:[#allocation3 + $0x90] sm:$0xff]
      %v3690 = vld [vmem:[#allocation3 + $0x98] sm:$0xff]
      %v3691 = vld [vmem:[#allocation3 + $0xa0] sm:$0xff]
      %v3692 = vld [vmem:[#allocation3 + $0xa8] sm:$0xff]
      %v3693 = vld [vmem:[#allocation3 + $0xb0] sm:$0xff]
      %v3694 = vld [vmem:[#allocation3 + $0xb8] sm:$0xff]
      %3719 = vrot.lane.b32.xlu0 %v3671, 40
      %v3720 = vpop.permute.xlu0 %3719
      %3721 = vrot.lane.b32.xlu0 %v3672, 40
      %v3722 = vpop.permute.xlu0 %3721
      %3723 = vrot.lane.b32.xlu0 %v3673, 40
      %v3724 = vpop.permute.xlu0 %3723
      %3725 = vrot.lane.b32.xlu0 %v3674, 40
      %v3726 = vpop.permute.xlu0 %3725
      %3727 = vrot.lane.b32.xlu0 %v3675, 40
      %v3728 = vpop.permute.xlu0 %3727
      %3729 = vrot.lane.b32.xlu0 %v3676, 40
      %v3730 = vpop.permute.xlu0 %3729
      %3731 = vrot.lane.b32.xlu0 %v3677, 40
      %v3732 = vpop.permute.xlu0 %3731
      %3733 = vrot.lane.b32.xlu0 %v3678, 40
      %v3734 = vpop.permute.xlu0 %3733
      %3735 = vrot.lane.b32.xlu0 %v3679, 40
      %v3736 = vpop.permute.xlu0 %3735
      %3737 = vrot.lane.b32.xlu0 %v3680, 40
      %v3738 = vpop.permute.xlu0 %3737
      %3739 = vrot.lane.b32.xlu0 %v3681, 40
      %v3740 = vpop.permute.xlu0 %3739
      %3741 = vrot.lane.b32.xlu0 %v3682, 40
      %v3742 = vpop.permute.xlu0 %3741
      %3743 = vrot.lane.b32.xlu0 %v3683, 40
      %v3744 = vpop.permute.xlu0 %3743
      %3745 = vrot.lane.b32.xlu0 %v3684, 40
      %v3746 = vpop.permute.xlu0 %3745
      %3747 = vrot.lane.b32.xlu0 %v3685, 40
      %v3748 = vpop.permute.xlu0 %3747
      %3749 = vrot.lane.b32.xlu0 %v3686, 40
      %v3750 = vpop.permute.xlu0 %3749
      %3751 = vrot.lane.b32.xlu0 %v3687, 40
      %v3752 = vpop.permute.xlu0 %3751
      %3753 = vrot.lane.b32.xlu0 %v3688, 40
      %v3754 = vpop.permute.xlu0 %3753
      %3755 = vrot.lane.b32.xlu0 %v3689, 40
      %v3756 = vpop.permute.xlu0 %3755
      %3757 = vrot.lane.b32.xlu0 %v3690, 40
      %v3758 = vpop.permute.xlu0 %3757
      %3759 = vrot.lane.b32.xlu0 %v3691, 40
      %v3760 = vpop.permute.xlu0 %3759
      %3761 = vrot.lane.b32.xlu0 %v3692, 40
      %v3762 = vpop.permute.xlu0 %3761
      %3763 = vrot.lane.b32.xlu0 %v3693, 40
      %v3764 = vpop.permute.xlu0 %3763
      %3765 = vrot.lane.b32.xlu0 %v3694, 40
      %v3766 = vpop.permute.xlu0 %3765
      %v3767 = vsel %vm644, %v3720, %v3722
      %v3768 = vsel %vm644, %v3722, %v3724
      %v3769 = vsel %vm644, %v3724, %v3726
      %v3770 = vsel %vm644, %v3726, %v3728
      %v3771 = vsel %vm644, %v3728, %v3730
      %v3772 = vsel %vm644, %v3732, %v3734
      %v3773 = vsel %vm644, %v3734, %v3736
      %v3774 = vsel %vm644, %v3736, %v3738
      %v3775 = vsel %vm644, %v3738, %v3740
      %v3776 = vsel %vm644, %v3740, %v3742
      %v3777 = vsel %vm644, %v3744, %v3746
      %v3778 = vsel %vm644, %v3746, %v3748
      %v3779 = vsel %vm644, %v3748, %v3750
      %v3780 = vsel %vm644, %v3750, %v3752
      %v3781 = vsel %vm644, %v3752, %v3754
      %v3782 = vsel %vm644, %v3756, %v3758
      %v3783 = vsel %vm644, %v3758, %v3760
      %v3784 = vsel %vm644, %v3760, %v3762
      %v3785 = vsel %vm644, %v3762, %v3764
      %v3786 = vsel %vm644, %v3764, %v3766
      %3807 = vst [vmem:[#allocation4 + $0xbe0] sm:$0xff] %v3767
      %3808 = vst [vmem:[#allocation4 + $0xbe8] sm:$0xff] %v3768
      %3809 = vst [vmem:[#allocation4 + $0xbf0] sm:$0xff] %v3769
      %3810 = vst [vmem:[#allocation4 + $0xbf8] sm:$0xff] %v3770
      %3811 = vst.msk [vmem:[#allocation4 + $0xc00] sm:$0xff] %vm1126, %v3771
      %3812 = vst [vmem:[#allocation4 + $0xc08] sm:$0xff] %v3772
      %3813 = vst [vmem:[#allocation4 + $0xc10] sm:$0xff] %v3773
      %3814 = vst [vmem:[#allocation4 + $0xc18] sm:$0xff] %v3774
      %3815 = vst [vmem:[#allocation4 + $0xc20] sm:$0xff] %v3775
      %3816 = vst.msk [vmem:[#allocation4 + $0xc28] sm:$0xff] %vm1126, %v3776
      %3817 = vst [vmem:[#allocation4 + $0xc30] sm:$0xff] %v3777
      %3818 = vst [vmem:[#allocation4 + $0xc38] sm:$0xff] %v3778
      %3819 = vst [vmem:[#allocation4 + $0xc40] sm:$0xff] %v3779
      %3820 = vst [vmem:[#allocation4 + $0xc48] sm:$0xff] %v3780
      %3821 = vst.msk [vmem:[#allocation4 + $0xc50] sm:$0xff] %vm1126, %v3781
      %3822 = vst [vmem:[#allocation4 + $0xc58] sm:$0xff] %v3782
      %3823 = vst [vmem:[#allocation4 + $0xc60] sm:$0xff] %v3783
      %3824 = vst [vmem:[#allocation4 + $0xc68] sm:$0xff] %v3784
      %3825 = vst [vmem:[#allocation4 + $0xc70] sm:$0xff] %v3785
      %3826 = vst.msk [vmem:[#allocation4 + $0xc78] sm:$0xff] %vm1126, %v3786
      %v3827 = vld [vmem:[#allocation3] sm:$0xff]
      %v3828 = vld [vmem:[#allocation3 + $0x8] sm:$0xff]
      %v3829 = vld [vmem:[#allocation3 + $0x10] sm:$0xff]
      %v3830 = vld [vmem:[#allocation3 + $0x18] sm:$0xff]
      %v3831 = vld [vmem:[#allocation3 + $0x20] sm:$0xff]
      %v3832 = vld [vmem:[#allocation3 + $0x28] sm:$0xff]
      %v3833 = vld [vmem:[#allocation3 + $0x30] sm:$0xff]
      %v3834 = vld [vmem:[#allocation3 + $0x38] sm:$0xff]
      %v3835 = vld [vmem:[#allocation3 + $0x40] sm:$0xff]
      %v3836 = vld [vmem:[#allocation3 + $0x48] sm:$0xff]
      %v3837 = vld [vmem:[#allocation3 + $0x50] sm:$0xff]
      %v3838 = vld [vmem:[#allocation3 + $0x58] sm:$0xff]
      %v3839 = vld [vmem:[#allocation3 + $0x60] sm:$0xff]
      %v3840 = vld [vmem:[#allocation3 + $0x68] sm:$0xff]
      %v3841 = vld [vmem:[#allocation3 + $0x70] sm:$0xff]
      %v3842 = vld [vmem:[#allocation3 + $0x78] sm:$0xff]
      %v3843 = vld [vmem:[#allocation3 + $0x80] sm:$0xff]
      %v3844 = vld [vmem:[#allocation3 + $0x88] sm:$0xff]
      %v3845 = vld [vmem:[#allocation3 + $0x90] sm:$0xff]
      %v3846 = vld [vmem:[#allocation3 + $0x98] sm:$0xff]
      %v3847 = vld [vmem:[#allocation3 + $0xa0] sm:$0xff]
      %v3848 = vld [vmem:[#allocation3 + $0xa8] sm:$0xff]
      %v3849 = vld [vmem:[#allocation3 + $0xb0] sm:$0xff]
      %v3850 = vld [vmem:[#allocation3 + $0xb8] sm:$0xff]
      %3875 = vrot.lane.b32.xlu0 %v3827, 16
      %v3876 = vpop.permute.xlu0 %3875
      %3877 = vrot.lane.b32.xlu0 %v3828, 16
      %v3878 = vpop.permute.xlu0 %3877
      %3879 = vrot.lane.b32.xlu0 %v3829, 16
      %v3880 = vpop.permute.xlu0 %3879
      %3881 = vrot.lane.b32.xlu0 %v3830, 16
      %v3882 = vpop.permute.xlu0 %3881
      %3883 = vrot.lane.b32.xlu0 %v3831, 16
      %v3884 = vpop.permute.xlu0 %3883
      %3885 = vrot.lane.b32.xlu0 %v3832, 16
      %v3886 = vpop.permute.xlu0 %3885
      %3887 = vrot.lane.b32.xlu0 %v3833, 16
      %v3888 = vpop.permute.xlu0 %3887
      %3889 = vrot.lane.b32.xlu0 %v3834, 16
      %v3890 = vpop.permute.xlu0 %3889
      %3891 = vrot.lane.b32.xlu0 %v3835, 16
      %v3892 = vpop.permute.xlu0 %3891
      %3893 = vrot.lane.b32.xlu0 %v3836, 16
      %v3894 = vpop.permute.xlu0 %3893
      %3895 = vrot.lane.b32.xlu0 %v3837, 16
      %v3896 = vpop.permute.xlu0 %3895
      %3897 = vrot.lane.b32.xlu0 %v3838, 16
      %v3898 = vpop.permute.xlu0 %3897
      %3899 = vrot.lane.b32.xlu0 %v3839, 16
      %v3900 = vpop.permute.xlu0 %3899
      %3901 = vrot.lane.b32.xlu0 %v3840, 16
      %v3902 = vpop.permute.xlu0 %3901
      %3903 = vrot.lane.b32.xlu0 %v3841, 16
      %v3904 = vpop.permute.xlu0 %3903
      %3905 = vrot.lane.b32.xlu0 %v3842, 16
      %v3906 = vpop.permute.xlu0 %3905
      %3907 = vrot.lane.b32.xlu0 %v3843, 16
      %v3908 = vpop.permute.xlu0 %3907
      %3909 = vrot.lane.b32.xlu0 %v3844, 16
      %v3910 = vpop.permute.xlu0 %3909
      %3911 = vrot.lane.b32.xlu0 %v3845, 16
      %v3912 = vpop.permute.xlu0 %3911
      %3913 = vrot.lane.b32.xlu0 %v3846, 16
      %v3914 = vpop.permute.xlu0 %3913
      %3915 = vrot.lane.b32.xlu0 %v3847, 16
      %v3916 = vpop.permute.xlu0 %3915
      %3917 = vrot.lane.b32.xlu0 %v3848, 16
      %v3918 = vpop.permute.xlu0 %3917
      %3919 = vrot.lane.b32.xlu0 %v3849, 16
      %v3920 = vpop.permute.xlu0 %3919
      %3921 = vrot.lane.b32.xlu0 %v3850, 16
      %v3922 = vpop.permute.xlu0 %3921
      %v3923 = vsel %vm655, %v3876, %v3878
      %v3924 = vsel %vm655, %v3878, %v3880
      %v3925 = vsel %vm655, %v3880, %v3882
      %v3926 = vsel %vm655, %v3882, %v3884
      %v3927 = vsel %vm655, %v3884, %v3886
      %v3928 = vsel %vm655, %v3888, %v3890
      %v3929 = vsel %vm655, %v3890, %v3892
      %v3930 = vsel %vm655, %v3892, %v3894
      %v3931 = vsel %vm655, %v3894, %v3896
      %v3932 = vsel %vm655, %v3896, %v3898
      %v3933 = vsel %vm655, %v3900, %v3902
      %v3934 = vsel %vm655, %v3902, %v3904
      %v3935 = vsel %vm655, %v3904, %v3906
      %v3936 = vsel %vm655, %v3906, %v3908
      %v3937 = vsel %vm655, %v3908, %v3910
      %v3938 = vsel %vm655, %v3912, %v3914
      %v3939 = vsel %vm655, %v3914, %v3916
      %v3940 = vsel %vm655, %v3916, %v3918
      %v3941 = vsel %vm655, %v3918, %v3920
      %v3942 = vsel %vm655, %v3920, %v3922
      %3963 = vst [vmem:[#allocation4 + $0xc80] sm:$0xff] %v3923
      %3964 = vst [vmem:[#allocation4 + $0xc88] sm:$0xff] %v3924
      %3965 = vst [vmem:[#allocation4 + $0xc90] sm:$0xff] %v3925
      %3966 = vst [vmem:[#allocation4 + $0xc98] sm:$0xff] %v3926
      %3967 = vst.msk [vmem:[#allocation4 + $0xca0] sm:$0xff] %vm1126, %v3927
      %3968 = vst [vmem:[#allocation4 + $0xca8] sm:$0xff] %v3928
      %3969 = vst [vmem:[#allocation4 + $0xcb0] sm:$0xff] %v3929
      %3970 = vst [vmem:[#allocation4 + $0xcb8] sm:$0xff] %v3930
      %3971 = vst [vmem:[#allocation4 + $0xcc0] sm:$0xff] %v3931
      %3972 = vst.msk [vmem:[#allocation4 + $0xcc8] sm:$0xff] %vm1126, %v3932
      %3973 = vst [vmem:[#allocation4 + $0xcd0] sm:$0xff] %v3933
      %3974 = vst [vmem:[#allocation4 + $0xcd8] sm:$0xff] %v3934
      %3975 = vst [vmem:[#allocation4 + $0xce0] sm:$0xff] %v3935
      %3976 = vst [vmem:[#allocation4 + $0xce8] sm:$0xff] %v3936
      %3977 = vst.msk [vmem:[#allocation4 + $0xcf0] sm:$0xff] %vm1126, %v3937
      %3978 = vst [vmem:[#allocation4 + $0xcf8] sm:$0xff] %v3938
      %3979 = vst [vmem:[#allocation4 + $0xd00] sm:$0xff] %v3939
      %3980 = vst [vmem:[#allocation4 + $0xd08] sm:$0xff] %v3940
      %3981 = vst [vmem:[#allocation4 + $0xd10] sm:$0xff] %v3941
      %3982 = vst.msk [vmem:[#allocation4 + $0xd18] sm:$0xff] %vm1126, %v3942
      %v3983 = vld [vmem:[#allocation3] sm:$0xff]
      %v3984 = vld [vmem:[#allocation3 + $0x8] sm:$0xff]
      %v3985 = vld [vmem:[#allocation3 + $0x10] sm:$0xff]
      %v3986 = vld [vmem:[#allocation3 + $0x18] sm:$0xff]
      %v3987 = vld [vmem:[#allocation3 + $0x20] sm:$0xff]
      %v3988 = vld [vmem:[#allocation3 + $0x28] sm:$0xff]
      %v3989 = vld [vmem:[#allocation3 + $0x30] sm:$0xff]
      %v3990 = vld [vmem:[#allocation3 + $0x38] sm:$0xff]
      %v3991 = vld [vmem:[#allocation3 + $0x40] sm:$0xff]
      %v3992 = vld [vmem:[#allocation3 + $0x48] sm:$0xff]
      %v3993 = vld [vmem:[#allocation3 + $0x50] sm:$0xff]
      %v3994 = vld [vmem:[#allocation3 + $0x58] sm:$0xff]
      %v3995 = vld [vmem:[#allocation3 + $0x60] sm:$0xff]
      %v3996 = vld [vmem:[#allocation3 + $0x68] sm:$0xff]
      %v3997 = vld [vmem:[#allocation3 + $0x70] sm:$0xff]
      %v3998 = vld [vmem:[#allocation3 + $0x78] sm:$0xff]
      %v3999 = vld [vmem:[#allocation3 + $0x80] sm:$0xff]
      %v4000 = vld [vmem:[#allocation3 + $0x88] sm:$0xff]
      %v4001 = vld [vmem:[#allocation3 + $0x90] sm:$0xff]
      %v4002 = vld [vmem:[#allocation3 + $0x98] sm:$0xff]
      %v4003 = vld [vmem:[#allocation3 + $0xa0] sm:$0xff]
      %v4004 = vld [vmem:[#allocation3 + $0xa8] sm:$0xff]
      %v4005 = vld [vmem:[#allocation3 + $0xb0] sm:$0xff]
      %v4006 = vld [vmem:[#allocation3 + $0xb8] sm:$0xff]
      %4031 = vrot.lane.b32.xlu0 %v3983, 15
      %v4032 = vpop.permute.xlu0 %4031
      %4033 = vrot.lane.b32.xlu0 %v3984, 15
      %v4034 = vpop.permute.xlu0 %4033
      %4035 = vrot.lane.b32.xlu0 %v3985, 15
      %v4036 = vpop.permute.xlu0 %4035
      %4037 = vrot.lane.b32.xlu0 %v3986, 15
      %v4038 = vpop.permute.xlu0 %4037
      %4039 = vrot.lane.b32.xlu0 %v3987, 15
      %v4040 = vpop.permute.xlu0 %4039
      %4041 = vrot.lane.b32.xlu0 %v3988, 15
      %v4042 = vpop.permute.xlu0 %4041
      %4043 = vrot.lane.b32.xlu0 %v3989, 15
      %v4044 = vpop.permute.xlu0 %4043
      %4045 = vrot.lane.b32.xlu0 %v3990, 15
      %v4046 = vpop.permute.xlu0 %4045
      %4047 = vrot.lane.b32.xlu0 %v3991, 15
      %v4048 = vpop.permute.xlu0 %4047
      %4049 = vrot.lane.b32.xlu0 %v3992, 15
      %v4050 = vpop.permute.xlu0 %4049
      %4051 = vrot.lane.b32.xlu0 %v3993, 15
      %v4052 = vpop.permute.xlu0 %4051
      %4053 = vrot.lane.b32.xlu0 %v3994, 15
      %v4054 = vpop.permute.xlu0 %4053
      %4055 = vrot.lane.b32.xlu0 %v3995, 15
      %v4056 = vpop.permute.xlu0 %4055
      %4057 = vrot.lane.b32.xlu0 %v3996, 15
      %v4058 = vpop.permute.xlu0 %4057
      %4059 = vrot.lane.b32.xlu0 %v3997, 15
      %v4060 = vpop.permute.xlu0 %4059
      %4061 = vrot.lane.b32.xlu0 %v3998, 15
      %v4062 = vpop.permute.xlu0 %4061
      %4063 = vrot.lane.b32.xlu0 %v3999, 15
      %v4064 = vpop.permute.xlu0 %4063
      %4065 = vrot.lane.b32.xlu0 %v4000, 15
      %v4066 = vpop.permute.xlu0 %4065
      %4067 = vrot.lane.b32.xlu0 %v4001, 15
      %v4068 = vpop.permute.xlu0 %4067
      %4069 = vrot.lane.b32.xlu0 %v4002, 15
      %v4070 = vpop.permute.xlu0 %4069
      %4071 = vrot.lane.b32.xlu0 %v4003, 15
      %v4072 = vpop.permute.xlu0 %4071
      %4073 = vrot.lane.b32.xlu0 %v4004, 15
      %v4074 = vpop.permute.xlu0 %4073
      %4075 = vrot.lane.b32.xlu0 %v4005, 15
      %v4076 = vpop.permute.xlu0 %4075
      %4077 = vrot.lane.b32.xlu0 %v4006, 15
      %v4078 = vpop.permute.xlu0 %4077
      %v4079 = vsel %vm666, %v4032, %v4034
      %v4080 = vsel %vm666, %v4034, %v4036
      %v4081 = vsel %vm666, %v4036, %v4038
      %v4082 = vsel %vm666, %v4038, %v4040
      %v4083 = vsel %vm666, %v4040, %v4042
      %v4084 = vsel %vm666, %v4044, %v4046
      %v4085 = vsel %vm666, %v4046, %v4048
      %v4086 = vsel %vm666, %v4048, %v4050
      %v4087 = vsel %vm666, %v4050, %v4052
      %v4088 = vsel %vm666, %v4052, %v4054
      %v4089 = vsel %vm666, %v4056, %v4058
      %v4090 = vsel %vm666, %v4058, %v4060
      %v4091 = vsel %vm666, %v4060, %v4062
      %v4092 = vsel %vm666, %v4062, %v4064
      %v4093 = vsel %vm666, %v4064, %v4066
      %v4094 = vsel %vm666, %v4068, %v4070
      %v4095 = vsel %vm666, %v4070, %v4072
      %v4096 = vsel %vm666, %v4072, %v4074
      %v4097 = vsel %vm666, %v4074, %v4076
      %v4098 = vsel %vm666, %v4076, %v4078
      %4119 = vst [vmem:[#allocation4 + $0xd20] sm:$0xff] %v4079
      %4120 = vst [vmem:[#allocation4 + $0xd28] sm:$0xff] %v4080
      %4121 = vst [vmem:[#allocation4 + $0xd30] sm:$0xff] %v4081
      %4122 = vst [vmem:[#allocation4 + $0xd38] sm:$0xff] %v4082
      %4123 = vst.msk [vmem:[#allocation4 + $0xd40] sm:$0xff] %vm1126, %v4083
      %4124 = vst [vmem:[#allocation4 + $0xd48] sm:$0xff] %v4084
      %4125 = vst [vmem:[#allocation4 + $0xd50] sm:$0xff] %v4085
      %4126 = vst [vmem:[#allocation4 + $0xd58] sm:$0xff] %v4086
      %4127 = vst [vmem:[#allocation4 + $0xd60] sm:$0xff] %v4087
      %4128 = vst.msk [vmem:[#allocation4 + $0xd68] sm:$0xff] %vm1126, %v4088
      %4129 = vst [vmem:[#allocation4 + $0xd70] sm:$0xff] %v4089
      %4130 = vst [vmem:[#allocation4 + $0xd78] sm:$0xff] %v4090
      %4131 = vst [vmem:[#allocation4 + $0xd80] sm:$0xff] %v4091
      %4132 = vst [vmem:[#allocation4 + $0xd88] sm:$0xff] %v4092
      %4133 = vst.msk [vmem:[#allocation4 + $0xd90] sm:$0xff] %vm1126, %v4093
      %4134 = vst [vmem:[#allocation4 + $0xd98] sm:$0xff] %v4094
      %4135 = vst [vmem:[#allocation4 + $0xda0] sm:$0xff] %v4095
      %4136 = vst [vmem:[#allocation4 + $0xda8] sm:$0xff] %v4096
      %4137 = vst [vmem:[#allocation4 + $0xdb0] sm:$0xff] %v4097
      %4138 = vst.msk [vmem:[#allocation4 + $0xdb8] sm:$0xff] %vm1126, %v4098
      %v4139 = vld [vmem:[#allocation3] sm:$0xff]
      %v4140 = vld [vmem:[#allocation3 + $0x8] sm:$0xff]
      %v4141 = vld [vmem:[#allocation3 + $0x10] sm:$0xff]
      %v4142 = vld [vmem:[#allocation3 + $0x18] sm:$0xff]
      %v4143 = vld [vmem:[#allocation3 + $0x20] sm:$0xff]
      %v4144 = vld [vmem:[#allocation3 + $0x28] sm:$0xff]
      %v4145 = vld [vmem:[#allocation3 + $0x30] sm:$0xff]
      %v4146 = vld [vmem:[#allocation3 + $0x38] sm:$0xff]
      %v4147 = vld [vmem:[#allocation3 + $0x40] sm:$0xff]
      %v4148 = vld [vmem:[#allocation3 + $0x48] sm:$0xff]
      %v4149 = vld [vmem:[#allocation3 + $0x50] sm:$0xff]
      %v4150 = vld [vmem:[#allocation3 + $0x58] sm:$0xff]
      %v4151 = vld [vmem:[#allocation3 + $0x60] sm:$0xff]
      %v4152 = vld [vmem:[#allocation3 + $0x68] sm:$0xff]
      %v4153 = vld [vmem:[#allocation3 + $0x70] sm:$0xff]
      %v4154 = vld [vmem:[#allocation3 + $0x78] sm:$0xff]
      %v4155 = vld [vmem:[#allocation3 + $0x80] sm:$0xff]
      %v4156 = vld [vmem:[#allocation3 + $0x88] sm:$0xff]
      %v4157 = vld [vmem:[#allocation3 + $0x90] sm:$0xff]
      %v4158 = vld [vmem:[#allocation3 + $0x98] sm:$0xff]
      %v4159 = vld [vmem:[#allocation3 + $0xa0] sm:$0xff]
      %v4160 = vld [vmem:[#allocation3 + $0xa8] sm:$0xff]
      %v4161 = vld [vmem:[#allocation3 + $0xb0] sm:$0xff]
      %v4162 = vld [vmem:[#allocation3 + $0xb8] sm:$0xff]
      %4187 = vrot.lane.b32.xlu0 %v4139, 14
      %v4188 = vpop.permute.xlu0 %4187
      %4189 = vrot.lane.b32.xlu0 %v4140, 14
      %v4190 = vpop.permute.xlu0 %4189
      %4191 = vrot.lane.b32.xlu0 %v4141, 14
      %v4192 = vpop.permute.xlu0 %4191
      %4193 = vrot.lane.b32.xlu0 %v4142, 14
      %v4194 = vpop.permute.xlu0 %4193
      %4195 = vrot.lane.b32.xlu0 %v4143, 14
      %v4196 = vpop.permute.xlu0 %4195
      %4197 = vrot.lane.b32.xlu0 %v4144, 14
      %v4198 = vpop.permute.xlu0 %4197
      %4199 = vrot.lane.b32.xlu0 %v4145, 14
      %v4200 = vpop.permute.xlu0 %4199
      %4201 = vrot.lane.b32.xlu0 %v4146, 14
      %v4202 = vpop.permute.xlu0 %4201
      %4203 = vrot.lane.b32.xlu0 %v4147, 14
      %v4204 = vpop.permute.xlu0 %4203
      %4205 = vrot.lane.b32.xlu0 %v4148, 14
      %v4206 = vpop.permute.xlu0 %4205
      %4207 = vrot.lane.b32.xlu0 %v4149, 14
      %v4208 = vpop.permute.xlu0 %4207
      %4209 = vrot.lane.b32.xlu0 %v4150, 14
      %v4210 = vpop.permute.xlu0 %4209
      %4211 = vrot.lane.b32.xlu0 %v4151, 14
      %v4212 = vpop.permute.xlu0 %4211
      %4213 = vrot.lane.b32.xlu0 %v4152, 14
      %v4214 = vpop.permute.xlu0 %4213
      %4215 = vrot.lane.b32.xlu0 %v4153, 14
      %v4216 = vpop.permute.xlu0 %4215
      %4217 = vrot.lane.b32.xlu0 %v4154, 14
      %v4218 = vpop.permute.xlu0 %4217
      %4219 = vrot.lane.b32.xlu0 %v4155, 14
      %v4220 = vpop.permute.xlu0 %4219
      %4221 = vrot.lane.b32.xlu0 %v4156, 14
      %v4222 = vpop.permute.xlu0 %4221
      %4223 = vrot.lane.b32.xlu0 %v4157, 14
      %v4224 = vpop.permute.xlu0 %4223
      %4225 = vrot.lane.b32.xlu0 %v4158, 14
      %v4226 = vpop.permute.xlu0 %4225
      %4227 = vrot.lane.b32.xlu0 %v4159, 14
      %v4228 = vpop.permute.xlu0 %4227
      %4229 = vrot.lane.b32.xlu0 %v4160, 14
      %v4230 = vpop.permute.xlu0 %4229
      %4231 = vrot.lane.b32.xlu0 %v4161, 14
      %v4232 = vpop.permute.xlu0 %4231
      %4233 = vrot.lane.b32.xlu0 %v4162, 14
      %v4234 = vpop.permute.xlu0 %4233
      %v4235 = vsel %vm677, %v4188, %v4190
      %v4236 = vsel %vm677, %v4190, %v4192
      %v4237 = vsel %vm677, %v4192, %v4194
      %v4238 = vsel %vm677, %v4194, %v4196
      %v4239 = vsel %vm677, %v4196, %v4198
      %v4240 = vsel %vm677, %v4200, %v4202
      %v4241 = vsel %vm677, %v4202, %v4204
      %v4242 = vsel %vm677, %v4204, %v4206
      %v4243 = vsel %vm677, %v4206, %v4208
      %v4244 = vsel %vm677, %v4208, %v4210
      %v4245 = vsel %vm677, %v4212, %v4214
      %v4246 = vsel %vm677, %v4214, %v4216
      %v4247 = vsel %vm677, %v4216, %v4218
      %v4248 = vsel %vm677, %v4218, %v4220
      %v4249 = vsel %vm677, %v4220, %v4222
      %v4250 = vsel %vm677, %v4224, %v4226
      %v4251 = vsel %vm677, %v4226, %v4228
      %v4252 = vsel %vm677, %v4228, %v4230
      %v4253 = vsel %vm677, %v4230, %v4232
      %v4254 = vsel %vm677, %v4232, %v4234
      %4275 = vst [vmem:[#allocation4 + $0xdc0] sm:$0xff] %v4235
      %4276 = vst [vmem:[#allocation4 + $0xdc8] sm:$0xff] %v4236
      %4277 = vst [vmem:[#allocation4 + $0xdd0] sm:$0xff] %v4237
      %4278 = vst [vmem:[#allocation4 + $0xdd8] sm:$0xff] %v4238
      %4279 = vst.msk [vmem:[#allocation4 + $0xde0] sm:$0xff] %vm1126, %v4239
      %4280 = vst [vmem:[#allocation4 + $0xde8] sm:$0xff] %v4240
      %4281 = vst [vmem:[#allocation4 + $0xdf0] sm:$0xff] %v4241
      %4282 = vst [vmem:[#allocation4 + $0xdf8] sm:$0xff] %v4242
      %4283 = vst [vmem:[#allocation4 + $0xe00] sm:$0xff] %v4243
      %4284 = vst.msk [vmem:[#allocation4 + $0xe08] sm:$0xff] %vm1126, %v4244
      %4285 = vst [vmem:[#allocation4 + $0xe10] sm:$0xff] %v4245
      %4286 = vst [vmem:[#allocation4 + $0xe18] sm:$0xff] %v4246
      %4287 = vst [vmem:[#allocation4 + $0xe20] sm:$0xff] %v4247
      %4288 = vst [vmem:[#allocation4 + $0xe28] sm:$0xff] %v4248
      %4289 = vst.msk [vmem:[#allocation4 + $0xe30] sm:$0xff] %vm1126, %v4249
      %4290 = vst [vmem:[#allocation4 + $0xe38] sm:$0xff] %v4250
      %4291 = vst [vmem:[#allocation4 + $0xe40] sm:$0xff] %v4251
      %4292 = vst [vmem:[#allocation4 + $0xe48] sm:$0xff] %v4252
      %4293 = vst [vmem:[#allocation4 + $0xe50] sm:$0xff] %v4253
      %4294 = vst.msk [vmem:[#allocation4 + $0xe58] sm:$0xff] %vm1126, %v4254
      %v4295 = vld [vmem:[#allocation3] sm:$0xff]
      %v4296 = vld [vmem:[#allocation3 + $0x8] sm:$0xff]
      %v4297 = vld [vmem:[#allocation3 + $0x10] sm:$0xff]
      %v4298 = vld [vmem:[#allocation3 + $0x18] sm:$0xff]
      %v4299 = vld [vmem:[#allocation3 + $0x20] sm:$0xff]
      %v4300 = vld [vmem:[#allocation3 + $0x28] sm:$0xff]
      %v4301 = vld [vmem:[#allocation3 + $0x30] sm:$0xff]
      %v4302 = vld [vmem:[#allocation3 + $0x38] sm:$0xff]
      %v4303 = vld [vmem:[#allocation3 + $0x40] sm:$0xff]
      %v4304 = vld [vmem:[#allocation3 + $0x48] sm:$0xff]
      %v4305 = vld [vmem:[#allocation3 + $0x50] sm:$0xff]
      %v4306 = vld [vmem:[#allocation3 + $0x58] sm:$0xff]
      %v4307 = vld [vmem:[#allocation3 + $0x60] sm:$0xff]
      %v4308 = vld [vmem:[#allocation3 + $0x68] sm:$0xff]
      %v4309 = vld [vmem:[#allocation3 + $0x70] sm:$0xff]
      %v4310 = vld [vmem:[#allocation3 + $0x78] sm:$0xff]
      %v4311 = vld [vmem:[#allocation3 + $0x80] sm:$0xff]
      %v4312 = vld [vmem:[#allocation3 + $0x88] sm:$0xff]
      %v4313 = vld [vmem:[#allocation3 + $0x90] sm:$0xff]
      %v4314 = vld [vmem:[#allocation3 + $0x98] sm:$0xff]
      %v4315 = vld [vmem:[#allocation3 + $0xa0] sm:$0xff]
      %v4316 = vld [vmem:[#allocation3 + $0xa8] sm:$0xff]
      %v4317 = vld [vmem:[#allocation3 + $0xb0] sm:$0xff]
      %v4318 = vld [vmem:[#allocation3 + $0xb8] sm:$0xff]
      %4343 = vrot.lane.b32.xlu0 %v4295, 13
      %v4344 = vpop.permute.xlu0 %4343
      %4345 = vrot.lane.b32.xlu0 %v4296, 13
      %v4346 = vpop.permute.xlu0 %4345
      %4347 = vrot.lane.b32.xlu0 %v4297, 13
      %v4348 = vpop.permute.xlu0 %4347
      %4349 = vrot.lane.b32.xlu0 %v4298, 13
      %v4350 = vpop.permute.xlu0 %4349
      %4351 = vrot.lane.b32.xlu0 %v4299, 13
      %v4352 = vpop.permute.xlu0 %4351
      %4353 = vrot.lane.b32.xlu0 %v4300, 13
      %v4354 = vpop.permute.xlu0 %4353
      %4355 = vrot.lane.b32.xlu0 %v4301, 13
      %v4356 = vpop.permute.xlu0 %4355
      %4357 = vrot.lane.b32.xlu0 %v4302, 13
      %v4358 = vpop.permute.xlu0 %4357
      %4359 = vrot.lane.b32.xlu0 %v4303, 13
      %v4360 = vpop.permute.xlu0 %4359
      %4361 = vrot.lane.b32.xlu0 %v4304, 13
      %v4362 = vpop.permute.xlu0 %4361
      %4363 = vrot.lane.b32.xlu0 %v4305, 13
      %v4364 = vpop.permute.xlu0 %4363
      %4365 = vrot.lane.b32.xlu0 %v4306, 13
      %v4366 = vpop.permute.xlu0 %4365
      %4367 = vrot.lane.b32.xlu0 %v4307, 13
      %v4368 = vpop.permute.xlu0 %4367
      %4369 = vrot.lane.b32.xlu0 %v4308, 13
      %v4370 = vpop.permute.xlu0 %4369
      %4371 = vrot.lane.b32.xlu0 %v4309, 13
      %v4372 = vpop.permute.xlu0 %4371
      %4373 = vrot.lane.b32.xlu0 %v4310, 13
      %v4374 = vpop.permute.xlu0 %4373
      %4375 = vrot.lane.b32.xlu0 %v4311, 13
      %v4376 = vpop.permute.xlu0 %4375
      %4377 = vrot.lane.b32.xlu0 %v4312, 13
      %v4378 = vpop.permute.xlu0 %4377
      %4379 = vrot.lane.b32.xlu0 %v4313, 13
      %v4380 = vpop.permute.xlu0 %4379
      %4381 = vrot.lane.b32.xlu0 %v4314, 13
      %v4382 = vpop.permute.xlu0 %4381
      %4383 = vrot.lane.b32.xlu0 %v4315, 13
      %v4384 = vpop.permute.xlu0 %4383
      %4385 = vrot.lane.b32.xlu0 %v4316, 13
      %v4386 = vpop.permute.xlu0 %4385
      %4387 = vrot.lane.b32.xlu0 %v4317, 13
      %v4388 = vpop.permute.xlu0 %4387
      %4389 = vrot.lane.b32.xlu0 %v4318, 13
      %v4390 = vpop.permute.xlu0 %4389
      %v4391 = vsel %vm688, %v4344, %v4346
      %v4392 = vsel %vm688, %v4346, %v4348
      %v4393 = vsel %vm688, %v4348, %v4350
      %v4394 = vsel %vm688, %v4350, %v4352
      %v4395 = vsel %vm688, %v4352, %v4354
      %v4396 = vsel %vm688, %v4356, %v4358
      %v4397 = vsel %vm688, %v4358, %v4360
      %v4398 = vsel %vm688, %v4360, %v4362
      %v4399 = vsel %vm688, %v4362, %v4364
      %v4400 = vsel %vm688, %v4364, %v4366
      %v4401 = vsel %vm688, %v4368, %v4370
      %v4402 = vsel %vm688, %v4370, %v4372
      %v4403 = vsel %vm688, %v4372, %v4374
      %v4404 = vsel %vm688, %v4374, %v4376
      %v4405 = vsel %vm688, %v4376, %v4378
      %v4406 = vsel %vm688, %v4380, %v4382
      %v4407 = vsel %vm688, %v4382, %v4384
      %v4408 = vsel %vm688, %v4384, %v4386
      %v4409 = vsel %vm688, %v4386, %v4388
      %v4410 = vsel %vm688, %v4388, %v4390
      %4431 = vst [vmem:[#allocation4 + $0xe60] sm:$0xff] %v4391
      %4432 = vst [vmem:[#allocation4 + $0xe68] sm:$0xff] %v4392
      %4433 = vst [vmem:[#allocation4 + $0xe70] sm:$0xff] %v4393
      %4434 = vst [vmem:[#allocation4 + $0xe78] sm:$0xff] %v4394
      %4435 = vst.msk [vmem:[#allocation4 + $0xe80] sm:$0xff] %vm1126, %v4395
      %4436 = vst [vmem:[#allocation4 + $0xe88] sm:$0xff] %v4396
      %4437 = vst [vmem:[#allocation4 + $0xe90] sm:$0xff] %v4397
      %4438 = vst [vmem:[#allocation4 + $0xe98] sm:$0xff] %v4398
      %4439 = vst [vmem:[#allocation4 + $0xea0] sm:$0xff] %v4399
      %4440 = vst.msk [vmem:[#allocation4 + $0xea8] sm:$0xff] %vm1126, %v4400
      %4441 = vst [vmem:[#allocation4 + $0xeb0] sm:$0xff] %v4401
      %4442 = vst [vmem:[#allocation4 + $0xeb8] sm:$0xff] %v4402
      %4443 = vst [vmem:[#allocation4 + $0xec0] sm:$0xff] %v4403
      %4444 = vst [vmem:[#allocation4 + $0xec8] sm:$0xff] %v4404
      %4445 = vst.msk [vmem:[#allocation4 + $0xed0] sm:$0xff] %vm1126, %v4405
      %4446 = vst [vmem:[#allocation4 + $0xed8] sm:$0xff] %v4406
      %4447 = vst [vmem:[#allocation4 + $0xee0] sm:$0xff] %v4407
      %4448 = vst [vmem:[#allocation4 + $0xee8] sm:$0xff] %v4408
      %4449 = vst [vmem:[#allocation4 + $0xef0] sm:$0xff] %v4409
      %4450 = vst.msk [vmem:[#allocation4 + $0xef8] sm:$0xff] %vm1126, %v4410
      %v4451 = vld [vmem:[#allocation3] sm:$0xff]
      %v4452 = vld [vmem:[#allocation3 + $0x8] sm:$0xff]
      %v4453 = vld [vmem:[#allocation3 + $0x10] sm:$0xff]
      %v4454 = vld [vmem:[#allocation3 + $0x18] sm:$0xff]
      %v4455 = vld [vmem:[#allocation3 + $0x20] sm:$0xff]
      %v4456 = vld [vmem:[#allocation3 + $0x28] sm:$0xff]
      %v4457 = vld [vmem:[#allocation3 + $0x30] sm:$0xff]
      %v4458 = vld [vmem:[#allocation3 + $0x38] sm:$0xff]
      %v4459 = vld [vmem:[#allocation3 + $0x40] sm:$0xff]
      %v4460 = vld [vmem:[#allocation3 + $0x48] sm:$0xff]
      %v4461 = vld [vmem:[#allocation3 + $0x50] sm:$0xff]
      %v4462 = vld [vmem:[#allocation3 + $0x58] sm:$0xff]
      %v4463 = vld [vmem:[#allocation3 + $0x60] sm:$0xff]
      %v4464 = vld [vmem:[#allocation3 + $0x68] sm:$0xff]
      %v4465 = vld [vmem:[#allocation3 + $0x70] sm:$0xff]
      %v4466 = vld [vmem:[#allocation3 + $0x78] sm:$0xff]
      %v4467 = vld [vmem:[#allocation3 + $0x80] sm:$0xff]
      %v4468 = vld [vmem:[#allocation3 + $0x88] sm:$0xff]
      %v4469 = vld [vmem:[#allocation3 + $0x90] sm:$0xff]
      %v4470 = vld [vmem:[#allocation3 + $0x98] sm:$0xff]
      %v4471 = vld [vmem:[#allocation3 + $0xa0] sm:$0xff]
      %v4472 = vld [vmem:[#allocation3 + $0xa8] sm:$0xff]
      %v4473 = vld [vmem:[#allocation3 + $0xb0] sm:$0xff]
      %v4474 = vld [vmem:[#allocation3 + $0xb8] sm:$0xff]
      %4499 = vrot.lane.b32.xlu0 %v4451, 12
      %v4500 = vpop.permute.xlu0 %4499
      %4501 = vrot.lane.b32.xlu0 %v4452, 12
      %v4502 = vpop.permute.xlu0 %4501
      %4503 = vrot.lane.b32.xlu0 %v4453, 12
      %v4504 = vpop.permute.xlu0 %4503
      %4505 = vrot.lane.b32.xlu0 %v4454, 12
      %v4506 = vpop.permute.xlu0 %4505
      %4507 = vrot.lane.b32.xlu0 %v4455, 12
      %v4508 = vpop.permute.xlu0 %4507
      %4509 = vrot.lane.b32.xlu0 %v4456, 12
      %v4510 = vpop.permute.xlu0 %4509
      %4511 = vrot.lane.b32.xlu0 %v4457, 12
      %v4512 = vpop.permute.xlu0 %4511
      %4513 = vrot.lane.b32.xlu0 %v4458, 12
      %v4514 = vpop.permute.xlu0 %4513
      %4515 = vrot.lane.b32.xlu0 %v4459, 12
      %v4516 = vpop.permute.xlu0 %4515
      %4517 = vrot.lane.b32.xlu0 %v4460, 12
      %v4518 = vpop.permute.xlu0 %4517
      %4519 = vrot.lane.b32.xlu0 %v4461, 12
      %v4520 = vpop.permute.xlu0 %4519
      %4521 = vrot.lane.b32.xlu0 %v4462, 12
      %v4522 = vpop.permute.xlu0 %4521
      %4523 = vrot.lane.b32.xlu0 %v4463, 12
      %v4524 = vpop.permute.xlu0 %4523
      %4525 = vrot.lane.b32.xlu0 %v4464, 12
      %v4526 = vpop.permute.xlu0 %4525
      %4527 = vrot.lane.b32.xlu0 %v4465, 12
      %v4528 = vpop.permute.xlu0 %4527
      %4529 = vrot.lane.b32.xlu0 %v4466, 12
      %v4530 = vpop.permute.xlu0 %4529
      %4531 = vrot.lane.b32.xlu0 %v4467, 12
      %v4532 = vpop.permute.xlu0 %4531
      %4533 = vrot.lane.b32.xlu0 %v4468, 12
      %v4534 = vpop.permute.xlu0 %4533
      %4535 = vrot.lane.b32.xlu0 %v4469, 12
      %v4536 = vpop.permute.xlu0 %4535
      %4537 = vrot.lane.b32.xlu0 %v4470, 12
      %v4538 = vpop.permute.xlu0 %4537
      %4539 = vrot.lane.b32.xlu0 %v4471, 12
      %v4540 = vpop.permute.xlu0 %4539
      %4541 = vrot.lane.b32.xlu0 %v4472, 12
      %v4542 = vpop.permute.xlu0 %4541
      %4543 = vrot.lane.b32.xlu0 %v4473, 12
      %v4544 = vpop.permute.xlu0 %4543
      %4545 = vrot.lane.b32.xlu0 %v4474, 12
      %v4546 = vpop.permute.xlu0 %4545
      %v4547 = vsel %vm699, %v4500, %v4502
      %v4548 = vsel %vm699, %v4502, %v4504
      %v4549 = vsel %vm699, %v4504, %v4506
      %v4550 = vsel %vm699, %v4506, %v4508
      %v4551 = vsel %vm699, %v4508, %v4510
      %v4552 = vsel %vm699, %v4512, %v4514
      %v4553 = vsel %vm699, %v4514, %v4516
      %v4554 = vsel %vm699, %v4516, %v4518
      %v4555 = vsel %vm699, %v4518, %v4520
      %v4556 = vsel %vm699, %v4520, %v4522
      %v4557 = vsel %vm699, %v4524, %v4526
      %v4558 = vsel %vm699, %v4526, %v4528
      %v4559 = vsel %vm699, %v4528, %v4530
      %v4560 = vsel %vm699, %v4530, %v4532
      %v4561 = vsel %vm699, %v4532, %v4534
      %v4562 = vsel %vm699, %v4536, %v4538
      %v4563 = vsel %vm699, %v4538, %v4540
      %v4564 = vsel %vm699, %v4540, %v4542
      %v4565 = vsel %vm699, %v4542, %v4544
      %v4566 = vsel %vm699, %v4544, %v4546
      %4587 = vst [vmem:[#allocation4 + $0xf00] sm:$0xff] %v4547
      %4588 = vst [vmem:[#allocation4 + $0xf08] sm:$0xff] %v4548
      %4589 = vst [vmem:[#allocation4 + $0xf10] sm:$0xff] %v4549
      %4590 = vst [vmem:[#allocation4 + $0xf18] sm:$0xff] %v4550
      %4591 = vst.msk [vmem:[#allocation4 + $0xf20] sm:$0xff] %vm1126, %v4551
      %4592 = vst [vmem:[#allocation4 + $0xf28] sm:$0xff] %v4552
      %4593 = vst [vmem:[#allocation4 + $0xf30] sm:$0xff] %v4553
      %4594 = vst [vmem:[#allocation4 + $0xf38] sm:$0xff] %v4554
      %4595 = vst [vmem:[#allocation4 + $0xf40] sm:$0xff] %v4555
      %4596 = vst.msk [vmem:[#allocation4 + $0xf48] sm:$0xff] %vm1126, %v4556
      %4597 = vst [vmem:[#allocation4 + $0xf50] sm:$0xff] %v4557
      %4598 = vst [vmem:[#allocation4 + $0xf58] sm:$0xff] %v4558
      %4599 = vst [vmem:[#allocation4 + $0xf60] sm:$0xff] %v4559
      %4600 = vst [vmem:[#allocation4 + $0xf68] sm:$0xff] %v4560
      %4601 = vst.msk [vmem:[#allocation4 + $0xf70] sm:$0xff] %vm1126, %v4561
      %4602 = vst [vmem:[#allocation4 + $0xf78] sm:$0xff] %v4562
      %4603 = vst [vmem:[#allocation4 + $0xf80] sm:$0xff] %v4563
      %4604 = vst [vmem:[#allocation4 + $0xf88] sm:$0xff] %v4564
      %4605 = vst [vmem:[#allocation4 + $0xf90] sm:$0xff] %v4565
      %4606 = vst.msk [vmem:[#allocation4 + $0xf98] sm:$0xff] %vm1126, %v4566
      %v4607 = vld [vmem:[#allocation4] sm:$0xff]
      %v4608 = vld [vmem:[#allocation4 + $0x8] sm:$0xff]
      %v4609 = vld [vmem:[#allocation4 + $0x10] sm:$0xff]
      %v4610 = vld [vmem:[#allocation4 + $0x18] sm:$0xff]
      %v4611 = vld [vmem:[#allocation4 + $0x20] sm:$0xff]
      %v4612 = vld [vmem:[#allocation4 + $0x28] sm:$0xff]
      %v4613 = vld [vmem:[#allocation4 + $0x30] sm:$0xff]
      %v4614 = vld [vmem:[#allocation4 + $0x38] sm:$0xff]
      %v4615 = vld [vmem:[#allocation4 + $0x40] sm:$0xff]
      %v4616 = vld [vmem:[#allocation4 + $0x48] sm:$0xff]
      %v4617 = vld [vmem:[#allocation4 + $0x50] sm:$0xff]
      %v4618 = vld [vmem:[#allocation4 + $0x58] sm:$0xff]
      %v4619 = vld [vmem:[#allocation4 + $0x60] sm:$0xff]
      %v4620 = vld [vmem:[#allocation4 + $0x68] sm:$0xff]
      %v4621 = vld [vmem:[#allocation4 + $0x70] sm:$0xff]
      %v4622 = vld [vmem:[#allocation4 + $0x78] sm:$0xff]
      %v4623 = vld [vmem:[#allocation4 + $0x80] sm:$0xff]
      %v4624 = vld [vmem:[#allocation4 + $0x88] sm:$0xff]
      %v4625 = vld [vmem:[#allocation4 + $0x90] sm:$0xff]
      %v4626 = vld [vmem:[#allocation4 + $0x98] sm:$0xff]
      %v4627 = vld [vmem:[#allocation4 + $0xa0] sm:$0xff]
      %v4628 = vld [vmem:[#allocation4 + $0xa8] sm:$0xff]
      %v4629 = vld [vmem:[#allocation4 + $0xb0] sm:$0xff]
      %v4630 = vld [vmem:[#allocation4 + $0xb8] sm:$0xff]
      %v4631 = vld [vmem:[#allocation4 + $0xc0] sm:$0xff]
      %v4632 = vld [vmem:[#allocation4 + $0xc8] sm:$0xff]
      %v4633 = vld [vmem:[#allocation4 + $0xd0] sm:$0xff]
      %v4634 = vld [vmem:[#allocation4 + $0xd8] sm:$0xff]
      %v4635 = vld [vmem:[#allocation4 + $0xe0] sm:$0xff]
      %v4636 = vld [vmem:[#allocation4 + $0xe8] sm:$0xff]
      %v4637 = vld [vmem:[#allocation4 + $0xf0] sm:$0xff]
      %v4638 = vld [vmem:[#allocation4 + $0xf8] sm:$0xff]
      %v4639 = vld [vmem:[#allocation4 + $0x100] sm:$0xff]
      %v4640 = vld [vmem:[#allocation4 + $0x108] sm:$0xff]
      %v4641 = vld [vmem:[#allocation4 + $0x110] sm:$0xff]
      %v4642 = vld [vmem:[#allocation4 + $0x118] sm:$0xff]
      %v4643 = vld [vmem:[#allocation4 + $0x120] sm:$0xff]
      %v4644 = vld [vmem:[#allocation4 + $0x128] sm:$0xff]
      %v4645 = vld [vmem:[#allocation4 + $0x130] sm:$0xff]
      %v4646 = vld [vmem:[#allocation4 + $0x138] sm:$0xff]
      %v4647 = vld [vmem:[#allocation4 + $0x140] sm:$0xff]
      %v4648 = vld [vmem:[#allocation4 + $0x148] sm:$0xff]
      %v4649 = vld [vmem:[#allocation4 + $0x150] sm:$0xff]
      %v4650 = vld [vmem:[#allocation4 + $0x158] sm:$0xff]
      %v4651 = vld [vmem:[#allocation4 + $0x160] sm:$0xff]
      %v4652 = vld [vmem:[#allocation4 + $0x168] sm:$0xff]
      %v4653 = vld [vmem:[#allocation4 + $0x170] sm:$0xff]
      %v4654 = vld [vmem:[#allocation4 + $0x178] sm:$0xff]
      %v4655 = vld [vmem:[#allocation4 + $0x180] sm:$0xff]
      %v4656 = vld [vmem:[#allocation4 + $0x188] sm:$0xff]
      %v4657 = vld [vmem:[#allocation4 + $0x190] sm:$0xff]
      %v4658 = vld [vmem:[#allocation4 + $0x198] sm:$0xff]
      %v4659 = vld [vmem:[#allocation4 + $0x1a0] sm:$0xff]
      %v4660 = vld [vmem:[#allocation4 + $0x1a8] sm:$0xff]
      %v4661 = vld [vmem:[#allocation4 + $0x1b0] sm:$0xff]
      %v4662 = vld [vmem:[#allocation4 + $0x1b8] sm:$0xff]
      %v4663 = vld [vmem:[#allocation4 + $0x1c0] sm:$0xff]
      %v4664 = vld [vmem:[#allocation4 + $0x1c8] sm:$0xff]
      %v4665 = vld [vmem:[#allocation4 + $0x1d0] sm:$0xff]
      %v4666 = vld [vmem:[#allocation4 + $0x1d8] sm:$0xff]
      %v4667 = vld [vmem:[#allocation4 + $0x1e0] sm:$0xff]
      %v4668 = vld [vmem:[#allocation4 + $0x1e8] sm:$0xff]
      %v4669 = vld [vmem:[#allocation4 + $0x1f0] sm:$0xff]
      %v4670 = vld [vmem:[#allocation4 + $0x1f8] sm:$0xff]
      %v4671 = vld [vmem:[#allocation4 + $0x200] sm:$0xff]
      %v4672 = vld [vmem:[#allocation4 + $0x208] sm:$0xff]
      %v4673 = vld [vmem:[#allocation4 + $0x210] sm:$0xff]
      %v4674 = vld [vmem:[#allocation4 + $0x218] sm:$0xff]
      %v4675 = vld [vmem:[#allocation4 + $0x220] sm:$0xff]
      %v4676 = vld [vmem:[#allocation4 + $0x228] sm:$0xff]
      %v4677 = vld [vmem:[#allocation4 + $0x230] sm:$0xff]
      %v4678 = vld [vmem:[#allocation4 + $0x238] sm:$0xff]
      %v4679 = vld [vmem:[#allocation4 + $0x240] sm:$0xff]
      %v4680 = vld [vmem:[#allocation4 + $0x248] sm:$0xff]
      %v4681 = vld [vmem:[#allocation4 + $0x250] sm:$0xff]
      %v4682 = vld [vmem:[#allocation4 + $0x258] sm:$0xff]
      %v4683 = vld [vmem:[#allocation4 + $0x260] sm:$0xff]
      %v4684 = vld [vmem:[#allocation4 + $0x268] sm:$0xff]
      %v4685 = vld [vmem:[#allocation4 + $0x270] sm:$0xff]
      %v4686 = vld [vmem:[#allocation4 + $0x278] sm:$0xff]
      %v4687 = vld [vmem:[#allocation4 + $0x280] sm:$0xff]
      %v4688 = vld [vmem:[#allocation4 + $0x288] sm:$0xff]
      %v4689 = vld [vmem:[#allocation4 + $0x290] sm:$0xff]
      %v4690 = vld [vmem:[#allocation4 + $0x298] sm:$0xff]
      %v4691 = vld [vmem:[#allocation4 + $0x2a0] sm:$0xff]
      %v4692 = vld [vmem:[#allocation4 + $0x2a8] sm:$0xff]
      %v4693 = vld [vmem:[#allocation4 + $0x2b0] sm:$0xff]
      %v4694 = vld [vmem:[#allocation4 + $0x2b8] sm:$0xff]
      %v4695 = vld [vmem:[#allocation4 + $0x2c0] sm:$0xff]
      %v4696 = vld [vmem:[#allocation4 + $0x2c8] sm:$0xff]
      %v4697 = vld [vmem:[#allocation4 + $0x2d0] sm:$0xff]
      %v4698 = vld [vmem:[#allocation4 + $0x2d8] sm:$0xff]
      %v4699 = vld [vmem:[#allocation4 + $0x2e0] sm:$0xff]
      %v4700 = vld [vmem:[#allocation4 + $0x2e8] sm:$0xff]
      %v4701 = vld [vmem:[#allocation4 + $0x2f0] sm:$0xff]
      %v4702 = vld [vmem:[#allocation4 + $0x2f8] sm:$0xff]
      %v4703 = vld [vmem:[#allocation4 + $0x300] sm:$0xff]
      %v4704 = vld [vmem:[#allocation4 + $0x308] sm:$0xff]
      %v4705 = vld [vmem:[#allocation4 + $0x310] sm:$0xff]
      %v4706 = vld [vmem:[#allocation4 + $0x318] sm:$0xff]
      %v4707 = vld [vmem:[#allocation4 + $0x320] sm:$0xff]
      %v4708 = vld [vmem:[#allocation4 + $0x328] sm:$0xff]
      %v4709 = vld [vmem:[#allocation4 + $0x330] sm:$0xff]
      %v4710 = vld [vmem:[#allocation4 + $0x338] sm:$0xff]
      %v4711 = vld [vmem:[#allocation4 + $0x340] sm:$0xff]
      %v4712 = vld [vmem:[#allocation4 + $0x348] sm:$0xff]
      %v4713 = vld [vmem:[#allocation4 + $0x350] sm:$0xff]
      %v4714 = vld [vmem:[#allocation4 + $0x358] sm:$0xff]
      %v4715 = vld [vmem:[#allocation4 + $0x360] sm:$0xff]
      %v4716 = vld [vmem:[#allocation4 + $0x368] sm:$0xff]
      %v4717 = vld [vmem:[#allocation4 + $0x370] sm:$0xff]
      %v4718 = vld [vmem:[#allocation4 + $0x378] sm:$0xff]
      %v4719 = vld [vmem:[#allocation4 + $0x380] sm:$0xff]
      %v4720 = vld [vmem:[#allocation4 + $0x388] sm:$0xff]
      %v4721 = vld [vmem:[#allocation4 + $0x390] sm:$0xff]
      %v4722 = vld [vmem:[#allocation4 + $0x398] sm:$0xff]
      %v4723 = vld [vmem:[#allocation4 + $0x3a0] sm:$0xff]
      %v4724 = vld [vmem:[#allocation4 + $0x3a8] sm:$0xff]
      %v4725 = vld [vmem:[#allocation4 + $0x3b0] sm:$0xff]
      %v4726 = vld [vmem:[#allocation4 + $0x3b8] sm:$0xff]
      %v4727 = vld [vmem:[#allocation4 + $0x3c0] sm:$0xff]
      %v4728 = vld [vmem:[#allocation4 + $0x3c8] sm:$0xff]
      %v4729 = vld [vmem:[#allocation4 + $0x3d0] sm:$0xff]
      %v4730 = vld [vmem:[#allocation4 + $0x3d8] sm:$0xff]
      %v4731 = vld [vmem:[#allocation4 + $0x3e0] sm:$0xff]
      %v4732 = vld [vmem:[#allocation4 + $0x3e8] sm:$0xff]
      %v4733 = vld [vmem:[#allocation4 + $0x3f0] sm:$0xff]
      %v4734 = vld [vmem:[#allocation4 + $0x3f8] sm:$0xff]
      %v4735 = vld [vmem:[#allocation4 + $0x400] sm:$0xff]
      %v4736 = vld [vmem:[#allocation4 + $0x408] sm:$0xff]
      %v4737 = vld [vmem:[#allocation4 + $0x410] sm:$0xff]
      %v4738 = vld [vmem:[#allocation4 + $0x418] sm:$0xff]
      %v4739 = vld [vmem:[#allocation4 + $0x420] sm:$0xff]
      %v4740 = vld [vmem:[#allocation4 + $0x428] sm:$0xff]
      %v4741 = vld [vmem:[#allocation4 + $0x430] sm:$0xff]
      %v4742 = vld [vmem:[#allocation4 + $0x438] sm:$0xff]
      %v4743 = vld [vmem:[#allocation4 + $0x440] sm:$0xff]
      %v4744 = vld [vmem:[#allocation4 + $0x448] sm:$0xff]
      %v4745 = vld [vmem:[#allocation4 + $0x450] sm:$0xff]
      %v4746 = vld [vmem:[#allocation4 + $0x458] sm:$0xff]
      %v4747 = vld [vmem:[#allocation4 + $0x460] sm:$0xff]
      %v4748 = vld [vmem:[#allocation4 + $0x468] sm:$0xff]
      %v4749 = vld [vmem:[#allocation4 + $0x470] sm:$0xff]
      %v4750 = vld [vmem:[#allocation4 + $0x478] sm:$0xff]
      %v4751 = vld [vmem:[#allocation4 + $0x480] sm:$0xff]
      %v4752 = vld [vmem:[#allocation4 + $0x488] sm:$0xff]
      %v4753 = vld [vmem:[#allocation4 + $0x490] sm:$0xff]
      %v4754 = vld [vmem:[#allocation4 + $0x498] sm:$0xff]
      %v4755 = vld [vmem:[#allocation4 + $0x4a0] sm:$0xff]
      %v4756 = vld [vmem:[#allocation4 + $0x4a8] sm:$0xff]
      %v4757 = vld [vmem:[#allocation4 + $0x4b0] sm:$0xff]
      %v4758 = vld [vmem:[#allocation4 + $0x4b8] sm:$0xff]
      %v4759 = vld [vmem:[#allocation4 + $0x4c0] sm:$0xff]
      %v4760 = vld [vmem:[#allocation4 + $0x4c8] sm:$0xff]
      %v4761 = vld [vmem:[#allocation4 + $0x4d0] sm:$0xff]
      %v4762 = vld [vmem:[#allocation4 + $0x4d8] sm:$0xff]
      %v4763 = vld [vmem:[#allocation4 + $0x4e0] sm:$0xff]
      %v4764 = vld [vmem:[#allocation4 + $0x4e8] sm:$0xff]
      %v4765 = vld [vmem:[#allocation4 + $0x4f0] sm:$0xff]
      %v4766 = vld [vmem:[#allocation4 + $0x4f8] sm:$0xff]
      %v4767 = vld [vmem:[#allocation4 + $0x500] sm:$0xff]
      %v4768 = vld [vmem:[#allocation4 + $0x508] sm:$0xff]
      %v4769 = vld [vmem:[#allocation4 + $0x510] sm:$0xff]
      %v4770 = vld [vmem:[#allocation4 + $0x518] sm:$0xff]
      %v4771 = vld [vmem:[#allocation4 + $0x520] sm:$0xff]
      %v4772 = vld [vmem:[#allocation4 + $0x528] sm:$0xff]
      %v4773 = vld [vmem:[#allocation4 + $0x530] sm:$0xff]
      %v4774 = vld [vmem:[#allocation4 + $0x538] sm:$0xff]
      %v4775 = vld [vmem:[#allocation4 + $0x540] sm:$0xff]
      %v4776 = vld [vmem:[#allocation4 + $0x548] sm:$0xff]
      %v4777 = vld [vmem:[#allocation4 + $0x550] sm:$0xff]
      %v4778 = vld [vmem:[#allocation4 + $0x558] sm:$0xff]
      %v4779 = vld [vmem:[#allocation4 + $0x560] sm:$0xff]
      %v4780 = vld [vmem:[#allocation4 + $0x568] sm:$0xff]
      %v4781 = vld [vmem:[#allocation4 + $0x570] sm:$0xff]
      %v4782 = vld [vmem:[#allocation4 + $0x578] sm:$0xff]
      %v4783 = vld [vmem:[#allocation4 + $0x580] sm:$0xff]
      %v4784 = vld [vmem:[#allocation4 + $0x588] sm:$0xff]
      %v4785 = vld [vmem:[#allocation4 + $0x590] sm:$0xff]
      %v4786 = vld [vmem:[#allocation4 + $0x598] sm:$0xff]
      %v4787 = vld [vmem:[#allocation4 + $0x5a0] sm:$0xff]
      %v4788 = vld [vmem:[#allocation4 + $0x5a8] sm:$0xff]
      %v4789 = vld [vmem:[#allocation4 + $0x5b0] sm:$0xff]
      %v4790 = vld [vmem:[#allocation4 + $0x5b8] sm:$0xff]
      %v4791 = vld [vmem:[#allocation4 + $0x5c0] sm:$0xff]
      %v4792 = vld [vmem:[#allocation4 + $0x5c8] sm:$0xff]
      %v4793 = vld [vmem:[#allocation4 + $0x5d0] sm:$0xff]
      %v4794 = vld [vmem:[#allocation4 + $0x5d8] sm:$0xff]
      %v4795 = vld [vmem:[#allocation4 + $0x5e0] sm:$0xff]
      %v4796 = vld [vmem:[#allocation4 + $0x5e8] sm:$0xff]
      %v4797 = vld [vmem:[#allocation4 + $0x5f0] sm:$0xff]
      %v4798 = vld [vmem:[#allocation4 + $0x5f8] sm:$0xff]
      %v4799 = vld [vmem:[#allocation4 + $0x600] sm:$0xff]
      %v4800 = vld [vmem:[#allocation4 + $0x608] sm:$0xff]
      %v4801 = vld [vmem:[#allocation4 + $0x610] sm:$0xff]
      %v4802 = vld [vmem:[#allocation4 + $0x618] sm:$0xff]
      %v4803 = vld [vmem:[#allocation4 + $0x620] sm:$0xff]
      %v4804 = vld [vmem:[#allocation4 + $0x628] sm:$0xff]
      %v4805 = vld [vmem:[#allocation4 + $0x630] sm:$0xff]
      %v4806 = vld [vmem:[#allocation4 + $0x638] sm:$0xff]
      %v4807 = vld [vmem:[#allocation4 + $0x640] sm:$0xff]
      %v4808 = vld [vmem:[#allocation4 + $0x648] sm:$0xff]
      %v4809 = vld [vmem:[#allocation4 + $0x650] sm:$0xff]
      %v4810 = vld [vmem:[#allocation4 + $0x658] sm:$0xff]
      %v4811 = vld [vmem:[#allocation4 + $0x660] sm:$0xff]
      %v4812 = vld [vmem:[#allocation4 + $0x668] sm:$0xff]
      %v4813 = vld [vmem:[#allocation4 + $0x670] sm:$0xff]
      %v4814 = vld [vmem:[#allocation4 + $0x678] sm:$0xff]
      %v4815 = vld [vmem:[#allocation4 + $0x680] sm:$0xff]
      %v4816 = vld [vmem:[#allocation4 + $0x688] sm:$0xff]
      %v4817 = vld [vmem:[#allocation4 + $0x690] sm:$0xff]
      %v4818 = vld [vmem:[#allocation4 + $0x698] sm:$0xff]
      %v4819 = vld [vmem:[#allocation4 + $0x6a0] sm:$0xff]
      %v4820 = vld [vmem:[#allocation4 + $0x6a8] sm:$0xff]
      %v4821 = vld [vmem:[#allocation4 + $0x6b0] sm:$0xff]
      %v4822 = vld [vmem:[#allocation4 + $0x6b8] sm:$0xff]
      %v4823 = vld [vmem:[#allocation4 + $0x6c0] sm:$0xff]
      %v4824 = vld [vmem:[#allocation4 + $0x6c8] sm:$0xff]
      %v4825 = vld [vmem:[#allocation4 + $0x6d0] sm:$0xff]
      %v4826 = vld [vmem:[#allocation4 + $0x6d8] sm:$0xff]
      %v4827 = vld [vmem:[#allocation4 + $0x6e0] sm:$0xff]
      %v4828 = vld [vmem:[#allocation4 + $0x6e8] sm:$0xff]
      %v4829 = vld [vmem:[#allocation4 + $0x6f0] sm:$0xff]
      %v4830 = vld [vmem:[#allocation4 + $0x6f8] sm:$0xff]
      %v4831 = vld [vmem:[#allocation4 + $0x700] sm:$0xff]
      %v4832 = vld [vmem:[#allocation4 + $0x708] sm:$0xff]
      %v4833 = vld [vmem:[#allocation4 + $0x710] sm:$0xff]
      %v4834 = vld [vmem:[#allocation4 + $0x718] sm:$0xff]
      %v4835 = vld [vmem:[#allocation4 + $0x720] sm:$0xff]
      %v4836 = vld [vmem:[#allocation4 + $0x728] sm:$0xff]
      %v4837 = vld [vmem:[#allocation4 + $0x730] sm:$0xff]
      %v4838 = vld [vmem:[#allocation4 + $0x738] sm:$0xff]
      %v4839 = vld [vmem:[#allocation4 + $0x740] sm:$0xff]
      %v4840 = vld [vmem:[#allocation4 + $0x748] sm:$0xff]
      %v4841 = vld [vmem:[#allocation4 + $0x750] sm:$0xff]
      %v4842 = vld [vmem:[#allocation4 + $0x758] sm:$0xff]
      %v4843 = vld [vmem:[#allocation4 + $0x760] sm:$0xff]
      %v4844 = vld [vmem:[#allocation4 + $0x768] sm:$0xff]
      %v4845 = vld [vmem:[#allocation4 + $0x770] sm:$0xff]
      %v4846 = vld [vmem:[#allocation4 + $0x778] sm:$0xff]
      %v4847 = vld [vmem:[#allocation4 + $0x780] sm:$0xff]
      %v4848 = vld [vmem:[#allocation4 + $0x788] sm:$0xff]
      %v4849 = vld [vmem:[#allocation4 + $0x790] sm:$0xff]
      %v4850 = vld [vmem:[#allocation4 + $0x798] sm:$0xff]
      %v4851 = vld [vmem:[#allocation4 + $0x7a0] sm:$0xff]
      %v4852 = vld [vmem:[#allocation4 + $0x7a8] sm:$0xff]
      %v4853 = vld [vmem:[#allocation4 + $0x7b0] sm:$0xff]
      %v4854 = vld [vmem:[#allocation4 + $0x7b8] sm:$0xff]
      %v4855 = vld [vmem:[#allocation4 + $0x7c0] sm:$0xff]
      %v4856 = vld [vmem:[#allocation4 + $0x7c8] sm:$0xff]
      %v4857 = vld [vmem:[#allocation4 + $0x7d0] sm:$0xff]
      %v4858 = vld [vmem:[#allocation4 + $0x7d8] sm:$0xff]
      %v4859 = vld [vmem:[#allocation4 + $0x7e0] sm:$0xff]
      %v4860 = vld [vmem:[#allocation4 + $0x7e8] sm:$0xff]
      %v4861 = vld [vmem:[#allocation4 + $0x7f0] sm:$0xff]
      %v4862 = vld [vmem:[#allocation4 + $0x7f8] sm:$0xff]
      %v4863 = vld [vmem:[#allocation4 + $0x800] sm:$0xff]
      %v4864 = vld [vmem:[#allocation4 + $0x808] sm:$0xff]
      %v4865 = vld [vmem:[#allocation4 + $0x810] sm:$0xff]
      %v4866 = vld [vmem:[#allocation4 + $0x818] sm:$0xff]
      %v4867 = vld [vmem:[#allocation4 + $0x820] sm:$0xff]
      %v4868 = vld [vmem:[#allocation4 + $0x828] sm:$0xff]
      %v4869 = vld [vmem:[#allocation4 + $0x830] sm:$0xff]
      %v4870 = vld [vmem:[#allocation4 + $0x838] sm:$0xff]
      %v4871 = vld [vmem:[#allocation4 + $0x840] sm:$0xff]
      %v4872 = vld [vmem:[#allocation4 + $0x848] sm:$0xff]
      %v4873 = vld [vmem:[#allocation4 + $0x850] sm:$0xff]
      %v4874 = vld [vmem:[#allocation4 + $0x858] sm:$0xff]
      %v4875 = vld [vmem:[#allocation4 + $0x860] sm:$0xff]
      %v4876 = vld [vmem:[#allocation4 + $0x868] sm:$0xff]
      %v4877 = vld [vmem:[#allocation4 + $0x870] sm:$0xff]
      %v4878 = vld [vmem:[#allocation4 + $0x878] sm:$0xff]
      %v4879 = vld [vmem:[#allocation4 + $0x880] sm:$0xff]
      %v4880 = vld [vmem:[#allocation4 + $0x888] sm:$0xff]
      %v4881 = vld [vmem:[#allocation4 + $0x890] sm:$0xff]
      %v4882 = vld [vmem:[#allocation4 + $0x898] sm:$0xff]
      %v4883 = vld [vmem:[#allocation4 + $0x8a0] sm:$0xff]
      %v4884 = vld [vmem:[#allocation4 + $0x8a8] sm:$0xff]
      %v4885 = vld [vmem:[#allocation4 + $0x8b0] sm:$0xff]
      %v4886 = vld [vmem:[#allocation4 + $0x8b8] sm:$0xff]
      %v4887 = vld [vmem:[#allocation4 + $0x8c0] sm:$0xff]
      %v4888 = vld [vmem:[#allocation4 + $0x8c8] sm:$0xff]
      %v4889 = vld [vmem:[#allocation4 + $0x8d0] sm:$0xff]
      %v4890 = vld [vmem:[#allocation4 + $0x8d8] sm:$0xff]
      %v4891 = vld [vmem:[#allocation4 + $0x8e0] sm:$0xff]
      %v4892 = vld [vmem:[#allocation4 + $0x8e8] sm:$0xff]
      %v4893 = vld [vmem:[#allocation4 + $0x8f0] sm:$0xff]
      %v4894 = vld [vmem:[#allocation4 + $0x8f8] sm:$0xff]
      %v4895 = vld [vmem:[#allocation4 + $0x900] sm:$0xff]
      %v4896 = vld [vmem:[#allocation4 + $0x908] sm:$0xff]
      %v4897 = vld [vmem:[#allocation4 + $0x910] sm:$0xff]
      %v4898 = vld [vmem:[#allocation4 + $0x918] sm:$0xff]
      %v4899 = vld [vmem:[#allocation4 + $0x920] sm:$0xff]
      %v4900 = vld [vmem:[#allocation4 + $0x928] sm:$0xff]
      %v4901 = vld [vmem:[#allocation4 + $0x930] sm:$0xff]
      %v4902 = vld [vmem:[#allocation4 + $0x938] sm:$0xff]
      %v4903 = vld [vmem:[#allocation4 + $0x940] sm:$0xff]
      %v4904 = vld [vmem:[#allocation4 + $0x948] sm:$0xff]
      %v4905 = vld [vmem:[#allocation4 + $0x950] sm:$0xff]
      %v4906 = vld [vmem:[#allocation4 + $0x958] sm:$0xff]
      %v4907 = vld [vmem:[#allocation4 + $0x960] sm:$0xff]
      %v4908 = vld [vmem:[#allocation4 + $0x968] sm:$0xff]
      %v4909 = vld [vmem:[#allocation4 + $0x970] sm:$0xff]
      %v4910 = vld [vmem:[#allocation4 + $0x978] sm:$0xff]
      %v4911 = vld [vmem:[#allocation4 + $0x980] sm:$0xff]
      %v4912 = vld [vmem:[#allocation4 + $0x988] sm:$0xff]
      %v4913 = vld [vmem:[#allocation4 + $0x990] sm:$0xff]
      %v4914 = vld [vmem:[#allocation4 + $0x998] sm:$0xff]
      %v4915 = vld [vmem:[#allocation4 + $0x9a0] sm:$0xff]
      %v4916 = vld [vmem:[#allocation4 + $0x9a8] sm:$0xff]
      %v4917 = vld [vmem:[#allocation4 + $0x9b0] sm:$0xff]
      %v4918 = vld [vmem:[#allocation4 + $0x9b8] sm:$0xff]
      %v4919 = vld [vmem:[#allocation4 + $0x9c0] sm:$0xff]
      %v4920 = vld [vmem:[#allocation4 + $0x9c8] sm:$0xff]
      %v4921 = vld [vmem:[#allocation4 + $0x9d0] sm:$0xff]
      %v4922 = vld [vmem:[#allocation4 + $0x9d8] sm:$0xff]
      %v4923 = vld [vmem:[#allocation4 + $0x9e0] sm:$0xff]
      %v4924 = vld [vmem:[#allocation4 + $0x9e8] sm:$0xff]
      %v4925 = vld [vmem:[#allocation4 + $0x9f0] sm:$0xff]
      %v4926 = vld [vmem:[#allocation4 + $0x9f8] sm:$0xff]
      %v4927 = vld [vmem:[#allocation4 + $0xa00] sm:$0xff]
      %v4928 = vld [vmem:[#allocation4 + $0xa08] sm:$0xff]
      %v4929 = vld [vmem:[#allocation4 + $0xa10] sm:$0xff]
      %v4930 = vld [vmem:[#allocation4 + $0xa18] sm:$0xff]
      %v4931 = vld [vmem:[#allocation4 + $0xa20] sm:$0xff]
      %v4932 = vld [vmem:[#allocation4 + $0xa28] sm:$0xff]
      %v4933 = vld [vmem:[#allocation4 + $0xa30] sm:$0xff]
      %v4934 = vld [vmem:[#allocation4 + $0xa38] sm:$0xff]
      %v4935 = vld [vmem:[#allocation4 + $0xa40] sm:$0xff]
      %v4936 = vld [vmem:[#allocation4 + $0xa48] sm:$0xff]
      %v4937 = vld [vmem:[#allocation4 + $0xa50] sm:$0xff]
      %v4938 = vld [vmem:[#allocation4 + $0xa58] sm:$0xff]
      %v4939 = vld [vmem:[#allocation4 + $0xa60] sm:$0xff]
      %v4940 = vld [vmem:[#allocation4 + $0xa68] sm:$0xff]
      %v4941 = vld [vmem:[#allocation4 + $0xa70] sm:$0xff]
      %v4942 = vld [vmem:[#allocation4 + $0xa78] sm:$0xff]
      %v4943 = vld [vmem:[#allocation4 + $0xa80] sm:$0xff]
      %v4944 = vld [vmem:[#allocation4 + $0xa88] sm:$0xff]
      %v4945 = vld [vmem:[#allocation4 + $0xa90] sm:$0xff]
      %v4946 = vld [vmem:[#allocation4 + $0xa98] sm:$0xff]
      %v4947 = vld [vmem:[#allocation4 + $0xaa0] sm:$0xff]
      %v4948 = vld [vmem:[#allocation4 + $0xaa8] sm:$0xff]
      %v4949 = vld [vmem:[#allocation4 + $0xab0] sm:$0xff]
      %v4950 = vld [vmem:[#allocation4 + $0xab8] sm:$0xff]
      %v4951 = vld [vmem:[#allocation4 + $0xac0] sm:$0xff]
      %v4952 = vld [vmem:[#allocation4 + $0xac8] sm:$0xff]
      %v4953 = vld [vmem:[#allocation4 + $0xad0] sm:$0xff]
      %v4954 = vld [vmem:[#allocation4 + $0xad8] sm:$0xff]
      %v4955 = vld [vmem:[#allocation4 + $0xae0] sm:$0xff]
      %v4956 = vld [vmem:[#allocation4 + $0xae8] sm:$0xff]
      %v4957 = vld [vmem:[#allocation4 + $0xaf0] sm:$0xff]
      %v4958 = vld [vmem:[#allocation4 + $0xaf8] sm:$0xff]
      %v4959 = vld [vmem:[#allocation4 + $0xb00] sm:$0xff]
      %v4960 = vld [vmem:[#allocation4 + $0xb08] sm:$0xff]
      %v4961 = vld [vmem:[#allocation4 + $0xb10] sm:$0xff]
      %v4962 = vld [vmem:[#allocation4 + $0xb18] sm:$0xff]
      %v4963 = vld [vmem:[#allocation4 + $0xb20] sm:$0xff]
      %v4964 = vld [vmem:[#allocation4 + $0xb28] sm:$0xff]
      %v4965 = vld [vmem:[#allocation4 + $0xb30] sm:$0xff]
      %v4966 = vld [vmem:[#allocation4 + $0xb38] sm:$0xff]
      %v4967 = vld [vmem:[#allocation4 + $0xb40] sm:$0xff]
      %v4968 = vld [vmem:[#allocation4 + $0xb48] sm:$0xff]
      %v4969 = vld [vmem:[#allocation4 + $0xb50] sm:$0xff]
      %v4970 = vld [vmem:[#allocation4 + $0xb58] sm:$0xff]
      %v4971 = vld [vmem:[#allocation4 + $0xb60] sm:$0xff]
      %v4972 = vld [vmem:[#allocation4 + $0xb68] sm:$0xff]
      %v4973 = vld [vmem:[#allocation4 + $0xb70] sm:$0xff]
      %v4974 = vld [vmem:[#allocation4 + $0xb78] sm:$0xff]
      %v4975 = vld [vmem:[#allocation4 + $0xb80] sm:$0xff]
      %v4976 = vld [vmem:[#allocation4 + $0xb88] sm:$0xff]
      %v4977 = vld [vmem:[#allocation4 + $0xb90] sm:$0xff]
      %v4978 = vld [vmem:[#allocation4 + $0xb98] sm:$0xff]
      %v4979 = vld [vmem:[#allocation4 + $0xba0] sm:$0xff]
      %v4980 = vld [vmem:[#allocation4 + $0xba8] sm:$0xff]
      %v4981 = vld [vmem:[#allocation4 + $0xbb0] sm:$0xff]
      %v4982 = vld [vmem:[#allocation4 + $0xbb8] sm:$0xff]
      %v4983 = vld [vmem:[#allocation4 + $0xbc0] sm:$0xff]
      %v4984 = vld [vmem:[#allocation4 + $0xbc8] sm:$0xff]
      %v4985 = vld [vmem:[#allocation4 + $0xbd0] sm:$0xff]
      %v4986 = vld [vmem:[#allocation4 + $0xbd8] sm:$0xff]
      %v4987 = vld [vmem:[#allocation4 + $0xbe0] sm:$0xff]
      %v4988 = vld [vmem:[#allocation4 + $0xbe8] sm:$0xff]
      %v4989 = vld [vmem:[#allocation4 + $0xbf0] sm:$0xff]
      %v4990 = vld [vmem:[#allocation4 + $0xbf8] sm:$0xff]
      %v4991 = vld [vmem:[#allocation4 + $0xc00] sm:$0xff]
      %v4992 = vld [vmem:[#allocation4 + $0xc08] sm:$0xff]
      %v4993 = vld [vmem:[#allocation4 + $0xc10] sm:$0xff]
      %v4994 = vld [vmem:[#allocation4 + $0xc18] sm:$0xff]
      %v4995 = vld [vmem:[#allocation4 + $0xc20] sm:$0xff]
      %v4996 = vld [vmem:[#allocation4 + $0xc28] sm:$0xff]
      %v4997 = vld [vmem:[#allocation4 + $0xc30] sm:$0xff]
      %v4998 = vld [vmem:[#allocation4 + $0xc38] sm:$0xff]
      %v4999 = vld [vmem:[#allocation4 + $0xc40] sm:$0xff]
      %v5000 = vld [vmem:[#allocation4 + $0xc48] sm:$0xff]
      %v5001 = vld [vmem:[#allocation4 + $0xc50] sm:$0xff]
      %v5002 = vld [vmem:[#allocation4 + $0xc58] sm:$0xff]
      %v5003 = vld [vmem:[#allocation4 + $0xc60] sm:$0xff]
      %v5004 = vld [vmem:[#allocation4 + $0xc68] sm:$0xff]
      %v5005 = vld [vmem:[#allocation4 + $0xc70] sm:$0xff]
      %v5006 = vld [vmem:[#allocation4 + $0xc78] sm:$0xff]
      %v5007 = vld [vmem:[#allocation4 + $0xc80] sm:$0xff]
      %v5008 = vld [vmem:[#allocation4 + $0xc88] sm:$0xff]
      %v5009 = vld [vmem:[#allocation4 + $0xc90] sm:$0xff]
      %v5010 = vld [vmem:[#allocation4 + $0xc98] sm:$0xff]
      %v5011 = vld [vmem:[#allocation4 + $0xca0] sm:$0xff]
      %v5012 = vld [vmem:[#allocation4 + $0xca8] sm:$0xff]
      %v5013 = vld [vmem:[#allocation4 + $0xcb0] sm:$0xff]
      %v5014 = vld [vmem:[#allocation4 + $0xcb8] sm:$0xff]
      %v5015 = vld [vmem:[#allocation4 + $0xcc0] sm:$0xff]
      %v5016 = vld [vmem:[#allocation4 + $0xcc8] sm:$0xff]
      %v5017 = vld [vmem:[#allocation4 + $0xcd0] sm:$0xff]
      %v5018 = vld [vmem:[#allocation4 + $0xcd8] sm:$0xff]
      %v5019 = vld [vmem:[#allocation4 + $0xce0] sm:$0xff]
      %v5020 = vld [vmem:[#allocation4 + $0xce8] sm:$0xff]
      %v5021 = vld [vmem:[#allocation4 + $0xcf0] sm:$0xff]
      %v5022 = vld [vmem:[#allocation4 + $0xcf8] sm:$0xff]
      %v5023 = vld [vmem:[#allocation4 + $0xd00] sm:$0xff]
      %v5024 = vld [vmem:[#allocation4 + $0xd08] sm:$0xff]
      %v5025 = vld [vmem:[#allocation4 + $0xd10] sm:$0xff]
      %v5026 = vld [vmem:[#allocation4 + $0xd18] sm:$0xff]
      %v5027 = vld [vmem:[#allocation4 + $0xd20] sm:$0xff]
      %v5028 = vld [vmem:[#allocation4 + $0xd28] sm:$0xff]
      %v5029 = vld [vmem:[#allocation4 + $0xd30] sm:$0xff]
      %v5030 = vld [vmem:[#allocation4 + $0xd38] sm:$0xff]
      %v5031 = vld [vmem:[#allocation4 + $0xd40] sm:$0xff]
      %v5032 = vld [vmem:[#allocation4 + $0xd48] sm:$0xff]
      %v5033 = vld [vmem:[#allocation4 + $0xd50] sm:$0xff]
      %v5034 = vld [vmem:[#allocation4 + $0xd58] sm:$0xff]
      %v5035 = vld [vmem:[#allocation4 + $0xd60] sm:$0xff]
      %v5036 = vld [vmem:[#allocation4 + $0xd68] sm:$0xff]
      %v5037 = vld [vmem:[#allocation4 + $0xd70] sm:$0xff]
      %v5038 = vld [vmem:[#allocation4 + $0xd78] sm:$0xff]
      %v5039 = vld [vmem:[#allocation4 + $0xd80] sm:$0xff]
      %v5040 = vld [vmem:[#allocation4 + $0xd88] sm:$0xff]
      %v5041 = vld [vmem:[#allocation4 + $0xd90] sm:$0xff]
      %v5042 = vld [vmem:[#allocation4 + $0xd98] sm:$0xff]
      %v5043 = vld [vmem:[#allocation4 + $0xda0] sm:$0xff]
      %v5044 = vld [vmem:[#allocation4 + $0xda8] sm:$0xff]
      %v5045 = vld [vmem:[#allocation4 + $0xdb0] sm:$0xff]
      %v5046 = vld [vmem:[#allocation4 + $0xdb8] sm:$0xff]
      %v5047 = vld [vmem:[#allocation4 + $0xdc0] sm:$0xff]
      %v5048 = vld [vmem:[#allocation4 + $0xdc8] sm:$0xff]
      %v5049 = vld [vmem:[#allocation4 + $0xdd0] sm:$0xff]
      %v5050 = vld [vmem:[#allocation4 + $0xdd8] sm:$0xff]
      %v5051 = vld [vmem:[#allocation4 + $0xde0] sm:$0xff]
      %v5052 = vld [vmem:[#allocation4 + $0xde8] sm:$0xff]
      %v5053 = vld [vmem:[#allocation4 + $0xdf0] sm:$0xff]
      %v5054 = vld [vmem:[#allocation4 + $0xdf8] sm:$0xff]
      %v5055 = vld [vmem:[#allocation4 + $0xe00] sm:$0xff]
      %v5056 = vld [vmem:[#allocation4 + $0xe08] sm:$0xff]
      %v5057 = vld [vmem:[#allocation4 + $0xe10] sm:$0xff]
      %v5058 = vld [vmem:[#allocation4 + $0xe18] sm:$0xff]
      %v5059 = vld [vmem:[#allocation4 + $0xe20] sm:$0xff]
      %v5060 = vld [vmem:[#allocation4 + $0xe28] sm:$0xff]
      %v5061 = vld [vmem:[#allocation4 + $0xe30] sm:$0xff]
      %v5062 = vld [vmem:[#allocation4 + $0xe38] sm:$0xff]
      %v5063 = vld [vmem:[#allocation4 + $0xe40] sm:$0xff]
      %v5064 = vld [vmem:[#allocation4 + $0xe48] sm:$0xff]
      %v5065 = vld [vmem:[#allocation4 + $0xe50] sm:$0xff]
      %v5066 = vld [vmem:[#allocation4 + $0xe58] sm:$0xff]
      %v5067 = vld [vmem:[#allocation4 + $0xe60] sm:$0xff]
      %v5068 = vld [vmem:[#allocation4 + $0xe68] sm:$0xff]
      %v5069 = vld [vmem:[#allocation4 + $0xe70] sm:$0xff]
      %v5070 = vld [vmem:[#allocation4 + $0xe78] sm:$0xff]
      %v5071 = vld [vmem:[#allocation4 + $0xe80] sm:$0xff]
      %v5072 = vld [vmem:[#allocation4 + $0xe88] sm:$0xff]
      %v5073 = vld [vmem:[#allocation4 + $0xe90] sm:$0xff]
      %v5074 = vld [vmem:[#allocation4 + $0xe98] sm:$0xff]
      %v5075 = vld [vmem:[#allocation4 + $0xea0] sm:$0xff]
      %v5076 = vld [vmem:[#allocation4 + $0xea8] sm:$0xff]
      %v5077 = vld [vmem:[#allocation4 + $0xeb0] sm:$0xff]
      %v5078 = vld [vmem:[#allocation4 + $0xeb8] sm:$0xff]
      %v5079 = vld [vmem:[#allocation4 + $0xec0] sm:$0xff]
      %v5080 = vld [vmem:[#allocation4 + $0xec8] sm:$0xff]
      %v5081 = vld [vmem:[#allocation4 + $0xed0] sm:$0xff]
      %v5082 = vld [vmem:[#allocation4 + $0xed8] sm:$0xff]
      %v5083 = vld [vmem:[#allocation4 + $0xee0] sm:$0xff]
      %v5084 = vld [vmem:[#allocation4 + $0xee8] sm:$0xff]
      %v5085 = vld [vmem:[#allocation4 + $0xef0] sm:$0xff]
      %v5086 = vld [vmem:[#allocation4 + $0xef8] sm:$0xff]
      %v5087 = vld [vmem:[#allocation4 + $0xf00] sm:$0xff]
      %v5088 = vld [vmem:[#allocation4 + $0xf08] sm:$0xff]
      %v5089 = vld [vmem:[#allocation4 + $0xf10] sm:$0xff]
      %v5090 = vld [vmem:[#allocation4 + $0xf18] sm:$0xff]
      %v5091 = vld [vmem:[#allocation4 + $0xf20] sm:$0xff]
      %v5092 = vld [vmem:[#allocation4 + $0xf28] sm:$0xff]
      %v5093 = vld [vmem:[#allocation4 + $0xf30] sm:$0xff]
      %v5094 = vld [vmem:[#allocation4 + $0xf38] sm:$0xff]
      %v5095 = vld [vmem:[#allocation4 + $0xf40] sm:$0xff]
      %v5096 = vld [vmem:[#allocation4 + $0xf48] sm:$0xff]
      %v5097 = vld [vmem:[#allocation4 + $0xf50] sm:$0xff]
      %v5098 = vld [vmem:[#allocation4 + $0xf58] sm:$0xff]
      %v5099 = vld [vmem:[#allocation4 + $0xf60] sm:$0xff]
      %v5100 = vld [vmem:[#allocation4 + $0xf68] sm:$0xff]
      %v5101 = vld [vmem:[#allocation4 + $0xf70] sm:$0xff]
      %v5102 = vld [vmem:[#allocation4 + $0xf78] sm:$0xff]
      %v5103 = vld [vmem:[#allocation4 + $0xf80] sm:$0xff]
      %v5104 = vld [vmem:[#allocation4 + $0xf88] sm:$0xff]
      %v5105 = vld [vmem:[#allocation4 + $0xf90] sm:$0xff]
      %v5106 = vld [vmem:[#allocation4 + $0xf98] sm:$0xff]
      %5108 = vset.pattern.permute.xlu0 0
      %5109 = vperm.xlu0 %5108, %v366
      %v5110 = vpop.permute.xlu0 %5109
      %5113 = vset.pattern.permute.xlu0 0
      %5114 = vperm.xlu0 %5113, %v367
      %v5115 = vpop.permute.xlu0 %5114
      %5118 = vset.pattern.permute.xlu0 0
      %5119 = vperm.xlu0 %5118, %v368
      %v5120 = vpop.permute.xlu0 %5119
      %5123 = vset.pattern.permute.xlu0 0
      %5124 = vperm.xlu0 %5123, %v369
      %v5125 = vpop.permute.xlu0 %5124
      %v5128 = vsel %vm1077, %v344, 0
      %v5131 = vsel %vm1077, %v351, 0
      %v5134 = vsel %vm1077, %v358, 0
      %v5137 = vsel %vm1077, %v365, 0
      %5139 = vmatprep.subr.mxu0 %v4608
      %5140 = vmatpush1.msra.mxu0 %v4607
      %5141 = vmatprep.subr.mxu0 %v4613
      %5142 = vmatpush1.msra.mxu0 %v4612
      %5143 = vmatprep.subr.mxu0 %v4618
      %5144 = vmatpush1.msra.mxu0 %v4617
      %5145 = vmatprep.subr.mxu0 %v4623
      %5146 = vmatpush1.msra.mxu0 %v4622
      %5147 = vmatprep.subr.mxu0 %v4628
      %5148 = vmatpush1.msra.mxu0 %v4627
      %5149 = vmatprep.subr.mxu0 %v4633
      %5150 = vmatpush1.msra.mxu0 %v4632
      %5151 = vmatprep.subr.mxu0 %v4638
      %5152 = vmatpush1.msra.mxu0 %v4637
      %5153 = vmatprep.subr.mxu0 %v4643
      %5154 = vmatpush1.msra.mxu0 %v4642
      %5155 = vmatprep.subr.mxu0 %v4648
      %5156 = vmatpush1.msra.mxu0 %v4647
      %5157 = vmatprep.subr.mxu0 %v4653
      %5158 = vmatpush1.msra.mxu0 %v4652
      %5159 = vmatprep.subr.mxu0 %v4658
      %5160 = vmatpush1.msra.mxu0 %v4657
      %5161 = vmatprep.subr.mxu0 %v4663
      %5162 = vmatpush1.msra.mxu0 %v4662
      %5163 = vmatprep.subr.mxu0 %v4668
      %5164 = vmatpush1.msra.mxu0 %v4667
      %5165 = vmatprep.subr.mxu0 %v4673
      %5166 = vmatpush1.msra.mxu0 %v4672
      %5167 = vmatprep.subr.mxu0 %v4678
      %5168 = vmatpush1.msra.mxu0 %v4677
      %5169 = vmatprep.subr.mxu0 %v4683
      %5170 = vmatpush1.msra.mxu0 %v4682
      %5171 = vmatprep.subr.mxu0 %v4688
      %5172 = vmatpush1.msra.mxu0 %v4687
      %5173 = vmatprep.subr.mxu0 %v4693
      %5174 = vmatpush1.msra.mxu0 %v4692
      %5175 = vmatprep.subr.mxu0 %v4698
      %5176 = vmatpush1.msra.mxu0 %v4697
      %5177 = vmatprep.subr.mxu0 %v4703
      %5178 = vmatpush1.msra.mxu0 %v4702
      %5179 = vmatprep.subr.mxu0 %v4708
      %5180 = vmatpush1.msra.mxu0 %v4707
      %5181 = vmatprep.subr.mxu0 %v4713
      %5182 = vmatpush1.msra.mxu0 %v4712
      %5183 = vmatprep.subr.mxu0 %v4718
      %5184 = vmatpush1.msra.mxu0 %v4717
      %5185 = vmatprep.subr.mxu0 %v4723
      %5186 = vmatpush1.msra.mxu0 %v4722
      %5187 = vmatprep.subr.mxu0 %v4728
      %5188 = vmatpush1.msra.mxu0 %v4727
      %5189 = vmatprep.subr.mxu0 %v4733
      %5190 = vmatpush1.msra.mxu0 %v4732
      %5191 = vmatprep.subr.mxu0 %v4738
      %5192 = vmatpush1.msra.mxu0 %v4737
      %5193 = vmatprep.subr.mxu0 %v4743
      %5194 = vmatpush1.msra.mxu0 %v4742
      %5195 = vmatprep.subr.mxu0 %v4748
      %5196 = vmatpush1.msra.mxu0 %v4747
      %5197 = vmatprep.subr.mxu0 %v4753
      %5198 = vmatpush1.msra.mxu0 %v4752
      %5199 = vmatprep.subr.mxu0 %v4758
      %5200 = vmatpush1.msra.mxu0 %v4757
      %5201 = vmatprep.subr.mxu0 %v4763
      %5202 = vmatpush1.msra.mxu0 %v4762
      %5203 = vmatprep.mubr.f32.mxu0 %v339
      %5204 = vmatmul.mubr.f32.gmra.mrb[0].mxu0 %v338
      %v5205 = vpop.f32.mrb[0].mxu0
      %v5206 = vadd.f32 %v5110, %v5205
      %v5207 = vpop.f32.mrb[0].mxu0
      %v5208 = vadd.f32 %v5110, %v5207
      %5209 = vmatprep.mubr.f32.mxu0 %v346
      %5210 = vmatmul.mubr.f32.gmra.mrb[0].mxu0 %v345
      %v5211 = vpop.f32.mrb[0].mxu0
      %v5212 = vadd.f32 %v5115, %v5211
      %v5213 = vpop.f32.mrb[0].mxu0
      %v5214 = vadd.f32 %v5115, %v5213
      %5215 = vmatprep.mubr.f32.mxu0 %v353
      %5216 = vmatmul.mubr.f32.gmra.mrb[0].mxu0 %v352
      %v5217 = vpop.f32.mrb[0].mxu0
      %v5218 = vadd.f32 %v5120, %v5217
      %v5219 = vpop.f32.mrb[0].mxu0
      %v5220 = vadd.f32 %v5120, %v5219
      %5221 = vmatprep.mubr.f32.mxu0 %v360
      %5222 = vmatmul.mubr.f32.gmra.mrb[0].mxu0 %v359
      %v5223 = vpop.f32.mrb[0].mxu0
      %v5224 = vadd.f32 %v5125, %v5223
      %v5225 = vpop.f32.mrb[0].mxu0
      %v5226 = vadd.f32 %v5125, %v5225
      %5227 = vdwg.mxu0
      %5228 = vmatprep.subr.mxu0 %v4768
      %5229 = vmatpush1.msra.mxu0 %v4767
      %5230 = vmatprep.subr.mxu0 %v4773
      %5231 = vmatpush1.msra.mxu0 %v4772
      %5232 = vmatprep.subr.mxu0 %v4778
      %5233 = vmatpush1.msra.mxu0 %v4777
      %5234 = vmatprep.subr.mxu0 %v4783
      %5235 = vmatpush1.msra.mxu0 %v4782
      %5236 = vmatprep.subr.mxu0 %v4788
      %5237 = vmatpush1.msra.mxu0 %v4787
      %5238 = vmatprep.subr.mxu0 %v4793
      %5239 = vmatpush1.msra.mxu0 %v4792
      %5240 = vmatprep.subr.mxu0 %v4798
      %5241 = vmatpush1.msra.mxu0 %v4797
      %5242 = vmatprep.subr.mxu0 %v4803
      %5243 = vmatpush1.msra.mxu0 %v4802
      %5244 = vmatprep.subr.mxu0 %v4808
      %5245 = vmatpush1.msra.mxu0 %v4807
      %5246 = vmatprep.subr.mxu0 %v4813
      %5247 = vmatpush1.msra.mxu0 %v4812
      %5248 = vmatprep.subr.mxu0 %v4818
      %5249 = vmatpush1.msra.mxu0 %v4817
      %5250 = vmatprep.subr.mxu0 %v4823
      %5251 = vmatpush1.msra.mxu0 %v4822
      %5252 = vmatprep.subr.mxu0 %v4828
      %5253 = vmatpush1.msra.mxu0 %v4827
      %5254 = vmatprep.subr.mxu0 %v4833
      %5255 = vmatpush1.msra.mxu0 %v4832
      %5256 = vmatprep.subr.mxu0 %v4838
      %5257 = vmatpush1.msra.mxu0 %v4837
      %5258 = vmatprep.subr.mxu0 %v4843
      %5259 = vmatpush1.msra.mxu0 %v4842
      %5260 = vmatprep.subr.mxu0 %v4848
      %5261 = vmatpush1.msra.mxu0 %v4847
      %5262 = vmatprep.subr.mxu0 %v4853
      %5263 = vmatpush1.msra.mxu0 %v4852
      %5264 = vmatprep.subr.mxu0 %v4858
      %5265 = vmatpush1.msra.mxu0 %v4857
      %5266 = vmatprep.subr.mxu0 %v4863
      %5267 = vmatpush1.msra.mxu0 %v4862
      %5268 = vmatprep.subr.mxu0 %v4868
      %5269 = vmatpush1.msra.mxu0 %v4867
      %5270 = vmatprep.subr.mxu0 %v4873
      %5271 = vmatpush1.msra.mxu0 %v4872
      %5272 = vmatprep.subr.mxu0 %v4878
      %5273 = vmatpush1.msra.mxu0 %v4877
      %5274 = vmatprep.subr.mxu0 %v4883
      %5275 = vmatpush1.msra.mxu0 %v4882
      %5276 = vmatprep.subr.mxu0 %v4888
      %5277 = vmatpush1.msra.mxu0 %v4887
      %5278 = vmatprep.subr.mxu0 %v4893
      %5279 = vmatpush1.msra.mxu0 %v4892
      %5280 = vmatprep.subr.mxu0 %v4898
      %5281 = vmatpush1.msra.mxu0 %v4897
      %5282 = vmatprep.subr.mxu0 %v4903
      %5283 = vmatpush1.msra.mxu0 %v4902
      %5284 = vmatprep.subr.mxu0 %v4908
      %5285 = vmatpush1.msra.mxu0 %v4907
      %5286 = vmatprep.subr.mxu0 %v4913
      %5287 = vmatpush1.msra.mxu0 %v4912
      %5288 = vmatprep.subr.mxu0 %v4918
      %5289 = vmatpush1.msra.mxu0 %v4917
      %5290 = vmatprep.subr.mxu0 %v4923
      %5291 = vmatpush1.msra.mxu0 %v4922
      %5292 = vmatprep.mubr.f32.mxu0 %v341
      %5293 = vmatmul.mubr.f32.gmra.mrb[0].mxu0 %v340
      %v5294 = vpop.f32.mrb[0].mxu0
      %v5295 = vadd.f32 %v5206, %v5294
      %v5296 = vpop.f32.mrb[0].mxu0
      %v5297 = vadd.f32 %v5208, %v5296
      %5298 = vmatprep.mubr.f32.mxu0 %v348
      %5299 = vmatmul.mubr.f32.gmra.mrb[0].mxu0 %v347
      %v5300 = vpop.f32.mrb[0].mxu0
      %v5301 = vadd.f32 %v5212, %v5300
      %v5302 = vpop.f32.mrb[0].mxu0
      %v5303 = vadd.f32 %v5214, %v5302
      %5304 = vmatprep.mubr.f32.mxu0 %v355
      %5305 = vmatmul.mubr.f32.gmra.mrb[0].mxu0 %v354
      %v5306 = vpop.f32.mrb[0].mxu0
      %v5307 = vadd.f32 %v5218, %v5306
      %v5308 = vpop.f32.mrb[0].mxu0
      %v5309 = vadd.f32 %v5220, %v5308
      %5310 = vmatprep.mubr.f32.mxu0 %v362
      %5311 = vmatmul.mubr.f32.gmra.mrb[0].mxu0 %v361
      %v5312 = vpop.f32.mrb[0].mxu0
      %v5313 = vadd.f32 %v5224, %v5312
      %v5314 = vpop.f32.mrb[0].mxu0
      %v5315 = vadd.f32 %v5226, %v5314
      %5316 = vdwg.mxu0
      %5317 = vmatprep.subr.mxu0 %v4928
      %5318 = vmatpush1.msra.mxu0 %v4927
      %5319 = vmatprep.subr.mxu0 %v4933
      %5320 = vmatpush1.msra.mxu0 %v4932
      %5321 = vmatprep.subr.mxu0 %v4938
      %5322 = vmatpush1.msra.mxu0 %v4937
      %5323 = vmatprep.subr.mxu0 %v4943
      %5324 = vmatpush1.msra.mxu0 %v4942
      %5325 = vmatprep.subr.mxu0 %v4948
      %5326 = vmatpush1.msra.mxu0 %v4947
      %5327 = vmatprep.subr.mxu0 %v4953
      %5328 = vmatpush1.msra.mxu0 %v4952
      %5329 = vmatprep.subr.mxu0 %v4958
      %5330 = vmatpush1.msra.mxu0 %v4957
      %5331 = vmatprep.subr.mxu0 %v4963
      %5332 = vmatpush1.msra.mxu0 %v4962
      %5333 = vmatprep.subr.mxu0 %v4968
      %5334 = vmatpush1.msra.mxu0 %v4967
      %5335 = vmatprep.subr.mxu0 %v4973
      %5336 = vmatpush1.msra.mxu0 %v4972
      %5337 = vmatprep.subr.mxu0 %v4978
      %5338 = vmatpush1.msra.mxu0 %v4977
      %5339 = vmatprep.subr.mxu0 %v4983
      %5340 = vmatpush1.msra.mxu0 %v4982
      %5341 = vmatprep.subr.mxu0 %v4988
      %5342 = vmatpush1.msra.mxu0 %v4987
      %5343 = vmatprep.subr.mxu0 %v4993
      %5344 = vmatpush1.msra.mxu0 %v4992
      %5345 = vmatprep.subr.mxu0 %v4998
      %5346 = vmatpush1.msra.mxu0 %v4997
      %5347 = vmatprep.subr.mxu0 %v5003
      %5348 = vmatpush1.msra.mxu0 %v5002
      %5349 = vmatprep.subr.mxu0 %v5008
      %5350 = vmatpush1.msra.mxu0 %v5007
      %5351 = vmatprep.subr.mxu0 %v5013
      %5352 = vmatpush1.msra.mxu0 %v5012
      %5353 = vmatprep.subr.mxu0 %v5018
      %5354 = vmatpush1.msra.mxu0 %v5017
      %5355 = vmatprep.subr.mxu0 %v5023
      %5356 = vmatpush1.msra.mxu0 %v5022
      %5357 = vmatprep.subr.mxu0 %v5028
      %5358 = vmatpush1.msra.mxu0 %v5027
      %5359 = vmatprep.subr.mxu0 %v5033
      %5360 = vmatpush1.msra.mxu0 %v5032
      %5361 = vmatprep.subr.mxu0 %v5038
      %5362 = vmatpush1.msra.mxu0 %v5037
      %5363 = vmatprep.subr.mxu0 %v5043
      %5364 = vmatpush1.msra.mxu0 %v5042
      %5365 = vmatprep.subr.mxu0 %v5048
      %5366 = vmatpush1.msra.mxu0 %v5047
      %5367 = vmatprep.subr.mxu0 %v5053
      %5368 = vmatpush1.msra.mxu0 %v5052
      %5369 = vmatprep.subr.mxu0 %v5058
      %5370 = vmatpush1.msra.mxu0 %v5057
      %5371 = vmatprep.subr.mxu0 %v5063
      %5372 = vmatpush1.msra.mxu0 %v5062
      %5373 = vmatprep.subr.mxu0 %v5068
      %5374 = vmatpush1.msra.mxu0 %v5067
      %5375 = vmatprep.subr.mxu0 %v5073
      %5376 = vmatpush1.msra.mxu0 %v5072
      %5377 = vmatprep.subr.mxu0 %v5078
      %5378 = vmatpush1.msra.mxu0 %v5077
      %5379 = vmatprep.subr.mxu0 %v5083
      %5380 = vmatpush1.msra.mxu0 %v5082
      %5381 = vmatprep.mubr.f32.mxu0 %v343
      %5382 = vmatmul.mubr.f32.gmra.mrb[0].mxu0 %v342
      %v5383 = vpop.f32.mrb[0].mxu0
      %v5384 = vadd.f32 %v5295, %v5383
      %v5385 = vpop.f32.mrb[0].mxu0
      %v5386 = vadd.f32 %v5297, %v5385
      %5387 = vmatprep.mubr.f32.mxu0 %v350
      %5388 = vmatmul.mubr.f32.gmra.mrb[0].mxu0 %v349
      %v5389 = vpop.f32.mrb[0].mxu0
      %v5390 = vadd.f32 %v5301, %v5389
      %v5391 = vpop.f32.mrb[0].mxu0
      %v5392 = vadd.f32 %v5303, %v5391
      %5393 = vmatprep.mubr.f32.mxu0 %v357
      %5394 = vmatmul.mubr.f32.gmra.mrb[0].mxu0 %v356
      %v5395 = vpop.f32.mrb[0].mxu0
      %v5396 = vadd.f32 %v5307, %v5395
      %v5397 = vpop.f32.mrb[0].mxu0
      %v5398 = vadd.f32 %v5309, %v5397
      %5399 = vmatprep.mubr.f32.mxu0 %v364
      %5400 = vmatmul.mubr.f32.gmra.mrb[0].mxu0 %v363
      %v5401 = vpop.f32.mrb[0].mxu0
      %v5402 = vadd.f32 %v5313, %v5401
      %v5403 = vpop.f32.mrb[0].mxu0
      %v5404 = vadd.f32 %v5315, %v5403
      %5405 = vdwg.mxu0
      %5406 = vmatprep.subr.mxu0 %v5088
      %5407 = vmatpush1.msra.mxu0 %v5087
      %5408 = vmatprep.subr.mxu0 %v5093
      %5409 = vmatpush1.msra.mxu0 %v5092
      %5410 = vmatprep.subr.mxu0 %v5098
      %5411 = vmatpush1.msra.mxu0 %v5097
      %5412 = vmatprep.subr.mxu0 %v5103
      %5413 = vmatpush1.msra.mxu0 %v5102
      %5414 = vmatprep.subr.mxu0 0.0
      %5415 = vmatpush1.msra.mxu0 0.0
      %5416 = vmatprep.subr.mxu0 0.0
      %5417 = vmatpush1.msra.mxu0 0.0
      %5418 = vmatprep.subr.mxu0 0.0
      %5419 = vmatpush1.msra.mxu0 0.0
      %5420 = vmatprep.subr.mxu0 0.0
      %5421 = vmatpush1.msra.mxu0 0.0
      %5422 = vmatprep.subr.mxu0 0.0
      %5423 = vmatpush1.msra.mxu0 0.0
      %5424 = vmatprep.subr.mxu0 0.0
      %5425 = vmatpush1.msra.mxu0 0.0
      %5426 = vmatprep.subr.mxu0 0.0
      %5427 = vmatpush1.msra.mxu0 0.0
      %5428 = vmatprep.subr.mxu0 0.0
      %5429 = vmatpush1.msra.mxu0 0.0
      %5430 = vmatprep.subr.mxu0 0.0
      %5431 = vmatpush1.msra.mxu0 0.0
      %5432 = vmatprep.subr.mxu0 0.0
      %5433 = vmatpush1.msra.mxu0 0.0
      %5434 = vmatprep.subr.mxu0 0.0
      %5435 = vmatpush1.msra.mxu0 0.0
      %5436 = vmatprep.subr.mxu0 0.0
      %5437 = vmatpush1.msra.mxu0 0.0
      %5438 = vmatprep.subr.mxu0 0.0
      %5439 = vmatpush1.msra.mxu0 0.0
      %5440 = vmatprep.subr.mxu0 0.0
      %5441 = vmatpush1.msra.mxu0 0.0
      %5442 = vmatprep.subr.mxu0 0.0
      %5443 = vmatpush1.msra.mxu0 0.0
      %5444 = vmatprep.subr.mxu0 0.0
      %5445 = vmatpush1.msra.mxu0 0.0
      %5446 = vmatprep.subr.mxu0 0.0
      %5447 = vmatpush1.msra.mxu0 0.0
      %5448 = vmatprep.subr.mxu0 0.0
      %5449 = vmatpush1.msra.mxu0 0.0
      %5450 = vmatprep.subr.mxu0 0.0
      %5451 = vmatpush1.msra.mxu0 0.0
      %5452 = vmatprep.subr.mxu0 0.0
      %5453 = vmatpush1.msra.mxu0 0.0
      %5454 = vmatprep.subr.mxu0 0.0
      %5455 = vmatpush1.msra.mxu0 0.0
      %5456 = vmatprep.subr.mxu0 0.0
      %5457 = vmatpush1.msra.mxu0 0.0
      %5458 = vmatprep.subr.mxu0 0.0
      %5459 = vmatpush1.msra.mxu0 0.0
      %5460 = vmatprep.subr.mxu0 0.0
      %5461 = vmatpush1.msra.mxu0 0.0
      %5462 = vmatprep.subr.mxu0 0.0
      %5463 = vmatpush1.msra.mxu0 0.0
      %5464 = vmatprep.subr.mxu0 0.0
      %5465 = vmatpush1.msra.mxu0 0.0
      %5466 = vmatprep.subr.mxu0 0.0
      %5467 = vmatpush1.msra.mxu0 0.0
      %5468 = vmatprep.subr.mxu0 0.0
      %5469 = vmatpush1.msra.mxu0 0.0
      %5470 = vmatprep.mubr.f32.mxu0 0.0
      %5471 = vmatmul.mubr.f32.gmra.mrb[0].mxu0 %v5128
      %v5472 = vpop.f32.mrb[0].mxu0
      %v5473 = vadd.f32 %v5384, %v5472
      %v5474 = vpop.f32.mrb[0].mxu0
      %v5475 = vadd.f32 %v5386, %v5474
      %5476 = vmatprep.mubr.f32.mxu0 0.0
      %5477 = vmatmul.mubr.f32.gmra.mrb[0].mxu0 %v5131
      %v5478 = vpop.f32.mrb[0].mxu0
      %v5479 = vadd.f32 %v5390, %v5478
      %v5480 = vpop.f32.mrb[0].mxu0
      %v5481 = vadd.f32 %v5392, %v5480
      %5482 = vmatprep.mubr.f32.mxu0 0.0
      %5483 = vmatmul.mubr.f32.gmra.mrb[0].mxu0 %v5134
      %v5484 = vpop.f32.mrb[0].mxu0
      %v5485 = vadd.f32 %v5396, %v5484
      %v5486 = vpop.f32.mrb[0].mxu0
      %v5487 = vadd.f32 %v5398, %v5486
      %5488 = vmatprep.mubr.f32.mxu0 0.0
      %5489 = vmatmul.mubr.f32.gmra.mrb[0].mxu0 %v5137
      %v5490 = vpop.f32.mrb[0].mxu0
      %v5491 = vadd.f32 %v5402, %v5490
      %v5492 = vpop.f32.mrb[0].mxu0
      %v5493 = vadd.f32 %v5404, %v5492
      %5494 = vdwg.mxu0
      %5495 = vmatprep.subr.mxu0 %v4610
      %5496 = vmatpush1.msra.mxu0 %v4609
      %5497 = vmatprep.subr.mxu0 %v4615
      %5498 = vmatpush1.msra.mxu0 %v4614
      %5499 = vmatprep.subr.mxu0 %v4620
      %5500 = vmatpush1.msra.mxu0 %v4619
      %5501 = vmatprep.subr.mxu0 %v4625
      %5502 = vmatpush1.msra.mxu0 %v4624
      %5503 = vmatprep.subr.mxu0 %v4630
      %5504 = vmatpush1.msra.mxu0 %v4629
      %5505 = vmatprep.subr.mxu0 %v4635
      %5506 = vmatpush1.msra.mxu0 %v4634
      %5507 = vmatprep.subr.mxu0 %v4640
      %5508 = vmatpush1.msra.mxu0 %v4639
      %5509 = vmatprep.subr.mxu0 %v4645
      %5510 = vmatpush1.msra.mxu0 %v4644
      %5511 = vmatprep.subr.mxu0 %v4650
      %5512 = vmatpush1.msra.mxu0 %v4649
      %5513 = vmatprep.subr.mxu0 %v4655
      %5514 = vmatpush1.msra.mxu0 %v4654
      %5515 = vmatprep.subr.mxu0 %v4660
      %5516 = vmatpush1.msra.mxu0 %v4659
      %5517 = vmatprep.subr.mxu0 %v4665
      %5518 = vmatpush1.msra.mxu0 %v4664
      %5519 = vmatprep.subr.mxu0 %v4670
      %5520 = vmatpush1.msra.mxu0 %v4669
      %5521 = vmatprep.subr.mxu0 %v4675
      %5522 = vmatpush1.msra.mxu0 %v4674
      %5523 = vmatprep.subr.mxu0 %v4680
      %5524 = vmatpush1.msra.mxu0 %v4679
      %5525 = vmatprep.subr.mxu0 %v4685
      %5526 = vmatpush1.msra.mxu0 %v4684
      %5527 = vmatprep.subr.mxu0 %v4690
      %5528 = vmatpush1.msra.mxu0 %v4689
      %5529 = vmatprep.subr.mxu0 %v4695
      %5530 = vmatpush1.msra.mxu0 %v4694
      %5531 = vmatprep.subr.mxu0 %v4700
      %5532 = vmatpush1.msra.mxu0 %v4699
      %5533 = vmatprep.subr.mxu0 %v4705
      %5534 = vmatpush1.msra.mxu0 %v4704
      %5535 = vmatprep.subr.mxu0 %v4710
      %5536 = vmatpush1.msra.mxu0 %v4709
      %5537 = vmatprep.subr.mxu0 %v4715
      %5538 = vmatpush1.msra.mxu0 %v4714
      %5539 = vmatprep.subr.mxu0 %v4720
      %5540 = vmatpush1.msra.mxu0 %v4719
      %5541 = vmatprep.subr.mxu0 %v4725
      %5542 = vmatpush1.msra.mxu0 %v4724
      %5543 = vmatprep.subr.mxu0 %v4730
      %5544 = vmatpush1.msra.mxu0 %v4729
      %5545 = vmatprep.subr.mxu0 %v4735
      %5546 = vmatpush1.msra.mxu0 %v4734
      %5547 = vmatprep.subr.mxu0 %v4740
      %5548 = vmatpush1.msra.mxu0 %v4739
      %5549 = vmatprep.subr.mxu0 %v4745
      %5550 = vmatpush1.msra.mxu0 %v4744
      %5551 = vmatprep.subr.mxu0 %v4750
      %5552 = vmatpush1.msra.mxu0 %v4749
      %5553 = vmatprep.subr.mxu0 %v4755
      %5554 = vmatpush1.msra.mxu0 %v4754
      %5555 = vmatprep.subr.mxu0 %v4760
      %5556 = vmatpush1.msra.mxu0 %v4759
      %5557 = vmatprep.subr.mxu0 %v4765
      %5558 = vmatpush1.msra.mxu0 %v4764
      %5559 = vmatprep.mubr.f32.mxu0 %v339
      %5560 = vmatmul.mubr.f32.gmra.mrb[0].mxu0 %v338
      %v5561 = vpop.f32.mrb[0].mxu0
      %v5562 = vadd.f32 %v5110, %v5561
      %v5563 = vpop.f32.mrb[0].mxu0
      %v5564 = vadd.f32 %v5110, %v5563
      %5565 = vmatprep.mubr.f32.mxu0 %v346
      %5566 = vmatmul.mubr.f32.gmra.mrb[0].mxu0 %v345
      %v5567 = vpop.f32.mrb[0].mxu0
      %v5568 = vadd.f32 %v5115, %v5567
      %v5569 = vpop.f32.mrb[0].mxu0
      %v5570 = vadd.f32 %v5115, %v5569
      %5571 = vmatprep.mubr.f32.mxu0 %v353
      %5572 = vmatmul.mubr.f32.gmra.mrb[0].mxu0 %v352
      %v5573 = vpop.f32.mrb[0].mxu0
      %v5574 = vadd.f32 %v5120, %v5573
      %v5575 = vpop.f32.mrb[0].mxu0
      %v5576 = vadd.f32 %v5120, %v5575
      %5577 = vmatprep.mubr.f32.mxu0 %v360
      %5578 = vmatmul.mubr.f32.gmra.mrb[0].mxu0 %v359
      %v5579 = vpop.f32.mrb[0].mxu0
      %v5580 = vadd.f32 %v5125, %v5579
      %v5581 = vpop.f32.mrb[0].mxu0
      %v5582 = vadd.f32 %v5125, %v5581
      %5583 = vdwg.mxu0
      %5584 = vmatprep.subr.mxu0 %v4770
      %5585 = vmatpush1.msra.mxu0 %v4769
      %5586 = vmatprep.subr.mxu0 %v4775
      %5587 = vmatpush1.msra.mxu0 %v4774
      %5588 = vmatprep.subr.mxu0 %v4780
      %5589 = vmatpush1.msra.mxu0 %v4779
      %5590 = vmatprep.subr.mxu0 %v4785
      %5591 = vmatpush1.msra.mxu0 %v4784
      %5592 = vmatprep.subr.mxu0 %v4790
      %5593 = vmatpush1.msra.mxu0 %v4789
      %5594 = vmatprep.subr.mxu0 %v4795
      %5595 = vmatpush1.msra.mxu0 %v4794
      %5596 = vmatprep.subr.mxu0 %v4800
      %5597 = vmatpush1.msra.mxu0 %v4799
      %5598 = vmatprep.subr.mxu0 %v4805
      %5599 = vmatpush1.msra.mxu0 %v4804
      %5600 = vmatprep.subr.mxu0 %v4810
      %5601 = vmatpush1.msra.mxu0 %v4809
      %5602 = vmatprep.subr.mxu0 %v4815
      %5603 = vmatpush1.msra.mxu0 %v4814
      %5604 = vmatprep.subr.mxu0 %v4820
      %5605 = vmatpush1.msra.mxu0 %v4819
      %5606 = vmatprep.subr.mxu0 %v4825
      %5607 = vmatpush1.msra.mxu0 %v4824
      %5608 = vmatprep.subr.mxu0 %v4830
      %5609 = vmatpush1.msra.mxu0 %v4829
      %5610 = vmatprep.subr.mxu0 %v4835
      %5611 = vmatpush1.msra.mxu0 %v4834
      %5612 = vmatprep.subr.mxu0 %v4840
      %5613 = vmatpush1.msra.mxu0 %v4839
      %5614 = vmatprep.subr.mxu0 %v4845
      %5615 = vmatpush1.msra.mxu0 %v4844
      %5616 = vmatprep.subr.mxu0 %v4850
      %5617 = vmatpush1.msra.mxu0 %v4849
      %5618 = vmatprep.subr.mxu0 %v4855
      %5619 = vmatpush1.msra.mxu0 %v4854
      %5620 = vmatprep.subr.mxu0 %v4860
      %5621 = vmatpush1.msra.mxu0 %v4859
      %5622 = vmatprep.subr.mxu0 %v4865
      %5623 = vmatpush1.msra.mxu0 %v4864
      %5624 = vmatprep.subr.mxu0 %v4870
      %5625 = vmatpush1.msra.mxu0 %v4869
      %5626 = vmatprep.subr.mxu0 %v4875
      %5627 = vmatpush1.msra.mxu0 %v4874
      %5628 = vmatprep.subr.mxu0 %v4880
      %5629 = vmatpush1.msra.mxu0 %v4879
      %5630 = vmatprep.subr.mxu0 %v4885
      %5631 = vmatpush1.msra.mxu0 %v4884
      %5632 = vmatprep.subr.mxu0 %v4890
      %5633 = vmatpush1.msra.mxu0 %v4889
      %5634 = vmatprep.subr.mxu0 %v4895
      %5635 = vmatpush1.msra.mxu0 %v4894
      %5636 = vmatprep.subr.mxu0 %v4900
      %5637 = vmatpush1.msra.mxu0 %v4899
      %5638 = vmatprep.subr.mxu0 %v4905
      %5639 = vmatpush1.msra.mxu0 %v4904
      %5640 = vmatprep.subr.mxu0 %v4910
      %5641 = vmatpush1.msra.mxu0 %v4909
      %5642 = vmatprep.subr.mxu0 %v4915
      %5643 = vmatpush1.msra.mxu0 %v4914
      %5644 = vmatprep.subr.mxu0 %v4920
      %5645 = vmatpush1.msra.mxu0 %v4919
      %5646 = vmatprep.subr.mxu0 %v4925
      %5647 = vmatpush1.msra.mxu0 %v4924
      %5648 = vmatprep.mubr.f32.mxu0 %v341
      %5649 = vmatmul.mubr.f32.gmra.mrb[0].mxu0 %v340
      %v5650 = vpop.f32.mrb[0].mxu0
      %v5651 = vadd.f32 %v5562, %v5650
      %v5652 = vpop.f32.mrb[0].mxu0
      %v5653 = vadd.f32 %v5564, %v5652
      %5654 = vmatprep.mubr.f32.mxu0 %v348
      %5655 = vmatmul.mubr.f32.gmra.mrb[0].mxu0 %v347
      %v5656 = vpop.f32.mrb[0].mxu0
      %v5657 = vadd.f32 %v5568, %v5656
      %v5658 = vpop.f32.mrb[0].mxu0
      %v5659 = vadd.f32 %v5570, %v5658
      %5660 = vmatprep.mubr.f32.mxu0 %v355
      %5661 = vmatmul.mubr.f32.gmra.mrb[0].mxu0 %v354
      %v5662 = vpop.f32.mrb[0].mxu0
      %v5663 = vadd.f32 %v5574, %v5662
      %v5664 = vpop.f32.mrb[0].mxu0
      %v5665 = vadd.f32 %v5576, %v5664
      %5666 = vmatprep.mubr.f32.mxu0 %v362
      %5667 = vmatmul.mubr.f32.gmra.mrb[0].mxu0 %v361
      %v5668 = vpop.f32.mrb[0].mxu0
      %v5669 = vadd.f32 %v5580, %v5668
      %v5670 = vpop.f32.mrb[0].mxu0
      %v5671 = vadd.f32 %v5582, %v5670
      %5672 = vdwg.mxu0
      %5673 = vmatprep.subr.mxu0 %v4930
      %5674 = vmatpush1.msra.mxu0 %v4929
      %5675 = vmatprep.subr.mxu0 %v4935
      %5676 = vmatpush1.msra.mxu0 %v4934
      %5677 = vmatprep.subr.mxu0 %v4940
      %5678 = vmatpush1.msra.mxu0 %v4939
      %5679 = vmatprep.subr.mxu0 %v4945
      %5680 = vmatpush1.msra.mxu0 %v4944
      %5681 = vmatprep.subr.mxu0 %v4950
      %5682 = vmatpush1.msra.mxu0 %v4949
      %5683 = vmatprep.subr.mxu0 %v4955
      %5684 = vmatpush1.msra.mxu0 %v4954
      %5685 = vmatprep.subr.mxu0 %v4960
      %5686 = vmatpush1.msra.mxu0 %v4959
      %5687 = vmatprep.subr.mxu0 %v4965
      %5688 = vmatpush1.msra.mxu0 %v4964
      %5689 = vmatprep.subr.mxu0 %v4970
      %5690 = vmatpush1.msra.mxu0 %v4969
      %5691 = vmatprep.subr.mxu0 %v4975
      %5692 = vmatpush1.msra.mxu0 %v4974
      %5693 = vmatprep.subr.mxu0 %v4980
      %5694 = vmatpush1.msra.mxu0 %v4979
      %5695 = vmatprep.subr.mxu0 %v4985
      %5696 = vmatpush1.msra.mxu0 %v4984
      %5697 = vmatprep.subr.mxu0 %v4990
      %5698 = vmatpush1.msra.mxu0 %v4989
      %5699 = vmatprep.subr.mxu0 %v4995
      %5700 = vmatpush1.msra.mxu0 %v4994
      %5701 = vmatprep.subr.mxu0 %v5000
      %5702 = vmatpush1.msra.mxu0 %v4999
      %5703 = vmatprep.subr.mxu0 %v5005
      %5704 = vmatpush1.msra.mxu0 %v5004
      %5705 = vmatprep.subr.mxu0 %v5010
      %5706 = vmatpush1.msra.mxu0 %v5009
      %5707 = vmatprep.subr.mxu0 %v5015
      %5708 = vmatpush1.msra.mxu0 %v5014
      %5709 = vmatprep.subr.mxu0 %v5020
      %5710 = vmatpush1.msra.mxu0 %v5019
      %5711 = vmatprep.subr.mxu0 %v5025
      %5712 = vmatpush1.msra.mxu0 %v5024
      %5713 = vmatprep.subr.mxu0 %v5030
      %5714 = vmatpush1.msra.mxu0 %v5029
      %5715 = vmatprep.subr.mxu0 %v5035
      %5716 = vmatpush1.msra.mxu0 %v5034
      %5717 = vmatprep.subr.mxu0 %v5040
      %5718 = vmatpush1.msra.mxu0 %v5039
      %5719 = vmatprep.subr.mxu0 %v5045
      %5720 = vmatpush1.msra.mxu0 %v5044
      %5721 = vmatprep.subr.mxu0 %v5050
      %5722 = vmatpush1.msra.mxu0 %v5049
      %5723 = vmatprep.subr.mxu0 %v5055
      %5724 = vmatpush1.msra.mxu0 %v5054
      %5725 = vmatprep.subr.mxu0 %v5060
      %5726 = vmatpush1.msra.mxu0 %v5059
      %5727 = vmatprep.subr.mxu0 %v5065
      %5728 = vmatpush1.msra.mxu0 %v5064
      %5729 = vmatprep.subr.mxu0 %v5070
      %5730 = vmatpush1.msra.mxu0 %v5069
      %5731 = vmatprep.subr.mxu0 %v5075
      %5732 = vmatpush1.msra.mxu0 %v5074
      %5733 = vmatprep.subr.mxu0 %v5080
      %5734 = vmatpush1.msra.mxu0 %v5079
      %5735 = vmatprep.subr.mxu0 %v5085
      %5736 = vmatpush1.msra.mxu0 %v5084
      %5737 = vmatprep.mubr.f32.mxu0 %v343
      %5738 = vmatmul.mubr.f32.gmra.mrb[0].mxu0 %v342
      %v5739 = vpop.f32.mrb[0].mxu0
      %v5740 = vadd.f32 %v5651, %v5739
      %v5741 = vpop.f32.mrb[0].mxu0
      %v5742 = vadd.f32 %v5653, %v5741
      %5743 = vmatprep.mubr.f32.mxu0 %v350
      %5744 = vmatmul.mubr.f32.gmra.mrb[0].mxu0 %v349
      %v5745 = vpop.f32.mrb[0].mxu0
      %v5746 = vadd.f32 %v5657, %v5745
      %v5747 = vpop.f32.mrb[0].mxu0
      %v5748 = vadd.f32 %v5659, %v5747
      %5749 = vmatprep.mubr.f32.mxu0 %v357
      %5750 = vmatmul.mubr.f32.gmra.mrb[0].mxu0 %v356
      %v5751 = vpop.f32.mrb[0].mxu0
      %v5752 = vadd.f32 %v5663, %v5751
      %v5753 = vpop.f32.mrb[0].mxu0
      %v5754 = vadd.f32 %v5665, %v5753
      %5755 = vmatprep.mubr.f32.mxu0 %v364
      %5756 = vmatmul.mubr.f32.gmra.mrb[0].mxu0 %v363
      %v5757 = vpop.f32.mrb[0].mxu0
      %v5758 = vadd.f32 %v5669, %v5757
      %v5759 = vpop.f32.mrb[0].mxu0
      %v5760 = vadd.f32 %v5671, %v5759
      %5761 = vdwg.mxu0
      %5762 = vmatprep.subr.mxu0 %v5090
      %5763 = vmatpush1.msra.mxu0 %v5089
      %5764 = vmatprep.subr.mxu0 %v5095
      %5765 = vmatpush1.msra.mxu0 %v5094
      %5766 = vmatprep.subr.mxu0 %v5100
      %5767 = vmatpush1.msra.mxu0 %v5099
      %5768 = vmatprep.subr.mxu0 %v5105
      %5769 = vmatpush1.msra.mxu0 %v5104
      %5770 = vmatprep.subr.mxu0 0.0
      %5771 = vmatpush1.msra.mxu0 0.0
      %5772 = vmatprep.subr.mxu0 0.0
      %5773 = vmatpush1.msra.mxu0 0.0
      %5774 = vmatprep.subr.mxu0 0.0
      %5775 = vmatpush1.msra.mxu0 0.0
      %5776 = vmatprep.subr.mxu0 0.0
      %5777 = vmatpush1.msra.mxu0 0.0
      %5778 = vmatprep.subr.mxu0 0.0
      %5779 = vmatpush1.msra.mxu0 0.0
      %5780 = vmatprep.subr.mxu0 0.0
      %5781 = vmatpush1.msra.mxu0 0.0
      %5782 = vmatprep.subr.mxu0 0.0
      %5783 = vmatpush1.msra.mxu0 0.0
      %5784 = vmatprep.subr.mxu0 0.0
      %5785 = vmatpush1.msra.mxu0 0.0
      %5786 = vmatprep.subr.mxu0 0.0
      %5787 = vmatpush1.msra.mxu0 0.0
      %5788 = vmatprep.subr.mxu0 0.0
      %5789 = vmatpush1.msra.mxu0 0.0
      %5790 = vmatprep.subr.mxu0 0.0
      %5791 = vmatpush1.msra.mxu0 0.0
      %5792 = vmatprep.subr.mxu0 0.0
      %5793 = vmatpush1.msra.mxu0 0.0
      %5794 = vmatprep.subr.mxu0 0.0
      %5795 = vmatpush1.msra.mxu0 0.0
      %5796 = vmatprep.subr.mxu0 0.0
      %5797 = vmatpush1.msra.mxu0 0.0
      %5798 = vmatprep.subr.mxu0 0.0
      %5799 = vmatpush1.msra.mxu0 0.0
      %5800 = vmatprep.subr.mxu0 0.0
      %5801 = vmatpush1.msra.mxu0 0.0
      %5802 = vmatprep.subr.mxu0 0.0
      %5803 = vmatpush1.msra.mxu0 0.0
      %5804 = vmatprep.subr.mxu0 0.0
      %5805 = vmatpush1.msra.mxu0 0.0
      %5806 = vmatprep.subr.mxu0 0.0
      %5807 = vmatpush1.msra.mxu0 0.0
      %5808 = vmatprep.subr.mxu0 0.0
      %5809 = vmatpush1.msra.mxu0 0.0
      %5810 = vmatprep.subr.mxu0 0.0
      %5811 = vmatpush1.msra.mxu0 0.0
      %5812 = vmatprep.subr.mxu0 0.0
      %5813 = vmatpush1.msra.mxu0 0.0
      %5814 = vmatprep.subr.mxu0 0.0
      %5815 = vmatpush1.msra.mxu0 0.0
      %5816 = vmatprep.subr.mxu0 0.0
      %5817 = vmatpush1.msra.mxu0 0.0
      %5818 = vmatprep.subr.mxu0 0.0
      %5819 = vmatpush1.msra.mxu0 0.0
      %5820 = vmatprep.subr.mxu0 0.0
      %5821 = vmatpush1.msra.mxu0 0.0
      %5822 = vmatprep.subr.mxu0 0.0
      %5823 = vmatpush1.msra.mxu0 0.0
      %5824 = vmatprep.subr.mxu0 0.0
      %5825 = vmatpush1.msra.mxu0 0.0
      %5826 = vmatprep.mubr.f32.mxu0 0.0
      %5827 = vmatmul.mubr.f32.gmra.mrb[0].mxu0 %v5128
      %v5828 = vpop.f32.mrb[0].mxu0
      %v5829 = vadd.f32 %v5740, %v5828
      %v5830 = vpop.f32.mrb[0].mxu0
      %v5831 = vadd.f32 %v5742, %v5830
      %5832 = vmatprep.mubr.f32.mxu0 0.0
      %5833 = vmatmul.mubr.f32.gmra.mrb[0].mxu0 %v5131
      %v5834 = vpop.f32.mrb[0].mxu0
      %v5835 = vadd.f32 %v5746, %v5834
      %v5836 = vpop.f32.mrb[0].mxu0
      %v5837 = vadd.f32 %v5748, %v5836
      %5838 = vmatprep.mubr.f32.mxu0 0.0
      %5839 = vmatmul.mubr.f32.gmra.mrb[0].mxu0 %v5134
      %v5840 = vpop.f32.mrb[0].mxu0
      %v5841 = vadd.f32 %v5752, %v5840
      %v5842 = vpop.f32.mrb[0].mxu0
      %v5843 = vadd.f32 %v5754, %v5842
      %5844 = vmatprep.mubr.f32.mxu0 0.0
      %5845 = vmatmul.mubr.f32.gmra.mrb[0].mxu0 %v5137
      %v5846 = vpop.f32.mrb[0].mxu0
      %v5847 = vadd.f32 %v5758, %v5846
      %v5848 = vpop.f32.mrb[0].mxu0
      %v5849 = vadd.f32 %v5760, %v5848
      %5850 = vdwg.mxu0
      %5851 = vmatprep.subr.mxu0 0.0
      %5852 = vmatpush1.msra.mxu0 %v4611
      %5853 = vmatprep.subr.mxu0 0.0
      %5854 = vmatpush1.msra.mxu0 %v4616
      %5855 = vmatprep.subr.mxu0 0.0
      %5856 = vmatpush1.msra.mxu0 %v4621
      %5857 = vmatprep.subr.mxu0 0.0
      %5858 = vmatpush1.msra.mxu0 %v4626
      %5859 = vmatprep.subr.mxu0 0.0
      %5860 = vmatpush1.msra.mxu0 %v4631
      %5861 = vmatprep.subr.mxu0 0.0
      %5862 = vmatpush1.msra.mxu0 %v4636
      %5863 = vmatprep.subr.mxu0 0.0
      %5864 = vmatpush1.msra.mxu0 %v4641
      %5865 = vmatprep.subr.mxu0 0.0
      %5866 = vmatpush1.msra.mxu0 %v4646
      %5867 = vmatprep.subr.mxu0 0.0
      %5868 = vmatpush1.msra.mxu0 %v4651
      %5869 = vmatprep.subr.mxu0 0.0
      %5870 = vmatpush1.msra.mxu0 %v4656
      %5871 = vmatprep.subr.mxu0 0.0
      %5872 = vmatpush1.msra.mxu0 %v4661
      %5873 = vmatprep.subr.mxu0 0.0
      %5874 = vmatpush1.msra.mxu0 %v4666
      %5875 = vmatprep.subr.mxu0 0.0
      %5876 = vmatpush1.msra.mxu0 %v4671
      %5877 = vmatprep.subr.mxu0 0.0
      %5878 = vmatpush1.msra.mxu0 %v4676
      %5879 = vmatprep.subr.mxu0 0.0
      %5880 = vmatpush1.msra.mxu0 %v4681
      %5881 = vmatprep.subr.mxu0 0.0
      %5882 = vmatpush1.msra.mxu0 %v4686
      %5883 = vmatprep.subr.mxu0 0.0
      %5884 = vmatpush1.msra.mxu0 %v4691
      %5885 = vmatprep.subr.mxu0 0.0
      %5886 = vmatpush1.msra.mxu0 %v4696
      %5887 = vmatprep.subr.mxu0 0.0
      %5888 = vmatpush1.msra.mxu0 %v4701
      %5889 = vmatprep.subr.mxu0 0.0
      %5890 = vmatpush1.msra.mxu0 %v4706
      %5891 = vmatprep.subr.mxu0 0.0
      %5892 = vmatpush1.msra.mxu0 %v4711
      %5893 = vmatprep.subr.mxu0 0.0
      %5894 = vmatpush1.msra.mxu0 %v4716
      %5895 = vmatprep.subr.mxu0 0.0
      %5896 = vmatpush1.msra.mxu0 %v4721
      %5897 = vmatprep.subr.mxu0 0.0
      %5898 = vmatpush1.msra.mxu0 %v4726
      %5899 = vmatprep.subr.mxu0 0.0
      %5900 = vmatpush1.msra.mxu0 %v4731
      %5901 = vmatprep.subr.mxu0 0.0
      %5902 = vmatpush1.msra.mxu0 %v4736
      %5903 = vmatprep.subr.mxu0 0.0
      %5904 = vmatpush1.msra.mxu0 %v4741
      %5905 = vmatprep.subr.mxu0 0.0
      %5906 = vmatpush1.msra.mxu0 %v4746
      %5907 = vmatprep.subr.mxu0 0.0
      %5908 = vmatpush1.msra.mxu0 %v4751
      %5909 = vmatprep.subr.mxu0 0.0
      %5910 = vmatpush1.msra.mxu0 %v4756
      %5911 = vmatprep.subr.mxu0 0.0
      %5912 = vmatpush1.msra.mxu0 %v4761
      %5913 = vmatprep.subr.mxu0 0.0
      %5914 = vmatpush1.msra.mxu0 %v4766
      %5915 = vmatprep.mubr.f32.mxu0 %v339
      %5916 = vmatmul.mubr.f32.gmra.mrb[0].mxu0 %v338
      %v5917 = vpop.f32.mrb[0].mxu0
      %v5918 = vadd.f32 %v5110, %v5917
      %v5919 = vpop.f32.mrb[0].mxu0
      %5920 = vmatprep.mubr.f32.mxu0 %v346
      %5921 = vmatmul.mubr.f32.gmra.mrb[0].mxu0 %v345
      %v5922 = vpop.f32.mrb[0].mxu0
      %v5923 = vadd.f32 %v5115, %v5922
      %v5924 = vpop.f32.mrb[0].mxu0
      %5925 = vmatprep.mubr.f32.mxu0 %v353
      %5926 = vmatmul.mubr.f32.gmra.mrb[0].mxu0 %v352
      %v5927 = vpop.f32.mrb[0].mxu0
      %v5928 = vadd.f32 %v5120, %v5927
      %v5929 = vpop.f32.mrb[0].mxu0
      %5930 = vmatprep.mubr.f32.mxu0 %v360
      %5931 = vmatmul.mubr.f32.gmra.mrb[0].mxu0 %v359
      %v5932 = vpop.f32.mrb[0].mxu0
      %v5933 = vadd.f32 %v5125, %v5932
      %v5934 = vpop.f32.mrb[0].mxu0
      %5935 = vdwg.mxu0
      %5936 = vmatprep.subr.mxu0 0.0
      %5937 = vmatpush1.msra.mxu0 %v4771
      %5938 = vmatprep.subr.mxu0 0.0
      %5939 = vmatpush1.msra.mxu0 %v4776
      %5940 = vmatprep.subr.mxu0 0.0
      %5941 = vmatpush1.msra.mxu0 %v4781
      %5942 = vmatprep.subr.mxu0 0.0
      %5943 = vmatpush1.msra.mxu0 %v4786
      %5944 = vmatprep.subr.mxu0 0.0
      %5945 = vmatpush1.msra.mxu0 %v4791
      %5946 = vmatprep.subr.mxu0 0.0
      %5947 = vmatpush1.msra.mxu0 %v4796
      %5948 = vmatprep.subr.mxu0 0.0
      %5949 = vmatpush1.msra.mxu0 %v4801
      %5950 = vmatprep.subr.mxu0 0.0
      %5951 = vmatpush1.msra.mxu0 %v4806
      %5952 = vmatprep.subr.mxu0 0.0
      %5953 = vmatpush1.msra.mxu0 %v4811
      %5954 = vmatprep.subr.mxu0 0.0
      %5955 = vmatpush1.msra.mxu0 %v4816
      %5956 = vmatprep.subr.mxu0 0.0
      %5957 = vmatpush1.msra.mxu0 %v4821
      %5958 = vmatprep.subr.mxu0 0.0
      %5959 = vmatpush1.msra.mxu0 %v4826
      %5960 = vmatprep.subr.mxu0 0.0
      %5961 = vmatpush1.msra.mxu0 %v4831
      %5962 = vmatprep.subr.mxu0 0.0
      %5963 = vmatpush1.msra.mxu0 %v4836
      %5964 = vmatprep.subr.mxu0 0.0
      %5965 = vmatpush1.msra.mxu0 %v4841
      %5966 = vmatprep.subr.mxu0 0.0
      %5967 = vmatpush1.msra.mxu0 %v4846
      %5968 = vmatprep.subr.mxu0 0.0
      %5969 = vmatpush1.msra.mxu0 %v4851
      %5970 = vmatprep.subr.mxu0 0.0
      %5971 = vmatpush1.msra.mxu0 %v4856
      %5972 = vmatprep.subr.mxu0 0.0
      %5973 = vmatpush1.msra.mxu0 %v4861
      %5974 = vmatprep.subr.mxu0 0.0
      %5975 = vmatpush1.msra.mxu0 %v4866
      %5976 = vmatprep.subr.mxu0 0.0
      %5977 = vmatpush1.msra.mxu0 %v4871
      %5978 = vmatprep.subr.mxu0 0.0
      %5979 = vmatpush1.msra.mxu0 %v4876
      %5980 = vmatprep.subr.mxu0 0.0
      %5981 = vmatpush1.msra.mxu0 %v4881
      %5982 = vmatprep.subr.mxu0 0.0
      %5983 = vmatpush1.msra.mxu0 %v4886
      %5984 = vmatprep.subr.mxu0 0.0
      %5985 = vmatpush1.msra.mxu0 %v4891
      %5986 = vmatprep.subr.mxu0 0.0
      %5987 = vmatpush1.msra.mxu0 %v4896
      %5988 = vmatprep.subr.mxu0 0.0
      %5989 = vmatpush1.msra.mxu0 %v4901
      %5990 = vmatprep.subr.mxu0 0.0
      %5991 = vmatpush1.msra.mxu0 %v4906
      %5992 = vmatprep.subr.mxu0 0.0
      %5993 = vmatpush1.msra.mxu0 %v4911
      %5994 = vmatprep.subr.mxu0 0.0
      %5995 = vmatpush1.msra.mxu0 %v4916
      %5996 = vmatprep.subr.mxu0 0.0
      %5997 = vmatpush1.msra.mxu0 %v4921
      %5998 = vmatprep.subr.mxu0 0.0
      %5999 = vmatpush1.msra.mxu0 %v4926
      %6000 = vmatprep.mubr.f32.mxu0 %v341
      %6001 = vmatmul.mubr.f32.gmra.mrb[0].mxu0 %v340
      %v6002 = vpop.f32.mrb[0].mxu0
      %v6003 = vadd.f32 %v5918, %v6002
      %v6004 = vpop.f32.mrb[0].mxu0
      %6005 = vmatprep.mubr.f32.mxu0 %v348
      %6006 = vmatmul.mubr.f32.gmra.mrb[0].mxu0 %v347
      %v6007 = vpop.f32.mrb[0].mxu0
      %v6008 = vadd.f32 %v5923, %v6007
      %v6009 = vpop.f32.mrb[0].mxu0
      %6010 = vmatprep.mubr.f32.mxu0 %v355
      %6011 = vmatmul.mubr.f32.gmra.mrb[0].mxu0 %v354
      %v6012 = vpop.f32.mrb[0].mxu0
      %v6013 = vadd.f32 %v5928, %v6012
      %v6014 = vpop.f32.mrb[0].mxu0
      %6015 = vmatprep.mubr.f32.mxu0 %v362
      %6016 = vmatmul.mubr.f32.gmra.mrb[0].mxu0 %v361
      %v6017 = vpop.f32.mrb[0].mxu0
      %v6018 = vadd.f32 %v5933, %v6017
      %v6019 = vpop.f32.mrb[0].mxu0
      %6020 = vdwg.mxu0
      %6021 = vmatprep.subr.mxu0 0.0
      %6022 = vmatpush1.msra.mxu0 %v4931
      %6023 = vmatprep.subr.mxu0 0.0
      %6024 = vmatpush1.msra.mxu0 %v4936
      %6025 = vmatprep.subr.mxu0 0.0
      %6026 = vmatpush1.msra.mxu0 %v4941
      %6027 = vmatprep.subr.mxu0 0.0
      %6028 = vmatpush1.msra.mxu0 %v4946
      %6029 = vmatprep.subr.mxu0 0.0
      %6030 = vmatpush1.msra.mxu0 %v4951
      %6031 = vmatprep.subr.mxu0 0.0
      %6032 = vmatpush1.msra.mxu0 %v4956
      %6033 = vmatprep.subr.mxu0 0.0
      %6034 = vmatpush1.msra.mxu0 %v4961
      %6035 = vmatprep.subr.mxu0 0.0
      %6036 = vmatpush1.msra.mxu0 %v4966
      %6037 = vmatprep.subr.mxu0 0.0
      %6038 = vmatpush1.msra.mxu0 %v4971
      %6039 = vmatprep.subr.mxu0 0.0
      %6040 = vmatpush1.msra.mxu0 %v4976
      %6041 = vmatprep.subr.mxu0 0.0
      %6042 = vmatpush1.msra.mxu0 %v4981
      %6043 = vmatprep.subr.mxu0 0.0
      %6044 = vmatpush1.msra.mxu0 %v4986
      %6045 = vmatprep.subr.mxu0 0.0
      %6046 = vmatpush1.msra.mxu0 %v4991
      %6047 = vmatprep.subr.mxu0 0.0
      %6048 = vmatpush1.msra.mxu0 %v4996
      %6049 = vmatprep.subr.mxu0 0.0
      %6050 = vmatpush1.msra.mxu0 %v5001
      %6051 = vmatprep.subr.mxu0 0.0
      %6052 = vmatpush1.msra.mxu0 %v5006
      %6053 = vmatprep.subr.mxu0 0.0
      %6054 = vmatpush1.msra.mxu0 %v5011
      %6055 = vmatprep.subr.mxu0 0.0
      %6056 = vmatpush1.msra.mxu0 %v5016
      %6057 = vmatprep.subr.mxu0 0.0
      %6058 = vmatpush1.msra.mxu0 %v5021
      %6059 = vmatprep.subr.mxu0 0.0
      %6060 = vmatpush1.msra.mxu0 %v5026
      %6061 = vmatprep.subr.mxu0 0.0
      %6062 = vmatpush1.msra.mxu0 %v5031
      %6063 = vmatprep.subr.mxu0 0.0
      %6064 = vmatpush1.msra.mxu0 %v5036
      %6065 = vmatprep.subr.mxu0 0.0
      %6066 = vmatpush1.msra.mxu0 %v5041
      %6067 = vmatprep.subr.mxu0 0.0
      %6068 = vmatpush1.msra.mxu0 %v5046
      %6069 = vmatprep.subr.mxu0 0.0
      %6070 = vmatpush1.msra.mxu0 %v5051
      %6071 = vmatprep.subr.mxu0 0.0
      %6072 = vmatpush1.msra.mxu0 %v5056
      %6073 = vmatprep.subr.mxu0 0.0
      %6074 = vmatpush1.msra.mxu0 %v5061
      %6075 = vmatprep.subr.mxu0 0.0
      %6076 = vmatpush1.msra.mxu0 %v5066
      %6077 = vmatprep.subr.mxu0 0.0
      %6078 = vmatpush1.msra.mxu0 %v5071
      %6079 = vmatprep.subr.mxu0 0.0
      %6080 = vmatpush1.msra.mxu0 %v5076
      %6081 = vmatprep.subr.mxu0 0.0
      %6082 = vmatpush1.msra.mxu0 %v5081
      %6083 = vmatprep.subr.mxu0 0.0
      %6084 = vmatpush1.msra.mxu0 %v5086
      %6085 = vmatprep.mubr.f32.mxu0 %v343
      %6086 = vmatmul.mubr.f32.gmra.mrb[0].mxu0 %v342
      %v6087 = vpop.f32.mrb[0].mxu0
      %v6088 = vadd.f32 %v6003, %v6087
      %v6089 = vpop.f32.mrb[0].mxu0
      %6090 = vmatprep.mubr.f32.mxu0 %v350
      %6091 = vmatmul.mubr.f32.gmra.mrb[0].mxu0 %v349
      %v6092 = vpop.f32.mrb[0].mxu0
      %v6093 = vadd.f32 %v6008, %v6092
      %v6094 = vpop.f32.mrb[0].mxu0
      %6095 = vmatprep.mubr.f32.mxu0 %v357
      %6096 = vmatmul.mubr.f32.gmra.mrb[0].mxu0 %v356
      %v6097 = vpop.f32.mrb[0].mxu0
      %v6098 = vadd.f32 %v6013, %v6097
      %v6099 = vpop.f32.mrb[0].mxu0
      %6100 = vmatprep.mubr.f32.mxu0 %v364
      %6101 = vmatmul.mubr.f32.gmra.mrb[0].mxu0 %v363
      %v6102 = vpop.f32.mrb[0].mxu0
      %v6103 = vadd.f32 %v6018, %v6102
      %v6104 = vpop.f32.mrb[0].mxu0
      %6105 = vdwg.mxu0
      %6106 = vmatprep.subr.mxu0 0.0
      %6107 = vmatpush1.msra.mxu0 %v5091
      %6108 = vmatprep.subr.mxu0 0.0
      %6109 = vmatpush1.msra.mxu0 %v5096
      %6110 = vmatprep.subr.mxu0 0.0
      %6111 = vmatpush1.msra.mxu0 %v5101
      %6112 = vmatprep.subr.mxu0 0.0
      %6113 = vmatpush1.msra.mxu0 %v5106
      %6114 = vmatprep.subr.mxu0 0.0
      %6115 = vmatpush1.msra.mxu0 0.0
      %6116 = vmatprep.subr.mxu0 0.0
      %6117 = vmatpush1.msra.mxu0 0.0
      %6118 = vmatprep.subr.mxu0 0.0
      %6119 = vmatpush1.msra.mxu0 0.0
      %6120 = vmatprep.subr.mxu0 0.0
      %6121 = vmatpush1.msra.mxu0 0.0
      %6122 = vmatprep.subr.mxu0 0.0
      %6123 = vmatpush1.msra.mxu0 0.0
      %6124 = vmatprep.subr.mxu0 0.0
      %6125 = vmatpush1.msra.mxu0 0.0
      %6126 = vmatprep.subr.mxu0 0.0
      %6127 = vmatpush1.msra.mxu0 0.0
      %6128 = vmatprep.subr.mxu0 0.0
      %6129 = vmatpush1.msra.mxu0 0.0
      %6130 = vmatprep.subr.mxu0 0.0
      %6131 = vmatpush1.msra.mxu0 0.0
      %6132 = vmatprep.subr.mxu0 0.0
      %6133 = vmatpush1.msra.mxu0 0.0
      %6134 = vmatprep.subr.mxu0 0.0
      %6135 = vmatpush1.msra.mxu0 0.0
      %6136 = vmatprep.subr.mxu0 0.0
      %6137 = vmatpush1.msra.mxu0 0.0
      %6138 = vmatprep.subr.mxu0 0.0
      %6139 = vmatpush1.msra.mxu0 0.0
      %6140 = vmatprep.subr.mxu0 0.0
      %6141 = vmatpush1.msra.mxu0 0.0
      %6142 = vmatprep.subr.mxu0 0.0
      %6143 = vmatpush1.msra.mxu0 0.0
      %6144 = vmatprep.subr.mxu0 0.0
      %6145 = vmatpush1.msra.mxu0 0.0
      %6146 = vmatprep.subr.mxu0 0.0
      %6147 = vmatpush1.msra.mxu0 0.0
      %6148 = vmatprep.subr.mxu0 0.0
      %6149 = vmatpush1.msra.mxu0 0.0
      %6150 = vmatprep.subr.mxu0 0.0
      %6151 = vmatpush1.msra.mxu0 0.0
      %6152 = vmatprep.subr.mxu0 0.0
      %6153 = vmatpush1.msra.mxu0 0.0
      %6154 = vmatprep.subr.mxu0 0.0
      %6155 = vmatpush1.msra.mxu0 0.0
      %6156 = vmatprep.subr.mxu0 0.0
      %6157 = vmatpush1.msra.mxu0 0.0
      %6158 = vmatprep.subr.mxu0 0.0
      %6159 = vmatpush1.msra.mxu0 0.0
      %6160 = vmatprep.subr.mxu0 0.0
      %6161 = vmatpush1.msra.mxu0 0.0
      %6162 = vmatprep.subr.mxu0 0.0
      %6163 = vmatpush1.msra.mxu0 0.0
      %6164 = vmatprep.subr.mxu0 0.0
      %6165 = vmatpush1.msra.mxu0 0.0
      %6166 = vmatprep.subr.mxu0 0.0
      %6167 = vmatpush1.msra.mxu0 0.0
      %6168 = vmatprep.subr.mxu0 0.0
      %6169 = vmatpush1.msra.mxu0 0.0
      %6170 = vmatprep.mubr.f32.mxu0 0.0
      %6171 = vmatmul.mubr.f32.gmra.mrb[0].mxu0 %v5128
      %v6172 = vpop.f32.mrb[0].mxu0
      %v6173 = vadd.f32 %v6088, %v6172
      %v6174 = vpop.f32.mrb[0].mxu0
      %6175 = vmatprep.mubr.f32.mxu0 0.0
      %6176 = vmatmul.mubr.f32.gmra.mrb[0].mxu0 %v5131
      %v6177 = vpop.f32.mrb[0].mxu0
      %v6178 = vadd.f32 %v6093, %v6177
      %v6179 = vpop.f32.mrb[0].mxu0
      %6180 = vmatprep.mubr.f32.mxu0 0.0
      %6181 = vmatmul.mubr.f32.gmra.mrb[0].mxu0 %v5134
      %v6182 = vpop.f32.mrb[0].mxu0
      %v6183 = vadd.f32 %v6098, %v6182
      %v6184 = vpop.f32.mrb[0].mxu0
      %6185 = vmatprep.mubr.f32.mxu0 0.0
      %6186 = vmatmul.mubr.f32.gmra.mrb[0].mxu0 %v5137
      %v6187 = vpop.f32.mrb[0].mxu0
      %v6188 = vadd.f32 %v6103, %v6187
      %v6189 = vpop.f32.mrb[0].mxu0
      %6190 = vdwg.mxu0
      %v6191 = vmax.f32 %v5473, 0.0
      %v6192 = vmax.f32 %v5475, 0.0
      %v6193 = vmax.f32 %v5829, 0.0
      %v6194 = vmax.f32 %v5831, 0.0
      %v6195 = vmax.f32 %v6173, 0.0
      %v6196 = vmax.f32 %v5479, 0.0
      %v6197 = vmax.f32 %v5481, 0.0
      %v6198 = vmax.f32 %v5835, 0.0
      %v6199 = vmax.f32 %v5837, 0.0
      %v6200 = vmax.f32 %v6178, 0.0
      %v6201 = vmax.f32 %v5485, 0.0
      %v6202 = vmax.f32 %v5487, 0.0
      %v6203 = vmax.f32 %v5841, 0.0
      %v6204 = vmax.f32 %v5843, 0.0
      %v6205 = vmax.f32 %v6183, 0.0
      %v6206 = vmax.f32 %v5491, 0.0
      %v6207 = vmax.f32 %v5493, 0.0
      %v6208 = vmax.f32 %v5847, 0.0
      %v6209 = vmax.f32 %v5849, 0.0
      %v6210 = vmax.f32 %v6188, 0.0
      %v6211 = vld [vmem:[%s7] sm:$0xff]
      %v6212 = vld [vmem:[%s7 + $0x8] sm:$0xff]
      %v6213 = vld [vmem:[%s7 + $0x10] sm:$0xff]
      %v6214 = vld [vmem:[%s7 + $0x18] sm:$0xff]
      %v6215 = vld [vmem:[%s7 + $0x20] sm:$0xff]
      %v6216 = vld [vmem:[%s7 + $0x28] sm:$0xff]
      %v6217 = vld [vmem:[%s7 + $0x30] sm:$0xff]
      %v6218 = vld [vmem:[%s7 + $0x38] sm:$0xff]
      %v6219 = vld [vmem:[%s7 + $0x40] sm:$0xff]
      %v6220 = vld [vmem:[%s7 + $0x48] sm:$0xff]
      %v6221 = vld [vmem:[%s7 + $0x50] sm:$0xff]
      %v6222 = vld [vmem:[%s7 + $0x58] sm:$0xff]
      %v6223 = vld [vmem:[%s7 + $0x60] sm:$0xff]
      %v6224 = vld [vmem:[%s7 + $0x68] sm:$0xff]
      %v6225 = vld [vmem:[%s7 + $0x70] sm:$0xff]
      %v6226 = vld [vmem:[%s7 + $0x78] sm:$0xff]
      %v6227 = vld [vmem:[%s7 + $0x80] sm:$0xff]
      %v6228 = vld [vmem:[%s7 + $0x88] sm:$0xff]
      %v6229 = vld [vmem:[%s7 + $0x90] sm:$0xff]
      %v6230 = vld [vmem:[%s7 + $0x98] sm:$0xff]
      %v6231 = vld [vmem:[%s7 + $0xa0] sm:$0xff]
      %v6232 = vld [vmem:[%s7 + $0xa8] sm:$0xff]
      %v6233 = vld [vmem:[%s7 + $0xb0] sm:$0xff]
      %v6234 = vld [vmem:[%s7 + $0xb8] sm:$0xff]
      %v6235 = vld [vmem:[%s7 + $0xc0] sm:$0xff]
      %v6236 = vld [vmem:[%s7 + $0xc8] sm:$0xff]
      %v6237 = vld [vmem:[%s7 + $0xd0] sm:$0xff]
      %v6238 = vld [vmem:[%s7 + $0xd8] sm:$0xff]
      %v6239 = vld [vmem:[%s7 + $0xe0] sm:$0xff]
      %v6240 = vld [vmem:[%s7 + $0xe8] sm:$0xff]
      %v6241 = vld [vmem:[%s7 + $0xf0] sm:$0xff]
      %v6242 = vld [vmem:[%s7 + $0xf8] sm:$0xff]
      %v6243 = vld [vmem:[%s7 + $0x100] sm:$0xff]
      %v6244 = vld [vmem:[%s7 + $0x108] sm:$0xff]
      %v6245 = vld [vmem:[%s7 + $0x110] sm:$0xff]
      %v6246 = vld [vmem:[%s7 + $0x118] sm:$0xff]
      %v6247 = vld [vmem:[%s7 + $0x120] sm:$0xff]
      %v6248 = vld [vmem:[%s7 + $0x128] sm:$0xff]
      %v6249 = vld [vmem:[%s7 + $0x130] sm:$0xff]
      %v6250 = vld [vmem:[%s7 + $0x138] sm:$0xff]
      %v6251 = vld [vmem:[%s7 + $0x140] sm:$0xff]
      %v6252 = vld [vmem:[%s7 + $0x148] sm:$0xff]
      %v6253 = vld [vmem:[%s7 + $0x150] sm:$0xff]
      %v6254 = vld [vmem:[%s7 + $0x158] sm:$0xff]
      %v6255 = vld [vmem:[%s7 + $0x160] sm:$0xff]
      %v6256 = vld [vmem:[%s7 + $0x168] sm:$0xff]
      %v6257 = vld [vmem:[%s7 + $0x170] sm:$0xff]
      %v6258 = vld [vmem:[%s7 + $0x178] sm:$0xff]
      %v6259 = vld [vmem:[%s7 + $0x180] sm:$0xff]
      %v6260 = vld [vmem:[%s7 + $0x188] sm:$0xff]
      %v6261 = vld [vmem:[%s7 + $0x190] sm:$0xff]
      %v6262 = vld [vmem:[%s7 + $0x198] sm:$0xff]
      %v6263 = vld [vmem:[%s7 + $0x1a0] sm:$0xff]
      %v6264 = vld [vmem:[%s7 + $0x1a8] sm:$0xff]
      %v6265 = vld [vmem:[%s7 + $0x1b0] sm:$0xff]
      %v6266 = vld [vmem:[%s7 + $0x1b8] sm:$0xff]
      %v6267 = vld [vmem:[%s7 + $0x1c0] sm:$0xff]
      %v6268 = vld [vmem:[%s7 + $0x1c8] sm:$0xff]
      %v6269 = vld [vmem:[%s7 + $0x1d0] sm:$0xff]
      %v6270 = vld [vmem:[%s7 + $0x1d8] sm:$0xff]
      %v6271 = vld [vmem:[%s7 + $0x1e0] sm:$0xff]
      %v6272 = vld [vmem:[%s7 + $0x1e8] sm:$0xff]
      %v6273 = vld [vmem:[%s7 + $0x1f0] sm:$0xff]
      %v6274 = vld [vmem:[%s7 + $0x1f8] sm:$0xff]
      %v6275 = vld [vmem:[%s7 + $0x200] sm:$0xff]
      %v6276 = vld [vmem:[%s7 + $0x208] sm:$0xff]
      %v6277 = vld [vmem:[%s7 + $0x210] sm:$0xff]
      %v6278 = vld [vmem:[%s7 + $0x218] sm:$0xff]
      %v6279 = vld [vmem:[%s7 + $0x220] sm:$0xff]
      %v6280 = vld [vmem:[%s7 + $0x228] sm:$0xff]
      %v6282 = vsel %vm1126, %v6195, 0
      %v6285 = vsel %vm1126, %v6200, 0
      %v6288 = vsel %vm1126, %v6205, 0
      %v6291 = vsel %vm1126, %v6210, 0
      %6293 = vmatprep.subr.mxu0 0.0
      %6294 = vmatpush1.msra.mxu0 %v6211
      %6295 = vmatprep.subr.mxu0 0.0
      %6296 = vmatpush1.msra.mxu0 %v6212
      %6297 = vmatprep.subr.mxu0 0.0
      %6298 = vmatpush1.msra.mxu0 %v6213
      %6299 = vmatprep.subr.mxu0 0.0
      %6300 = vmatpush1.msra.mxu0 %v6214
      %6301 = vmatprep.subr.mxu0 0.0
      %6302 = vmatpush1.msra.mxu0 %v6215
      %6303 = vmatprep.subr.mxu0 0.0
      %6304 = vmatpush1.msra.mxu0 %v6216
      %6305 = vmatprep.subr.mxu0 0.0
      %6306 = vmatpush1.msra.mxu0 %v6217
      %6307 = vmatprep.subr.mxu0 0.0
      %6308 = vmatpush1.msra.mxu0 %v6218
      %6309 = vmatprep.subr.mxu0 0.0
      %6310 = vmatpush1.msra.mxu0 %v6219
      %6311 = vmatprep.subr.mxu0 0.0
      %6312 = vmatpush1.msra.mxu0 %v6220
      %6313 = vmatprep.subr.mxu0 0.0
      %6314 = vmatpush1.msra.mxu0 %v6221
      %6315 = vmatprep.subr.mxu0 0.0
      %6316 = vmatpush1.msra.mxu0 %v6222
      %6317 = vmatprep.subr.mxu0 0.0
      %6318 = vmatpush1.msra.mxu0 %v6223
      %6319 = vmatprep.subr.mxu0 0.0
      %6320 = vmatpush1.msra.mxu0 %v6224
      %6321 = vmatprep.subr.mxu0 0.0
      %6322 = vmatpush1.msra.mxu0 %v6225
      %6323 = vmatprep.subr.mxu0 0.0
      %6324 = vmatpush1.msra.mxu0 %v6226
      %6325 = vmatprep.subr.mxu0 0.0
      %6326 = vmatpush1.msra.mxu0 %v6227
      %6327 = vmatprep.subr.mxu0 0.0
      %6328 = vmatpush1.msra.mxu0 %v6228
      %6329 = vmatprep.subr.mxu0 0.0
      %6330 = vmatpush1.msra.mxu0 %v6229
      %6331 = vmatprep.subr.mxu0 0.0
      %6332 = vmatpush1.msra.mxu0 %v6230
      %6333 = vmatprep.subr.mxu0 0.0
      %6334 = vmatpush1.msra.mxu0 %v6231
      %6335 = vmatprep.subr.mxu0 0.0
      %6336 = vmatpush1.msra.mxu0 %v6232
      %6337 = vmatprep.subr.mxu0 0.0
      %6338 = vmatpush1.msra.mxu0 %v6233
      %6339 = vmatprep.subr.mxu0 0.0
      %6340 = vmatpush1.msra.mxu0 %v6234
      %6341 = vmatprep.subr.mxu0 0.0
      %6342 = vmatpush1.msra.mxu0 %v6235
      %6343 = vmatprep.subr.mxu0 0.0
      %6344 = vmatpush1.msra.mxu0 %v6236
      %6345 = vmatprep.subr.mxu0 0.0
      %6346 = vmatpush1.msra.mxu0 %v6237
      %6347 = vmatprep.subr.mxu0 0.0
      %6348 = vmatpush1.msra.mxu0 %v6238
      %6349 = vmatprep.subr.mxu0 0.0
      %6350 = vmatpush1.msra.mxu0 %v6239
      %6351 = vmatprep.subr.mxu0 0.0
      %6352 = vmatpush1.msra.mxu0 %v6240
      %6353 = vmatprep.subr.mxu0 0.0
      %6354 = vmatpush1.msra.mxu0 %v6241
      %6355 = vmatprep.subr.mxu0 0.0
      %6356 = vmatpush1.msra.mxu0 %v6242
      %6357 = vmatprep.mubr.f32.mxu0 %v6192
      %6358 = vmatmul.mubr.f32.gmra.mrb[0].mxu0 %v6191
      %v6359 = vpop.f32.mrb[0].mxu0
      %v6360 = vadd.f32 0.0, %v6359
      %v6361 = vpop.f32.mrb[0].mxu0
      %6362 = vmatprep.mubr.f32.mxu0 %v6197
      %6363 = vmatmul.mubr.f32.gmra.mrb[0].mxu0 %v6196
      %v6364 = vpop.f32.mrb[0].mxu0
      %v6365 = vadd.f32 0.0, %v6364
      %v6366 = vpop.f32.mrb[0].mxu0
      %6367 = vmatprep.mubr.f32.mxu0 %v6202
      %6368 = vmatmul.mubr.f32.gmra.mrb[0].mxu0 %v6201
      %v6369 = vpop.f32.mrb[0].mxu0
      %v6370 = vadd.f32 0.0, %v6369
      %v6371 = vpop.f32.mrb[0].mxu0
      %6372 = vmatprep.mubr.f32.mxu0 %v6207
      %6373 = vmatmul.mubr.f32.gmra.mrb[0].mxu0 %v6206
      %v6374 = vpop.f32.mrb[0].mxu0
      %v6375 = vadd.f32 0.0, %v6374
      %v6376 = vpop.f32.mrb[0].mxu0
      %6377 = vdwg.mxu0
      %6378 = vmatprep.subr.mxu0 0.0
      %6379 = vmatpush1.msra.mxu0 %v6243
      %6380 = vmatprep.subr.mxu0 0.0
      %6381 = vmatpush1.msra.mxu0 %v6244
      %6382 = vmatprep.subr.mxu0 0.0
      %6383 = vmatpush1.msra.mxu0 %v6245
      %6384 = vmatprep.subr.mxu0 0.0
      %6385 = vmatpush1.msra.mxu0 %v6246
      %6386 = vmatprep.subr.mxu0 0.0
      %6387 = vmatpush1.msra.mxu0 %v6247
      %6388 = vmatprep.subr.mxu0 0.0
      %6389 = vmatpush1.msra.mxu0 %v6248
      %6390 = vmatprep.subr.mxu0 0.0
      %6391 = vmatpush1.msra.mxu0 %v6249
      %6392 = vmatprep.subr.mxu0 0.0
      %6393 = vmatpush1.msra.mxu0 %v6250
      %6394 = vmatprep.subr.mxu0 0.0
      %6395 = vmatpush1.msra.mxu0 %v6251
      %6396 = vmatprep.subr.mxu0 0.0
      %6397 = vmatpush1.msra.mxu0 %v6252
      %6398 = vmatprep.subr.mxu0 0.0
      %6399 = vmatpush1.msra.mxu0 %v6253
      %6400 = vmatprep.subr.mxu0 0.0
      %6401 = vmatpush1.msra.mxu0 %v6254
      %6402 = vmatprep.subr.mxu0 0.0
      %6403 = vmatpush1.msra.mxu0 %v6255
      %6404 = vmatprep.subr.mxu0 0.0
      %6405 = vmatpush1.msra.mxu0 %v6256
      %6406 = vmatprep.subr.mxu0 0.0
      %6407 = vmatpush1.msra.mxu0 %v6257
      %6408 = vmatprep.subr.mxu0 0.0
      %6409 = vmatpush1.msra.mxu0 %v6258
      %6410 = vmatprep.subr.mxu0 0.0
      %6411 = vmatpush1.msra.mxu0 %v6259
      %6412 = vmatprep.subr.mxu0 0.0
      %6413 = vmatpush1.msra.mxu0 %v6260
      %6414 = vmatprep.subr.mxu0 0.0
      %6415 = vmatpush1.msra.mxu0 %v6261
      %6416 = vmatprep.subr.mxu0 0.0
      %6417 = vmatpush1.msra.mxu0 %v6262
      %6418 = vmatprep.subr.mxu0 0.0
      %6419 = vmatpush1.msra.mxu0 %v6263
      %6420 = vmatprep.subr.mxu0 0.0
      %6421 = vmatpush1.msra.mxu0 %v6264
      %6422 = vmatprep.subr.mxu0 0.0
      %6423 = vmatpush1.msra.mxu0 %v6265
      %6424 = vmatprep.subr.mxu0 0.0
      %6425 = vmatpush1.msra.mxu0 %v6266
      %6426 = vmatprep.subr.mxu0 0.0
      %6427 = vmatpush1.msra.mxu0 %v6267
      %6428 = vmatprep.subr.mxu0 0.0
      %6429 = vmatpush1.msra.mxu0 %v6268
      %6430 = vmatprep.subr.mxu0 0.0
      %6431 = vmatpush1.msra.mxu0 %v6269
      %6432 = vmatprep.subr.mxu0 0.0
      %6433 = vmatpush1.msra.mxu0 %v6270
      %6434 = vmatprep.subr.mxu0 0.0
      %6435 = vmatpush1.msra.mxu0 %v6271
      %6436 = vmatprep.subr.mxu0 0.0
      %6437 = vmatpush1.msra.mxu0 %v6272
      %6438 = vmatprep.subr.mxu0 0.0
      %6439 = vmatpush1.msra.mxu0 %v6273
      %6440 = vmatprep.subr.mxu0 0.0
      %6441 = vmatpush1.msra.mxu0 %v6274
      %6442 = vmatprep.mubr.f32.mxu0 %v6194
      %6443 = vmatmul.mubr.f32.gmra.mrb[0].mxu0 %v6193
      %v6444 = vpop.f32.mrb[0].mxu0
      %v6445 = vadd.f32 %v6360, %v6444
      %v6446 = vpop.f32.mrb[0].mxu0
      %6447 = vmatprep.mubr.f32.mxu0 %v6199
      %6448 = vmatmul.mubr.f32.gmra.mrb[0].mxu0 %v6198
      %v6449 = vpop.f32.mrb[0].mxu0
      %v6450 = vadd.f32 %v6365, %v6449
      %v6451 = vpop.f32.mrb[0].mxu0
      %6452 = vmatprep.mubr.f32.mxu0 %v6204
      %6453 = vmatmul.mubr.f32.gmra.mrb[0].mxu0 %v6203
      %v6454 = vpop.f32.mrb[0].mxu0
      %v6455 = vadd.f32 %v6370, %v6454
      %v6456 = vpop.f32.mrb[0].mxu0
      %6457 = vmatprep.mubr.f32.mxu0 %v6209
      %6458 = vmatmul.mubr.f32.gmra.mrb[0].mxu0 %v6208
      %v6459 = vpop.f32.mrb[0].mxu0
      %v6460 = vadd.f32 %v6375, %v6459
      %v6461 = vpop.f32.mrb[0].mxu0
      %6462 = vdwg.mxu0
      %6463 = vmatprep.subr.mxu0 0.0
      %6464 = vmatpush1.msra.mxu0 %v6275
      %6465 = vmatprep.subr.mxu0 0.0
      %6466 = vmatpush1.msra.mxu0 %v6276
      %6467 = vmatprep.subr.mxu0 0.0
      %6468 = vmatpush1.msra.mxu0 %v6277
      %6469 = vmatprep.subr.mxu0 0.0
      %6470 = vmatpush1.msra.mxu0 %v6278
      %6471 = vmatprep.subr.mxu0 0.0
      %6472 = vmatpush1.msra.mxu0 %v6279
      %6473 = vmatprep.subr.mxu0 0.0
      %6474 = vmatpush1.msra.mxu0 %v6280
      %6475 = vmatprep.subr.mxu0 0.0
      %6476 = vmatpush1.msra.mxu0 0.0
      %6477 = vmatprep.subr.mxu0 0.0
      %6478 = vmatpush1.msra.mxu0 0.0
      %6479 = vmatprep.subr.mxu0 0.0
      %6480 = vmatpush1.msra.mxu0 0.0
      %6481 = vmatprep.subr.mxu0 0.0
      %6482 = vmatpush1.msra.mxu0 0.0
      %6483 = vmatprep.subr.mxu0 0.0
      %6484 = vmatpush1.msra.mxu0 0.0
      %6485 = vmatprep.subr.mxu0 0.0
      %6486 = vmatpush1.msra.mxu0 0.0
      %6487 = vmatprep.subr.mxu0 0.0
      %6488 = vmatpush1.msra.mxu0 0.0
      %6489 = vmatprep.subr.mxu0 0.0
      %6490 = vmatpush1.msra.mxu0 0.0
      %6491 = vmatprep.subr.mxu0 0.0
      %6492 = vmatpush1.msra.mxu0 0.0
      %6493 = vmatprep.subr.mxu0 0.0
      %6494 = vmatpush1.msra.mxu0 0.0
      %6495 = vmatprep.subr.mxu0 0.0
      %6496 = vmatpush1.msra.mxu0 0.0
      %6497 = vmatprep.subr.mxu0 0.0
      %6498 = vmatpush1.msra.mxu0 0.0
      %6499 = vmatprep.subr.mxu0 0.0
      %6500 = vmatpush1.msra.mxu0 0.0
      %6501 = vmatprep.subr.mxu0 0.0
      %6502 = vmatpush1.msra.mxu0 0.0
      %6503 = vmatprep.subr.mxu0 0.0
      %6504 = vmatpush1.msra.mxu0 0.0
      %6505 = vmatprep.subr.mxu0 0.0
      %6506 = vmatpush1.msra.mxu0 0.0
      %6507 = vmatprep.subr.mxu0 0.0
      %6508 = vmatpush1.msra.mxu0 0.0
      %6509 = vmatprep.subr.mxu0 0.0
      %6510 = vmatpush1.msra.mxu0 0.0
      %6511 = vmatprep.subr.mxu0 0.0
      %6512 = vmatpush1.msra.mxu0 0.0
      %6513 = vmatprep.subr.mxu0 0.0
      %6514 = vmatpush1.msra.mxu0 0.0
      %6515 = vmatprep.subr.mxu0 0.0
      %6516 = vmatpush1.msra.mxu0 0.0
      %6517 = vmatprep.subr.mxu0 0.0
      %6518 = vmatpush1.msra.mxu0 0.0
      %6519 = vmatprep.subr.mxu0 0.0
      %6520 = vmatpush1.msra.mxu0 0.0
      %6521 = vmatprep.subr.mxu0 0.0
      %6522 = vmatpush1.msra.mxu0 0.0
      %6523 = vmatprep.subr.mxu0 0.0
      %6524 = vmatpush1.msra.mxu0 0.0
      %6525 = vmatprep.subr.mxu0 0.0
      %6526 = vmatpush1.msra.mxu0 0.0
      %6527 = vmatprep.mubr.f32.mxu0 0.0
      %6528 = vmatmul.mubr.f32.gmra.mrb[0].mxu0 %v6282
      %v6529 = vpop.f32.mrb[0].mxu0
      %v6530 = vadd.f32 %v6445, %v6529
      %v6531 = vpop.f32.mrb[0].mxu0
      %6532 = vmatprep.mubr.f32.mxu0 0.0
      %6533 = vmatmul.mubr.f32.gmra.mrb[0].mxu0 %v6285
      %v6534 = vpop.f32.mrb[0].mxu0
      %v6535 = vadd.f32 %v6450, %v6534
      %v6536 = vpop.f32.mrb[0].mxu0
      %6537 = vmatprep.mubr.f32.mxu0 0.0
      %6538 = vmatmul.mubr.f32.gmra.mrb[0].mxu0 %v6288
      %v6539 = vpop.f32.mrb[0].mxu0
      %v6540 = vadd.f32 %v6455, %v6539
      %v6541 = vpop.f32.mrb[0].mxu0
      %6542 = vmatprep.mubr.f32.mxu0 0.0
      %6543 = vmatmul.mubr.f32.gmra.mrb[0].mxu0 %v6291
      %v6544 = vpop.f32.mrb[0].mxu0
      %v6545 = vadd.f32 %v6460, %v6544
      %v6546 = vpop.f32.mrb[0].mxu0
      %6547 = vdwg.mxu0
      %s6548 = scalar_lea.vmem %s7, 560
      %v6549 = vld [vmem:[%s6548] sm:$0xff]
      %v6550 = vld [vmem:[%s6548 + $0x8] sm:$0xff]
      %v6551 = vld [vmem:[%s6548 + $0x10] sm:$0xff]
      %v6552 = vld [vmem:[%s6548 + $0x18] sm:$0xff]
      %v6553 = vld [vmem:[%s6548 + $0x20] sm:$0xff]
      %v6554 = vld [vmem:[%s6548 + $0x28] sm:$0xff]
      %v6555 = vld [vmem:[%s6548 + $0x30] sm:$0xff]
      %v6556 = vld [vmem:[%s6548 + $0x38] sm:$0xff]
      %v6557 = vld [vmem:[%s6548 + $0x40] sm:$0xff]
      %v6558 = vld [vmem:[%s6548 + $0x48] sm:$0xff]
      %v6559 = vld [vmem:[%s6548 + $0x50] sm:$0xff]
      %v6560 = vld [vmem:[%s6548 + $0x58] sm:$0xff]
      %v6561 = vld [vmem:[%s6548 + $0x60] sm:$0xff]
      %v6562 = vld [vmem:[%s6548 + $0x68] sm:$0xff]
      %v6563 = vld [vmem:[%s6548 + $0x70] sm:$0xff]
      %v6564 = vld [vmem:[%s6548 + $0x78] sm:$0xff]
      %v6565 = vld [vmem:[%s6548 + $0x80] sm:$0xff]
      %v6566 = vld [vmem:[%s6548 + $0x88] sm:$0xff]
      %v6567 = vld [vmem:[%s6548 + $0x90] sm:$0xff]
      %v6568 = vld [vmem:[%s6548 + $0x98] sm:$0xff]
      %v6569 = vld [vmem:[%s6548 + $0xa0] sm:$0xff]
      %v6570 = vld [vmem:[%s6548 + $0xa8] sm:$0xff]
      %v6571 = vld [vmem:[%s6548 + $0xb0] sm:$0xff]
      %v6572 = vld [vmem:[%s6548 + $0xb8] sm:$0xff]
      %v6573 = vld [vmem:[%s6548 + $0xc0] sm:$0xff]
      %v6574 = vld [vmem:[%s6548 + $0xc8] sm:$0xff]
      %v6575 = vld [vmem:[%s6548 + $0xd0] sm:$0xff]
      %v6576 = vld [vmem:[%s6548 + $0xd8] sm:$0xff]
      %v6577 = vld [vmem:[%s6548 + $0xe0] sm:$0xff]
      %v6578 = vld [vmem:[%s6548 + $0xe8] sm:$0xff]
      %v6579 = vld [vmem:[%s6548 + $0xf0] sm:$0xff]
      %v6580 = vld [vmem:[%s6548 + $0xf8] sm:$0xff]
      %v6581 = vld [vmem:[%s6548 + $0x100] sm:$0xff]
      %v6582 = vld [vmem:[%s6548 + $0x108] sm:$0xff]
      %v6583 = vld [vmem:[%s6548 + $0x110] sm:$0xff]
      %v6584 = vld [vmem:[%s6548 + $0x118] sm:$0xff]
      %v6585 = vld [vmem:[%s6548 + $0x120] sm:$0xff]
      %v6586 = vld [vmem:[%s6548 + $0x128] sm:$0xff]
      %v6587 = vld [vmem:[%s6548 + $0x130] sm:$0xff]
      %v6588 = vld [vmem:[%s6548 + $0x138] sm:$0xff]
      %v6589 = vld [vmem:[%s6548 + $0x140] sm:$0xff]
      %v6590 = vld [vmem:[%s6548 + $0x148] sm:$0xff]
      %v6591 = vld [vmem:[%s6548 + $0x150] sm:$0xff]
      %v6592 = vld [vmem:[%s6548 + $0x158] sm:$0xff]
      %v6593 = vld [vmem:[%s6548 + $0x160] sm:$0xff]
      %v6594 = vld [vmem:[%s6548 + $0x168] sm:$0xff]
      %v6595 = vld [vmem:[%s6548 + $0x170] sm:$0xff]
      %v6596 = vld [vmem:[%s6548 + $0x178] sm:$0xff]
      %v6597 = vld [vmem:[%s6548 + $0x180] sm:$0xff]
      %v6598 = vld [vmem:[%s6548 + $0x188] sm:$0xff]
      %v6599 = vld [vmem:[%s6548 + $0x190] sm:$0xff]
      %v6600 = vld [vmem:[%s6548 + $0x198] sm:$0xff]
      %v6601 = vld [vmem:[%s6548 + $0x1a0] sm:$0xff]
      %v6602 = vld [vmem:[%s6548 + $0x1a8] sm:$0xff]
      %v6603 = vld [vmem:[%s6548 + $0x1b0] sm:$0xff]
      %v6604 = vld [vmem:[%s6548 + $0x1b8] sm:$0xff]
      %v6605 = vld [vmem:[%s6548 + $0x1c0] sm:$0xff]
      %v6606 = vld [vmem:[%s6548 + $0x1c8] sm:$0xff]
      %v6607 = vld [vmem:[%s6548 + $0x1d0] sm:$0xff]
      %v6608 = vld [vmem:[%s6548 + $0x1d8] sm:$0xff]
      %v6609 = vld [vmem:[%s6548 + $0x1e0] sm:$0xff]
      %v6610 = vld [vmem:[%s6548 + $0x1e8] sm:$0xff]
      %v6611 = vld [vmem:[%s6548 + $0x1f0] sm:$0xff]
      %v6612 = vld [vmem:[%s6548 + $0x1f8] sm:$0xff]
      %v6613 = vld [vmem:[%s6548 + $0x200] sm:$0xff]
      %v6614 = vld [vmem:[%s6548 + $0x208] sm:$0xff]
      %v6615 = vld [vmem:[%s6548 + $0x210] sm:$0xff]
      %v6616 = vld [vmem:[%s6548 + $0x218] sm:$0xff]
      %v6617 = vld [vmem:[%s6548 + $0x220] sm:$0xff]
      %v6618 = vld [vmem:[%s6548 + $0x228] sm:$0xff]
      %6619 = vmatprep.subr.mxu0 0.0
      %6620 = vmatpush1.msra.mxu0 %v6549
      %6621 = vmatprep.subr.mxu0 0.0
      %6622 = vmatpush1.msra.mxu0 %v6550
      %6623 = vmatprep.subr.mxu0 0.0
      %6624 = vmatpush1.msra.mxu0 %v6551
      %6625 = vmatprep.subr.mxu0 0.0
      %6626 = vmatpush1.msra.mxu0 %v6552
      %6627 = vmatprep.subr.mxu0 0.0
      %6628 = vmatpush1.msra.mxu0 %v6553
      %6629 = vmatprep.subr.mxu0 0.0
      %6630 = vmatpush1.msra.mxu0 %v6554
      %6631 = vmatprep.subr.mxu0 0.0
      %6632 = vmatpush1.msra.mxu0 %v6555
      %6633 = vmatprep.subr.mxu0 0.0
      %6634 = vmatpush1.msra.mxu0 %v6556
      %6635 = vmatprep.subr.mxu0 0.0
      %6636 = vmatpush1.msra.mxu0 %v6557
      %6637 = vmatprep.subr.mxu0 0.0
      %6638 = vmatpush1.msra.mxu0 %v6558
      %6639 = vmatprep.subr.mxu0 0.0
      %6640 = vmatpush1.msra.mxu0 %v6559
      %6641 = vmatprep.subr.mxu0 0.0
      %6642 = vmatpush1.msra.mxu0 %v6560
      %6643 = vmatprep.subr.mxu0 0.0
      %6644 = vmatpush1.msra.mxu0 %v6561
      %6645 = vmatprep.subr.mxu0 0.0
      %6646 = vmatpush1.msra.mxu0 %v6562
      %6647 = vmatprep.subr.mxu0 0.0
      %6648 = vmatpush1.msra.mxu0 %v6563
      %6649 = vmatprep.subr.mxu0 0.0
      %6650 = vmatpush1.msra.mxu0 %v6564
      %6651 = vmatprep.subr.mxu0 0.0
      %6652 = vmatpush1.msra.mxu0 %v6565
      %6653 = vmatprep.subr.mxu0 0.0
      %6654 = vmatpush1.msra.mxu0 %v6566
      %6655 = vmatprep.subr.mxu0 0.0
      %6656 = vmatpush1.msra.mxu0 %v6567
      %6657 = vmatprep.subr.mxu0 0.0
      %6658 = vmatpush1.msra.mxu0 %v6568
      %6659 = vmatprep.subr.mxu0 0.0
      %6660 = vmatpush1.msra.mxu0 %v6569
      %6661 = vmatprep.subr.mxu0 0.0
      %6662 = vmatpush1.msra.mxu0 %v6570
      %6663 = vmatprep.subr.mxu0 0.0
      %6664 = vmatpush1.msra.mxu0 %v6571
      %6665 = vmatprep.subr.mxu0 0.0
      %6666 = vmatpush1.msra.mxu0 %v6572
      %6667 = vmatprep.subr.mxu0 0.0
      %6668 = vmatpush1.msra.mxu0 %v6573
      %6669 = vmatprep.subr.mxu0 0.0
      %6670 = vmatpush1.msra.mxu0 %v6574
      %6671 = vmatprep.subr.mxu0 0.0
      %6672 = vmatpush1.msra.mxu0 %v6575
      %6673 = vmatprep.subr.mxu0 0.0
      %6674 = vmatpush1.msra.mxu0 %v6576
      %6675 = vmatprep.subr.mxu0 0.0
      %6676 = vmatpush1.msra.mxu0 %v6577
      %6677 = vmatprep.subr.mxu0 0.0
      %6678 = vmatpush1.msra.mxu0 %v6578
      %6679 = vmatprep.subr.mxu0 0.0
      %6680 = vmatpush1.msra.mxu0 %v6579
      %6681 = vmatprep.subr.mxu0 0.0
      %6682 = vmatpush1.msra.mxu0 %v6580
      %6683 = vmatprep.mubr.f32.mxu0 %v6192
      %6684 = vmatmul.mubr.f32.gmra.mrb[0].mxu0 %v6191
      %v6685 = vpop.f32.mrb[0].mxu0
      %v6686 = vadd.f32 0.0, %v6685
      %v6687 = vpop.f32.mrb[0].mxu0
      %6688 = vmatprep.mubr.f32.mxu0 %v6197
      %6689 = vmatmul.mubr.f32.gmra.mrb[0].mxu0 %v6196
      %v6690 = vpop.f32.mrb[0].mxu0
      %v6691 = vadd.f32 0.0, %v6690
      %v6692 = vpop.f32.mrb[0].mxu0
      %6693 = vmatprep.mubr.f32.mxu0 %v6202
      %6694 = vmatmul.mubr.f32.gmra.mrb[0].mxu0 %v6201
      %v6695 = vpop.f32.mrb[0].mxu0
      %v6696 = vadd.f32 0.0, %v6695
      %v6697 = vpop.f32.mrb[0].mxu0
      %6698 = vmatprep.mubr.f32.mxu0 %v6207
      %6699 = vmatmul.mubr.f32.gmra.mrb[0].mxu0 %v6206
      %v6700 = vpop.f32.mrb[0].mxu0
      %v6701 = vadd.f32 0.0, %v6700
      %v6702 = vpop.f32.mrb[0].mxu0
      %6703 = vdwg.mxu0
      %6704 = vmatprep.subr.mxu0 0.0
      %6705 = vmatpush1.msra.mxu0 %v6581
      %6706 = vmatprep.subr.mxu0 0.0
      %6707 = vmatpush1.msra.mxu0 %v6582
      %6708 = vmatprep.subr.mxu0 0.0
      %6709 = vmatpush1.msra.mxu0 %v6583
      %6710 = vmatprep.subr.mxu0 0.0
      %6711 = vmatpush1.msra.mxu0 %v6584
      %6712 = vmatprep.subr.mxu0 0.0
      %6713 = vmatpush1.msra.mxu0 %v6585
      %6714 = vmatprep.subr.mxu0 0.0
      %6715 = vmatpush1.msra.mxu0 %v6586
      %6716 = vmatprep.subr.mxu0 0.0
      %6717 = vmatpush1.msra.mxu0 %v6587
      %6718 = vmatprep.subr.mxu0 0.0
      %6719 = vmatpush1.msra.mxu0 %v6588
      %6720 = vmatprep.subr.mxu0 0.0
      %6721 = vmatpush1.msra.mxu0 %v6589
      %6722 = vmatprep.subr.mxu0 0.0
      %6723 = vmatpush1.msra.mxu0 %v6590
      %6724 = vmatprep.subr.mxu0 0.0
      %6725 = vmatpush1.msra.mxu0 %v6591
      %6726 = vmatprep.subr.mxu0 0.0
      %6727 = vmatpush1.msra.mxu0 %v6592
      %6728 = vmatprep.subr.mxu0 0.0
      %6729 = vmatpush1.msra.mxu0 %v6593
      %6730 = vmatprep.subr.mxu0 0.0
      %6731 = vmatpush1.msra.mxu0 %v6594
      %6732 = vmatprep.subr.mxu0 0.0
      %6733 = vmatpush1.msra.mxu0 %v6595
      %6734 = vmatprep.subr.mxu0 0.0
      %6735 = vmatpush1.msra.mxu0 %v6596
      %6736 = vmatprep.subr.mxu0 0.0
      %6737 = vmatpush1.msra.mxu0 %v6597
      %6738 = vmatprep.subr.mxu0 0.0
      %6739 = vmatpush1.msra.mxu0 %v6598
      %6740 = vmatprep.subr.mxu0 0.0
      %6741 = vmatpush1.msra.mxu0 %v6599
      %6742 = vmatprep.subr.mxu0 0.0
      %6743 = vmatpush1.msra.mxu0 %v6600
      %6744 = vmatprep.subr.mxu0 0.0
      %6745 = vmatpush1.msra.mxu0 %v6601
      %6746 = vmatprep.subr.mxu0 0.0
      %6747 = vmatpush1.msra.mxu0 %v6602
      %6748 = vmatprep.subr.mxu0 0.0
      %6749 = vmatpush1.msra.mxu0 %v6603
      %6750 = vmatprep.subr.mxu0 0.0
      %6751 = vmatpush1.msra.mxu0 %v6604
      %6752 = vmatprep.subr.mxu0 0.0
      %6753 = vmatpush1.msra.mxu0 %v6605
      %6754 = vmatprep.subr.mxu0 0.0
      %6755 = vmatpush1.msra.mxu0 %v6606
      %6756 = vmatprep.subr.mxu0 0.0
      %6757 = vmatpush1.msra.mxu0 %v6607
      %6758 = vmatprep.subr.mxu0 0.0
      %6759 = vmatpush1.msra.mxu0 %v6608
      %6760 = vmatprep.subr.mxu0 0.0
      %6761 = vmatpush1.msra.mxu0 %v6609
      %6762 = vmatprep.subr.mxu0 0.0
      %6763 = vmatpush1.msra.mxu0 %v6610
      %6764 = vmatprep.subr.mxu0 0.0
      %6765 = vmatpush1.msra.mxu0 %v6611
      %6766 = vmatprep.subr.mxu0 0.0
      %6767 = vmatpush1.msra.mxu0 %v6612
      %6768 = vmatprep.mubr.f32.mxu0 %v6194
      %6769 = vmatmul.mubr.f32.gmra.mrb[0].mxu0 %v6193
      %v6770 = vpop.f32.mrb[0].mxu0
      %v6771 = vadd.f32 %v6686, %v6770
      %v6772 = vpop.f32.mrb[0].mxu0
      %6773 = vmatprep.mubr.f32.mxu0 %v6199
      %6774 = vmatmul.mubr.f32.gmra.mrb[0].mxu0 %v6198
      %v6775 = vpop.f32.mrb[0].mxu0
      %v6776 = vadd.f32 %v6691, %v6775
      %v6777 = vpop.f32.mrb[0].mxu0
      %6778 = vmatprep.mubr.f32.mxu0 %v6204
      %6779 = vmatmul.mubr.f32.gmra.mrb[0].mxu0 %v6203
      %v6780 = vpop.f32.mrb[0].mxu0
      %v6781 = vadd.f32 %v6696, %v6780
      %v6782 = vpop.f32.mrb[0].mxu0
      %6783 = vmatprep.mubr.f32.mxu0 %v6209
      %6784 = vmatmul.mubr.f32.gmra.mrb[0].mxu0 %v6208
      %v6785 = vpop.f32.mrb[0].mxu0
      %v6786 = vadd.f32 %v6701, %v6785
      %v6787 = vpop.f32.mrb[0].mxu0
      %6788 = vdwg.mxu0
      %6789 = vmatprep.subr.mxu0 0.0
      %6790 = vmatpush1.msra.mxu0 %v6613
      %6791 = vmatprep.subr.mxu0 0.0
      %6792 = vmatpush1.msra.mxu0 %v6614
      %6793 = vmatprep.subr.mxu0 0.0
      %6794 = vmatpush1.msra.mxu0 %v6615
      %6795 = vmatprep.subr.mxu0 0.0
      %6796 = vmatpush1.msra.mxu0 %v6616
      %6797 = vmatprep.subr.mxu0 0.0
      %6798 = vmatpush1.msra.mxu0 %v6617
      %6799 = vmatprep.subr.mxu0 0.0
      %6800 = vmatpush1.msra.mxu0 %v6618
      %6801 = vmatprep.subr.mxu0 0.0
      %6802 = vmatpush1.msra.mxu0 0.0
      %6803 = vmatprep.subr.mxu0 0.0
      %6804 = vmatpush1.msra.mxu0 0.0
      %6805 = vmatprep.subr.mxu0 0.0
      %6806 = vmatpush1.msra.mxu0 0.0
      %6807 = vmatprep.subr.mxu0 0.0
      %6808 = vmatpush1.msra.mxu0 0.0
      %6809 = vmatprep.subr.mxu0 0.0
      %6810 = vmatpush1.msra.mxu0 0.0
      %6811 = vmatprep.subr.mxu0 0.0
      %6812 = vmatpush1.msra.mxu0 0.0
      %6813 = vmatprep.subr.mxu0 0.0
      %6814 = vmatpush1.msra.mxu0 0.0
      %6815 = vmatprep.subr.mxu0 0.0
      %6816 = vmatpush1.msra.mxu0 0.0
      %6817 = vmatprep.subr.mxu0 0.0
      %6818 = vmatpush1.msra.mxu0 0.0
      %6819 = vmatprep.subr.mxu0 0.0
      %6820 = vmatpush1.msra.mxu0 0.0
      %6821 = vmatprep.subr.mxu0 0.0
      %6822 = vmatpush1.msra.mxu0 0.0
      %6823 = vmatprep.subr.mxu0 0.0
      %6824 = vmatpush1.msra.mxu0 0.0
      %6825 = vmatprep.subr.mxu0 0.0
      %6826 = vmatpush1.msra.mxu0 0.0
      %6827 = vmatprep.subr.mxu0 0.0
      %6828 = vmatpush1.msra.mxu0 0.0
      %6829 = vmatprep.subr.mxu0 0.0
      %6830 = vmatpush1.msra.mxu0 0.0
      %6831 = vmatprep.subr.mxu0 0.0
      %6832 = vmatpush1.msra.mxu0 0.0
      %6833 = vmatprep.subr.mxu0 0.0
      %6834 = vmatpush1.msra.mxu0 0.0
      %6835 = vmatprep.subr.mxu0 0.0
      %6836 = vmatpush1.msra.mxu0 0.0
      %6837 = vmatprep.subr.mxu0 0.0
      %6838 = vmatpush1.msra.mxu0 0.0
      %6839 = vmatprep.subr.mxu0 0.0
      %6840 = vmatpush1.msra.mxu0 0.0
      %6841 = vmatprep.subr.mxu0 0.0
      %6842 = vmatpush1.msra.mxu0 0.0
      %6843 = vmatprep.subr.mxu0 0.0
      %6844 = vmatpush1.msra.mxu0 0.0
      %6845 = vmatprep.subr.mxu0 0.0
      %6846 = vmatpush1.msra.mxu0 0.0
      %6847 = vmatprep.subr.mxu0 0.0
      %6848 = vmatpush1.msra.mxu0 0.0
      %6849 = vmatprep.subr.mxu0 0.0
      %6850 = vmatpush1.msra.mxu0 0.0
      %6851 = vmatprep.subr.mxu0 0.0
      %6852 = vmatpush1.msra.mxu0 0.0
      %6853 = vmatprep.mubr.f32.mxu0 0.0
      %6854 = vmatmul.mubr.f32.gmra.mrb[0].mxu0 %v6282
      %v6855 = vpop.f32.mrb[0].mxu0
      %v6856 = vadd.f32 %v6771, %v6855
      %v6857 = vpop.f32.mrb[0].mxu0
      %6858 = vmatprep.mubr.f32.mxu0 0.0
      %6859 = vmatmul.mubr.f32.gmra.mrb[0].mxu0 %v6285
      %v6860 = vpop.f32.mrb[0].mxu0
      %v6861 = vadd.f32 %v6776, %v6860
      %v6862 = vpop.f32.mrb[0].mxu0
      %6863 = vmatprep.mubr.f32.mxu0 0.0
      %6864 = vmatmul.mubr.f32.gmra.mrb[0].mxu0 %v6288
      %v6865 = vpop.f32.mrb[0].mxu0
      %v6866 = vadd.f32 %v6781, %v6865
      %v6867 = vpop.f32.mrb[0].mxu0
      %6868 = vmatprep.mubr.f32.mxu0 0.0
      %6869 = vmatmul.mubr.f32.gmra.mrb[0].mxu0 %v6291
      %v6870 = vpop.f32.mrb[0].mxu0
      %v6871 = vadd.f32 %v6786, %v6870
      %v6872 = vpop.f32.mrb[0].mxu0
      %6873 = vdwg.mxu0
      %v6874 = vmax.f32 %v6530, %v6856
      %v6875 = vmax.f32 %v6535, %v6861
      %v6876 = vmax.f32 %v6540, %v6866
      %v6877 = vmax.f32 %v6545, %v6871
      %s6878 = scalar_lea.vmem %s7, 1120
      %v6879 = vld [vmem:[%s6878] sm:$0xff]
      %v6880 = vld [vmem:[%s6878 + $0x8] sm:$0xff]
      %v6881 = vld [vmem:[%s6878 + $0x10] sm:$0xff]
      %v6882 = vld [vmem:[%s6878 + $0x18] sm:$0xff]
      %v6883 = vld [vmem:[%s6878 + $0x20] sm:$0xff]
      %v6884 = vld [vmem:[%s6878 + $0x28] sm:$0xff]
      %v6885 = vld [vmem:[%s6878 + $0x30] sm:$0xff]
      %v6886 = vld [vmem:[%s6878 + $0x38] sm:$0xff]
      %v6887 = vld [vmem:[%s6878 + $0x40] sm:$0xff]
      %v6888 = vld [vmem:[%s6878 + $0x48] sm:$0xff]
      %v6889 = vld [vmem:[%s6878 + $0x50] sm:$0xff]
      %v6890 = vld [vmem:[%s6878 + $0x58] sm:$0xff]
      %v6891 = vld [vmem:[%s6878 + $0x60] sm:$0xff]
      %v6892 = vld [vmem:[%s6878 + $0x68] sm:$0xff]
      %v6893 = vld [vmem:[%s6878 + $0x70] sm:$0xff]
      %v6894 = vld [vmem:[%s6878 + $0x78] sm:$0xff]
      %v6895 = vld [vmem:[%s6878 + $0x80] sm:$0xff]
      %v6896 = vld [vmem:[%s6878 + $0x88] sm:$0xff]
      %v6897 = vld [vmem:[%s6878 + $0x90] sm:$0xff]
      %v6898 = vld [vmem:[%s6878 + $0x98] sm:$0xff]
      %v6899 = vld [vmem:[%s6878 + $0xa0] sm:$0xff]
      %v6900 = vld [vmem:[%s6878 + $0xa8] sm:$0xff]
      %v6901 = vld [vmem:[%s6878 + $0xb0] sm:$0xff]
      %v6902 = vld [vmem:[%s6878 + $0xb8] sm:$0xff]
      %v6903 = vld [vmem:[%s6878 + $0xc0] sm:$0xff]
      %v6904 = vld [vmem:[%s6878 + $0xc8] sm:$0xff]
      %v6905 = vld [vmem:[%s6878 + $0xd0] sm:$0xff]
      %v6906 = vld [vmem:[%s6878 + $0xd8] sm:$0xff]
      %v6907 = vld [vmem:[%s6878 + $0xe0] sm:$0xff]
      %v6908 = vld [vmem:[%s6878 + $0xe8] sm:$0xff]
      %v6909 = vld [vmem:[%s6878 + $0xf0] sm:$0xff]
      %v6910 = vld [vmem:[%s6878 + $0xf8] sm:$0xff]
      %v6911 = vld [vmem:[%s6878 + $0x100] sm:$0xff]
      %v6912 = vld [vmem:[%s6878 + $0x108] sm:$0xff]
      %v6913 = vld [vmem:[%s6878 + $0x110] sm:$0xff]
      %v6914 = vld [vmem:[%s6878 + $0x118] sm:$0xff]
      %v6915 = vld [vmem:[%s6878 + $0x120] sm:$0xff]
      %v6916 = vld [vmem:[%s6878 + $0x128] sm:$0xff]
      %v6917 = vld [vmem:[%s6878 + $0x130] sm:$0xff]
      %v6918 = vld [vmem:[%s6878 + $0x138] sm:$0xff]
      %v6919 = vld [vmem:[%s6878 + $0x140] sm:$0xff]
      %v6920 = vld [vmem:[%s6878 + $0x148] sm:$0xff]
      %v6921 = vld [vmem:[%s6878 + $0x150] sm:$0xff]
      %v6922 = vld [vmem:[%s6878 + $0x158] sm:$0xff]
      %v6923 = vld [vmem:[%s6878 + $0x160] sm:$0xff]
      %v6924 = vld [vmem:[%s6878 + $0x168] sm:$0xff]
      %v6925 = vld [vmem:[%s6878 + $0x170] sm:$0xff]
      %v6926 = vld [vmem:[%s6878 + $0x178] sm:$0xff]
      %v6927 = vld [vmem:[%s6878 + $0x180] sm:$0xff]
      %v6928 = vld [vmem:[%s6878 + $0x188] sm:$0xff]
      %v6929 = vld [vmem:[%s6878 + $0x190] sm:$0xff]
      %v6930 = vld [vmem:[%s6878 + $0x198] sm:$0xff]
      %v6931 = vld [vmem:[%s6878 + $0x1a0] sm:$0xff]
      %v6932 = vld [vmem:[%s6878 + $0x1a8] sm:$0xff]
      %v6933 = vld [vmem:[%s6878 + $0x1b0] sm:$0xff]
      %v6934 = vld [vmem:[%s6878 + $0x1b8] sm:$0xff]
      %v6935 = vld [vmem:[%s6878 + $0x1c0] sm:$0xff]
      %v6936 = vld [vmem:[%s6878 + $0x1c8] sm:$0xff]
      %v6937 = vld [vmem:[%s6878 + $0x1d0] sm:$0xff]
      %v6938 = vld [vmem:[%s6878 + $0x1d8] sm:$0xff]
      %v6939 = vld [vmem:[%s6878 + $0x1e0] sm:$0xff]
      %v6940 = vld [vmem:[%s6878 + $0x1e8] sm:$0xff]
      %v6941 = vld [vmem:[%s6878 + $0x1f0] sm:$0xff]
      %v6942 = vld [vmem:[%s6878 + $0x1f8] sm:$0xff]
      %v6943 = vld [vmem:[%s6878 + $0x200] sm:$0xff]
      %v6944 = vld [vmem:[%s6878 + $0x208] sm:$0xff]
      %v6945 = vld [vmem:[%s6878 + $0x210] sm:$0xff]
      %v6946 = vld [vmem:[%s6878 + $0x218] sm:$0xff]
      %v6947 = vld [vmem:[%s6878 + $0x220] sm:$0xff]
      %v6948 = vld [vmem:[%s6878 + $0x228] sm:$0xff]
      %6949 = vmatprep.subr.mxu0 0.0
      %6950 = vmatpush1.msra.mxu0 %v6879
      %6951 = vmatprep.subr.mxu0 0.0
      %6952 = vmatpush1.msra.mxu0 %v6880
      %6953 = vmatprep.subr.mxu0 0.0
      %6954 = vmatpush1.msra.mxu0 %v6881
      %6955 = vmatprep.subr.mxu0 0.0
      %6956 = vmatpush1.msra.mxu0 %v6882
      %6957 = vmatprep.subr.mxu0 0.0
      %6958 = vmatpush1.msra.mxu0 %v6883
      %6959 = vmatprep.subr.mxu0 0.0
      %6960 = vmatpush1.msra.mxu0 %v6884
      %6961 = vmatprep.subr.mxu0 0.0
      %6962 = vmatpush1.msra.mxu0 %v6885
      %6963 = vmatprep.subr.mxu0 0.0
      %6964 = vmatpush1.msra.mxu0 %v6886
      %6965 = vmatprep.subr.mxu0 0.0
      %6966 = vmatpush1.msra.mxu0 %v6887
      %6967 = vmatprep.subr.mxu0 0.0
      %6968 = vmatpush1.msra.mxu0 %v6888
      %6969 = vmatprep.subr.mxu0 0.0
      %6970 = vmatpush1.msra.mxu0 %v6889
      %6971 = vmatprep.subr.mxu0 0.0
      %6972 = vmatpush1.msra.mxu0 %v6890
      %6973 = vmatprep.subr.mxu0 0.0
      %6974 = vmatpush1.msra.mxu0 %v6891
      %6975 = vmatprep.subr.mxu0 0.0
      %6976 = vmatpush1.msra.mxu0 %v6892
      %6977 = vmatprep.subr.mxu0 0.0
      %6978 = vmatpush1.msra.mxu0 %v6893
      %6979 = vmatprep.subr.mxu0 0.0
      %6980 = vmatpush1.msra.mxu0 %v6894
      %6981 = vmatprep.subr.mxu0 0.0
      %6982 = vmatpush1.msra.mxu0 %v6895
      %6983 = vmatprep.subr.mxu0 0.0
      %6984 = vmatpush1.msra.mxu0 %v6896
      %6985 = vmatprep.subr.mxu0 0.0
      %6986 = vmatpush1.msra.mxu0 %v6897
      %6987 = vmatprep.subr.mxu0 0.0
      %6988 = vmatpush1.msra.mxu0 %v6898
      %6989 = vmatprep.subr.mxu0 0.0
      %6990 = vmatpush1.msra.mxu0 %v6899
      %6991 = vmatprep.subr.mxu0 0.0
      %6992 = vmatpush1.msra.mxu0 %v6900
      %6993 = vmatprep.subr.mxu0 0.0
      %6994 = vmatpush1.msra.mxu0 %v6901
      %6995 = vmatprep.subr.mxu0 0.0
      %6996 = vmatpush1.msra.mxu0 %v6902
      %6997 = vmatprep.subr.mxu0 0.0
      %6998 = vmatpush1.msra.mxu0 %v6903
      %6999 = vmatprep.subr.mxu0 0.0
      %7000 = vmatpush1.msra.mxu0 %v6904
      %7001 = vmatprep.subr.mxu0 0.0
      %7002 = vmatpush1.msra.mxu0 %v6905
      %7003 = vmatprep.subr.mxu0 0.0
      %7004 = vmatpush1.msra.mxu0 %v6906
      %7005 = vmatprep.subr.mxu0 0.0
      %7006 = vmatpush1.msra.mxu0 %v6907
      %7007 = vmatprep.subr.mxu0 0.0
      %7008 = vmatpush1.msra.mxu0 %v6908
      %7009 = vmatprep.subr.mxu0 0.0
      %7010 = vmatpush1.msra.mxu0 %v6909
      %7011 = vmatprep.subr.mxu0 0.0
      %7012 = vmatpush1.msra.mxu0 %v6910
      %7013 = vmatprep.mubr.f32.mxu0 %v6192
      %7014 = vmatmul.mubr.f32.gmra.mrb[0].mxu0 %v6191
      %v7015 = vpop.f32.mrb[0].mxu0
      %v7016 = vadd.f32 0.0, %v7015
      %v7017 = vpop.f32.mrb[0].mxu0
      %7018 = vmatprep.mubr.f32.mxu0 %v6197
      %7019 = vmatmul.mubr.f32.gmra.mrb[0].mxu0 %v6196
      %v7020 = vpop.f32.mrb[0].mxu0
      %v7021 = vadd.f32 0.0, %v7020
      %v7022 = vpop.f32.mrb[0].mxu0
      %7023 = vmatprep.mubr.f32.mxu0 %v6202
      %7024 = vmatmul.mubr.f32.gmra.mrb[0].mxu0 %v6201
      %v7025 = vpop.f32.mrb[0].mxu0
      %v7026 = vadd.f32 0.0, %v7025
      %v7027 = vpop.f32.mrb[0].mxu0
      %7028 = vmatprep.mubr.f32.mxu0 %v6207
      %7029 = vmatmul.mubr.f32.gmra.mrb[0].mxu0 %v6206
      %v7030 = vpop.f32.mrb[0].mxu0
      %v7031 = vadd.f32 0.0, %v7030
      %v7032 = vpop.f32.mrb[0].mxu0
      %7033 = vdwg.mxu0
      %7034 = vmatprep.subr.mxu0 0.0
      %7035 = vmatpush1.msra.mxu0 %v6911
      %7036 = vmatprep.subr.mxu0 0.0
      %7037 = vmatpush1.msra.mxu0 %v6912
      %7038 = vmatprep.subr.mxu0 0.0
      %7039 = vmatpush1.msra.mxu0 %v6913
      %7040 = vmatprep.subr.mxu0 0.0
      %7041 = vmatpush1.msra.mxu0 %v6914
      %7042 = vmatprep.subr.mxu0 0.0
      %7043 = vmatpush1.msra.mxu0 %v6915
      %7044 = vmatprep.subr.mxu0 0.0
      %7045 = vmatpush1.msra.mxu0 %v6916
      %7046 = vmatprep.subr.mxu0 0.0
      %7047 = vmatpush1.msra.mxu0 %v6917
      %7048 = vmatprep.subr.mxu0 0.0
      %7049 = vmatpush1.msra.mxu0 %v6918
      %7050 = vmatprep.subr.mxu0 0.0
      %7051 = vmatpush1.msra.mxu0 %v6919
      %7052 = vmatprep.subr.mxu0 0.0
      %7053 = vmatpush1.msra.mxu0 %v6920
      %7054 = vmatprep.subr.mxu0 0.0
      %7055 = vmatpush1.msra.mxu0 %v6921
      %7056 = vmatprep.subr.mxu0 0.0
      %7057 = vmatpush1.msra.mxu0 %v6922
      %7058 = vmatprep.subr.mxu0 0.0
      %7059 = vmatpush1.msra.mxu0 %v6923
      %7060 = vmatprep.subr.mxu0 0.0
      %7061 = vmatpush1.msra.mxu0 %v6924
      %7062 = vmatprep.subr.mxu0 0.0
      %7063 = vmatpush1.msra.mxu0 %v6925
      %7064 = vmatprep.subr.mxu0 0.0
      %7065 = vmatpush1.msra.mxu0 %v6926
      %7066 = vmatprep.subr.mxu0 0.0
      %7067 = vmatpush1.msra.mxu0 %v6927
      %7068 = vmatprep.subr.mxu0 0.0
      %7069 = vmatpush1.msra.mxu0 %v6928
      %7070 = vmatprep.subr.mxu0 0.0
      %7071 = vmatpush1.msra.mxu0 %v6929
      %7072 = vmatprep.subr.mxu0 0.0
      %7073 = vmatpush1.msra.mxu0 %v6930
      %7074 = vmatprep.subr.mxu0 0.0
      %7075 = vmatpush1.msra.mxu0 %v6931
      %7076 = vmatprep.subr.mxu0 0.0
      %7077 = vmatpush1.msra.mxu0 %v6932
      %7078 = vmatprep.subr.mxu0 0.0
      %7079 = vmatpush1.msra.mxu0 %v6933
      %7080 = vmatprep.subr.mxu0 0.0
      %7081 = vmatpush1.msra.mxu0 %v6934
      %7082 = vmatprep.subr.mxu0 0.0
      %7083 = vmatpush1.msra.mxu0 %v6935
      %7084 = vmatprep.subr.mxu0 0.0
      %7085 = vmatpush1.msra.mxu0 %v6936
      %7086 = vmatprep.subr.mxu0 0.0
      %7087 = vmatpush1.msra.mxu0 %v6937
      %7088 = vmatprep.subr.mxu0 0.0
      %7089 = vmatpush1.msra.mxu0 %v6938
      %7090 = vmatprep.subr.mxu0 0.0
      %7091 = vmatpush1.msra.mxu0 %v6939
      %7092 = vmatprep.subr.mxu0 0.0
      %7093 = vmatpush1.msra.mxu0 %v6940
      %7094 = vmatprep.subr.mxu0 0.0
      %7095 = vmatpush1.msra.mxu0 %v6941
      %7096 = vmatprep.subr.mxu0 0.0
      %7097 = vmatpush1.msra.mxu0 %v6942
      %7098 = vmatprep.mubr.f32.mxu0 %v6194
      %7099 = vmatmul.mubr.f32.gmra.mrb[0].mxu0 %v6193
      %v7100 = vpop.f32.mrb[0].mxu0
      %v7101 = vadd.f32 %v7016, %v7100
      %v7102 = vpop.f32.mrb[0].mxu0
      %7103 = vmatprep.mubr.f32.mxu0 %v6199
      %7104 = vmatmul.mubr.f32.gmra.mrb[0].mxu0 %v6198
      %v7105 = vpop.f32.mrb[0].mxu0
      %v7106 = vadd.f32 %v7021, %v7105
      %v7107 = vpop.f32.mrb[0].mxu0
      %7108 = vmatprep.mubr.f32.mxu0 %v6204
      %7109 = vmatmul.mubr.f32.gmra.mrb[0].mxu0 %v6203
      %v7110 = vpop.f32.mrb[0].mxu0
      %v7111 = vadd.f32 %v7026, %v7110
      %v7112 = vpop.f32.mrb[0].mxu0
      %7113 = vmatprep.mubr.f32.mxu0 %v6209
      %7114 = vmatmul.mubr.f32.gmra.mrb[0].mxu0 %v6208
      %v7115 = vpop.f32.mrb[0].mxu0
      %v7116 = vadd.f32 %v7031, %v7115
      %v7117 = vpop.f32.mrb[0].mxu0
      %7118 = vdwg.mxu0
      %7119 = vmatprep.subr.mxu0 0.0
      %7120 = vmatpush1.msra.mxu0 %v6943
      %7121 = vmatprep.subr.mxu0 0.0
      %7122 = vmatpush1.msra.mxu0 %v6944
      %7123 = vmatprep.subr.mxu0 0.0
      %7124 = vmatpush1.msra.mxu0 %v6945
      %7125 = vmatprep.subr.mxu0 0.0
      %7126 = vmatpush1.msra.mxu0 %v6946
      %7127 = vmatprep.subr.mxu0 0.0
      %7128 = vmatpush1.msra.mxu0 %v6947
      %7129 = vmatprep.subr.mxu0 0.0
      %7130 = vmatpush1.msra.mxu0 %v6948
      %7131 = vmatprep.subr.mxu0 0.0
      %7132 = vmatpush1.msra.mxu0 0.0
      %7133 = vmatprep.subr.mxu0 0.0
      %7134 = vmatpush1.msra.mxu0 0.0
      %7135 = vmatprep.subr.mxu0 0.0
      %7136 = vmatpush1.msra.mxu0 0.0
      %7137 = vmatprep.subr.mxu0 0.0
      %7138 = vmatpush1.msra.mxu0 0.0
      %7139 = vmatprep.subr.mxu0 0.0
      %7140 = vmatpush1.msra.mxu0 0.0
      %7141 = vmatprep.subr.mxu0 0.0
      %7142 = vmatpush1.msra.mxu0 0.0
      %7143 = vmatprep.subr.mxu0 0.0
      %7144 = vmatpush1.msra.mxu0 0.0
      %7145 = vmatprep.subr.mxu0 0.0
      %7146 = vmatpush1.msra.mxu0 0.0
      %7147 = vmatprep.subr.mxu0 0.0
      %7148 = vmatpush1.msra.mxu0 0.0
      %7149 = vmatprep.subr.mxu0 0.0
      %7150 = vmatpush1.msra.mxu0 0.0
      %7151 = vmatprep.subr.mxu0 0.0
      %7152 = vmatpush1.msra.mxu0 0.0
      %7153 = vmatprep.subr.mxu0 0.0
      %7154 = vmatpush1.msra.mxu0 0.0
      %7155 = vmatprep.subr.mxu0 0.0
      %7156 = vmatpush1.msra.mxu0 0.0
      %7157 = vmatprep.subr.mxu0 0.0
      %7158 = vmatpush1.msra.mxu0 0.0
      %7159 = vmatprep.subr.mxu0 0.0
      %7160 = vmatpush1.msra.mxu0 0.0
      %7161 = vmatprep.subr.mxu0 0.0
      %7162 = vmatpush1.msra.mxu0 0.0
      %7163 = vmatprep.subr.mxu0 0.0
      %7164 = vmatpush1.msra.mxu0 0.0
      %7165 = vmatprep.subr.mxu0 0.0
      %7166 = vmatpush1.msra.mxu0 0.0
      %7167 = vmatprep.subr.mxu0 0.0
      %7168 = vmatpush1.msra.mxu0 0.0
      %7169 = vmatprep.subr.mxu0 0.0
      %7170 = vmatpush1.msra.mxu0 0.0
      %7171 = vmatprep.subr.mxu0 0.0
      %7172 = vmatpush1.msra.mxu0 0.0
      %7173 = vmatprep.subr.mxu0 0.0
      %7174 = vmatpush1.msra.mxu0 0.0
      %7175 = vmatprep.subr.mxu0 0.0
      %7176 = vmatpush1.msra.mxu0 0.0
      %7177 = vmatprep.subr.mxu0 0.0
      %7178 = vmatpush1.msra.mxu0 0.0
      %7179 = vmatprep.subr.mxu0 0.0
      %7180 = vmatpush1.msra.mxu0 0.0
      %7181 = vmatprep.subr.mxu0 0.0
      %7182 = vmatpush1.msra.mxu0 0.0
      %7183 = vmatprep.mubr.f32.mxu0 0.0
      %7184 = vmatmul.mubr.f32.gmra.mrb[0].mxu0 %v6282
      %v7185 = vpop.f32.mrb[0].mxu0
      %v7186 = vadd.f32 %v7101, %v7185
      %v7187 = vpop.f32.mrb[0].mxu0
      %7188 = vmatprep.mubr.f32.mxu0 0.0
      %7189 = vmatmul.mubr.f32.gmra.mrb[0].mxu0 %v6285
      %v7190 = vpop.f32.mrb[0].mxu0
      %v7191 = vadd.f32 %v7106, %v7190
      %v7192 = vpop.f32.mrb[0].mxu0
      %7193 = vmatprep.mubr.f32.mxu0 0.0
      %7194 = vmatmul.mubr.f32.gmra.mrb[0].mxu0 %v6288
      %v7195 = vpop.f32.mrb[0].mxu0
      %v7196 = vadd.f32 %v7111, %v7195
      %v7197 = vpop.f32.mrb[0].mxu0
      %7198 = vmatprep.mubr.f32.mxu0 0.0
      %7199 = vmatmul.mubr.f32.gmra.mrb[0].mxu0 %v6291
      %v7200 = vpop.f32.mrb[0].mxu0
      %v7201 = vadd.f32 %v7116, %v7200
      %v7202 = vpop.f32.mrb[0].mxu0
      %7203 = vdwg.mxu0
      %v7204 = vmax.f32 %v6874, %v7186
      %v7205 = vmax.f32 %v6875, %v7191
      %v7206 = vmax.f32 %v6876, %v7196
      %v7207 = vmax.f32 %v6877, %v7201
      %s7208 = scalar_lea.vmem %s7, 1680
      %v7209 = vld [vmem:[%s7208] sm:$0xff]
      %v7210 = vld [vmem:[%s7208 + $0x8] sm:$0xff]
      %v7211 = vld [vmem:[%s7208 + $0x10] sm:$0xff]
      %v7212 = vld [vmem:[%s7208 + $0x18] sm:$0xff]
      %v7213 = vld [vmem:[%s7208 + $0x20] sm:$0xff]
      %v7214 = vld [vmem:[%s7208 + $0x28] sm:$0xff]
      %v7215 = vld [vmem:[%s7208 + $0x30] sm:$0xff]
      %v7216 = vld [vmem:[%s7208 + $0x38] sm:$0xff]
      %v7217 = vld [vmem:[%s7208 + $0x40] sm:$0xff]
      %v7218 = vld [vmem:[%s7208 + $0x48] sm:$0xff]
      %v7219 = vld [vmem:[%s7208 + $0x50] sm:$0xff]
      %v7220 = vld [vmem:[%s7208 + $0x58] sm:$0xff]
      %v7221 = vld [vmem:[%s7208 + $0x60] sm:$0xff]
      %v7222 = vld [vmem:[%s7208 + $0x68] sm:$0xff]
      %v7223 = vld [vmem:[%s7208 + $0x70] sm:$0xff]
      %v7224 = vld [vmem:[%s7208 + $0x78] sm:$0xff]
      %v7225 = vld [vmem:[%s7208 + $0x80] sm:$0xff]
      %v7226 = vld [vmem:[%s7208 + $0x88] sm:$0xff]
      %v7227 = vld [vmem:[%s7208 + $0x90] sm:$0xff]
      %v7228 = vld [vmem:[%s7208 + $0x98] sm:$0xff]
      %v7229 = vld [vmem:[%s7208 + $0xa0] sm:$0xff]
      %v7230 = vld [vmem:[%s7208 + $0xa8] sm:$0xff]
      %v7231 = vld [vmem:[%s7208 + $0xb0] sm:$0xff]
      %v7232 = vld [vmem:[%s7208 + $0xb8] sm:$0xff]
      %v7233 = vld [vmem:[%s7208 + $0xc0] sm:$0xff]
      %v7234 = vld [vmem:[%s7208 + $0xc8] sm:$0xff]
      %v7235 = vld [vmem:[%s7208 + $0xd0] sm:$0xff]
      %v7236 = vld [vmem:[%s7208 + $0xd8] sm:$0xff]
      %v7237 = vld [vmem:[%s7208 + $0xe0] sm:$0xff]
      %v7238 = vld [vmem:[%s7208 + $0xe8] sm:$0xff]
      %v7239 = vld [vmem:[%s7208 + $0xf0] sm:$0xff]
      %v7240 = vld [vmem:[%s7208 + $0xf8] sm:$0xff]
      %v7241 = vld [vmem:[%s7208 + $0x100] sm:$0xff]
      %v7242 = vld [vmem:[%s7208 + $0x108] sm:$0xff]
      %v7243 = vld [vmem:[%s7208 + $0x110] sm:$0xff]
      %v7244 = vld [vmem:[%s7208 + $0x118] sm:$0xff]
      %v7245 = vld [vmem:[%s7208 + $0x120] sm:$0xff]
      %v7246 = vld [vmem:[%s7208 + $0x128] sm:$0xff]
      %v7247 = vld [vmem:[%s7208 + $0x130] sm:$0xff]
      %v7248 = vld [vmem:[%s7208 + $0x138] sm:$0xff]
      %v7249 = vld [vmem:[%s7208 + $0x140] sm:$0xff]
      %v7250 = vld [vmem:[%s7208 + $0x148] sm:$0xff]
      %v7251 = vld [vmem:[%s7208 + $0x150] sm:$0xff]
      %v7252 = vld [vmem:[%s7208 + $0x158] sm:$0xff]
      %v7253 = vld [vmem:[%s7208 + $0x160] sm:$0xff]
      %v7254 = vld [vmem:[%s7208 + $0x168] sm:$0xff]
      %v7255 = vld [vmem:[%s7208 + $0x170] sm:$0xff]
      %v7256 = vld [vmem:[%s7208 + $0x178] sm:$0xff]
      %v7257 = vld [vmem:[%s7208 + $0x180] sm:$0xff]
      %v7258 = vld [vmem:[%s7208 + $0x188] sm:$0xff]
      %v7259 = vld [vmem:[%s7208 + $0x190] sm:$0xff]
      %v7260 = vld [vmem:[%s7208 + $0x198] sm:$0xff]
      %v7261 = vld [vmem:[%s7208 + $0x1a0] sm:$0xff]
      %v7262 = vld [vmem:[%s7208 + $0x1a8] sm:$0xff]
      %v7263 = vld [vmem:[%s7208 + $0x1b0] sm:$0xff]
      %v7264 = vld [vmem:[%s7208 + $0x1b8] sm:$0xff]
      %v7265 = vld [vmem:[%s7208 + $0x1c0] sm:$0xff]
      %v7266 = vld [vmem:[%s7208 + $0x1c8] sm:$0xff]
      %v7267 = vld [vmem:[%s7208 + $0x1d0] sm:$0xff]
      %v7268 = vld [vmem:[%s7208 + $0x1d8] sm:$0xff]
      %v7269 = vld [vmem:[%s7208 + $0x1e0] sm:$0xff]
      %v7270 = vld [vmem:[%s7208 + $0x1e8] sm:$0xff]
      %v7271 = vld [vmem:[%s7208 + $0x1f0] sm:$0xff]
      %v7272 = vld [vmem:[%s7208 + $0x1f8] sm:$0xff]
      %v7273 = vld [vmem:[%s7208 + $0x200] sm:$0xff]
      %v7274 = vld [vmem:[%s7208 + $0x208] sm:$0xff]
      %v7275 = vld [vmem:[%s7208 + $0x210] sm:$0xff]
      %v7276 = vld [vmem:[%s7208 + $0x218] sm:$0xff]
      %v7277 = vld [vmem:[%s7208 + $0x220] sm:$0xff]
      %v7278 = vld [vmem:[%s7208 + $0x228] sm:$0xff]
      %7279 = vmatprep.subr.mxu0 0.0
      %7280 = vmatpush1.msra.mxu0 %v7209
      %7281 = vmatprep.subr.mxu0 0.0
      %7282 = vmatpush1.msra.mxu0 %v7210
      %7283 = vmatprep.subr.mxu0 0.0
      %7284 = vmatpush1.msra.mxu0 %v7211
      %7285 = vmatprep.subr.mxu0 0.0
      %7286 = vmatpush1.msra.mxu0 %v7212
      %7287 = vmatprep.subr.mxu0 0.0
      %7288 = vmatpush1.msra.mxu0 %v7213
      %7289 = vmatprep.subr.mxu0 0.0
      %7290 = vmatpush1.msra.mxu0 %v7214
      %7291 = vmatprep.subr.mxu0 0.0
      %7292 = vmatpush1.msra.mxu0 %v7215
      %7293 = vmatprep.subr.mxu0 0.0
      %7294 = vmatpush1.msra.mxu0 %v7216
      %7295 = vmatprep.subr.mxu0 0.0
      %7296 = vmatpush1.msra.mxu0 %v7217
      %7297 = vmatprep.subr.mxu0 0.0
      %7298 = vmatpush1.msra.mxu0 %v7218
      %7299 = vmatprep.subr.mxu0 0.0
      %7300 = vmatpush1.msra.mxu0 %v7219
      %7301 = vmatprep.subr.mxu0 0.0
      %7302 = vmatpush1.msra.mxu0 %v7220
      %7303 = vmatprep.subr.mxu0 0.0
      %7304 = vmatpush1.msra.mxu0 %v7221
      %7305 = vmatprep.subr.mxu0 0.0
      %7306 = vmatpush1.msra.mxu0 %v7222
      %7307 = vmatprep.subr.mxu0 0.0
      %7308 = vmatpush1.msra.mxu0 %v7223
      %7309 = vmatprep.subr.mxu0 0.0
      %7310 = vmatpush1.msra.mxu0 %v7224
      %7311 = vmatprep.subr.mxu0 0.0
      %7312 = vmatpush1.msra.mxu0 %v7225
      %7313 = vmatprep.subr.mxu0 0.0
      %7314 = vmatpush1.msra.mxu0 %v7226
      %7315 = vmatprep.subr.mxu0 0.0
      %7316 = vmatpush1.msra.mxu0 %v7227
      %7317 = vmatprep.subr.mxu0 0.0
      %7318 = vmatpush1.msra.mxu0 %v7228
      %7319 = vmatprep.subr.mxu0 0.0
      %7320 = vmatpush1.msra.mxu0 %v7229
      %7321 = vmatprep.subr.mxu0 0.0
      %7322 = vmatpush1.msra.mxu0 %v7230
      %7323 = vmatprep.subr.mxu0 0.0
      %7324 = vmatpush1.msra.mxu0 %v7231
      %7325 = vmatprep.subr.mxu0 0.0
      %7326 = vmatpush1.msra.mxu0 %v7232
      %7327 = vmatprep.subr.mxu0 0.0
      %7328 = vmatpush1.msra.mxu0 %v7233
      %7329 = vmatprep.subr.mxu0 0.0
      %7330 = vmatpush1.msra.mxu0 %v7234
      %7331 = vmatprep.subr.mxu0 0.0
      %7332 = vmatpush1.msra.mxu0 %v7235
      %7333 = vmatprep.subr.mxu0 0.0
      %7334 = vmatpush1.msra.mxu0 %v7236
      %7335 = vmatprep.subr.mxu0 0.0
      %7336 = vmatpush1.msra.mxu0 %v7237
      %7337 = vmatprep.subr.mxu0 0.0
      %7338 = vmatpush1.msra.mxu0 %v7238
      %7339 = vmatprep.subr.mxu0 0.0
      %7340 = vmatpush1.msra.mxu0 %v7239
      %7341 = vmatprep.subr.mxu0 0.0
      %7342 = vmatpush1.msra.mxu0 %v7240
      %7343 = vmatprep.mubr.f32.mxu0 %v6192
      %7344 = vmatmul.mubr.f32.gmra.mrb[0].mxu0 %v6191
      %v7345 = vpop.f32.mrb[0].mxu0
      %v7346 = vadd.f32 0.0, %v7345
      %v7347 = vpop.f32.mrb[0].mxu0
      %7348 = vmatprep.mubr.f32.mxu0 %v6197
      %7349 = vmatmul.mubr.f32.gmra.mrb[0].mxu0 %v6196
      %v7350 = vpop.f32.mrb[0].mxu0
      %v7351 = vadd.f32 0.0, %v7350
      %v7352 = vpop.f32.mrb[0].mxu0
      %7353 = vmatprep.mubr.f32.mxu0 %v6202
      %7354 = vmatmul.mubr.f32.gmra.mrb[0].mxu0 %v6201
      %v7355 = vpop.f32.mrb[0].mxu0
      %v7356 = vadd.f32 0.0, %v7355
      %v7357 = vpop.f32.mrb[0].mxu0
      %7358 = vmatprep.mubr.f32.mxu0 %v6207
      %7359 = vmatmul.mubr.f32.gmra.mrb[0].mxu0 %v6206
      %v7360 = vpop.f32.mrb[0].mxu0
      %v7361 = vadd.f32 0.0, %v7360
      %v7362 = vpop.f32.mrb[0].mxu0
      %7363 = vdwg.mxu0
      %7364 = vmatprep.subr.mxu0 0.0
      %7365 = vmatpush1.msra.mxu0 %v7241
      %7366 = vmatprep.subr.mxu0 0.0
      %7367 = vmatpush1.msra.mxu0 %v7242
      %7368 = vmatprep.subr.mxu0 0.0
      %7369 = vmatpush1.msra.mxu0 %v7243
      %7370 = vmatprep.subr.mxu0 0.0
      %7371 = vmatpush1.msra.mxu0 %v7244
      %7372 = vmatprep.subr.mxu0 0.0
      %7373 = vmatpush1.msra.mxu0 %v7245
      %7374 = vmatprep.subr.mxu0 0.0
      %7375 = vmatpush1.msra.mxu0 %v7246
      %7376 = vmatprep.subr.mxu0 0.0
      %7377 = vmatpush1.msra.mxu0 %v7247
      %7378 = vmatprep.subr.mxu0 0.0
      %7379 = vmatpush1.msra.mxu0 %v7248
      %7380 = vmatprep.subr.mxu0 0.0
      %7381 = vmatpush1.msra.mxu0 %v7249
      %7382 = vmatprep.subr.mxu0 0.0
      %7383 = vmatpush1.msra.mxu0 %v7250
      %7384 = vmatprep.subr.mxu0 0.0
      %7385 = vmatpush1.msra.mxu0 %v7251
      %7386 = vmatprep.subr.mxu0 0.0
      %7387 = vmatpush1.msra.mxu0 %v7252
      %7388 = vmatprep.subr.mxu0 0.0
      %7389 = vmatpush1.msra.mxu0 %v7253
      %7390 = vmatprep.subr.mxu0 0.0
      %7391 = vmatpush1.msra.mxu0 %v7254
      %7392 = vmatprep.subr.mxu0 0.0
      %7393 = vmatpush1.msra.mxu0 %v7255
      %7394 = vmatprep.subr.mxu0 0.0
      %7395 = vmatpush1.msra.mxu0 %v7256
      %7396 = vmatprep.subr.mxu0 0.0
      %7397 = vmatpush1.msra.mxu0 %v7257
      %7398 = vmatprep.subr.mxu0 0.0
      %7399 = vmatpush1.msra.mxu0 %v7258
      %7400 = vmatprep.subr.mxu0 0.0
      %7401 = vmatpush1.msra.mxu0 %v7259
      %7402 = vmatprep.subr.mxu0 0.0
      %7403 = vmatpush1.msra.mxu0 %v7260
      %7404 = vmatprep.subr.mxu0 0.0
      %7405 = vmatpush1.msra.mxu0 %v7261
      %7406 = vmatprep.subr.mxu0 0.0
      %7407 = vmatpush1.msra.mxu0 %v7262
      %7408 = vmatprep.subr.mxu0 0.0
      %7409 = vmatpush1.msra.mxu0 %v7263
      %7410 = vmatprep.subr.mxu0 0.0
      %7411 = vmatpush1.msra.mxu0 %v7264
      %7412 = vmatprep.subr.mxu0 0.0
      %7413 = vmatpush1.msra.mxu0 %v7265
      %7414 = vmatprep.subr.mxu0 0.0
      %7415 = vmatpush1.msra.mxu0 %v7266
      %7416 = vmatprep.subr.mxu0 0.0
      %7417 = vmatpush1.msra.mxu0 %v7267
      %7418 = vmatprep.subr.mxu0 0.0
      %7419 = vmatpush1.msra.mxu0 %v7268
      %7420 = vmatprep.subr.mxu0 0.0
      %7421 = vmatpush1.msra.mxu0 %v7269
      %7422 = vmatprep.subr.mxu0 0.0
      %7423 = vmatpush1.msra.mxu0 %v7270
      %7424 = vmatprep.subr.mxu0 0.0
      %7425 = vmatpush1.msra.mxu0 %v7271
      %7426 = vmatprep.subr.mxu0 0.0
      %7427 = vmatpush1.msra.mxu0 %v7272
      %7428 = vmatprep.mubr.f32.mxu0 %v6194
      %7429 = vmatmul.mubr.f32.gmra.mrb[0].mxu0 %v6193
      %v7430 = vpop.f32.mrb[0].mxu0
      %v7431 = vadd.f32 %v7346, %v7430
      %v7432 = vpop.f32.mrb[0].mxu0
      %7433 = vmatprep.mubr.f32.mxu0 %v6199
      %7434 = vmatmul.mubr.f32.gmra.mrb[0].mxu0 %v6198
      %v7435 = vpop.f32.mrb[0].mxu0
      %v7436 = vadd.f32 %v7351, %v7435
      %v7437 = vpop.f32.mrb[0].mxu0
      %7438 = vmatprep.mubr.f32.mxu0 %v6204
      %7439 = vmatmul.mubr.f32.gmra.mrb[0].mxu0 %v6203
      %v7440 = vpop.f32.mrb[0].mxu0
      %v7441 = vadd.f32 %v7356, %v7440
      %v7442 = vpop.f32.mrb[0].mxu0
      %7443 = vmatprep.mubr.f32.mxu0 %v6209
      %7444 = vmatmul.mubr.f32.gmra.mrb[0].mxu0 %v6208
      %v7445 = vpop.f32.mrb[0].mxu0
      %v7446 = vadd.f32 %v7361, %v7445
      %v7447 = vpop.f32.mrb[0].mxu0
      %7448 = vdwg.mxu0
      %7449 = vmatprep.subr.mxu0 0.0
      %7450 = vmatpush1.msra.mxu0 %v7273
      %7451 = vmatprep.subr.mxu0 0.0
      %7452 = vmatpush1.msra.mxu0 %v7274
      %7453 = vmatprep.subr.mxu0 0.0
      %7454 = vmatpush1.msra.mxu0 %v7275
      %7455 = vmatprep.subr.mxu0 0.0
      %7456 = vmatpush1.msra.mxu0 %v7276
      %7457 = vmatprep.subr.mxu0 0.0
      %7458 = vmatpush1.msra.mxu0 %v7277
      %7459 = vmatprep.subr.mxu0 0.0
      %7460 = vmatpush1.msra.mxu0 %v7278
      %7461 = vmatprep.subr.mxu0 0.0
      %7462 = vmatpush1.msra.mxu0 0.0
      %7463 = vmatprep.subr.mxu0 0.0
      %7464 = vmatpush1.msra.mxu0 0.0
      %7465 = vmatprep.subr.mxu0 0.0
      %7466 = vmatpush1.msra.mxu0 0.0
      %7467 = vmatprep.subr.mxu0 0.0
      %7468 = vmatpush1.msra.mxu0 0.0
      %7469 = vmatprep.subr.mxu0 0.0
      %7470 = vmatpush1.msra.mxu0 0.0
      %7471 = vmatprep.subr.mxu0 0.0
      %7472 = vmatpush1.msra.mxu0 0.0
      %7473 = vmatprep.subr.mxu0 0.0
      %7474 = vmatpush1.msra.mxu0 0.0
      %7475 = vmatprep.subr.mxu0 0.0
      %7476 = vmatpush1.msra.mxu0 0.0
      %7477 = vmatprep.subr.mxu0 0.0
      %7478 = vmatpush1.msra.mxu0 0.0
      %7479 = vmatprep.subr.mxu0 0.0
      %7480 = vmatpush1.msra.mxu0 0.0
      %7481 = vmatprep.subr.mxu0 0.0
      %7482 = vmatpush1.msra.mxu0 0.0
      %7483 = vmatprep.subr.mxu0 0.0
      %7484 = vmatpush1.msra.mxu0 0.0
      %7485 = vmatprep.subr.mxu0 0.0
      %7486 = vmatpush1.msra.mxu0 0.0
      %7487 = vmatprep.subr.mxu0 0.0
      %7488 = vmatpush1.msra.mxu0 0.0
      %7489 = vmatprep.subr.mxu0 0.0
      %7490 = vmatpush1.msra.mxu0 0.0
      %7491 = vmatprep.subr.mxu0 0.0
      %7492 = vmatpush1.msra.mxu0 0.0
      %7493 = vmatprep.subr.mxu0 0.0
      %7494 = vmatpush1.msra.mxu0 0.0
      %7495 = vmatprep.subr.mxu0 0.0
      %7496 = vmatpush1.msra.mxu0 0.0
      %7497 = vmatprep.subr.mxu0 0.0
      %7498 = vmatpush1.msra.mxu0 0.0
      %7499 = vmatprep.subr.mxu0 0.0
      %7500 = vmatpush1.msra.mxu0 0.0
      %7501 = vmatprep.subr.mxu0 0.0
      %7502 = vmatpush1.msra.mxu0 0.0
      %7503 = vmatprep.subr.mxu0 0.0
      %7504 = vmatpush1.msra.mxu0 0.0
      %7505 = vmatprep.subr.mxu0 0.0
      %7506 = vmatpush1.msra.mxu0 0.0
      %7507 = vmatprep.subr.mxu0 0.0
      %7508 = vmatpush1.msra.mxu0 0.0
      %7509 = vmatprep.subr.mxu0 0.0
      %7510 = vmatpush1.msra.mxu0 0.0
      %7511 = vmatprep.subr.mxu0 0.0
      %7512 = vmatpush1.msra.mxu0 0.0
      %7513 = vmatprep.mubr.f32.mxu0 0.0
      %7514 = vmatmul.mubr.f32.gmra.mrb[0].mxu0 %v6282
      %v7515 = vpop.f32.mrb[0].mxu0
      %v7516 = vadd.f32 %v7431, %v7515
      %v7517 = vpop.f32.mrb[0].mxu0
      %7518 = vmatprep.mubr.f32.mxu0 0.0
      %7519 = vmatmul.mubr.f32.gmra.mrb[0].mxu0 %v6285
      %v7520 = vpop.f32.mrb[0].mxu0
      %v7521 = vadd.f32 %v7436, %v7520
      %v7522 = vpop.f32.mrb[0].mxu0
      %7523 = vmatprep.mubr.f32.mxu0 0.0
      %7524 = vmatmul.mubr.f32.gmra.mrb[0].mxu0 %v6288
      %v7525 = vpop.f32.mrb[0].mxu0
      %v7526 = vadd.f32 %v7441, %v7525
      %v7527 = vpop.f32.mrb[0].mxu0
      %7528 = vmatprep.mubr.f32.mxu0 0.0
      %7529 = vmatmul.mubr.f32.gmra.mrb[0].mxu0 %v6291
      %v7530 = vpop.f32.mrb[0].mxu0
      %v7531 = vadd.f32 %v7446, %v7530
      %v7532 = vpop.f32.mrb[0].mxu0
      %7533 = vdwg.mxu0
      %v7534 = vmax.f32 %v7204, %v7516
      %v7535 = vmax.f32 %v7205, %v7521
      %v7536 = vmax.f32 %v7206, %v7526
      %v7537 = vmax.f32 %v7207, %v7531
      %7538 = vst.msk [vmem:[#allocation5] sm:$0xff] %vm490, %v7534
      %7539 = vst.msk [vmem:[#allocation5 + $0x8] sm:$0xff] %vm490, %v7535
      %7540 = vst.msk [vmem:[#allocation5 + $0x10] sm:$0xff] %vm490, %v7536
      %7541 = vst.msk [vmem:[#allocation5 + $0x18] sm:$0xff] %vm490, %v7537
      %vm7542 = vcmask 851744
      %7543 = vst.msk [vmem:[#allocation5] sm:$0xff] %vm7542, 0.0
      %7544 = vst.msk [vmem:[#allocation5 + $0x8] sm:$0xff] %vm7542, 0.0
      %7545 = vst.msk [vmem:[#allocation5 + $0x10] sm:$0xff] %vm7542, 0.0
      %7546 = vst.msk [vmem:[#allocation5 + $0x18] sm:$0xff] %vm7542, 0.0
      %v7547 = vld [vmem:[#allocation5] sm:$0xff]
      %v7548 = vld [vmem:[#allocation5 + $0x8] sm:$0xff]
      %v7549 = vld [vmem:[#allocation5 + $0x10] sm:$0xff]
      %v7550 = vld [vmem:[#allocation5 + $0x18] sm:$0xff]
      %vm7551 = vcmask 490496
      %7552 = vst.msk [vmem:[#allocation6] sm:$0xff] %vm7551, %v7547
      %7553 = vst.msk [vmem:[#allocation6 + $0x8] sm:$0xff] %vm7551, %v7548
      %7554 = vst.msk [vmem:[#allocation6 + $0x10] sm:$0xff] %vm7551, %v7549
      %7555 = vst.msk [vmem:[#allocation6 + $0x18] sm:$0xff] %vm7551, %v7550
      %v7556 = vld [vmem:[#allocation5] sm:$0xff]
      %v7557 = vld [vmem:[#allocation5 + $0x8] sm:$0xff]
      %v7558 = vld [vmem:[#allocation5 + $0x10] sm:$0xff]
      %v7559 = vld [vmem:[#allocation5 + $0x18] sm:$0xff]
      %7564 = vrot.lane.b32.xlu0 %v7556, 127
      %v7565 = vpop.permute.xlu0 %7564
      %7566 = vrot.lane.b32.xlu0 %v7557, 127
      %v7567 = vpop.permute.xlu0 %7566
      %7568 = vrot.lane.b32.xlu0 %v7558, 127
      %v7569 = vpop.permute.xlu0 %7568
      %7570 = vrot.lane.b32.xlu0 %v7559, 127
      %v7571 = vpop.permute.xlu0 %7570
      %7576 = vst.msk [vmem:[#allocation6 + $0x20] sm:$0xff] %vm7551, %v7565
      %7577 = vst.msk [vmem:[#allocation6 + $0x28] sm:$0xff] %vm7551, %v7567
      %7578 = vst.msk [vmem:[#allocation6 + $0x30] sm:$0xff] %vm7551, %v7569
      %7579 = vst.msk [vmem:[#allocation6 + $0x38] sm:$0xff] %vm7551, %v7571
      %v7580 = vld [vmem:[#allocation5] sm:$0xff]
      %v7581 = vld [vmem:[#allocation5 + $0x8] sm:$0xff]
      %v7582 = vld [vmem:[#allocation5 + $0x10] sm:$0xff]
      %v7583 = vld [vmem:[#allocation5 + $0x18] sm:$0xff]
      %7588 = vrot.lane.b32.xlu0 %v7580, 126
      %v7589 = vpop.permute.xlu0 %7588
      %7590 = vrot.lane.b32.xlu0 %v7581, 126
      %v7591 = vpop.permute.xlu0 %7590
      %7592 = vrot.lane.b32.xlu0 %v7582, 126
      %v7593 = vpop.permute.xlu0 %7592
      %7594 = vrot.lane.b32.xlu0 %v7583, 126
      %v7595 = vpop.permute.xlu0 %7594
      %7600 = vst.msk [vmem:[#allocation6 + $0x40] sm:$0xff] %vm7551, %v7589
      %7601 = vst.msk [vmem:[#allocation6 + $0x48] sm:$0xff] %vm7551, %v7591
      %7602 = vst.msk [vmem:[#allocation6 + $0x50] sm:$0xff] %vm7551, %v7593
      %7603 = vst.msk [vmem:[#allocation6 + $0x58] sm:$0xff] %vm7551, %v7595
      %v7604 = vld [vmem:[#allocation5] sm:$0xff]
      %v7605 = vld [vmem:[#allocation5 + $0x8] sm:$0xff]
      %v7606 = vld [vmem:[#allocation5 + $0x10] sm:$0xff]
      %v7607 = vld [vmem:[#allocation5 + $0x18] sm:$0xff]
      %7612 = vrot.lane.b32.xlu0 %v7604, 125
      %v7613 = vpop.permute.xlu0 %7612
      %7614 = vrot.lane.b32.xlu0 %v7605, 125
      %v7615 = vpop.permute.xlu0 %7614
      %7616 = vrot.lane.b32.xlu0 %v7606, 125
      %v7617 = vpop.permute.xlu0 %7616
      %7618 = vrot.lane.b32.xlu0 %v7607, 125
      %v7619 = vpop.permute.xlu0 %7618
      %7624 = vst.msk [vmem:[#allocation6 + $0x60] sm:$0xff] %vm7551, %v7613
      %7625 = vst.msk [vmem:[#allocation6 + $0x68] sm:$0xff] %vm7551, %v7615
      %7626 = vst.msk [vmem:[#allocation6 + $0x70] sm:$0xff] %vm7551, %v7617
      %7627 = vst.msk [vmem:[#allocation6 + $0x78] sm:$0xff] %vm7551, %v7619
      %v7628 = vld [vmem:[#allocation5] sm:$0xff]
      %v7629 = vld [vmem:[#allocation5 + $0x8] sm:$0xff]
      %v7630 = vld [vmem:[#allocation5 + $0x10] sm:$0xff]
      %v7631 = vld [vmem:[#allocation5 + $0x18] sm:$0xff]
      %7636 = vrot.lane.b32.xlu0 %v7628, 124
      %v7637 = vpop.permute.xlu0 %7636
      %7638 = vrot.lane.b32.xlu0 %v7629, 124
      %v7639 = vpop.permute.xlu0 %7638
      %7640 = vrot.lane.b32.xlu0 %v7630, 124
      %v7641 = vpop.permute.xlu0 %7640
      %7642 = vrot.lane.b32.xlu0 %v7631, 124
      %v7643 = vpop.permute.xlu0 %7642
      %7648 = vst.msk [vmem:[#allocation6 + $0x80] sm:$0xff] %vm7551, %v7637
      %7649 = vst.msk [vmem:[#allocation6 + $0x88] sm:$0xff] %vm7551, %v7639
      %7650 = vst.msk [vmem:[#allocation6 + $0x90] sm:$0xff] %vm7551, %v7641
      %7651 = vst.msk [vmem:[#allocation6 + $0x98] sm:$0xff] %vm7551, %v7643
      %v7652 = vld [vmem:[#allocation5] sm:$0xff]
      %v7653 = vld [vmem:[#allocation5 + $0x8] sm:$0xff]
      %v7654 = vld [vmem:[#allocation5 + $0x10] sm:$0xff]
      %v7655 = vld [vmem:[#allocation5 + $0x18] sm:$0xff]
      %7660 = vrot.lane.b32.xlu0 %v7652, 118
      %v7661 = vpop.permute.xlu0 %7660
      %7662 = vrot.lane.b32.xlu0 %v7653, 118
      %v7663 = vpop.permute.xlu0 %7662
      %7664 = vrot.lane.b32.xlu0 %v7654, 118
      %v7665 = vpop.permute.xlu0 %7664
      %7666 = vrot.lane.b32.xlu0 %v7655, 118
      %v7667 = vpop.permute.xlu0 %7666
      %7672 = vst.msk [vmem:[#allocation6 + $0xa0] sm:$0xff] %vm7551, %v7661
      %7673 = vst.msk [vmem:[#allocation6 + $0xa8] sm:$0xff] %vm7551, %v7663
      %7674 = vst.msk [vmem:[#allocation6 + $0xb0] sm:$0xff] %vm7551, %v7665
      %7675 = vst.msk [vmem:[#allocation6 + $0xb8] sm:$0xff] %vm7551, %v7667
      %v7676 = vld [vmem:[#allocation5] sm:$0xff]
      %v7677 = vld [vmem:[#allocation5 + $0x8] sm:$0xff]
      %v7678 = vld [vmem:[#allocation5 + $0x10] sm:$0xff]
      %v7679 = vld [vmem:[#allocation5 + $0x18] sm:$0xff]
      %7684 = vrot.lane.b32.xlu0 %v7676, 117
      %v7685 = vpop.permute.xlu0 %7684
      %7686 = vrot.lane.b32.xlu0 %v7677, 117
      %v7687 = vpop.permute.xlu0 %7686
      %7688 = vrot.lane.b32.xlu0 %v7678, 117
      %v7689 = vpop.permute.xlu0 %7688
      %7690 = vrot.lane.b32.xlu0 %v7679, 117
      %v7691 = vpop.permute.xlu0 %7690
      %7696 = vst.msk [vmem:[#allocation6 + $0xc0] sm:$0xff] %vm7551, %v7685
      %7697 = vst.msk [vmem:[#allocation6 + $0xc8] sm:$0xff] %vm7551, %v7687
      %7698 = vst.msk [vmem:[#allocation6 + $0xd0] sm:$0xff] %vm7551, %v7689
      %7699 = vst.msk [vmem:[#allocation6 + $0xd8] sm:$0xff] %vm7551, %v7691
      %v7700 = vld [vmem:[#allocation5] sm:$0xff]
      %v7701 = vld [vmem:[#allocation5 + $0x8] sm:$0xff]
      %v7702 = vld [vmem:[#allocation5 + $0x10] sm:$0xff]
      %v7703 = vld [vmem:[#allocation5 + $0x18] sm:$0xff]
      %7708 = vrot.lane.b32.xlu0 %v7700, 116
      %v7709 = vpop.permute.xlu0 %7708
      %7710 = vrot.lane.b32.xlu0 %v7701, 116
      %v7711 = vpop.permute.xlu0 %7710
      %7712 = vrot.lane.b32.xlu0 %v7702, 116
      %v7713 = vpop.permute.xlu0 %7712
      %7714 = vrot.lane.b32.xlu0 %v7703, 116
      %v7715 = vpop.permute.xlu0 %7714
      %7720 = vst.msk [vmem:[#allocation6 + $0xe0] sm:$0xff] %vm7551, %v7709
      %7721 = vst.msk [vmem:[#allocation6 + $0xe8] sm:$0xff] %vm7551, %v7711
      %7722 = vst.msk [vmem:[#allocation6 + $0xf0] sm:$0xff] %vm7551, %v7713
      %7723 = vst.msk [vmem:[#allocation6 + $0xf8] sm:$0xff] %vm7551, %v7715
      %v7724 = vld [vmem:[#allocation5] sm:$0xff]
      %v7725 = vld [vmem:[#allocation5 + $0x8] sm:$0xff]
      %v7726 = vld [vmem:[#allocation5 + $0x10] sm:$0xff]
      %v7727 = vld [vmem:[#allocation5 + $0x18] sm:$0xff]
      %7732 = vrot.lane.b32.xlu0 %v7724, 115
      %v7733 = vpop.permute.xlu0 %7732
      %7734 = vrot.lane.b32.xlu0 %v7725, 115
      %v7735 = vpop.permute.xlu0 %7734
      %7736 = vrot.lane.b32.xlu0 %v7726, 115
      %v7737 = vpop.permute.xlu0 %7736
      %7738 = vrot.lane.b32.xlu0 %v7727, 115
      %v7739 = vpop.permute.xlu0 %7738
      %7744 = vst.msk [vmem:[#allocation6 + $0x100] sm:$0xff] %vm7551, %v7733
      %7745 = vst.msk [vmem:[#allocation6 + $0x108] sm:$0xff] %vm7551, %v7735
      %7746 = vst.msk [vmem:[#allocation6 + $0x110] sm:$0xff] %vm7551, %v7737
      %7747 = vst.msk [vmem:[#allocation6 + $0x118] sm:$0xff] %vm7551, %v7739
      %v7748 = vld [vmem:[#allocation5] sm:$0xff]
      %v7749 = vld [vmem:[#allocation5 + $0x8] sm:$0xff]
      %v7750 = vld [vmem:[#allocation5 + $0x10] sm:$0xff]
      %v7751 = vld [vmem:[#allocation5 + $0x18] sm:$0xff]
      %7756 = vrot.lane.b32.xlu0 %v7748, 114
      %v7757 = vpop.permute.xlu0 %7756
      %7758 = vrot.lane.b32.xlu0 %v7749, 114
      %v7759 = vpop.permute.xlu0 %7758
      %7760 = vrot.lane.b32.xlu0 %v7750, 114
      %v7761 = vpop.permute.xlu0 %7760
      %7762 = vrot.lane.b32.xlu0 %v7751, 114
      %v7763 = vpop.permute.xlu0 %7762
      %7768 = vst.msk [vmem:[#allocation6 + $0x120] sm:$0xff] %vm7551, %v7757
      %7769 = vst.msk [vmem:[#allocation6 + $0x128] sm:$0xff] %vm7551, %v7759
      %7770 = vst.msk [vmem:[#allocation6 + $0x130] sm:$0xff] %vm7551, %v7761
      %7771 = vst.msk [vmem:[#allocation6 + $0x138] sm:$0xff] %vm7551, %v7763
      %v7772 = vld [vmem:[#allocation5] sm:$0xff]
      %v7773 = vld [vmem:[#allocation5 + $0x8] sm:$0xff]
      %v7774 = vld [vmem:[#allocation5 + $0x10] sm:$0xff]
      %v7775 = vld [vmem:[#allocation5 + $0x18] sm:$0xff]
      %7780 = vrot.lane.b32.xlu0 %v7772, 108
      %v7781 = vpop.permute.xlu0 %7780
      %7782 = vrot.lane.b32.xlu0 %v7773, 108
      %v7783 = vpop.permute.xlu0 %7782
      %7784 = vrot.lane.b32.xlu0 %v7774, 108
      %v7785 = vpop.permute.xlu0 %7784
      %7786 = vrot.lane.b32.xlu0 %v7775, 108
      %v7787 = vpop.permute.xlu0 %7786
      %7792 = vst.msk [vmem:[#allocation6 + $0x140] sm:$0xff] %vm7551, %v7781
      %7793 = vst.msk [vmem:[#allocation6 + $0x148] sm:$0xff] %vm7551, %v7783
      %7794 = vst.msk [vmem:[#allocation6 + $0x150] sm:$0xff] %vm7551, %v7785
      %7795 = vst.msk [vmem:[#allocation6 + $0x158] sm:$0xff] %vm7551, %v7787
      %v7796 = vld [vmem:[#allocation5] sm:$0xff]
      %v7797 = vld [vmem:[#allocation5 + $0x8] sm:$0xff]
      %v7798 = vld [vmem:[#allocation5 + $0x10] sm:$0xff]
      %v7799 = vld [vmem:[#allocation5 + $0x18] sm:$0xff]
      %7804 = vrot.lane.b32.xlu0 %v7796, 107
      %v7805 = vpop.permute.xlu0 %7804
      %7806 = vrot.lane.b32.xlu0 %v7797, 107
      %v7807 = vpop.permute.xlu0 %7806
      %7808 = vrot.lane.b32.xlu0 %v7798, 107
      %v7809 = vpop.permute.xlu0 %7808
      %7810 = vrot.lane.b32.xlu0 %v7799, 107
      %v7811 = vpop.permute.xlu0 %7810
      %7816 = vst.msk [vmem:[#allocation6 + $0x160] sm:$0xff] %vm7551, %v7805
      %7817 = vst.msk [vmem:[#allocation6 + $0x168] sm:$0xff] %vm7551, %v7807
      %7818 = vst.msk [vmem:[#allocation6 + $0x170] sm:$0xff] %vm7551, %v7809
      %7819 = vst.msk [vmem:[#allocation6 + $0x178] sm:$0xff] %vm7551, %v7811
      %v7820 = vld [vmem:[#allocation5] sm:$0xff]
      %v7821 = vld [vmem:[#allocation5 + $0x8] sm:$0xff]
      %v7822 = vld [vmem:[#allocation5 + $0x10] sm:$0xff]
      %v7823 = vld [vmem:[#allocation5 + $0x18] sm:$0xff]
      %7828 = vrot.lane.b32.xlu0 %v7820, 106
      %v7829 = vpop.permute.xlu0 %7828
      %7830 = vrot.lane.b32.xlu0 %v7821, 106
      %v7831 = vpop.permute.xlu0 %7830
      %7832 = vrot.lane.b32.xlu0 %v7822, 106
      %v7833 = vpop.permute.xlu0 %7832
      %7834 = vrot.lane.b32.xlu0 %v7823, 106
      %v7835 = vpop.permute.xlu0 %7834
      %7840 = vst.msk [vmem:[#allocation6 + $0x180] sm:$0xff] %vm7551, %v7829
      %7841 = vst.msk [vmem:[#allocation6 + $0x188] sm:$0xff] %vm7551, %v7831
      %7842 = vst.msk [vmem:[#allocation6 + $0x190] sm:$0xff] %vm7551, %v7833
      %7843 = vst.msk [vmem:[#allocation6 + $0x198] sm:$0xff] %vm7551, %v7835
      %v7844 = vld [vmem:[#allocation5] sm:$0xff]
      %v7845 = vld [vmem:[#allocation5 + $0x8] sm:$0xff]
      %v7846 = vld [vmem:[#allocation5 + $0x10] sm:$0xff]
      %v7847 = vld [vmem:[#allocation5 + $0x18] sm:$0xff]
      %7852 = vrot.lane.b32.xlu0 %v7844, 105
      %v7853 = vpop.permute.xlu0 %7852
      %7854 = vrot.lane.b32.xlu0 %v7845, 105
      %v7855 = vpop.permute.xlu0 %7854
      %7856 = vrot.lane.b32.xlu0 %v7846, 105
      %v7857 = vpop.permute.xlu0 %7856
      %7858 = vrot.lane.b32.xlu0 %v7847, 105
      %v7859 = vpop.permute.xlu0 %7858
      %7864 = vst.msk [vmem:[#allocation6 + $0x1a0] sm:$0xff] %vm7551, %v7853
      %7865 = vst.msk [vmem:[#allocation6 + $0x1a8] sm:$0xff] %vm7551, %v7855
      %7866 = vst.msk [vmem:[#allocation6 + $0x1b0] sm:$0xff] %vm7551, %v7857
      %7867 = vst.msk [vmem:[#allocation6 + $0x1b8] sm:$0xff] %vm7551, %v7859
      %v7868 = vld [vmem:[#allocation5] sm:$0xff]
      %v7869 = vld [vmem:[#allocation5 + $0x8] sm:$0xff]
      %v7870 = vld [vmem:[#allocation5 + $0x10] sm:$0xff]
      %v7871 = vld [vmem:[#allocation5 + $0x18] sm:$0xff]
      %7876 = vrot.lane.b32.xlu0 %v7868, 104
      %v7877 = vpop.permute.xlu0 %7876
      %7878 = vrot.lane.b32.xlu0 %v7869, 104
      %v7879 = vpop.permute.xlu0 %7878
      %7880 = vrot.lane.b32.xlu0 %v7870, 104
      %v7881 = vpop.permute.xlu0 %7880
      %7882 = vrot.lane.b32.xlu0 %v7871, 104
      %v7883 = vpop.permute.xlu0 %7882
      %7888 = vst.msk [vmem:[#allocation6 + $0x1c0] sm:$0xff] %vm7551, %v7877
      %7889 = vst.msk [vmem:[#allocation6 + $0x1c8] sm:$0xff] %vm7551, %v7879
      %7890 = vst.msk [vmem:[#allocation6 + $0x1d0] sm:$0xff] %vm7551, %v7881
      %7891 = vst.msk [vmem:[#allocation6 + $0x1d8] sm:$0xff] %vm7551, %v7883
      %v7892 = vld [vmem:[#allocation5] sm:$0xff]
      %v7893 = vld [vmem:[#allocation5 + $0x8] sm:$0xff]
      %v7894 = vld [vmem:[#allocation5 + $0x10] sm:$0xff]
      %v7895 = vld [vmem:[#allocation5 + $0x18] sm:$0xff]
      %7900 = vrot.lane.b32.xlu0 %v7892, 98
      %v7901 = vpop.permute.xlu0 %7900
      %7902 = vrot.lane.b32.xlu0 %v7893, 98
      %v7903 = vpop.permute.xlu0 %7902
      %7904 = vrot.lane.b32.xlu0 %v7894, 98
      %v7905 = vpop.permute.xlu0 %7904
      %7906 = vrot.lane.b32.xlu0 %v7895, 98
      %v7907 = vpop.permute.xlu0 %7906
      %7912 = vst.msk [vmem:[#allocation6 + $0x1e0] sm:$0xff] %vm7551, %v7901
      %7913 = vst.msk [vmem:[#allocation6 + $0x1e8] sm:$0xff] %vm7551, %v7903
      %7914 = vst.msk [vmem:[#allocation6 + $0x1f0] sm:$0xff] %vm7551, %v7905
      %7915 = vst.msk [vmem:[#allocation6 + $0x1f8] sm:$0xff] %vm7551, %v7907
      %v7916 = vld [vmem:[#allocation5] sm:$0xff]
      %v7917 = vld [vmem:[#allocation5 + $0x8] sm:$0xff]
      %v7918 = vld [vmem:[#allocation5 + $0x10] sm:$0xff]
      %v7919 = vld [vmem:[#allocation5 + $0x18] sm:$0xff]
      %7924 = vrot.lane.b32.xlu0 %v7916, 97
      %v7925 = vpop.permute.xlu0 %7924
      %7926 = vrot.lane.b32.xlu0 %v7917, 97
      %v7927 = vpop.permute.xlu0 %7926
      %7928 = vrot.lane.b32.xlu0 %v7918, 97
      %v7929 = vpop.permute.xlu0 %7928
      %7930 = vrot.lane.b32.xlu0 %v7919, 97
      %v7931 = vpop.permute.xlu0 %7930
      %7936 = vst.msk [vmem:[#allocation6 + $0x200] sm:$0xff] %vm7551, %v7925
      %7937 = vst.msk [vmem:[#allocation6 + $0x208] sm:$0xff] %vm7551, %v7927
      %7938 = vst.msk [vmem:[#allocation6 + $0x210] sm:$0xff] %vm7551, %v7929
      %7939 = vst.msk [vmem:[#allocation6 + $0x218] sm:$0xff] %vm7551, %v7931
      %v7940 = vld [vmem:[#allocation5] sm:$0xff]
      %v7941 = vld [vmem:[#allocation5 + $0x8] sm:$0xff]
      %v7942 = vld [vmem:[#allocation5 + $0x10] sm:$0xff]
      %v7943 = vld [vmem:[#allocation5 + $0x18] sm:$0xff]
      %7948 = vrot.lane.b32.xlu0 %v7940, 96
      %v7949 = vpop.permute.xlu0 %7948
      %7950 = vrot.lane.b32.xlu0 %v7941, 96
      %v7951 = vpop.permute.xlu0 %7950
      %7952 = vrot.lane.b32.xlu0 %v7942, 96
      %v7953 = vpop.permute.xlu0 %7952
      %7954 = vrot.lane.b32.xlu0 %v7943, 96
      %v7955 = vpop.permute.xlu0 %7954
      %7960 = vst.msk [vmem:[#allocation6 + $0x220] sm:$0xff] %vm7551, %v7949
      %7961 = vst.msk [vmem:[#allocation6 + $0x228] sm:$0xff] %vm7551, %v7951
      %7962 = vst.msk [vmem:[#allocation6 + $0x230] sm:$0xff] %vm7551, %v7953
      %7963 = vst.msk [vmem:[#allocation6 + $0x238] sm:$0xff] %vm7551, %v7955
      %v7964 = vld [vmem:[#allocation5] sm:$0xff]
      %v7965 = vld [vmem:[#allocation5 + $0x8] sm:$0xff]
      %v7966 = vld [vmem:[#allocation5 + $0x10] sm:$0xff]
      %v7967 = vld [vmem:[#allocation5 + $0x18] sm:$0xff]
      %7972 = vrot.lane.b32.xlu0 %v7964, 95
      %v7973 = vpop.permute.xlu0 %7972
      %7974 = vrot.lane.b32.xlu0 %v7965, 95
      %v7975 = vpop.permute.xlu0 %7974
      %7976 = vrot.lane.b32.xlu0 %v7966, 95
      %v7977 = vpop.permute.xlu0 %7976
      %7978 = vrot.lane.b32.xlu0 %v7967, 95
      %v7979 = vpop.permute.xlu0 %7978
      %7984 = vst.msk [vmem:[#allocation6 + $0x240] sm:$0xff] %vm7551, %v7973
      %7985 = vst.msk [vmem:[#allocation6 + $0x248] sm:$0xff] %vm7551, %v7975
      %7986 = vst.msk [vmem:[#allocation6 + $0x250] sm:$0xff] %vm7551, %v7977
      %7987 = vst.msk [vmem:[#allocation6 + $0x258] sm:$0xff] %vm7551, %v7979
      %v7988 = vld [vmem:[#allocation5] sm:$0xff]
      %v7989 = vld [vmem:[#allocation5 + $0x8] sm:$0xff]
      %v7990 = vld [vmem:[#allocation5 + $0x10] sm:$0xff]
      %v7991 = vld [vmem:[#allocation5 + $0x18] sm:$0xff]
      %7996 = vrot.lane.b32.xlu0 %v7988, 94
      %v7997 = vpop.permute.xlu0 %7996
      %7998 = vrot.lane.b32.xlu0 %v7989, 94
      %v7999 = vpop.permute.xlu0 %7998
      %8000 = vrot.lane.b32.xlu0 %v7990, 94
      %v8001 = vpop.permute.xlu0 %8000
      %8002 = vrot.lane.b32.xlu0 %v7991, 94
      %v8003 = vpop.permute.xlu0 %8002
      %8008 = vst.msk [vmem:[#allocation6 + $0x260] sm:$0xff] %vm7551, %v7997
      %8009 = vst.msk [vmem:[#allocation6 + $0x268] sm:$0xff] %vm7551, %v7999
      %8010 = vst.msk [vmem:[#allocation6 + $0x270] sm:$0xff] %vm7551, %v8001
      %8011 = vst.msk [vmem:[#allocation6 + $0x278] sm:$0xff] %vm7551, %v8003
      %v8012 = vld [vmem:[#allocation5] sm:$0xff]
      %v8013 = vld [vmem:[#allocation5 + $0x8] sm:$0xff]
      %v8014 = vld [vmem:[#allocation5 + $0x10] sm:$0xff]
      %v8015 = vld [vmem:[#allocation5 + $0x18] sm:$0xff]
      %8020 = vrot.lane.b32.xlu0 %v8012, 88
      %v8021 = vpop.permute.xlu0 %8020
      %8022 = vrot.lane.b32.xlu0 %v8013, 88
      %v8023 = vpop.permute.xlu0 %8022
      %8024 = vrot.lane.b32.xlu0 %v8014, 88
      %v8025 = vpop.permute.xlu0 %8024
      %8026 = vrot.lane.b32.xlu0 %v8015, 88
      %v8027 = vpop.permute.xlu0 %8026
      %8032 = vst.msk [vmem:[#allocation6 + $0x280] sm:$0xff] %vm7551, %v8021
      %8033 = vst.msk [vmem:[#allocation6 + $0x288] sm:$0xff] %vm7551, %v8023
      %8034 = vst.msk [vmem:[#allocation6 + $0x290] sm:$0xff] %vm7551, %v8025
      %8035 = vst.msk [vmem:[#allocation6 + $0x298] sm:$0xff] %vm7551, %v8027
      %v8036 = vld [vmem:[#allocation5] sm:$0xff]
      %v8037 = vld [vmem:[#allocation5 + $0x8] sm:$0xff]
      %v8038 = vld [vmem:[#allocation5 + $0x10] sm:$0xff]
      %v8039 = vld [vmem:[#allocation5 + $0x18] sm:$0xff]
      %8044 = vrot.lane.b32.xlu0 %v8036, 87
      %v8045 = vpop.permute.xlu0 %8044
      %8046 = vrot.lane.b32.xlu0 %v8037, 87
      %v8047 = vpop.permute.xlu0 %8046
      %8048 = vrot.lane.b32.xlu0 %v8038, 87
      %v8049 = vpop.permute.xlu0 %8048
      %8050 = vrot.lane.b32.xlu0 %v8039, 87
      %v8051 = vpop.permute.xlu0 %8050
      %8056 = vst.msk [vmem:[#allocation6 + $0x2a0] sm:$0xff] %vm7551, %v8045
      %8057 = vst.msk [vmem:[#allocation6 + $0x2a8] sm:$0xff] %vm7551, %v8047
      %8058 = vst.msk [vmem:[#allocation6 + $0x2b0] sm:$0xff] %vm7551, %v8049
      %8059 = vst.msk [vmem:[#allocation6 + $0x2b8] sm:$0xff] %vm7551, %v8051
      %v8060 = vld [vmem:[#allocation5] sm:$0xff]
      %v8061 = vld [vmem:[#allocation5 + $0x8] sm:$0xff]
      %v8062 = vld [vmem:[#allocation5 + $0x10] sm:$0xff]
      %v8063 = vld [vmem:[#allocation5 + $0x18] sm:$0xff]
      %8068 = vrot.lane.b32.xlu0 %v8060, 86
      %v8069 = vpop.permute.xlu0 %8068
      %8070 = vrot.lane.b32.xlu0 %v8061, 86
      %v8071 = vpop.permute.xlu0 %8070
      %8072 = vrot.lane.b32.xlu0 %v8062, 86
      %v8073 = vpop.permute.xlu0 %8072
      %8074 = vrot.lane.b32.xlu0 %v8063, 86
      %v8075 = vpop.permute.xlu0 %8074
      %8080 = vst.msk [vmem:[#allocation6 + $0x2c0] sm:$0xff] %vm7551, %v8069
      %8081 = vst.msk [vmem:[#allocation6 + $0x2c8] sm:$0xff] %vm7551, %v8071
      %8082 = vst.msk [vmem:[#allocation6 + $0x2d0] sm:$0xff] %vm7551, %v8073
      %8083 = vst.msk [vmem:[#allocation6 + $0x2d8] sm:$0xff] %vm7551, %v8075
      %v8084 = vld [vmem:[#allocation5] sm:$0xff]
      %v8085 = vld [vmem:[#allocation5 + $0x8] sm:$0xff]
      %v8086 = vld [vmem:[#allocation5 + $0x10] sm:$0xff]
      %v8087 = vld [vmem:[#allocation5 + $0x18] sm:$0xff]
      %8092 = vrot.lane.b32.xlu0 %v8084, 85
      %v8093 = vpop.permute.xlu0 %8092
      %8094 = vrot.lane.b32.xlu0 %v8085, 85
      %v8095 = vpop.permute.xlu0 %8094
      %8096 = vrot.lane.b32.xlu0 %v8086, 85
      %v8097 = vpop.permute.xlu0 %8096
      %8098 = vrot.lane.b32.xlu0 %v8087, 85
      %v8099 = vpop.permute.xlu0 %8098
      %8104 = vst.msk [vmem:[#allocation6 + $0x2e0] sm:$0xff] %vm7551, %v8093
      %8105 = vst.msk [vmem:[#allocation6 + $0x2e8] sm:$0xff] %vm7551, %v8095
      %8106 = vst.msk [vmem:[#allocation6 + $0x2f0] sm:$0xff] %vm7551, %v8097
      %8107 = vst.msk [vmem:[#allocation6 + $0x2f8] sm:$0xff] %vm7551, %v8099
      %v8108 = vld [vmem:[#allocation5] sm:$0xff]
      %v8109 = vld [vmem:[#allocation5 + $0x8] sm:$0xff]
      %v8110 = vld [vmem:[#allocation5 + $0x10] sm:$0xff]
      %v8111 = vld [vmem:[#allocation5 + $0x18] sm:$0xff]
      %8116 = vrot.lane.b32.xlu0 %v8108, 84
      %v8117 = vpop.permute.xlu0 %8116
      %8118 = vrot.lane.b32.xlu0 %v8109, 84
      %v8119 = vpop.permute.xlu0 %8118
      %8120 = vrot.lane.b32.xlu0 %v8110, 84
      %v8121 = vpop.permute.xlu0 %8120
      %8122 = vrot.lane.b32.xlu0 %v8111, 84
      %v8123 = vpop.permute.xlu0 %8122
      %8128 = vst.msk [vmem:[#allocation6 + $0x300] sm:$0xff] %vm7551, %v8117
      %8129 = vst.msk [vmem:[#allocation6 + $0x308] sm:$0xff] %vm7551, %v8119
      %8130 = vst.msk [vmem:[#allocation6 + $0x310] sm:$0xff] %vm7551, %v8121
      %8131 = vst.msk [vmem:[#allocation6 + $0x318] sm:$0xff] %vm7551, %v8123
      %v8132 = vld [vmem:[#allocation6] sm:$0xff]
      %v8133 = vld [vmem:[#allocation6 + $0x8] sm:$0xff]
      %v8134 = vld [vmem:[#allocation6 + $0x10] sm:$0xff]
      %v8135 = vld [vmem:[#allocation6 + $0x18] sm:$0xff]
      %v8136 = vld [vmem:[#allocation6 + $0x20] sm:$0xff]
      %v8137 = vld [vmem:[#allocation6 + $0x28] sm:$0xff]
      %v8138 = vld [vmem:[#allocation6 + $0x30] sm:$0xff]
      %v8139 = vld [vmem:[#allocation6 + $0x38] sm:$0xff]
      %v8140 = vld [vmem:[#allocation6 + $0x40] sm:$0xff]
      %v8141 = vld [vmem:[#allocation6 + $0x48] sm:$0xff]
      %v8142 = vld [vmem:[#allocation6 + $0x50] sm:$0xff]
      %v8143 = vld [vmem:[#allocation6 + $0x58] sm:$0xff]
      %v8144 = vld [vmem:[#allocation6 + $0x60] sm:$0xff]
      %v8145 = vld [vmem:[#allocation6 + $0x68] sm:$0xff]
      %v8146 = vld [vmem:[#allocation6 + $0x70] sm:$0xff]
      %v8147 = vld [vmem:[#allocation6 + $0x78] sm:$0xff]
      %v8148 = vld [vmem:[#allocation6 + $0x80] sm:$0xff]
      %v8149 = vld [vmem:[#allocation6 + $0x88] sm:$0xff]
      %v8150 = vld [vmem:[#allocation6 + $0x90] sm:$0xff]
      %v8151 = vld [vmem:[#allocation6 + $0x98] sm:$0xff]
      %v8152 = vld [vmem:[#allocation6 + $0xa0] sm:$0xff]
      %v8153 = vld [vmem:[#allocation6 + $0xa8] sm:$0xff]
      %v8154 = vld [vmem:[#allocation6 + $0xb0] sm:$0xff]
      %v8155 = vld [vmem:[#allocation6 + $0xb8] sm:$0xff]
      %v8156 = vld [vmem:[#allocation6 + $0xc0] sm:$0xff]
      %v8157 = vld [vmem:[#allocation6 + $0xc8] sm:$0xff]
      %v8158 = vld [vmem:[#allocation6 + $0xd0] sm:$0xff]
      %v8159 = vld [vmem:[#allocation6 + $0xd8] sm:$0xff]
      %v8160 = vld [vmem:[#allocation6 + $0xe0] sm:$0xff]
      %v8161 = vld [vmem:[#allocation6 + $0xe8] sm:$0xff]
      %v8162 = vld [vmem:[#allocation6 + $0xf0] sm:$0xff]
      %v8163 = vld [vmem:[#allocation6 + $0xf8] sm:$0xff]
      %v8164 = vld [vmem:[#allocation6 + $0x100] sm:$0xff]
      %v8165 = vld [vmem:[#allocation6 + $0x108] sm:$0xff]
      %v8166 = vld [vmem:[#allocation6 + $0x110] sm:$0xff]
      %v8167 = vld [vmem:[#allocation6 + $0x118] sm:$0xff]
      %v8168 = vld [vmem:[#allocation6 + $0x120] sm:$0xff]
      %v8169 = vld [vmem:[#allocation6 + $0x128] sm:$0xff]
      %v8170 = vld [vmem:[#allocation6 + $0x130] sm:$0xff]
      %v8171 = vld [vmem:[#allocation6 + $0x138] sm:$0xff]
      %v8172 = vld [vmem:[#allocation6 + $0x140] sm:$0xff]
      %v8173 = vld [vmem:[#allocation6 + $0x148] sm:$0xff]
      %v8174 = vld [vmem:[#allocation6 + $0x150] sm:$0xff]
      %v8175 = vld [vmem:[#allocation6 + $0x158] sm:$0xff]
      %v8176 = vld [vmem:[#allocation6 + $0x160] sm:$0xff]
      %v8177 = vld [vmem:[#allocation6 + $0x168] sm:$0xff]
      %v8178 = vld [vmem:[#allocation6 + $0x170] sm:$0xff]
      %v8179 = vld [vmem:[#allocation6 + $0x178] sm:$0xff]
      %v8180 = vld [vmem:[#allocation6 + $0x180] sm:$0xff]
      %v8181 = vld [vmem:[#allocation6 + $0x188] sm:$0xff]
      %v8182 = vld [vmem:[#allocation6 + $0x190] sm:$0xff]
      %v8183 = vld [vmem:[#allocation6 + $0x198] sm:$0xff]
      %v8184 = vld [vmem:[#allocation6 + $0x1a0] sm:$0xff]
      %v8185 = vld [vmem:[#allocation6 + $0x1a8] sm:$0xff]
      %v8186 = vld [vmem:[#allocation6 + $0x1b0] sm:$0xff]
      %v8187 = vld [vmem:[#allocation6 + $0x1b8] sm:$0xff]
      %v8188 = vld [vmem:[#allocation6 + $0x1c0] sm:$0xff]
      %v8189 = vld [vmem:[#allocation6 + $0x1c8] sm:$0xff]
      %v8190 = vld [vmem:[#allocation6 + $0x1d0] sm:$0xff]
      %v8191 = vld [vmem:[#allocation6 + $0x1d8] sm:$0xff]
      %v8192 = vld [vmem:[#allocation6 + $0x1e0] sm:$0xff]
      %v8193 = vld [vmem:[#allocation6 + $0x1e8] sm:$0xff]
      %v8194 = vld [vmem:[#allocation6 + $0x1f0] sm:$0xff]
      %v8195 = vld [vmem:[#allocation6 + $0x1f8] sm:$0xff]
      %v8196 = vld [vmem:[#allocation6 + $0x200] sm:$0xff]
      %v8197 = vld [vmem:[#allocation6 + $0x208] sm:$0xff]
      %v8198 = vld [vmem:[#allocation6 + $0x210] sm:$0xff]
      %v8199 = vld [vmem:[#allocation6 + $0x218] sm:$0xff]
      %v8200 = vld [vmem:[#allocation6 + $0x220] sm:$0xff]
      %v8201 = vld [vmem:[#allocation6 + $0x228] sm:$0xff]
      %v8202 = vld [vmem:[#allocation6 + $0x230] sm:$0xff]
      %v8203 = vld [vmem:[#allocation6 + $0x238] sm:$0xff]
      %v8204 = vld [vmem:[#allocation6 + $0x240] sm:$0xff]
      %v8205 = vld [vmem:[#allocation6 + $0x248] sm:$0xff]
      %v8206 = vld [vmem:[#allocation6 + $0x250] sm:$0xff]
      %v8207 = vld [vmem:[#allocation6 + $0x258] sm:$0xff]
      %v8208 = vld [vmem:[#allocation6 + $0x260] sm:$0xff]
      %v8209 = vld [vmem:[#allocation6 + $0x268] sm:$0xff]
      %v8210 = vld [vmem:[#allocation6 + $0x270] sm:$0xff]
      %v8211 = vld [vmem:[#allocation6 + $0x278] sm:$0xff]
      %v8212 = vld [vmem:[#allocation6 + $0x280] sm:$0xff]
      %v8213 = vld [vmem:[#allocation6 + $0x288] sm:$0xff]
      %v8214 = vld [vmem:[#allocation6 + $0x290] sm:$0xff]
      %v8215 = vld [vmem:[#allocation6 + $0x298] sm:$0xff]
      %v8216 = vld [vmem:[#allocation6 + $0x2a0] sm:$0xff]
      %v8217 = vld [vmem:[#allocation6 + $0x2a8] sm:$0xff]
      %v8218 = vld [vmem:[#allocation6 + $0x2b0] sm:$0xff]
      %v8219 = vld [vmem:[#allocation6 + $0x2b8] sm:$0xff]
      %v8220 = vld [vmem:[#allocation6 + $0x2c0] sm:$0xff]
      %v8221 = vld [vmem:[#allocation6 + $0x2c8] sm:$0xff]
      %v8222 = vld [vmem:[#allocation6 + $0x2d0] sm:$0xff]
      %v8223 = vld [vmem:[#allocation6 + $0x2d8] sm:$0xff]
      %v8224 = vld [vmem:[#allocation6 + $0x2e0] sm:$0xff]
      %v8225 = vld [vmem:[#allocation6 + $0x2e8] sm:$0xff]
      %v8226 = vld [vmem:[#allocation6 + $0x2f0] sm:$0xff]
      %v8227 = vld [vmem:[#allocation6 + $0x2f8] sm:$0xff]
      %v8228 = vld [vmem:[#allocation6 + $0x300] sm:$0xff]
      %v8229 = vld [vmem:[#allocation6 + $0x308] sm:$0xff]
      %v8230 = vld [vmem:[#allocation6 + $0x310] sm:$0xff]
      %v8231 = vld [vmem:[#allocation6 + $0x318] sm:$0xff]
      %8233 = vset.pattern.permute.xlu0 0
      %8234 = vperm.xlu0 %8233, %v426
      %v8235 = vpop.permute.xlu0 %8234
      %8238 = vset.pattern.permute.xlu0 0
      %8239 = vperm.xlu0 %8238, %v427
      %v8240 = vpop.permute.xlu0 %8239
      %8243 = vset.pattern.permute.xlu0 0
      %8244 = vperm.xlu0 %8243, %v428
      %v8245 = vpop.permute.xlu0 %8244
      %8248 = vset.pattern.permute.xlu0 0
      %8249 = vperm.xlu0 %8248, %v429
      %v8250 = vpop.permute.xlu0 %8249
      %8253 = vset.pattern.permute.xlu0 0
      %8254 = vperm.xlu0 %8253, %v430
      %v8255 = vpop.permute.xlu0 %8254
      %8258 = vset.pattern.permute.xlu0 0
      %8259 = vperm.xlu0 %8258, %v431
      %v8260 = vpop.permute.xlu0 %8259
      %8263 = vset.pattern.permute.xlu0 0
      %8264 = vperm.xlu0 %8263, %v432
      %v8265 = vpop.permute.xlu0 %8264
      %8268 = vset.pattern.permute.xlu0 0
      %8269 = vperm.xlu0 %8268, %v433
      %v8270 = vpop.permute.xlu0 %8269
      %v8273 = vsel %vm1077, %v376, 0
      %v8276 = vsel %vm1077, %v383, 0
      %v8279 = vsel %vm1077, %v390, 0
      %v8282 = vsel %vm1077, %v397, 0
      %v8285 = vsel %vm1077, %v404, 0
      %v8288 = vsel %vm1077, %v411, 0
      %v8291 = vsel %vm1077, %v418, 0
      %v8294 = vsel %vm1077, %v425, 0
      %8296 = vmatprep.subr.mxu0 0.0
      %8297 = vmatpush1.msra.mxu0 %v8132
      %8298 = vmatprep.subr.mxu0 0.0
      %8299 = vmatpush1.msra.mxu0 %v8133
      %8300 = vmatprep.subr.mxu0 0.0
      %8301 = vmatpush1.msra.mxu0 %v8134
      %8302 = vmatprep.subr.mxu0 0.0
      %8303 = vmatpush1.msra.mxu0 %v8135
      %8304 = vmatprep.subr.mxu0 0.0
      %8305 = vmatpush1.msra.mxu0 %v8136
      %8306 = vmatprep.subr.mxu0 0.0
      %8307 = vmatpush1.msra.mxu0 %v8137
      %8308 = vmatprep.subr.mxu0 0.0
      %8309 = vmatpush1.msra.mxu0 %v8138
      %8310 = vmatprep.subr.mxu0 0.0
      %8311 = vmatpush1.msra.mxu0 %v8139
      %8312 = vmatprep.subr.mxu0 0.0
      %8313 = vmatpush1.msra.mxu0 %v8140
      %8314 = vmatprep.subr.mxu0 0.0
      %8315 = vmatpush1.msra.mxu0 %v8141
      %8316 = vmatprep.subr.mxu0 0.0
      %8317 = vmatpush1.msra.mxu0 %v8142
      %8318 = vmatprep.subr.mxu0 0.0
      %8319 = vmatpush1.msra.mxu0 %v8143
      %8320 = vmatprep.subr.mxu0 0.0
      %8321 = vmatpush1.msra.mxu0 %v8144
      %8322 = vmatprep.subr.mxu0 0.0
      %8323 = vmatpush1.msra.mxu0 %v8145
      %8324 = vmatprep.subr.mxu0 0.0
      %8325 = vmatpush1.msra.mxu0 %v8146
      %8326 = vmatprep.subr.mxu0 0.0
      %8327 = vmatpush1.msra.mxu0 %v8147
      %8328 = vmatprep.subr.mxu0 0.0
      %8329 = vmatpush1.msra.mxu0 %v8148
      %8330 = vmatprep.subr.mxu0 0.0
      %8331 = vmatpush1.msra.mxu0 %v8149
      %8332 = vmatprep.subr.mxu0 0.0
      %8333 = vmatpush1.msra.mxu0 %v8150
      %8334 = vmatprep.subr.mxu0 0.0
      %8335 = vmatpush1.msra.mxu0 %v8151
      %8336 = vmatprep.subr.mxu0 0.0
      %8337 = vmatpush1.msra.mxu0 %v8152
      %8338 = vmatprep.subr.mxu0 0.0
      %8339 = vmatpush1.msra.mxu0 %v8153
      %8340 = vmatprep.subr.mxu0 0.0
      %8341 = vmatpush1.msra.mxu0 %v8154
      %8342 = vmatprep.subr.mxu0 0.0
      %8343 = vmatpush1.msra.mxu0 %v8155
      %8344 = vmatprep.subr.mxu0 0.0
      %8345 = vmatpush1.msra.mxu0 %v8156
      %8346 = vmatprep.subr.mxu0 0.0
      %8347 = vmatpush1.msra.mxu0 %v8157
      %8348 = vmatprep.subr.mxu0 0.0
      %8349 = vmatpush1.msra.mxu0 %v8158
      %8350 = vmatprep.subr.mxu0 0.0
      %8351 = vmatpush1.msra.mxu0 %v8159
      %8352 = vmatprep.subr.mxu0 0.0
      %8353 = vmatpush1.msra.mxu0 %v8160
      %8354 = vmatprep.subr.mxu0 0.0
      %8355 = vmatpush1.msra.mxu0 %v8161
      %8356 = vmatprep.subr.mxu0 0.0
      %8357 = vmatpush1.msra.mxu0 %v8162
      %8358 = vmatprep.subr.mxu0 0.0
      %8359 = vmatpush1.msra.mxu0 %v8163
      %8360 = vmatprep.mubr.f32.mxu0 %v371
      %8361 = vmatmul.mubr.f32.gmra.mrb[0].mxu0 %v370
      %v8362 = vpop.f32.mrb[0].mxu0
      %v8363 = vadd.f32 %v8235, %v8362
      %v8364 = vpop.f32.mrb[0].mxu0
      %8365 = vmatprep.mubr.f32.mxu0 %v378
      %8366 = vmatmul.mubr.f32.gmra.mrb[0].mxu0 %v377
      %v8367 = vpop.f32.mrb[0].mxu0
      %v8368 = vadd.f32 %v8240, %v8367
      %v8369 = vpop.f32.mrb[0].mxu0
      %8370 = vmatprep.mubr.f32.mxu0 %v385
      %8371 = vmatmul.mubr.f32.gmra.mrb[0].mxu0 %v384
      %v8372 = vpop.f32.mrb[0].mxu0
      %v8373 = vadd.f32 %v8245, %v8372
      %v8374 = vpop.f32.mrb[0].mxu0
      %8375 = vmatprep.mubr.f32.mxu0 %v392
      %8376 = vmatmul.mubr.f32.gmra.mrb[0].mxu0 %v391
      %v8377 = vpop.f32.mrb[0].mxu0
      %v8378 = vadd.f32 %v8250, %v8377
      %v8379 = vpop.f32.mrb[0].mxu0
      %8380 = vmatprep.mubr.f32.mxu0 %v399
      %8381 = vmatmul.mubr.f32.gmra.mrb[0].mxu0 %v398
      %v8382 = vpop.f32.mrb[0].mxu0
      %v8383 = vadd.f32 %v8255, %v8382
      %v8384 = vpop.f32.mrb[0].mxu0
      %8385 = vmatprep.mubr.f32.mxu0 %v406
      %8386 = vmatmul.mubr.f32.gmra.mrb[0].mxu0 %v405
      %v8387 = vpop.f32.mrb[0].mxu0
      %v8388 = vadd.f32 %v8260, %v8387
      %v8389 = vpop.f32.mrb[0].mxu0
      %8390 = vmatprep.mubr.f32.mxu0 %v413
      %8391 = vmatmul.mubr.f32.gmra.mrb[0].mxu0 %v412
      %v8392 = vpop.f32.mrb[0].mxu0
      %v8393 = vadd.f32 %v8265, %v8392
      %v8394 = vpop.f32.mrb[0].mxu0
      %8395 = vmatprep.mubr.f32.mxu0 %v420
      %8396 = vmatmul.mubr.f32.gmra.mrb[0].mxu0 %v419
      %v8397 = vpop.f32.mrb[0].mxu0
      %v8398 = vadd.f32 %v8270, %v8397
      %v8399 = vpop.f32.mrb[0].mxu0
      %8400 = vdwg.mxu0
      %8401 = vmatprep.subr.mxu0 0.0
      %8402 = vmatpush1.msra.mxu0 %v8164
      %8403 = vmatprep.subr.mxu0 0.0
      %8404 = vmatpush1.msra.mxu0 %v8165
      %8405 = vmatprep.subr.mxu0 0.0
      %8406 = vmatpush1.msra.mxu0 %v8166
      %8407 = vmatprep.subr.mxu0 0.0
      %8408 = vmatpush1.msra.mxu0 %v8167
      %8409 = vmatprep.subr.mxu0 0.0
      %8410 = vmatpush1.msra.mxu0 %v8168
      %8411 = vmatprep.subr.mxu0 0.0
      %8412 = vmatpush1.msra.mxu0 %v8169
      %8413 = vmatprep.subr.mxu0 0.0
      %8414 = vmatpush1.msra.mxu0 %v8170
      %8415 = vmatprep.subr.mxu0 0.0
      %8416 = vmatpush1.msra.mxu0 %v8171
      %8417 = vmatprep.subr.mxu0 0.0
      %8418 = vmatpush1.msra.mxu0 %v8172
      %8419 = vmatprep.subr.mxu0 0.0
      %8420 = vmatpush1.msra.mxu0 %v8173
      %8421 = vmatprep.subr.mxu0 0.0
      %8422 = vmatpush1.msra.mxu0 %v8174
      %8423 = vmatprep.subr.mxu0 0.0
      %8424 = vmatpush1.msra.mxu0 %v8175
      %8425 = vmatprep.subr.mxu0 0.0
      %8426 = vmatpush1.msra.mxu0 %v8176
      %8427 = vmatprep.subr.mxu0 0.0
      %8428 = vmatpush1.msra.mxu0 %v8177
      %8429 = vmatprep.subr.mxu0 0.0
      %8430 = vmatpush1.msra.mxu0 %v8178
      %8431 = vmatprep.subr.mxu0 0.0
      %8432 = vmatpush1.msra.mxu0 %v8179
      %8433 = vmatprep.subr.mxu0 0.0
      %8434 = vmatpush1.msra.mxu0 %v8180
      %8435 = vmatprep.subr.mxu0 0.0
      %8436 = vmatpush1.msra.mxu0 %v8181
      %8437 = vmatprep.subr.mxu0 0.0
      %8438 = vmatpush1.msra.mxu0 %v8182
      %8439 = vmatprep.subr.mxu0 0.0
      %8440 = vmatpush1.msra.mxu0 %v8183
      %8441 = vmatprep.subr.mxu0 0.0
      %8442 = vmatpush1.msra.mxu0 %v8184
      %8443 = vmatprep.subr.mxu0 0.0
      %8444 = vmatpush1.msra.mxu0 %v8185
      %8445 = vmatprep.subr.mxu0 0.0
      %8446 = vmatpush1.msra.mxu0 %v8186
      %8447 = vmatprep.subr.mxu0 0.0
      %8448 = vmatpush1.msra.mxu0 %v8187
      %8449 = vmatprep.subr.mxu0 0.0
      %8450 = vmatpush1.msra.mxu0 %v8188
      %8451 = vmatprep.subr.mxu0 0.0
      %8452 = vmatpush1.msra.mxu0 %v8189
      %8453 = vmatprep.subr.mxu0 0.0
      %8454 = vmatpush1.msra.mxu0 %v8190
      %8455 = vmatprep.subr.mxu0 0.0
      %8456 = vmatpush1.msra.mxu0 %v8191
      %8457 = vmatprep.subr.mxu0 0.0
      %8458 = vmatpush1.msra.mxu0 %v8192
      %8459 = vmatprep.subr.mxu0 0.0
      %8460 = vmatpush1.msra.mxu0 %v8193
      %8461 = vmatprep.subr.mxu0 0.0
      %8462 = vmatpush1.msra.mxu0 %v8194
      %8463 = vmatprep.subr.mxu0 0.0
      %8464 = vmatpush1.msra.mxu0 %v8195
      %8465 = vmatprep.mubr.f32.mxu0 %v373
      %8466 = vmatmul.mubr.f32.gmra.mrb[0].mxu0 %v372
      %v8467 = vpop.f32.mrb[0].mxu0
      %v8468 = vadd.f32 %v8363, %v8467
      %v8469 = vpop.f32.mrb[0].mxu0
      %8470 = vmatprep.mubr.f32.mxu0 %v380
      %8471 = vmatmul.mubr.f32.gmra.mrb[0].mxu0 %v379
      %v8472 = vpop.f32.mrb[0].mxu0
      %v8473 = vadd.f32 %v8368, %v8472
      %v8474 = vpop.f32.mrb[0].mxu0
      %8475 = vmatprep.mubr.f32.mxu0 %v387
      %8476 = vmatmul.mubr.f32.gmra.mrb[0].mxu0 %v386
      %v8477 = vpop.f32.mrb[0].mxu0
      %v8478 = vadd.f32 %v8373, %v8477
      %v8479 = vpop.f32.mrb[0].mxu0
      %8480 = vmatprep.mubr.f32.mxu0 %v394
      %8481 = vmatmul.mubr.f32.gmra.mrb[0].mxu0 %v393
      %v8482 = vpop.f32.mrb[0].mxu0
      %v8483 = vadd.f32 %v8378, %v8482
      %v8484 = vpop.f32.mrb[0].mxu0
      %8485 = vmatprep.mubr.f32.mxu0 %v401
      %8486 = vmatmul.mubr.f32.gmra.mrb[0].mxu0 %v400
      %v8487 = vpop.f32.mrb[0].mxu0
      %v8488 = vadd.f32 %v8383, %v8487
      %v8489 = vpop.f32.mrb[0].mxu0
      %8490 = vmatprep.mubr.f32.mxu0 %v408
      %8491 = vmatmul.mubr.f32.gmra.mrb[0].mxu0 %v407
      %v8492 = vpop.f32.mrb[0].mxu0
      %v8493 = vadd.f32 %v8388, %v8492
      %v8494 = vpop.f32.mrb[0].mxu0
      %8495 = vmatprep.mubr.f32.mxu0 %v415
      %8496 = vmatmul.mubr.f32.gmra.mrb[0].mxu0 %v414
      %v8497 = vpop.f32.mrb[0].mxu0
      %v8498 = vadd.f32 %v8393, %v8497
      %v8499 = vpop.f32.mrb[0].mxu0
      %8500 = vmatprep.mubr.f32.mxu0 %v422
      %8501 = vmatmul.mubr.f32.gmra.mrb[0].mxu0 %v421
      %v8502 = vpop.f32.mrb[0].mxu0
      %v8503 = vadd.f32 %v8398, %v8502
      %v8504 = vpop.f32.mrb[0].mxu0
      %8505 = vdwg.mxu0
      %8506 = vmatprep.subr.mxu0 0.0
      %8507 = vmatpush1.msra.mxu0 %v8196
      %8508 = vmatprep.subr.mxu0 0.0
      %8509 = vmatpush1.msra.mxu0 %v8197
      %8510 = vmatprep.subr.mxu0 0.0
      %8511 = vmatpush1.msra.mxu0 %v8198
      %8512 = vmatprep.subr.mxu0 0.0
      %8513 = vmatpush1.msra.mxu0 %v8199
      %8514 = vmatprep.subr.mxu0 0.0
      %8515 = vmatpush1.msra.mxu0 %v8200
      %8516 = vmatprep.subr.mxu0 0.0
      %8517 = vmatpush1.msra.mxu0 %v8201
      %8518 = vmatprep.subr.mxu0 0.0
      %8519 = vmatpush1.msra.mxu0 %v8202
      %8520 = vmatprep.subr.mxu0 0.0
      %8521 = vmatpush1.msra.mxu0 %v8203
      %8522 = vmatprep.subr.mxu0 0.0
      %8523 = vmatpush1.msra.mxu0 %v8204
      %8524 = vmatprep.subr.mxu0 0.0
      %8525 = vmatpush1.msra.mxu0 %v8205
      %8526 = vmatprep.subr.mxu0 0.0
      %8527 = vmatpush1.msra.mxu0 %v8206
      %8528 = vmatprep.subr.mxu0 0.0
      %8529 = vmatpush1.msra.mxu0 %v8207
      %8530 = vmatprep.subr.mxu0 0.0
      %8531 = vmatpush1.msra.mxu0 %v8208
      %8532 = vmatprep.subr.mxu0 0.0
      %8533 = vmatpush1.msra.mxu0 %v8209
      %8534 = vmatprep.subr.mxu0 0.0
      %8535 = vmatpush1.msra.mxu0 %v8210
      %8536 = vmatprep.subr.mxu0 0.0
      %8537 = vmatpush1.msra.mxu0 %v8211
      %8538 = vmatprep.subr.mxu0 0.0
      %8539 = vmatpush1.msra.mxu0 %v8212
      %8540 = vmatprep.subr.mxu0 0.0
      %8541 = vmatpush1.msra.mxu0 %v8213
      %8542 = vmatprep.subr.mxu0 0.0
      %8543 = vmatpush1.msra.mxu0 %v8214
      %8544 = vmatprep.subr.mxu0 0.0
      %8545 = vmatpush1.msra.mxu0 %v8215
      %8546 = vmatprep.subr.mxu0 0.0
      %8547 = vmatpush1.msra.mxu0 %v8216
      %8548 = vmatprep.subr.mxu0 0.0
      %8549 = vmatpush1.msra.mxu0 %v8217
      %8550 = vmatprep.subr.mxu0 0.0
      %8551 = vmatpush1.msra.mxu0 %v8218
      %8552 = vmatprep.subr.mxu0 0.0
      %8553 = vmatpush1.msra.mxu0 %v8219
      %8554 = vmatprep.subr.mxu0 0.0
      %8555 = vmatpush1.msra.mxu0 %v8220
      %8556 = vmatprep.subr.mxu0 0.0
      %8557 = vmatpush1.msra.mxu0 %v8221
      %8558 = vmatprep.subr.mxu0 0.0
      %8559 = vmatpush1.msra.mxu0 %v8222
      %8560 = vmatprep.subr.mxu0 0.0
      %8561 = vmatpush1.msra.mxu0 %v8223
      %8562 = vmatprep.subr.mxu0 0.0
      %8563 = vmatpush1.msra.mxu0 %v8224
      %8564 = vmatprep.subr.mxu0 0.0
      %8565 = vmatpush1.msra.mxu0 %v8225
      %8566 = vmatprep.subr.mxu0 0.0
      %8567 = vmatpush1.msra.mxu0 %v8226
      %8568 = vmatprep.subr.mxu0 0.0
      %8569 = vmatpush1.msra.mxu0 %v8227
      %8570 = vmatprep.mubr.f32.mxu0 %v375
      %8571 = vmatmul.mubr.f32.gmra.mrb[0].mxu0 %v374
      %v8572 = vpop.f32.mrb[0].mxu0
      %v8573 = vadd.f32 %v8468, %v8572
      %v8574 = vpop.f32.mrb[0].mxu0
      %8575 = vmatprep.mubr.f32.mxu0 %v382
      %8576 = vmatmul.mubr.f32.gmra.mrb[0].mxu0 %v381
      %v8577 = vpop.f32.mrb[0].mxu0
      %v8578 = vadd.f32 %v8473, %v8577
      %v8579 = vpop.f32.mrb[0].mxu0
      %8580 = vmatprep.mubr.f32.mxu0 %v389
      %8581 = vmatmul.mubr.f32.gmra.mrb[0].mxu0 %v388
      %v8582 = vpop.f32.mrb[0].mxu0
      %v8583 = vadd.f32 %v8478, %v8582
      %v8584 = vpop.f32.mrb[0].mxu0
      %8585 = vmatprep.mubr.f32.mxu0 %v396
      %8586 = vmatmul.mubr.f32.gmra.mrb[0].mxu0 %v395
      %v8587 = vpop.f32.mrb[0].mxu0
      %v8588 = vadd.f32 %v8483, %v8587
      %v8589 = vpop.f32.mrb[0].mxu0
      %8590 = vmatprep.mubr.f32.mxu0 %v403
      %8591 = vmatmul.mubr.f32.gmra.mrb[0].mxu0 %v402
      %v8592 = vpop.f32.mrb[0].mxu0
      %v8593 = vadd.f32 %v8488, %v8592
      %v8594 = vpop.f32.mrb[0].mxu0
      %8595 = vmatprep.mubr.f32.mxu0 %v410
      %8596 = vmatmul.mubr.f32.gmra.mrb[0].mxu0 %v409
      %v8597 = vpop.f32.mrb[0].mxu0
      %v8598 = vadd.f32 %v8493, %v8597
      %v8599 = vpop.f32.mrb[0].mxu0
      %8600 = vmatprep.mubr.f32.mxu0 %v417
      %8601 = vmatmul.mubr.f32.gmra.mrb[0].mxu0 %v416
      %v8602 = vpop.f32.mrb[0].mxu0
      %v8603 = vadd.f32 %v8498, %v8602
      %v8604 = vpop.f32.mrb[0].mxu0
      %8605 = vmatprep.mubr.f32.mxu0 %v424
      %8606 = vmatmul.mubr.f32.gmra.mrb[0].mxu0 %v423
      %v8607 = vpop.f32.mrb[0].mxu0
      %v8608 = vadd.f32 %v8503, %v8607
      %v8609 = vpop.f32.mrb[0].mxu0
      %8610 = vdwg.mxu0
      %8611 = vmatprep.subr.mxu0 0.0
      %8612 = vmatpush1.msra.mxu0 %v8228
      %8613 = vmatprep.subr.mxu0 0.0
      %8614 = vmatpush1.msra.mxu0 %v8229
      %8615 = vmatprep.subr.mxu0 0.0
      %8616 = vmatpush1.msra.mxu0 %v8230
      %8617 = vmatprep.subr.mxu0 0.0
      %8618 = vmatpush1.msra.mxu0 %v8231
      %8619 = vmatprep.subr.mxu0 0.0
      %8620 = vmatpush1.msra.mxu0 0.0
      %8621 = vmatprep.subr.mxu0 0.0
      %8622 = vmatpush1.msra.mxu0 0.0
      %8623 = vmatprep.subr.mxu0 0.0
      %8624 = vmatpush1.msra.mxu0 0.0
      %8625 = vmatprep.subr.mxu0 0.0
      %8626 = vmatpush1.msra.mxu0 0.0
      %8627 = vmatprep.subr.mxu0 0.0
      %8628 = vmatpush1.msra.mxu0 0.0
      %8629 = vmatprep.subr.mxu0 0.0
      %8630 = vmatpush1.msra.mxu0 0.0
      %8631 = vmatprep.subr.mxu0 0.0
      %8632 = vmatpush1.msra.mxu0 0.0
      %8633 = vmatprep.subr.mxu0 0.0
      %8634 = vmatpush1.msra.mxu0 0.0
      %8635 = vmatprep.subr.mxu0 0.0
      %8636 = vmatpush1.msra.mxu0 0.0
      %8637 = vmatprep.subr.mxu0 0.0
      %8638 = vmatpush1.msra.mxu0 0.0
      %8639 = vmatprep.subr.mxu0 0.0
      %8640 = vmatpush1.msra.mxu0 0.0
      %8641 = vmatprep.subr.mxu0 0.0
      %8642 = vmatpush1.msra.mxu0 0.0
      %8643 = vmatprep.subr.mxu0 0.0
      %8644 = vmatpush1.msra.mxu0 0.0
      %8645 = vmatprep.subr.mxu0 0.0
      %8646 = vmatpush1.msra.mxu0 0.0
      %8647 = vmatprep.subr.mxu0 0.0
      %8648 = vmatpush1.msra.mxu0 0.0
      %8649 = vmatprep.subr.mxu0 0.0
      %8650 = vmatpush1.msra.mxu0 0.0
      %8651 = vmatprep.subr.mxu0 0.0
      %8652 = vmatpush1.msra.mxu0 0.0
      %8653 = vmatprep.subr.mxu0 0.0
      %8654 = vmatpush1.msra.mxu0 0.0
      %8655 = vmatprep.subr.mxu0 0.0
      %8656 = vmatpush1.msra.mxu0 0.0
      %8657 = vmatprep.subr.mxu0 0.0
      %8658 = vmatpush1.msra.mxu0 0.0
      %8659 = vmatprep.subr.mxu0 0.0
      %8660 = vmatpush1.msra.mxu0 0.0
      %8661 = vmatprep.subr.mxu0 0.0
      %8662 = vmatpush1.msra.mxu0 0.0
      %8663 = vmatprep.subr.mxu0 0.0
      %8664 = vmatpush1.msra.mxu0 0.0
      %8665 = vmatprep.subr.mxu0 0.0
      %8666 = vmatpush1.msra.mxu0 0.0
      %8667 = vmatprep.subr.mxu0 0.0
      %8668 = vmatpush1.msra.mxu0 0.0
      %8669 = vmatprep.subr.mxu0 0.0
      %8670 = vmatpush1.msra.mxu0 0.0
      %8671 = vmatprep.subr.mxu0 0.0
      %8672 = vmatpush1.msra.mxu0 0.0
      %8673 = vmatprep.subr.mxu0 0.0
      %8674 = vmatpush1.msra.mxu0 0.0
      %8675 = vmatprep.mubr.f32.mxu0 0.0
      %8676 = vmatmul.mubr.f32.gmra.mrb[0].mxu0 %v8273
      %v8677 = vpop.f32.mrb[0].mxu0
      %v8678 = vadd.f32 %v8573, %v8677
      %v8679 = vpop.f32.mrb[0].mxu0
      %8680 = vmatprep.mubr.f32.mxu0 0.0
      %8681 = vmatmul.mubr.f32.gmra.mrb[0].mxu0 %v8276
      %v8682 = vpop.f32.mrb[0].mxu0
      %v8683 = vadd.f32 %v8578, %v8682
      %v8684 = vpop.f32.mrb[0].mxu0
      %8685 = vmatprep.mubr.f32.mxu0 0.0
      %8686 = vmatmul.mubr.f32.gmra.mrb[0].mxu0 %v8279
      %v8687 = vpop.f32.mrb[0].mxu0
      %v8688 = vadd.f32 %v8583, %v8687
      %v8689 = vpop.f32.mrb[0].mxu0
      %8690 = vmatprep.mubr.f32.mxu0 0.0
      %8691 = vmatmul.mubr.f32.gmra.mrb[0].mxu0 %v8282
      %v8692 = vpop.f32.mrb[0].mxu0
      %v8693 = vadd.f32 %v8588, %v8692
      %v8694 = vpop.f32.mrb[0].mxu0
      %8695 = vmatprep.mubr.f32.mxu0 0.0
      %8696 = vmatmul.mubr.f32.gmra.mrb[0].mxu0 %v8285
      %v8697 = vpop.f32.mrb[0].mxu0
      %v8698 = vadd.f32 %v8593, %v8697
      %v8699 = vpop.f32.mrb[0].mxu0
      %8700 = vmatprep.mubr.f32.mxu0 0.0
      %8701 = vmatmul.mubr.f32.gmra.mrb[0].mxu0 %v8288
      %v8702 = vpop.f32.mrb[0].mxu0
      %v8703 = vadd.f32 %v8598, %v8702
      %v8704 = vpop.f32.mrb[0].mxu0
      %8705 = vmatprep.mubr.f32.mxu0 0.0
      %8706 = vmatmul.mubr.f32.gmra.mrb[0].mxu0 %v8291
      %v8707 = vpop.f32.mrb[0].mxu0
      %v8708 = vadd.f32 %v8603, %v8707
      %v8709 = vpop.f32.mrb[0].mxu0
      %8710 = vmatprep.mubr.f32.mxu0 0.0
      %8711 = vmatmul.mubr.f32.gmra.mrb[0].mxu0 %v8294
      %v8712 = vpop.f32.mrb[0].mxu0
      %v8713 = vadd.f32 %v8608, %v8712
      %v8714 = vpop.f32.mrb[0].mxu0
      %8715 = vdwg.mxu0
      %v8716 = vmax.f32 %v8678, 0.0
      %v8717 = vmax.f32 %v8683, 0.0
      %v8718 = vmax.f32 %v8688, 0.0
      %v8719 = vmax.f32 %v8693, 0.0
      %v8720 = vmax.f32 %v8698, 0.0
      %v8721 = vmax.f32 %v8703, 0.0
      %v8722 = vmax.f32 %v8708, 0.0
      %v8723 = vmax.f32 %v8713, 0.0
      %v8724 = vld [vmem:[%s8] sm:$0xff]
      %v8725 = vld [vmem:[%s8 + $0x8] sm:$0xff]
      %v8726 = vld [vmem:[%s8 + $0x10] sm:$0xff]
      %v8727 = vld [vmem:[%s8 + $0x18] sm:$0xff]
      %v8728 = vld [vmem:[%s8 + $0x20] sm:$0xff]
      %v8729 = vld [vmem:[%s8 + $0x28] sm:$0xff]
      %v8730 = vld [vmem:[%s8 + $0x30] sm:$0xff]
      %v8731 = vld [vmem:[%s8 + $0x38] sm:$0xf]
      %v8733 = vsel %vm7551, %v8716, 0
      %v8736 = vsel %vm7551, %v8717, 0
      %v8739 = vsel %vm7551, %v8718, 0
      %v8742 = vsel %vm7551, %v8719, 0
      %v8745 = vsel %vm7551, %v8720, 0
      %v8748 = vsel %vm7551, %v8721, 0
      %v8751 = vsel %vm7551, %v8722, 0
      %v8754 = vsel %vm7551, %v8723, 0
      %vm8756 = vcmask 1043456
      %v8758 = vsel %vm8756, %v8731, 0
      %8760 = vmatprep.subr.mxu0 0.0
      %8761 = vmatpush1.msra.mxu0 %v8724
      %8762 = vmatprep.subr.mxu0 0.0
      %8763 = vmatpush1.msra.mxu0 %v8725
      %8764 = vmatprep.subr.mxu0 0.0
      %8765 = vmatpush1.msra.mxu0 %v8726
      %8766 = vmatprep.subr.mxu0 0.0
      %8767 = vmatpush1.msra.mxu0 %v8727
      %8768 = vmatprep.subr.mxu0 0.0
      %8769 = vmatpush1.msra.mxu0 %v8728
      %8770 = vmatprep.subr.mxu0 0.0
      %8771 = vmatpush1.msra.mxu0 %v8729
      %8772 = vmatprep.subr.mxu0 0.0
      %8773 = vmatpush1.msra.mxu0 %v8730
      %8774 = vmatprep.subr.mxu0 0.0
      %8775 = vmatpush1.msra.mxu0 %v8758
      %8776 = vmatprep.subr.mxu0 0.0
      %8777 = vmatpush1.msra.mxu0 0.0
      %8778 = vmatprep.subr.mxu0 0.0
      %8779 = vmatpush1.msra.mxu0 0.0
      %8780 = vmatprep.subr.mxu0 0.0
      %8781 = vmatpush1.msra.mxu0 0.0
      %8782 = vmatprep.subr.mxu0 0.0
      %8783 = vmatpush1.msra.mxu0 0.0
      %8784 = vmatprep.subr.mxu0 0.0
      %8785 = vmatpush1.msra.mxu0 0.0
      %8786 = vmatprep.subr.mxu0 0.0
      %8787 = vmatpush1.msra.mxu0 0.0
      %8788 = vmatprep.subr.mxu0 0.0
      %8789 = vmatpush1.msra.mxu0 0.0
      %8790 = vmatprep.subr.mxu0 0.0
      %8791 = vmatpush1.msra.mxu0 0.0
      %8792 = vmatprep.subr.mxu0 0.0
      %8793 = vmatpush1.msra.mxu0 0.0
      %8794 = vmatprep.subr.mxu0 0.0
      %8795 = vmatpush1.msra.mxu0 0.0
      %8796 = vmatprep.subr.mxu0 0.0
      %8797 = vmatpush1.msra.mxu0 0.0
      %8798 = vmatprep.subr.mxu0 0.0
      %8799 = vmatpush1.msra.mxu0 0.0
      %8800 = vmatprep.subr.mxu0 0.0
      %8801 = vmatpush1.msra.mxu0 0.0
      %8802 = vmatprep.subr.mxu0 0.0
      %8803 = vmatpush1.msra.mxu0 0.0
      %8804 = vmatprep.subr.mxu0 0.0
      %8805 = vmatpush1.msra.mxu0 0.0
      %8806 = vmatprep.subr.mxu0 0.0
      %8807 = vmatpush1.msra.mxu0 0.0
      %8808 = vmatprep.subr.mxu0 0.0
      %8809 = vmatpush1.msra.mxu0 0.0
      %8810 = vmatprep.subr.mxu0 0.0
      %8811 = vmatpush1.msra.mxu0 0.0
      %8812 = vmatprep.subr.mxu0 0.0
      %8813 = vmatpush1.msra.mxu0 0.0
      %8814 = vmatprep.subr.mxu0 0.0
      %8815 = vmatpush1.msra.mxu0 0.0
      %8816 = vmatprep.subr.mxu0 0.0
      %8817 = vmatpush1.msra.mxu0 0.0
      %8818 = vmatprep.subr.mxu0 0.0
      %8819 = vmatpush1.msra.mxu0 0.0
      %8820 = vmatprep.subr.mxu0 0.0
      %8821 = vmatpush1.msra.mxu0 0.0
      %8822 = vmatprep.subr.mxu0 0.0
      %8823 = vmatpush1.msra.mxu0 0.0
      %8824 = vmatprep.mubr.f32.mxu0 0.0
      %8825 = vmatmul.mubr.f32.gmra.mrb[0].mxu0 %v8733
      %v8826 = vpop.f32.mrb[0].mxu0
      %v8827 = vadd.f32 0.0, %v8826
      %v8828 = vpop.f32.mrb[0].mxu0
      %8829 = vmatprep.mubr.f32.mxu0 0.0
      %8830 = vmatmul.mubr.f32.gmra.mrb[0].mxu0 %v8736
      %v8831 = vpop.f32.mrb[0].mxu0
      %v8832 = vadd.f32 0.0, %v8831
      %v8833 = vpop.f32.mrb[0].mxu0
      %8834 = vmatprep.mubr.f32.mxu0 0.0
      %8835 = vmatmul.mubr.f32.gmra.mrb[0].mxu0 %v8739
      %v8836 = vpop.f32.mrb[0].mxu0
      %v8837 = vadd.f32 0.0, %v8836
      %v8838 = vpop.f32.mrb[0].mxu0
      %8839 = vmatprep.mubr.f32.mxu0 0.0
      %8840 = vmatmul.mubr.f32.gmra.mrb[0].mxu0 %v8742
      %v8841 = vpop.f32.mrb[0].mxu0
      %v8842 = vadd.f32 0.0, %v8841
      %v8843 = vpop.f32.mrb[0].mxu0
      %8844 = vmatprep.mubr.f32.mxu0 0.0
      %8845 = vmatmul.mubr.f32.gmra.mrb[0].mxu0 %v8745
      %v8846 = vpop.f32.mrb[0].mxu0
      %v8847 = vadd.f32 0.0, %v8846
      %v8848 = vpop.f32.mrb[0].mxu0
      %8849 = vmatprep.mubr.f32.mxu0 0.0
      %8850 = vmatmul.mubr.f32.gmra.mrb[0].mxu0 %v8748
      %v8851 = vpop.f32.mrb[0].mxu0
      %v8852 = vadd.f32 0.0, %v8851
      %v8853 = vpop.f32.mrb[0].mxu0
      %8854 = vmatprep.mubr.f32.mxu0 0.0
      %8855 = vmatmul.mubr.f32.gmra.mrb[0].mxu0 %v8751
      %v8856 = vpop.f32.mrb[0].mxu0
      %v8857 = vadd.f32 0.0, %v8856
      %v8858 = vpop.f32.mrb[0].mxu0
      %8859 = vmatprep.mubr.f32.mxu0 0.0
      %8860 = vmatmul.mubr.f32.gmra.mrb[0].mxu0 %v8754
      %v8861 = vpop.f32.mrb[0].mxu0
      %v8862 = vadd.f32 0.0, %v8861
      %v8863 = vpop.f32.mrb[0].mxu0
      %8864 = vdwg.mxu0
      %s8865 = scalar_lea.vmem %s8, 64
      %v8866 = vld [vmem:[%s8865] sm:$0xff]
      %v8867 = vld [vmem:[%s8865 + $0x8] sm:$0xff]
      %v8868 = vld [vmem:[%s8865 + $0x10] sm:$0xff]
      %v8869 = vld [vmem:[%s8865 + $0x18] sm:$0xff]
      %v8870 = vld [vmem:[%s8865 + $0x20] sm:$0xff]
      %v8871 = vld [vmem:[%s8865 + $0x28] sm:$0xff]
      %v8872 = vld [vmem:[%s8865 + $0x30] sm:$0xff]
      %v8873 = vld [vmem:[%s8865 + $0x38] sm:$0xf]
      %v8875 = vsel %vm8756, %v8873, 0
      %8877 = vmatprep.subr.mxu0 0.0
      %8878 = vmatpush1.msra.mxu0 %v8866
      %8879 = vmatprep.subr.mxu0 0.0
      %8880 = vmatpush1.msra.mxu0 %v8867
      %8881 = vmatprep.subr.mxu0 0.0
      %8882 = vmatpush1.msra.mxu0 %v8868
      %8883 = vmatprep.subr.mxu0 0.0
      %8884 = vmatpush1.msra.mxu0 %v8869
      %8885 = vmatprep.subr.mxu0 0.0
      %8886 = vmatpush1.msra.mxu0 %v8870
      %8887 = vmatprep.subr.mxu0 0.0
      %8888 = vmatpush1.msra.mxu0 %v8871
      %8889 = vmatprep.subr.mxu0 0.0
      %8890 = vmatpush1.msra.mxu0 %v8872
      %8891 = vmatprep.subr.mxu0 0.0
      %8892 = vmatpush1.msra.mxu0 %v8875
      %8893 = vmatprep.subr.mxu0 0.0
      %8894 = vmatpush1.msra.mxu0 0.0
      %8895 = vmatprep.subr.mxu0 0.0
      %8896 = vmatpush1.msra.mxu0 0.0
      %8897 = vmatprep.subr.mxu0 0.0
      %8898 = vmatpush1.msra.mxu0 0.0
      %8899 = vmatprep.subr.mxu0 0.0
      %8900 = vmatpush1.msra.mxu0 0.0
      %8901 = vmatprep.subr.mxu0 0.0
      %8902 = vmatpush1.msra.mxu0 0.0
      %8903 = vmatprep.subr.mxu0 0.0
      %8904 = vmatpush1.msra.mxu0 0.0
      %8905 = vmatprep.subr.mxu0 0.0
      %8906 = vmatpush1.msra.mxu0 0.0
      %8907 = vmatprep.subr.mxu0 0.0
      %8908 = vmatpush1.msra.mxu0 0.0
      %8909 = vmatprep.subr.mxu0 0.0
      %8910 = vmatpush1.msra.mxu0 0.0
      %8911 = vmatprep.subr.mxu0 0.0
      %8912 = vmatpush1.msra.mxu0 0.0
      %8913 = vmatprep.subr.mxu0 0.0
      %8914 = vmatpush1.msra.mxu0 0.0
      %8915 = vmatprep.subr.mxu0 0.0
      %8916 = vmatpush1.msra.mxu0 0.0
      %8917 = vmatprep.subr.mxu0 0.0
      %8918 = vmatpush1.msra.mxu0 0.0
      %8919 = vmatprep.subr.mxu0 0.0
      %8920 = vmatpush1.msra.mxu0 0.0
      %8921 = vmatprep.subr.mxu0 0.0
      %8922 = vmatpush1.msra.mxu0 0.0
      %8923 = vmatprep.subr.mxu0 0.0
      %8924 = vmatpush1.msra.mxu0 0.0
      %8925 = vmatprep.subr.mxu0 0.0
      %8926 = vmatpush1.msra.mxu0 0.0
      %8927 = vmatprep.subr.mxu0 0.0
      %8928 = vmatpush1.msra.mxu0 0.0
      %8929 = vmatprep.subr.mxu0 0.0
      %8930 = vmatpush1.msra.mxu0 0.0
      %8931 = vmatprep.subr.mxu0 0.0
      %8932 = vmatpush1.msra.mxu0 0.0
      %8933 = vmatprep.subr.mxu0 0.0
      %8934 = vmatpush1.msra.mxu0 0.0
      %8935 = vmatprep.subr.mxu0 0.0
      %8936 = vmatpush1.msra.mxu0 0.0
      %8937 = vmatprep.subr.mxu0 0.0
      %8938 = vmatpush1.msra.mxu0 0.0
      %8939 = vmatprep.subr.mxu0 0.0
      %8940 = vmatpush1.msra.mxu0 0.0
      %8941 = vmatprep.mubr.f32.mxu0 0.0
      %8942 = vmatmul.mubr.f32.gmra.mrb[0].mxu0 %v8733
      %v8943 = vpop.f32.mrb[0].mxu0
      %v8944 = vadd.f32 0.0, %v8943
      %v8945 = vpop.f32.mrb[0].mxu0
      %8946 = vmatprep.mubr.f32.mxu0 0.0
      %8947 = vmatmul.mubr.f32.gmra.mrb[0].mxu0 %v8736
      %v8948 = vpop.f32.mrb[0].mxu0
      %v8949 = vadd.f32 0.0, %v8948
      %v8950 = vpop.f32.mrb[0].mxu0
      %8951 = vmatprep.mubr.f32.mxu0 0.0
      %8952 = vmatmul.mubr.f32.gmra.mrb[0].mxu0 %v8739
      %v8953 = vpop.f32.mrb[0].mxu0
      %v8954 = vadd.f32 0.0, %v8953
      %v8955 = vpop.f32.mrb[0].mxu0
      %8956 = vmatprep.mubr.f32.mxu0 0.0
      %8957 = vmatmul.mubr.f32.gmra.mrb[0].mxu0 %v8742
      %v8958 = vpop.f32.mrb[0].mxu0
      %v8959 = vadd.f32 0.0, %v8958
      %v8960 = vpop.f32.mrb[0].mxu0
      %8961 = vmatprep.mubr.f32.mxu0 0.0
      %8962 = vmatmul.mubr.f32.gmra.mrb[0].mxu0 %v8745
      %v8963 = vpop.f32.mrb[0].mxu0
      %v8964 = vadd.f32 0.0, %v8963
      %v8965 = vpop.f32.mrb[0].mxu0
      %8966 = vmatprep.mubr.f32.mxu0 0.0
      %8967 = vmatmul.mubr.f32.gmra.mrb[0].mxu0 %v8748
      %v8968 = vpop.f32.mrb[0].mxu0
      %v8969 = vadd.f32 0.0, %v8968
      %v8970 = vpop.f32.mrb[0].mxu0
      %8971 = vmatprep.mubr.f32.mxu0 0.0
      %8972 = vmatmul.mubr.f32.gmra.mrb[0].mxu0 %v8751
      %v8973 = vpop.f32.mrb[0].mxu0
      %v8974 = vadd.f32 0.0, %v8973
      %v8975 = vpop.f32.mrb[0].mxu0
      %8976 = vmatprep.mubr.f32.mxu0 0.0
      %8977 = vmatmul.mubr.f32.gmra.mrb[0].mxu0 %v8754
      %v8978 = vpop.f32.mrb[0].mxu0
      %v8979 = vadd.f32 0.0, %v8978
      %v8980 = vpop.f32.mrb[0].mxu0
      %8981 = vdwg.mxu0
      %v8982 = vmax.f32 %v8827, %v8944
      %v8983 = vmax.f32 %v8832, %v8949
      %v8984 = vmax.f32 %v8837, %v8954
      %v8985 = vmax.f32 %v8842, %v8959
      %v8986 = vmax.f32 %v8847, %v8964
      %v8987 = vmax.f32 %v8852, %v8969
      %v8988 = vmax.f32 %v8857, %v8974
      %v8989 = vmax.f32 %v8862, %v8979
      %s8990 = scalar_lea.vmem %s8, 128
      %v8991 = vld [vmem:[%s8990] sm:$0xff]
      %v8992 = vld [vmem:[%s8990 + $0x8] sm:$0xff]
      %v8993 = vld [vmem:[%s8990 + $0x10] sm:$0xff]
      %v8994 = vld [vmem:[%s8990 + $0x18] sm:$0xff]
      %v8995 = vld [vmem:[%s8990 + $0x20] sm:$0xff]
      %v8996 = vld [vmem:[%s8990 + $0x28] sm:$0xff]
      %v8997 = vld [vmem:[%s8990 + $0x30] sm:$0xff]
      %v8998 = vld [vmem:[%s8990 + $0x38] sm:$0xf]
      %v9000 = vsel %vm8756, %v8998, 0
      %9002 = vmatprep.subr.mxu0 0.0
      %9003 = vmatpush1.msra.mxu0 %v8991
      %9004 = vmatprep.subr.mxu0 0.0
      %9005 = vmatpush1.msra.mxu0 %v8992
      %9006 = vmatprep.subr.mxu0 0.0
      %9007 = vmatpush1.msra.mxu0 %v8993
      %9008 = vmatprep.subr.mxu0 0.0
      %9009 = vmatpush1.msra.mxu0 %v8994
      %9010 = vmatprep.subr.mxu0 0.0
      %9011 = vmatpush1.msra.mxu0 %v8995
      %9012 = vmatprep.subr.mxu0 0.0
      %9013 = vmatpush1.msra.mxu0 %v8996
      %9014 = vmatprep.subr.mxu0 0.0
      %9015 = vmatpush1.msra.mxu0 %v8997
      %9016 = vmatprep.subr.mxu0 0.0
      %9017 = vmatpush1.msra.mxu0 %v9000
      %9018 = vmatprep.subr.mxu0 0.0
      %9019 = vmatpush1.msra.mxu0 0.0
      %9020 = vmatprep.subr.mxu0 0.0
      %9021 = vmatpush1.msra.mxu0 0.0
      %9022 = vmatprep.subr.mxu0 0.0
      %9023 = vmatpush1.msra.mxu0 0.0
      %9024 = vmatprep.subr.mxu0 0.0
      %9025 = vmatpush1.msra.mxu0 0.0
      %9026 = vmatprep.subr.mxu0 0.0
      %9027 = vmatpush1.msra.mxu0 0.0
      %9028 = vmatprep.subr.mxu0 0.0
      %9029 = vmatpush1.msra.mxu0 0.0
      %9030 = vmatprep.subr.mxu0 0.0
      %9031 = vmatpush1.msra.mxu0 0.0
      %9032 = vmatprep.subr.mxu0 0.0
      %9033 = vmatpush1.msra.mxu0 0.0
      %9034 = vmatprep.subr.mxu0 0.0
      %9035 = vmatpush1.msra.mxu0 0.0
      %9036 = vmatprep.subr.mxu0 0.0
      %9037 = vmatpush1.msra.mxu0 0.0
      %9038 = vmatprep.subr.mxu0 0.0
      %9039 = vmatpush1.msra.mxu0 0.0
      %9040 = vmatprep.subr.mxu0 0.0
      %9041 = vmatpush1.msra.mxu0 0.0
      %9042 = vmatprep.subr.mxu0 0.0
      %9043 = vmatpush1.msra.mxu0 0.0
      %9044 = vmatprep.subr.mxu0 0.0
      %9045 = vmatpush1.msra.mxu0 0.0
      %9046 = vmatprep.subr.mxu0 0.0
      %9047 = vmatpush1.msra.mxu0 0.0
      %9048 = vmatprep.subr.mxu0 0.0
      %9049 = vmatpush1.msra.mxu0 0.0
      %9050 = vmatprep.subr.mxu0 0.0
      %9051 = vmatpush1.msra.mxu0 0.0
      %9052 = vmatprep.subr.mxu0 0.0
      %9053 = vmatpush1.msra.mxu0 0.0
      %9054 = vmatprep.subr.mxu0 0.0
      %9055 = vmatpush1.msra.mxu0 0.0
      %9056 = vmatprep.subr.mxu0 0.0
      %9057 = vmatpush1.msra.mxu0 0.0
      %9058 = vmatprep.subr.mxu0 0.0
      %9059 = vmatpush1.msra.mxu0 0.0
      %9060 = vmatprep.subr.mxu0 0.0
      %9061 = vmatpush1.msra.mxu0 0.0
      %9062 = vmatprep.subr.mxu0 0.0
      %9063 = vmatpush1.msra.mxu0 0.0
      %9064 = vmatprep.subr.mxu0 0.0
      %9065 = vmatpush1.msra.mxu0 0.0
      %9066 = vmatprep.mubr.f32.mxu0 0.0
      %9067 = vmatmul.mubr.f32.gmra.mrb[0].mxu0 %v8733
      %v9068 = vpop.f32.mrb[0].mxu0
      %v9069 = vadd.f32 0.0, %v9068
      %v9070 = vpop.f32.mrb[0].mxu0
      %9071 = vmatprep.mubr.f32.mxu0 0.0
      %9072 = vmatmul.mubr.f32.gmra.mrb[0].mxu0 %v8736
      %v9073 = vpop.f32.mrb[0].mxu0
      %v9074 = vadd.f32 0.0, %v9073
      %v9075 = vpop.f32.mrb[0].mxu0
      %9076 = vmatprep.mubr.f32.mxu0 0.0
      %9077 = vmatmul.mubr.f32.gmra.mrb[0].mxu0 %v8739
      %v9078 = vpop.f32.mrb[0].mxu0
      %v9079 = vadd.f32 0.0, %v9078
      %v9080 = vpop.f32.mrb[0].mxu0
      %9081 = vmatprep.mubr.f32.mxu0 0.0
      %9082 = vmatmul.mubr.f32.gmra.mrb[0].mxu0 %v8742
      %v9083 = vpop.f32.mrb[0].mxu0
      %v9084 = vadd.f32 0.0, %v9083
      %v9085 = vpop.f32.mrb[0].mxu0
      %9086 = vmatprep.mubr.f32.mxu0 0.0
      %9087 = vmatmul.mubr.f32.gmra.mrb[0].mxu0 %v8745
      %v9088 = vpop.f32.mrb[0].mxu0
      %v9089 = vadd.f32 0.0, %v9088
      %v9090 = vpop.f32.mrb[0].mxu0
      %9091 = vmatprep.mubr.f32.mxu0 0.0
      %9092 = vmatmul.mubr.f32.gmra.mrb[0].mxu0 %v8748
      %v9093 = vpop.f32.mrb[0].mxu0
      %v9094 = vadd.f32 0.0, %v9093
      %v9095 = vpop.f32.mrb[0].mxu0
      %9096 = vmatprep.mubr.f32.mxu0 0.0
      %9097 = vmatmul.mubr.f32.gmra.mrb[0].mxu0 %v8751
      %v9098 = vpop.f32.mrb[0].mxu0
      %v9099 = vadd.f32 0.0, %v9098
      %v9100 = vpop.f32.mrb[0].mxu0
      %9101 = vmatprep.mubr.f32.mxu0 0.0
      %9102 = vmatmul.mubr.f32.gmra.mrb[0].mxu0 %v8754
      %v9103 = vpop.f32.mrb[0].mxu0
      %v9104 = vadd.f32 0.0, %v9103
      %v9105 = vpop.f32.mrb[0].mxu0
      %9106 = vdwg.mxu0
      %v9107 = vmax.f32 %v8982, %v9069
      %v9108 = vmax.f32 %v8983, %v9074
      %v9109 = vmax.f32 %v8984, %v9079
      %v9110 = vmax.f32 %v8985, %v9084
      %v9111 = vmax.f32 %v8986, %v9089
      %v9112 = vmax.f32 %v8987, %v9094
      %v9113 = vmax.f32 %v8988, %v9099
      %v9114 = vmax.f32 %v8989, %v9104
      %s9115 = scalar_lea.vmem %s8, 192
      %v9116 = vld [vmem:[%s9115] sm:$0xff]
      %v9117 = vld [vmem:[%s9115 + $0x8] sm:$0xff]
      %v9118 = vld [vmem:[%s9115 + $0x10] sm:$0xff]
      %v9119 = vld [vmem:[%s9115 + $0x18] sm:$0xff]
      %v9120 = vld [vmem:[%s9115 + $0x20] sm:$0xff]
      %v9121 = vld [vmem:[%s9115 + $0x28] sm:$0xff]
      %v9122 = vld [vmem:[%s9115 + $0x30] sm:$0xff]
      %v9123 = vld [vmem:[%s9115 + $0x38] sm:$0xf]
      %v9125 = vsel %vm8756, %v9123, 0
      %9127 = vmatprep.subr.mxu0 0.0
      %9128 = vmatpush1.msra.mxu0 %v9116
      %9129 = vmatprep.subr.mxu0 0.0
      %9130 = vmatpush1.msra.mxu0 %v9117
      %9131 = vmatprep.subr.mxu0 0.0
      %9132 = vmatpush1.msra.mxu0 %v9118
      %9133 = vmatprep.subr.mxu0 0.0
      %9134 = vmatpush1.msra.mxu0 %v9119
      %9135 = vmatprep.subr.mxu0 0.0
      %9136 = vmatpush1.msra.mxu0 %v9120
      %9137 = vmatprep.subr.mxu0 0.0
      %9138 = vmatpush1.msra.mxu0 %v9121
      %9139 = vmatprep.subr.mxu0 0.0
      %9140 = vmatpush1.msra.mxu0 %v9122
      %9141 = vmatprep.subr.mxu0 0.0
      %9142 = vmatpush1.msra.mxu0 %v9125
      %9143 = vmatprep.subr.mxu0 0.0
      %9144 = vmatpush1.msra.mxu0 0.0
      %9145 = vmatprep.subr.mxu0 0.0
      %9146 = vmatpush1.msra.mxu0 0.0
      %9147 = vmatprep.subr.mxu0 0.0
      %9148 = vmatpush1.msra.mxu0 0.0
      %9149 = vmatprep.subr.mxu0 0.0
      %9150 = vmatpush1.msra.mxu0 0.0
      %9151 = vmatprep.subr.mxu0 0.0
      %9152 = vmatpush1.msra.mxu0 0.0
      %9153 = vmatprep.subr.mxu0 0.0
      %9154 = vmatpush1.msra.mxu0 0.0
      %9155 = vmatprep.subr.mxu0 0.0
      %9156 = vmatpush1.msra.mxu0 0.0
      %9157 = vmatprep.subr.mxu0 0.0
      %9158 = vmatpush1.msra.mxu0 0.0
      %9159 = vmatprep.subr.mxu0 0.0
      %9160 = vmatpush1.msra.mxu0 0.0
      %9161 = vmatprep.subr.mxu0 0.0
      %9162 = vmatpush1.msra.mxu0 0.0
      %9163 = vmatprep.subr.mxu0 0.0
      %9164 = vmatpush1.msra.mxu0 0.0
      %9165 = vmatprep.subr.mxu0 0.0
      %9166 = vmatpush1.msra.mxu0 0.0
      %9167 = vmatprep.subr.mxu0 0.0
      %9168 = vmatpush1.msra.mxu0 0.0
      %9169 = vmatprep.subr.mxu0 0.0
      %9170 = vmatpush1.msra.mxu0 0.0
      %9171 = vmatprep.subr.mxu0 0.0
      %9172 = vmatpush1.msra.mxu0 0.0
      %9173 = vmatprep.subr.mxu0 0.0
      %9174 = vmatpush1.msra.mxu0 0.0
      %9175 = vmatprep.subr.mxu0 0.0
      %9176 = vmatpush1.msra.mxu0 0.0
      %9177 = vmatprep.subr.mxu0 0.0
      %9178 = vmatpush1.msra.mxu0 0.0
      %9179 = vmatprep.subr.mxu0 0.0
      %9180 = vmatpush1.msra.mxu0 0.0
      %9181 = vmatprep.subr.mxu0 0.0
      %9182 = vmatpush1.msra.mxu0 0.0
      %9183 = vmatprep.subr.mxu0 0.0
      %9184 = vmatpush1.msra.mxu0 0.0
      %9185 = vmatprep.subr.mxu0 0.0
      %9186 = vmatpush1.msra.mxu0 0.0
      %9187 = vmatprep.subr.mxu0 0.0
      %9188 = vmatpush1.msra.mxu0 0.0
      %9189 = vmatprep.subr.mxu0 0.0
      %9190 = vmatpush1.msra.mxu0 0.0
      %9191 = vmatprep.mubr.f32.mxu0 0.0
      %9192 = vmatmul.mubr.f32.gmra.mrb[0].mxu0 %v8733
      %v9193 = vpop.f32.mrb[0].mxu0
      %v9194 = vadd.f32 0.0, %v9193
      %v9195 = vpop.f32.mrb[0].mxu0
      %9196 = vmatprep.mubr.f32.mxu0 0.0
      %9197 = vmatmul.mubr.f32.gmra.mrb[0].mxu0 %v8736
      %v9198 = vpop.f32.mrb[0].mxu0
      %v9199 = vadd.f32 0.0, %v9198
      %v9200 = vpop.f32.mrb[0].mxu0
      %9201 = vmatprep.mubr.f32.mxu0 0.0
      %9202 = vmatmul.mubr.f32.gmra.mrb[0].mxu0 %v8739
      %v9203 = vpop.f32.mrb[0].mxu0
      %v9204 = vadd.f32 0.0, %v9203
      %v9205 = vpop.f32.mrb[0].mxu0
      %9206 = vmatprep.mubr.f32.mxu0 0.0
      %9207 = vmatmul.mubr.f32.gmra.mrb[0].mxu0 %v8742
      %v9208 = vpop.f32.mrb[0].mxu0
      %v9209 = vadd.f32 0.0, %v9208
      %v9210 = vpop.f32.mrb[0].mxu0
      %9211 = vmatprep.mubr.f32.mxu0 0.0
      %9212 = vmatmul.mubr.f32.gmra.mrb[0].mxu0 %v8745
      %v9213 = vpop.f32.mrb[0].mxu0
      %v9214 = vadd.f32 0.0, %v9213
      %v9215 = vpop.f32.mrb[0].mxu0
      %9216 = vmatprep.mubr.f32.mxu0 0.0
      %9217 = vmatmul.mubr.f32.gmra.mrb[0].mxu0 %v8748
      %v9218 = vpop.f32.mrb[0].mxu0
      %v9219 = vadd.f32 0.0, %v9218
      %v9220 = vpop.f32.mrb[0].mxu0
      %9221 = vmatprep.mubr.f32.mxu0 0.0
      %9222 = vmatmul.mubr.f32.gmra.mrb[0].mxu0 %v8751
      %v9223 = vpop.f32.mrb[0].mxu0
      %v9224 = vadd.f32 0.0, %v9223
      %v9225 = vpop.f32.mrb[0].mxu0
      %9226 = vmatprep.mubr.f32.mxu0 0.0
      %9227 = vmatmul.mubr.f32.gmra.mrb[0].mxu0 %v8754
      %v9228 = vpop.f32.mrb[0].mxu0
      %v9229 = vadd.f32 0.0, %v9228
      %v9230 = vpop.f32.mrb[0].mxu0
      %9231 = vdwg.mxu0
      %v9232 = vmax.f32 %v9107, %v9194
      %v9233 = vmax.f32 %v9108, %v9199
      %v9234 = vmax.f32 %v9109, %v9204
      %v9235 = vmax.f32 %v9110, %v9209
      %v9236 = vmax.f32 %v9111, %v9214
      %v9237 = vmax.f32 %v9112, %v9219
      %v9238 = vmax.f32 %v9113, %v9224
      %v9239 = vmax.f32 %v9114, %v9229
      %vm9240 = vcmask 72704
      %9241 = vst.msk [vmem:[%s329] sm:$0xff] %vm9240, %v9232
      %9242 = vst.msk [vmem:[%s329 + $0x8] sm:$0xff] %vm9240, %v9233
      %9243 = vst.msk [vmem:[%s329 + $0x10] sm:$0xff] %vm9240, %v9234
      %9244 = vst.msk [vmem:[%s329 + $0x18] sm:$0xff] %vm9240, %v9235
      %9245 = vst.msk [vmem:[%s329 + $0x20] sm:$0xff] %vm9240, %v9236
      %9246 = vst.msk [vmem:[%s329 + $0x28] sm:$0xff] %vm9240, %v9237
      %9247 = vst.msk [vmem:[%s329 + $0x30] sm:$0xff] %vm9240, %v9238
      %9248 = vst.msk [vmem:[%s329 + $0x38] sm:$0xff] %vm9240, %v9239
      %p9249 = scmp.lt.s32.totalorder %s20, 1
      %s9250 = scalar_select %p9249, %s20, 1
      %s9251 = smul.addr %s9250, 8
      %s9252 = smul.addr %s9251, 8
      %s9253 = scalar_lea.vmem %s9, %s9252
      // Predicated region
      $region57: #{mnist_cnn_forward.2} parent=55 // pred_check
        %p9254 = pneg %p232
      $region58: #{mnist_cnn_forward.2} parent=55 // pred_check_branch
        %9256 = sbr.rel (%p9254) target = $region60
      $region59: #{mnist_cnn_forward.2} parent=55 // pred_region
        _
      $region60: #{mnist_cnn_forward.2} parent=55 // pred_fallthru
        _
    $region56: #{mnist_cnn_forward.2} parent=5 // pred_fallthru
      _
    %p9257 = scmp.le.s32.totalorder 2, %s15
    // Predicated region
    $region61: #{mnist_cnn_forward.2} parent=5 // pred_check
      %p9258 = pneg %p9257
    $region62: #{mnist_cnn_forward.2} parent=5 // pred_check_branch
      %9260 = sbr.rel (%p9258) target = $region64
    $region63: #{mnist_cnn_forward.2} parent=5 // pred_region
      %s9261 = ssub.s32 %s15, 2
      // Predicated region
      $region65: #{mnist_cnn_forward.2} parent=63 // pred_check
        %p9262 = pneg %p238
      $region66: #{mnist_cnn_forward.2} parent=63 // pred_check_branch
        %9264 = sbr.rel (%p9262) target = $region68
      $region67: #{mnist_cnn_forward.2} parent=63 // pred_region
        %p9265 = scmp.lt.s32.totalorder %s21, 1
        %s9266 = scalar_select %p9265, %s21, 1
        %s9267 = smul.addr %s9266, 8
        %s9268 = smul.addr %s9267, 8
        %s9269 = scalar_lea.vmem %s9, %s9268
      $region68: #{mnist_cnn_forward.2} parent=63 // pred_fallthru
        _
    $region64: #{mnist_cnn_forward.2} parent=5 // pred_fallthru
      _
  $region6: #{mnist_cnn_forward.2} parent=0 // loop_footer
    %s19 = sadd.s32 1, %s15
  $region7: #{mnist_cnn_forward.2} parent=0 // loop_footer_branch
    %14 = sbr.rel target = $region3
  $region8: #{mnist_cnn_forward.2} parent=0 // loop_exit
    _

</llo_original>
